<compile_context>
chip_gen: v7x
topology: tpu7x:2x2x1
jax: 0.10.0
libtpu: 0.0.40
codegen_flags: <defaults>
</compile_context>

<pallas_src>
import jax
import jax.numpy as jnp
from jax import lax
from jax.experimental import pallas as pl
from jax.experimental.pallas import tpu as pltpu


def _pack_cell(wih, whh, bih, bhh, H):
    """Block-diagonal fused-gate packing for one GRU cell.

    wih: (in, 3H), whh: (H, 3H), bih/bhh: (1, 3H), gate columns [r|z|n].
    Returns W_cat (in+H, 4H), b_cat (1, 4H) such that for xh = [inp | h_prev]:
        g = xh @ W_cat + b_cat
          = [ r-preact (ih+hh summed) | z-preact (summed) | W_in x + b_in | W_hn h + b_hn ]
    """
    in_dim = wih.shape[0]
    H2 = 2 * H
    top = jnp.concatenate(
        [wih[:, :H2], wih[:, H2:], jnp.zeros((in_dim, H), wih.dtype)], axis=1)
    bot = jnp.concatenate(
        [whh[:, :H2], jnp.zeros((H, H), whh.dtype), whh[:, H2:]], axis=1)
    w_cat = jnp.concatenate([top, bot], axis=0)                       # (in+H, 4H)
    b_cat = jnp.concatenate(
        [bih[:, :H2] + bhh[:, :H2], bih[:, H2:], bhh[:, H2:]], axis=1)  # (1, 4H)
    return w_cat, b_cat


def gru_seq2seq_forward(inp_tensor, tgt_tensor, params):
    """Pallas equivalent of PTGRUSeq2Seq.forward(inp, tgt, teacher_forcing=False), mse loss."""
    B, T, E = inp_tensor.shape
    Ttgt = tgt_tensor.shape[1]
    L, H, _ = params["enc_whh"].shape
    assert L >= 2, "fused packing stores layers 1..L-1 in a separate slab"
    H2, H3, H4 = 2 * H, 3 * H, 4 * H
    f32, bf16 = jnp.float32, jnp.bfloat16
    p = params

    # ---------------- wrapper-side weight repacking (one-time) -----------------------
    # encoder layer 0: input / hidden kept as separate 4H-layout slabs so the input
    # projection can be hoisted across all T steps inside the kernel.
    e0win = jnp.concatenate([p["enc_wih0"], jnp.zeros((E, H), f32)], axis=1)      # (E,4H)
    whh0 = p["enc_whh"][0]
    e0whh = jnp.concatenate([whh0[:, :H2], jnp.zeros((H, H), f32), whh0[:, H2:]],
                            axis=1)                                               # (H,4H)
    e0b = jnp.concatenate([p["enc_bih"][0][:, :H2] + p["enc_bhh"][0][:, :H2],
                           p["enc_bih"][0][:, H2:], p["enc_bhh"][0][:, H2:]],
                          axis=1)                                                 # (1,4H)
    # encoder layers 1..L-1 and all decoder layers: block-diagonal fused cells
    enc_cat, enc_catb, dec_cat, dec_catb = [], [], [], []
    for l in range(1, L):
        w, b = _pack_cell(p["enc_wihr"][l - 1], p["enc_whh"][l],
                          p["enc_bih"][l], p["enc_bhh"][l], H)
        enc_cat.append(w); enc_catb.append(b)
        w, b = _pack_cell(p["dec_wihr"][l - 1], p["dec_whh"][l],
                          p["dec_bih"][l], p["dec_bhh"][l], H)
        dec_cat.append(w); dec_catb.append(b)
    d0cat, d0b = _pack_cell(p["dec_wih0"], p["dec_whh"][0],
                            p["dec_bih"][0], p["dec_bhh"][0], H)                  # (E+H,4H)

    x_flat = jnp.swapaxes(inp_tensor, 0, 1).reshape(T * B, E).astype(f32)
    tgt_flat = jnp.swapaxes(tgt_tensor, 0, 1).reshape(Ttgt * B, E).astype(f32)

    bf = lambda a: a.astype(bf16)   # bf16 weights -> single-pass MXU; f32 accumulate
    args = (x_flat, tgt_flat,
            bf(e0win), bf(e0whh), e0b,
            bf(jnp.stack(enc_cat)), jnp.stack(enc_catb),
            bf(d0cat), d0b,
            bf(jnp.stack(dec_cat)), jnp.stack(dec_catb),
            bf(p["l1w"]), p["l1b"], bf(p["l2w"]), p["l2b"])

    # ---------------- the kernel ------------------------------------------------------
    def kernel(x_ref, tgt_ref,
               e0win_ref, e0whh_ref, e0b_ref, ecat_ref, ecatb_ref,
               d0cat_ref, d0b_ref, dcat_ref, dcatb_ref,
               l1w_ref, l1b_ref, l2w_ref, l2b_ref,
               enc_out_ref, enc_hid_ref, dec_out_ref, dec_hid_ref, loss_ref):
        # Hoist bias broadcasts and the small / hottest weight slabs out of the
        # unrolled loops.  The big (2H,4H) per-layer slabs are re-read per use on
        # purpose (24 vregs of weights held live would risk spills in the unroll).
        e0whh = e0whh_ref[...]                                          # (H,4H) bf16
        d0cat = d0cat_ref[...]                                          # (E+H,4H) bf16
        l1w = l1w_ref[...]
        l2w = l2w_ref[...]
        ecatb = [jnp.broadcast_to(ecatb_ref[l], (B, H4)) for l in range(L - 1)]
        dcatb = [jnp.broadcast_to(dcatb_ref[l], (B, H4)) for l in range(L - 1)]
        d0b = jnp.broadcast_to(d0b_ref[...], (B, H4))
        l1b = jnp.broadcast_to(l1b_ref[...], (B, H))
        l2b = jnp.broadcast_to(l2b_ref[...], (B, E))

        def gates(g, h_prev):
            # g (B,4H) packed [ r-preact | z-preact | gx_n | gh_n ]  (PyTorch GRU)
            rz = jax.nn.sigmoid(g[:, :H2])
            r, z = rz[:, :H], rz[:, H:]
            n = jnp.tanh(g[:, H2:H3] + r * g[:, H3:])
            return (1.0 - z) * n + z * h_prev

        def fused_cell(inp, h_prev, w_cat, b_cat):
            # ONE MXU issue per cell: [inp | h_prev] @ block-diag(W_ih, W_hh).
            xh = jnp.concatenate([inp, h_prev], axis=1).astype(bf16)
            g = jnp.dot(xh, w_cat, preferred_element_type=f32) + b_cat
            return gates(g, h_prev)

        # encoder layer-0 input projection for all T steps in one matmul, bias folded in
        gx0_all = (jnp.dot(x_ref[...].astype(bf16), e0win_ref[...],
                           preferred_element_type=f32) + e0b_ref[...])   # (T*B, 4H)

        # -------- encoder: L stacked GRU layers over T steps (fully unrolled) --------
        h = [jnp.zeros((B, H), f32) for _ in range(L)]
        enc_tops = []
        for t in range(T):
            g0 = gx0_all[t * B:(t + 1) * B, :] + jnp.dot(
                h[0].astype(bf16), e0whh, preferred_element_type=f32)
            h[0] = gates(g0, h[0])
            inp = h[0]
            for l in range(1, L):
                h[l] = fused_cell(inp, h[l], ecat_ref[l - 1], ecatb[l - 1])
                inp = h[l]
            enc_tops.append(inp)
        # deferred bulk stores (keep tiny masked stores off the recurrence chain)
        enc_out_ref[...] = jnp.concatenate(enc_tops, axis=0)             # (T*B, H)
        enc_hid_ref[...] = jnp.concatenate(h, axis=0)                    # (L*B, H)

        # -------- decoder: free running (no teacher forcing), summed MSE -------------
        dec_in = x_ref[0:B, :]                                           # inp[:, 0, :]
        dec_outs = [dec_in]                                              # step 0 = input
        hd = list(h)                                                     # hidden.clone()
        sq_acc = jnp.zeros((B, E), f32)
        for di in range(Ttgt - 1):                                       # fully unrolled
            hd[0] = fused_cell(dec_in, hd[0], d0cat, d0b)
            inp = hd[0]
            for l in range(1, L):
                hd[l] = fused_cell(inp, hd[l], dcat_ref[l - 1], dcatb[l - 1])
                inp = hd[l]
            h1 = jnp.maximum(
                jnp.dot(inp.astype(bf16), l1w, preferred_element_type=f32) + l1b, 0.0)
            out = jnp.dot(h1.astype(bf16), l2w, preferred_element_type=f32) + l2b
            dec_outs.append(out)
            diff = out - tgt_ref[(di + 1) * B:(di + 2) * B, :]
            sq_acc = sq_acc + diff * diff                                # reduce after loop
            dec_in = out                                                 # free-running feedback
        dec_out_ref[...] = jnp.concatenate(dec_outs, axis=0)             # (Ttgt*B, E)
        dec_hid_ref[...] = jnp.concatenate(hd, axis=0)                   # (L*B, H)
        # sum over steps of per-step mean MSE == total sum of squares / (B*E)
        loss_ref[...] = jnp.reshape(jnp.sum(sq_acc) * (1.0 / (B * E)), (1, 1))

    vmem = lambda: pl.BlockSpec(memory_space=pltpu.MemorySpace.VMEM)
    enc_out, enc_hid, dec_out, dec_hid, loss = pl.pallas_call(
        kernel,
        out_shape=(
            jax.ShapeDtypeStruct((T * B, H), jnp.float32),      # encoder_output (time-major flat)
            jax.ShapeDtypeStruct((L * B, H), jnp.float32),      # encoder_hidden
            jax.ShapeDtypeStruct((Ttgt * B, E), jnp.float32),   # decoder_output (time-major flat)
            jax.ShapeDtypeStruct((L * B, H), jnp.float32),      # decoder_hidden
            jax.ShapeDtypeStruct((1, 1), jnp.float32),          # loss
        ),
        in_specs=[vmem() for _ in args],
        out_specs=(vmem(), vmem(), vmem(), vmem(), vmem()),
    )(*args)

    return {
        "encoder_output": jnp.swapaxes(enc_out.reshape(T, B, H), 0, 1),
        "encoder_hidden": enc_hid.reshape(L, B, H),
        "decoder_output": jnp.swapaxes(dec_out.reshape(Ttgt, B, E), 0, 1),
        "decoder_hidden": dec_hid.reshape(L, B, H),
        "loss": loss[0, 0],
    }


# --------------------------- deterministic parameter setup ---------------------------

def _init_gru_stack(key, L, H, E):
    """PyTorch nn.GRU-style uniform init, repacked into fused-gate (transposed) slabs.

    Returns: wih0 (E, 3H)        layer-0 input weight (gate columns [r|z|n])
             wihr (L-1, H, 3H)   input weights for layers 1..L-1
             whh  (L, H, 3H)     hidden weights
             bih  (L, 1, 3H)     input biases
             bhh  (L, 1, 3H)     hidden biases
    """
    bound = 1.0 / (H ** 0.5)
    keys = jax.random.split(key, 4 * L)
    wih0 = None
    wihr, whh, bih, bhh = [], [], [], []
    for l in range(L):
        in_dim = E if l == 0 else H
        w_ih = jax.random.uniform(keys[4 * l + 0], (3 * H, in_dim), jnp.float32, -bound, bound)
        w_hh = jax.random.uniform(keys[4 * l + 1], (3 * H, H), jnp.float32, -bound, bound)
        b_ih = jax.random.uniform(keys[4 * l + 2], (3 * H,), jnp.float32, -bound, bound)
        b_hh = jax.random.uniform(keys[4 * l + 3], (3 * H,), jnp.float32, -bound, bound)
        if l == 0:
            wih0 = w_ih.T                       # (E, 3H)
        else:
            wihr.append(w_ih.T)                 # (H, 3H)
        whh.append(w_hh.T)                      # (H, 3H)
        bih.append(b_ih.reshape(1, 3 * H))
        bhh.append(b_hh.reshape(1, 3 * H))
    return wih0, jnp.stack(wihr), jnp.stack(whh), jnp.stack(bih), jnp.stack(bhh)


def init_params(key, H=32, E=4, L=4):
    assert L >= 2, "fused packing stores layers 1..L-1 in a separate slab"
    k_enc, k_dec, k1, k2, k3, k4 = jax.random.split(key, 6)
    e0, er, ehh, ebi, ebh = _init_gru_stack(k_enc, L, H, E)
    d0, dr, dhh, dbi, dbh = _init_gru_stack(k_dec, L, H, E)
    bound = 1.0 / (H ** 0.5)
    return {
        "enc_wih0": e0, "enc_wihr": er, "enc_whh": ehh, "enc_bih": ebi, "enc_bhh": ebh,
        "dec_wih0": d0, "dec_wihr": dr, "dec_whh": dhh, "dec_bih": dbi, "dec_bhh": dbh,
        "l1w": jax.random.uniform(k1, (H, H), jnp.float32, -bound, bound),   # (in, out)
        "l1b": jax.random.uniform(k2, (1, H), jnp.float32, -bound, bound),
        "l2w": jax.random.uniform(k3, (H, E), jnp.float32, -bound, bound),   # (in, out)
        "l2b": jax.random.uniform(k4, (1, E), jnp.float32, -bound, bound),
    }


# ------------------------------- plain-JAX reference ---------------------------------

def reference_forward(x, tgt, p):
    B, T, E = x.shape
    L, H, _ = p["enc_whh"].shape
    Ttgt = tgt.shape[1]
    prec = lax.Precision.HIGHEST

    def cell(inp, hp, wih, bih, whh, bhh):
        gx = jnp.dot(inp, wih, precision=prec) + bih
        gh = jnp.dot(hp, whh, precision=prec) + bhh
        r = jax.nn.sigmoid(gx[:, :H] + gh[:, :H])
        z = jax.nn.sigmoid(gx[:, H:2 * H] + gh[:, H:2 * H])
        n = jnp.tanh(gx[:, 2 * H:] + r * gh[:, 2 * H:])
        return (1.0 - z) * n + z * hp

    def wih(prefix, l):
        return p[prefix + "_wih0"] if l == 0 else p[prefix + "_wihr"][l - 1]

    h = [jnp.zeros((B, H), jnp.float32) for _ in range(L)]
    enc_out = []
    for t in range(T):
        inp = x[:, t, :]
        for l in range(L):
            h[l] = cell(inp, h[l], wih("enc", l), p["enc_bih"][l],
                        p["enc_whh"][l], p["enc_bhh"][l])
            inp = h[l]
        enc_out.append(inp)
    enc_out = jnp.stack(enc_out, axis=1)
    enc_hid = jnp.stack(h, axis=0)

    hd = list(h)
    dec_in = x[:, 0, :]
    dec_outs = [x[:, 0, :]]
    loss = jnp.zeros((), jnp.float32)
    for di in range(Ttgt - 1):
        inp = dec_in
        for l in range(L):
            hd[l] = cell(inp, hd[l], wih("dec", l), p["dec_bih"][l],
                         p["dec_whh"][l], p["dec_bhh"][l])
            inp = hd[l]
        h1 = jnp.maximum(jnp.dot(inp, p["l1w"], precision=prec) + p["l1b"], 0.0)
        out = jnp.dot(h1, p["l2w"], precision=prec) + p["l2b"]
        dec_outs.append(out)
        loss = loss + jnp.mean((out - tgt[:, di + 1, :]) ** 2)
        dec_in = out

    return {
        "encoder_output": enc_out,
        "encoder_hidden": enc_hid,
        "decoder_output": jnp.stack(dec_outs, axis=1),
        "decoder_hidden": jnp.stack(hd, axis=0),
        "loss": loss,
    }


if __name__ == "__main__":
    B, T, Ttgt, H, E, L = 2, 8, 8, 32, 4, 4
    root = jax.random.PRNGKey(0)
    kx, kt, kp = jax.random.split(root, 3)
    inp_tensor = jax.random.normal(kx, (B, T, E), jnp.float32)     # (batch, seq, embed)
    tgt_tensor = jax.random.normal(kt, (B, Ttgt, E), jnp.float32)  # (batch, tgt_seq, embed)
    params = init_params(kp, H=H, E=E, L=L)

    out = gru_seq2seq_forward(inp_tensor, tgt_tensor, params)
    out = jax.block_until_ready(out)

    ref = reference_forward(inp_tensor, tgt_tensor, params)
    for name in ("encoder_output", "encoder_hidden", "decoder_output", "decoder_hidden", "loss"):
        if not jnp.allclose(out[name], ref[name], atol=5e-2, rtol=5e-2):
            raise AssertionError(f"mismatch in {name}")

    print("KERNEL_OK")
</pallas_src>

<mosaic_0001>
module attributes {stable_mosaic.version = 11 : i64} {
  func.func @kernel(%arg0: memref<16x4xf32, #tpu.memory_space<vmem>>, %arg1: memref<16x4xf32, #tpu.memory_space<vmem>>, %arg2: memref<4x128xbf16, #tpu.memory_space<vmem>>, %arg3: memref<32x128xbf16, #tpu.memory_space<vmem>>, %arg4: memref<1x128xf32, #tpu.memory_space<vmem>>, %arg5: memref<3x64x128xbf16, #tpu.memory_space<vmem>>, %arg6: memref<3x1x128xf32, #tpu.memory_space<vmem>>, %arg7: memref<36x128xbf16, #tpu.memory_space<vmem>>, %arg8: memref<1x128xf32, #tpu.memory_space<vmem>>, %arg9: memref<3x64x128xbf16, #tpu.memory_space<vmem>>, %arg10: memref<3x1x128xf32, #tpu.memory_space<vmem>>, %arg11: memref<32x32xbf16, #tpu.memory_space<vmem>>, %arg12: memref<1x32xf32, #tpu.memory_space<vmem>>, %arg13: memref<32x4xbf16, #tpu.memory_space<vmem>>, %arg14: memref<1x4xf32, #tpu.memory_space<vmem>>, %arg15: memref<16x32xf32, #tpu.memory_space<vmem>>, %arg16: memref<8x32xf32, #tpu.memory_space<vmem>>, %arg17: memref<16x4xf32, #tpu.memory_space<vmem>>, %arg18: memref<8x32xf32, #tpu.memory_space<vmem>>, %arg19: memref<1x1xf32, #tpu.memory_space<vmem>>) attributes {dimension_semantics = [], scalar_prefetch = 0 : i64, scratch_operands = 0 : i64, tpu.core_type = #tpu.core_type<tc>} {
    %c0 = arith.constant 0 : index
    %c0_0 = arith.constant 0 : index
    %0 = vector.load %arg3[%c0, %c0_0] : memref<32x128xbf16, #tpu.memory_space<vmem>>, vector<32x128xbf16>
    %c0_1 = arith.constant 0 : index
    %c0_2 = arith.constant 0 : index
    %1 = vector.load %arg7[%c0_1, %c0_2] : memref<36x128xbf16, #tpu.memory_space<vmem>>, vector<36x128xbf16>
    %c0_3 = arith.constant 0 : index
    %c0_4 = arith.constant 0 : index
    %2 = vector.load %arg11[%c0_3, %c0_4] : memref<32x32xbf16, #tpu.memory_space<vmem>>, vector<32x32xbf16>
    %c0_5 = arith.constant 0 : index
    %c0_6 = arith.constant 0 : index
    %3 = vector.load %arg13[%c0_5, %c0_6] : memref<32x4xbf16, #tpu.memory_space<vmem>>, vector<32x4xbf16>
    %c0_7 = arith.constant 0 : index
    %c0_8 = arith.constant 0 : index
    %c0_9 = arith.constant 0 : index
    %4 = vector.load %arg6[%c0_7, %c0_8, %c0_9] : memref<3x1x128xf32, #tpu.memory_space<vmem>>, vector<1x1x128xf32>
    %5 = vector.shape_cast %4 : vector<1x1x128xf32> to vector<1x128xf32>
    %6 = vector.shape_cast %5 : vector<1x128xf32> to vector<1x128xf32>
    %7 = vector.broadcast %6 : vector<1x128xf32> to vector<2x128xf32>
    %c1 = arith.constant 1 : index
    %c0_10 = arith.constant 0 : index
    %c0_11 = arith.constant 0 : index
    %8 = vector.load %arg6[%c1, %c0_10, %c0_11] : memref<3x1x128xf32, #tpu.memory_space<vmem>>, vector<1x1x128xf32>
    %9 = vector.shape_cast %8 : vector<1x1x128xf32> to vector<1x128xf32>
    %10 = vector.shape_cast %9 : vector<1x128xf32> to vector<1x128xf32>
    %11 = vector.broadcast %10 : vector<1x128xf32> to vector<2x128xf32>
    %c2 = arith.constant 2 : index
    %c0_12 = arith.constant 0 : index
    %c0_13 = arith.constant 0 : index
    %12 = vector.load %arg6[%c2, %c0_12, %c0_13] : memref<3x1x128xf32, #tpu.memory_space<vmem>>, vector<1x1x128xf32>
    %13 = vector.shape_cast %12 : vector<1x1x128xf32> to vector<1x128xf32>
    %14 = vector.shape_cast %13 : vector<1x128xf32> to vector<1x128xf32>
    %15 = vector.broadcast %14 : vector<1x128xf32> to vector<2x128xf32>
    %c0_14 = arith.constant 0 : index
    %c0_15 = arith.constant 0 : index
    %c0_16 = arith.constant 0 : index
    %16 = vector.load %arg10[%c0_14, %c0_15, %c0_16] : memref<3x1x128xf32, #tpu.memory_space<vmem>>, vector<1x1x128xf32>
    %17 = vector.shape_cast %16 : vector<1x1x128xf32> to vector<1x128xf32>
    %18 = vector.shape_cast %17 : vector<1x128xf32> to vector<1x128xf32>
    %19 = vector.broadcast %18 : vector<1x128xf32> to vector<2x128xf32>
    %c1_17 = arith.constant 1 : index
    %c0_18 = arith.constant 0 : index
    %c0_19 = arith.constant 0 : index
    %20 = vector.load %arg10[%c1_17, %c0_18, %c0_19] : memref<3x1x128xf32, #tpu.memory_space<vmem>>, vector<1x1x128xf32>
    %21 = vector.shape_cast %20 : vector<1x1x128xf32> to vector<1x128xf32>
    %22 = vector.shape_cast %21 : vector<1x128xf32> to vector<1x128xf32>
    %23 = vector.broadcast %22 : vector<1x128xf32> to vector<2x128xf32>
    %c2_20 = arith.constant 2 : index
    %c0_21 = arith.constant 0 : index
    %c0_22 = arith.constant 0 : index
    %24 = vector.load %arg10[%c2_20, %c0_21, %c0_22] : memref<3x1x128xf32, #tpu.memory_space<vmem>>, vector<1x1x128xf32>
    %25 = vector.shape_cast %24 : vector<1x1x128xf32> to vector<1x128xf32>
    %26 = vector.shape_cast %25 : vector<1x128xf32> to vector<1x128xf32>
    %27 = vector.broadcast %26 : vector<1x128xf32> to vector<2x128xf32>
    %c0_23 = arith.constant 0 : index
    %c0_24 = arith.constant 0 : index
    %28 = vector.load %arg8[%c0_23, %c0_24] : memref<1x128xf32, #tpu.memory_space<vmem>>, vector<1x128xf32>
    %29 = vector.shape_cast %28 : vector<1x128xf32> to vector<1x128xf32>
    %30 = vector.broadcast %29 : vector<1x128xf32> to vector<2x128xf32>
    %c0_25 = arith.constant 0 : index
    %c0_26 = arith.constant 0 : index
    %31 = vector.load %arg12[%c0_25, %c0_26] : memref<1x32xf32, #tpu.memory_space<vmem>>, vector<1x32xf32>
    %32 = vector.shape_cast %31 : vector<1x32xf32> to vector<1x32xf32>
    %33 = vector.broadcast %32 : vector<1x32xf32> to vector<2x32xf32>
    %c0_27 = arith.constant 0 : index
    %c0_28 = arith.constant 0 : index
    %34 = vector.load %arg14[%c0_27, %c0_28] : memref<1x4xf32, #tpu.memory_space<vmem>>, vector<1x4xf32>
    %35 = vector.shape_cast %34 : vector<1x4xf32> to vector<1x4xf32>
    %36 = vector.broadcast %35 : vector<1x4xf32> to vector<2x4xf32>
    %c0_29 = arith.constant 0 : index
    %c0_30 = arith.constant 0 : index
    %37 = vector.load %arg0[%c0_29, %c0_30] : memref<16x4xf32, #tpu.memory_space<vmem>>, vector<16x4xf32>
    %38 = arith.truncf %37 : vector<16x4xf32> to vector<16x4xbf16>
    %c0_31 = arith.constant 0 : index
    %c0_32 = arith.constant 0 : index
    %39 = vector.load %arg2[%c0_31, %c0_32] : memref<4x128xbf16, #tpu.memory_space<vmem>>, vector<4x128xbf16>
    %cst = arith.constant dense<0.000000e+00> : vector<16x128xf32>
    %40 = tpu.matmul %38, %39, %cst {dimension_numbers = #tpu.dot_dimension_numbers<[1], [0], [0], [1], [0, 0, 1, 1], [], []>} : vector<16x4xbf16>, vector<4x128xbf16>, vector<16x128xf32> -> vector<16x128xf32>
    %c0_33 = arith.constant 0 : index
    %c0_34 = arith.constant 0 : index
    %41 = vector.load %arg4[%c0_33, %c0_34] : memref<1x128xf32, #tpu.memory_space<vmem>>, vector<1x128xf32>
    %42 = vector.broadcast %41 : vector<1x128xf32> to vector<16x128xf32>
    %43 = arith.addf %40, %42 : vector<16x128xf32>
    %cst_35 = arith.constant 0.000000e+00 : f32
    %44 = vector.broadcast %cst_35 : f32 to vector<2x32xf32>
    %cst_36 = arith.constant 0.000000e+00 : f32
    %45 = vector.broadcast %cst_36 : f32 to vector<2x32xf32>
    %cst_37 = arith.constant 0.000000e+00 : f32
    %46 = vector.broadcast %cst_37 : f32 to vector<2x32xf32>
    %cst_38 = arith.constant 0.000000e+00 : f32
    %47 = vector.broadcast %cst_38 : f32 to vector<2x32xf32>
    %48 = vector.extract_strided_slice %43 {offsets = [0, 0], sizes = [2, 128], strides = [1, 1]} : vector<16x128xf32> to vector<2x128xf32>
    %49 = arith.truncf %44 : vector<2x32xf32> to vector<2x32xbf16>
    %cst_39 = arith.constant dense<0.000000e+00> : vector<2x128xf32>
    %50 = tpu.matmul %49, %0, %cst_39 {dimension_numbers = #tpu.dot_dimension_numbers<[1], [0], [0], [1], [0, 0, 1, 1], [], []>} : vector<2x32xbf16>, vector<32x128xbf16>, vector<2x128xf32> -> vector<2x128xf32>
    %51 = arith.addf %48, %50 : vector<2x128xf32>
    %52 = vector.extract_strided_slice %51 {offsets = [0, 0], sizes = [2, 64], strides = [1, 1]} : vector<2x128xf32> to vector<2x64xf32>
    %53 = arith.negf %52 : vector<2x64xf32>
    %54 = math.exp %53 : vector<2x64xf32>
    %cst_40 = arith.constant 1.000000e+00 : f32
    %55 = vector.broadcast %cst_40 : f32 to vector<2x64xf32>
    %56 = arith.addf %55, %54 : vector<2x64xf32>
    %57 = arith.divf %55, %56 : vector<2x64xf32>
    %58 = vector.extract_strided_slice %57 {offsets = [0, 0], sizes = [2, 32], strides = [1, 1]} : vector<2x64xf32> to vector<2x32xf32>
    %59 = vector.extract_strided_slice %57 {offsets = [0, 32], sizes = [2, 32], strides = [1, 1]} : vector<2x64xf32> to vector<2x32xf32>
    %60 = vector.extract_strided_slice %51 {offsets = [0, 64], sizes = [2, 32], strides = [1, 1]} : vector<2x128xf32> to vector<2x32xf32>
    %61 = vector.extract_strided_slice %51 {offsets = [0, 96], sizes = [2, 32], strides = [1, 1]} : vector<2x128xf32> to vector<2x32xf32>
    %62 = arith.mulf %58, %61 : vector<2x32xf32>
    %63 = arith.addf %60, %62 : vector<2x32xf32>
    %64 = math.tanh %63 : vector<2x32xf32>
    %cst_41 = arith.constant 1.000000e+00 : f32
    %65 = vector.broadcast %cst_41 : f32 to vector<2x32xf32>
    %66 = arith.subf %65, %59 : vector<2x32xf32>
    %67 = arith.mulf %66, %64 : vector<2x32xf32>
    %68 = arith.mulf %59, %44 : vector<2x32xf32>
    %69 = arith.addf %67, %68 : vector<2x32xf32>
    %c0_42 = arith.constant 0 : index
    %c0_43 = arith.constant 0 : index
    %c0_44 = arith.constant 0 : index
    %70 = vector.load %arg5[%c0_42, %c0_43, %c0_44] : memref<3x64x128xbf16, #tpu.memory_space<vmem>>, vector<1x64x128xbf16>
    %71 = vector.shape_cast %70 : vector<1x64x128xbf16> to vector<64x128xbf16>
    %72 = tpu.concatenate %69, %45 in 1 : vector<2x32xf32>, vector<2x32xf32> -> vector<2x64xf32>
    %73 = arith.truncf %72 : vector<2x64xf32> to vector<2x64xbf16>
    %cst_45 = arith.constant dense<0.000000e+00> : vector<2x128xf32>
    %74 = tpu.matmul %73, %71, %cst_45 {dimension_numbers = #tpu.dot_dimension_numbers<[1], [0], [0], [1], [0, 0, 1, 1], [], []>} : vector<2x64xbf16>, vector<64x128xbf16>, vector<2x128xf32> -> vector<2x128xf32>
    %75 = arith.addf %74, %7 : vector<2x128xf32>
    %76 = vector.extract_strided_slice %75 {offsets = [0, 0], sizes = [2, 64], strides = [1, 1]} : vector<2x128xf32> to vector<2x64xf32>
    %77 = arith.negf %76 : vector<2x64xf32>
    %78 = math.exp %77 : vector<2x64xf32>
    %cst_46 = arith.constant 1.000000e+00 : f32
    %79 = vector.broadcast %cst_46 : f32 to vector<2x64xf32>
    %80 = arith.addf %79, %78 : vector<2x64xf32>
    %81 = arith.divf %79, %80 : vector<2x64xf32>
    %82 = vector.extract_strided_slice %81 {offsets = [0, 0], sizes = [2, 32], strides = [1, 1]} : vector<2x64xf32> to vector<2x32xf32>
    %83 = vector.extract_strided_slice %81 {offsets = [0, 32], sizes = [2, 32], strides = [1, 1]} : vector<2x64xf32> to vector<2x32xf32>
    %84 = vector.extract_strided_slice %75 {offsets = [0, 64], sizes = [2, 32], strides = [1, 1]} : vector<2x128xf32> to vector<2x32xf32>
    %85 = vector.extract_strided_slice %75 {offsets = [0, 96], sizes = [2, 32], strides = [1, 1]} : vector<2x128xf32> to vector<2x32xf32>
    %86 = arith.mulf %82, %85 : vector<2x32xf32>
    %87 = arith.addf %84, %86 : vector<2x32xf32>
    %88 = math.tanh %87 : vector<2x32xf32>
    %cst_47 = arith.constant 1.000000e+00 : f32
    %89 = vector.broadcast %cst_47 : f32 to vector<2x32xf32>
    %90 = arith.subf %89, %83 : vector<2x32xf32>
    %91 = arith.mulf %90, %88 : vector<2x32xf32>
    %92 = arith.mulf %83, %45 : vector<2x32xf32>
    %93 = arith.addf %91, %92 : vector<2x32xf32>
    %c1_48 = arith.constant 1 : index
    %c0_49 = arith.constant 0 : index
    %c0_50 = arith.constant 0 : index
    %94 = vector.load %arg5[%c1_48, %c0_49, %c0_50] : memref<3x64x128xbf16, #tpu.memory_space<vmem>>, vector<1x64x128xbf16>
    %95 = vector.shape_cast %94 : vector<1x64x128xbf16> to vector<64x128xbf16>
    %96 = tpu.concatenate %93, %46 in 1 : vector<2x32xf32>, vector<2x32xf32> -> vector<2x64xf32>
    %97 = arith.truncf %96 : vector<2x64xf32> to vector<2x64xbf16>
    %cst_51 = arith.constant dense<0.000000e+00> : vector<2x128xf32>
    %98 = tpu.matmul %97, %95, %cst_51 {dimension_numbers = #tpu.dot_dimension_numbers<[1], [0], [0], [1], [0, 0, 1, 1], [], []>} : vector<2x64xbf16>, vector<64x128xbf16>, vector<2x128xf32> -> vector<2x128xf32>
    %99 = arith.addf %98, %11 : vector<2x128xf32>
    %100 = vector.extract_strided_slice %99 {offsets = [0, 0], sizes = [2, 64], strides = [1, 1]} : vector<2x128xf32> to vector<2x64xf32>
    %101 = arith.negf %100 : vector<2x64xf32>
    %102 = math.exp %101 : vector<2x64xf32>
    %cst_52 = arith.constant 1.000000e+00 : f32
    %103 = vector.broadcast %cst_52 : f32 to vector<2x64xf32>
    %104 = arith.addf %103, %102 : vector<2x64xf32>
    %105 = arith.divf %103, %104 : vector<2x64xf32>
    %106 = vector.extract_strided_slice %105 {offsets = [0, 0], sizes = [2, 32], strides = [1, 1]} : vector<2x64xf32> to vector<2x32xf32>
    %107 = vector.extract_strided_slice %105 {offsets = [0, 32], sizes = [2, 32], strides = [1, 1]} : vector<2x64xf32> to vector<2x32xf32>
    %108 = vector.extract_strided_slice %99 {offsets = [0, 64], sizes = [2, 32], strides = [1, 1]} : vector<2x128xf32> to vector<2x32xf32>
    %109 = vector.extract_strided_slice %99 {offsets = [0, 96], sizes = [2, 32], strides = [1, 1]} : vector<2x128xf32> to vector<2x32xf32>
    %110 = arith.mulf %106, %109 : vector<2x32xf32>
    %111 = arith.addf %108, %110 : vector<2x32xf32>
    %112 = math.tanh %111 : vector<2x32xf32>
    %cst_53 = arith.constant 1.000000e+00 : f32
    %113 = vector.broadcast %cst_53 : f32 to vector<2x32xf32>
    %114 = arith.subf %113, %107 : vector<2x32xf32>
    %115 = arith.mulf %114, %112 : vector<2x32xf32>
    %116 = arith.mulf %107, %46 : vector<2x32xf32>
    %117 = arith.addf %115, %116 : vector<2x32xf32>
    %c2_54 = arith.constant 2 : index
    %c0_55 = arith.constant 0 : index
    %c0_56 = arith.constant 0 : index
    %118 = vector.load %arg5[%c2_54, %c0_55, %c0_56] : memref<3x64x128xbf16, #tpu.memory_space<vmem>>, vector<1x64x128xbf16>
    %119 = vector.shape_cast %118 : vector<1x64x128xbf16> to vector<64x128xbf16>
    %120 = tpu.concatenate %117, %47 in 1 : vector<2x32xf32>, vector<2x32xf32> -> vector<2x64xf32>
    %121 = arith.truncf %120 : vector<2x64xf32> to vector<2x64xbf16>
    %cst_57 = arith.constant dense<0.000000e+00> : vector<2x128xf32>
    %122 = tpu.matmul %121, %119, %cst_57 {dimension_numbers = #tpu.dot_dimension_numbers<[1], [0], [0], [1], [0, 0, 1, 1], [], []>} : vector<2x64xbf16>, vector<64x128xbf16>, vector<2x128xf32> -> vector<2x128xf32>
    %123 = arith.addf %122, %15 : vector<2x128xf32>
    %124 = vector.extract_strided_slice %123 {offsets = [0, 0], sizes = [2, 64], strides = [1, 1]} : vector<2x128xf32> to vector<2x64xf32>
    %125 = arith.negf %124 : vector<2x64xf32>
    %126 = math.exp %125 : vector<2x64xf32>
    %cst_58 = arith.constant 1.000000e+00 : f32
    %127 = vector.broadcast %cst_58 : f32 to vector<2x64xf32>
    %128 = arith.addf %127, %126 : vector<2x64xf32>
    %129 = arith.divf %127, %128 : vector<2x64xf32>
    %130 = vector.extract_strided_slice %129 {offsets = [0, 0], sizes = [2, 32], strides = [1, 1]} : vector<2x64xf32> to vector<2x32xf32>
    %131 = vector.extract_strided_slice %129 {offsets = [0, 32], sizes = [2, 32], strides = [1, 1]} : vector<2x64xf32> to vector<2x32xf32>
    %132 = vector.extract_strided_slice %123 {offsets = [0, 64], sizes = [2, 32], strides = [1, 1]} : vector<2x128xf32> to vector<2x32xf32>
    %133 = vector.extract_strided_slice %123 {offsets = [0, 96], sizes = [2, 32], strides = [1, 1]} : vector<2x128xf32> to vector<2x32xf32>
    %134 = arith.mulf %130, %133 : vector<2x32xf32>
    %135 = arith.addf %132, %134 : vector<2x32xf32>
    %136 = math.tanh %135 : vector<2x32xf32>
    %cst_59 = arith.constant 1.000000e+00 : f32
    %137 = vector.broadcast %cst_59 : f32 to vector<2x32xf32>
    %138 = arith.subf %137, %131 : vector<2x32xf32>
    %139 = arith.mulf %138, %136 : vector<2x32xf32>
    %140 = arith.mulf %131, %47 : vector<2x32xf32>
    %141 = arith.addf %139, %140 : vector<2x32xf32>
    %142 = vector.extract_strided_slice %43 {offsets = [2, 0], sizes = [2, 128], strides = [1, 1]} : vector<16x128xf32> to vector<2x128xf32>
    %143 = arith.truncf %69 : vector<2x32xf32> to vector<2x32xbf16>
    %cst_60 = arith.constant dense<0.000000e+00> : vector<2x128xf32>
    %144 = tpu.matmul %143, %0, %cst_60 {dimension_numbers = #tpu.dot_dimension_numbers<[1], [0], [0], [1], [0, 0, 1, 1], [], []>} : vector<2x32xbf16>, vector<32x128xbf16>, vector<2x128xf32> -> vector<2x128xf32>
    %145 = arith.addf %142, %144 : vector<2x128xf32>
    %146 = vector.extract_strided_slice %145 {offsets = [0, 0], sizes = [2, 64], strides = [1, 1]} : vector<2x128xf32> to vector<2x64xf32>
    %147 = arith.negf %146 : vector<2x64xf32>
    %148 = math.exp %147 : vector<2x64xf32>
    %cst_61 = arith.constant 1.000000e+00 : f32
    %149 = vector.broadcast %cst_61 : f32 to vector<2x64xf32>
    %150 = arith.addf %149, %148 : vector<2x64xf32>
    %151 = arith.divf %149, %150 : vector<2x64xf32>
    %152 = vector.extract_strided_slice %151 {offsets = [0, 0], sizes = [2, 32], strides = [1, 1]} : vector<2x64xf32> to vector<2x32xf32>
    %153 = vector.extract_strided_slice %151 {offsets = [0, 32], sizes = [2, 32], strides = [1, 1]} : vector<2x64xf32> to vector<2x32xf32>
    %154 = vector.extract_strided_slice %145 {offsets = [0, 64], sizes = [2, 32], strides = [1, 1]} : vector<2x128xf32> to vector<2x32xf32>
    %155 = vector.extract_strided_slice %145 {offsets = [0, 96], sizes = [2, 32], strides = [1, 1]} : vector<2x128xf32> to vector<2x32xf32>
    %156 = arith.mulf %152, %155 : vector<2x32xf32>
    %157 = arith.addf %154, %156 : vector<2x32xf32>
    %158 = math.tanh %157 : vector<2x32xf32>
    %cst_62 = arith.constant 1.000000e+00 : f32
    %159 = vector.broadcast %cst_62 : f32 to vector<2x32xf32>
    %160 = arith.subf %159, %153 : vector<2x32xf32>
    %161 = arith.mulf %160, %158 : vector<2x32xf32>
    %162 = arith.mulf %153, %69 : vector<2x32xf32>
    %163 = arith.addf %161, %162 : vector<2x32xf32>
    %c0_63 = arith.constant 0 : index
    %c0_64 = arith.constant 0 : index
    %c0_65 = arith.constant 0 : index
    %164 = vector.load %arg5[%c0_63, %c0_64, %c0_65] : memref<3x64x128xbf16, #tpu.memory_space<vmem>>, vector<1x64x128xbf16>
    %165 = vector.shape_cast %164 : vector<1x64x128xbf16> to vector<64x128xbf16>
    %166 = tpu.concatenate %163, %93 in 1 : vector<2x32xf32>, vector<2x32xf32> -> vector<2x64xf32>
    %167 = arith.truncf %166 : vector<2x64xf32> to vector<2x64xbf16>
    %cst_66 = arith.constant dense<0.000000e+00> : vector<2x128xf32>
    %168 = tpu.matmul %167, %165, %cst_66 {dimension_numbers = #tpu.dot_dimension_numbers<[1], [0], [0], [1], [0, 0, 1, 1], [], []>} : vector<2x64xbf16>, vector<64x128xbf16>, vector<2x128xf32> -> vector<2x128xf32>
    %169 = arith.addf %168, %7 : vector<2x128xf32>
    %170 = vector.extract_strided_slice %169 {offsets = [0, 0], sizes = [2, 64], strides = [1, 1]} : vector<2x128xf32> to vector<2x64xf32>
    %171 = arith.negf %170 : vector<2x64xf32>
    %172 = math.exp %171 : vector<2x64xf32>
    %cst_67 = arith.constant 1.000000e+00 : f32
    %173 = vector.broadcast %cst_67 : f32 to vector<2x64xf32>
    %174 = arith.addf %173, %172 : vector<2x64xf32>
    %175 = arith.divf %173, %174 : vector<2x64xf32>
    %176 = vector.extract_strided_slice %175 {offsets = [0, 0], sizes = [2, 32], strides = [1, 1]} : vector<2x64xf32> to vector<2x32xf32>
    %177 = vector.extract_strided_slice %175 {offsets = [0, 32], sizes = [2, 32], strides = [1, 1]} : vector<2x64xf32> to vector<2x32xf32>
    %178 = vector.extract_strided_slice %169 {offsets = [0, 64], sizes = [2, 32], strides = [1, 1]} : vector<2x128xf32> to vector<2x32xf32>
    %179 = vector.extract_strided_slice %169 {offsets = [0, 96], sizes = [2, 32], strides = [1, 1]} : vector<2x128xf32> to vector<2x32xf32>
    %180 = arith.mulf %176, %179 : vector<2x32xf32>
    %181 = arith.addf %178, %180 : vector<2x32xf32>
    %182 = math.tanh %181 : vector<2x32xf32>
    %cst_68 = arith.constant 1.000000e+00 : f32
    %183 = vector.broadcast %cst_68 : f32 to vector<2x32xf32>
    %184 = arith.subf %183, %177 : vector<2x32xf32>
    %185 = arith.mulf %184, %182 : vector<2x32xf32>
    %186 = arith.mulf %177, %93 : vector<2x32xf32>
    %187 = arith.addf %185, %186 : vector<2x32xf32>
    %c1_69 = arith.constant 1 : index
    %c0_70 = arith.constant 0 : index
    %c0_71 = arith.constant 0 : index
    %188 = vector.load %arg5[%c1_69, %c0_70, %c0_71] : memref<3x64x128xbf16, #tpu.memory_space<vmem>>, vector<1x64x128xbf16>
    %189 = vector.shape_cast %188 : vector<1x64x128xbf16> to vector<64x128xbf16>
    %190 = tpu.concatenate %187, %117 in 1 : vector<2x32xf32>, vector<2x32xf32> -> vector<2x64xf32>
    %191 = arith.truncf %190 : vector<2x64xf32> to vector<2x64xbf16>
    %cst_72 = arith.constant dense<0.000000e+00> : vector<2x128xf32>
    %192 = tpu.matmul %191, %189, %cst_72 {dimension_numbers = #tpu.dot_dimension_numbers<[1], [0], [0], [1], [0, 0, 1, 1], [], []>} : vector<2x64xbf16>, vector<64x128xbf16>, vector<2x128xf32> -> vector<2x128xf32>
    %193 = arith.addf %192, %11 : vector<2x128xf32>
    %194 = vector.extract_strided_slice %193 {offsets = [0, 0], sizes = [2, 64], strides = [1, 1]} : vector<2x128xf32> to vector<2x64xf32>
    %195 = arith.negf %194 : vector<2x64xf32>
    %196 = math.exp %195 : vector<2x64xf32>
    %cst_73 = arith.constant 1.000000e+00 : f32
    %197 = vector.broadcast %cst_73 : f32 to vector<2x64xf32>
    %198 = arith.addf %197, %196 : vector<2x64xf32>
    %199 = arith.divf %197, %198 : vector<2x64xf32>
    %200 = vector.extract_strided_slice %199 {offsets = [0, 0], sizes = [2, 32], strides = [1, 1]} : vector<2x64xf32> to vector<2x32xf32>
    %201 = vector.extract_strided_slice %199 {offsets = [0, 32], sizes = [2, 32], strides = [1, 1]} : vector<2x64xf32> to vector<2x32xf32>
    %202 = vector.extract_strided_slice %193 {offsets = [0, 64], sizes = [2, 32], strides = [1, 1]} : vector<2x128xf32> to vector<2x32xf32>
    %203 = vector.extract_strided_slice %193 {offsets = [0, 96], sizes = [2, 32], strides = [1, 1]} : vector<2x128xf32> to vector<2x32xf32>
    %204 = arith.mulf %200, %203 : vector<2x32xf32>
    %205 = arith.addf %202, %204 : vector<2x32xf32>
    %206 = math.tanh %205 : vector<2x32xf32>
    %cst_74 = arith.constant 1.000000e+00 : f32
    %207 = vector.broadcast %cst_74 : f32 to vector<2x32xf32>
    %208 = arith.subf %207, %201 : vector<2x32xf32>
    %209 = arith.mulf %208, %206 : vector<2x32xf32>
    %210 = arith.mulf %201, %117 : vector<2x32xf32>
    %211 = arith.addf %209, %210 : vector<2x32xf32>
    %c2_75 = arith.constant 2 : index
    %c0_76 = arith.constant 0 : index
    %c0_77 = arith.constant 0 : index
    %212 = vector.load %arg5[%c2_75, %c0_76, %c0_77] : memref<3x64x128xbf16, #tpu.memory_space<vmem>>, vector<1x64x128xbf16>
    %213 = vector.shape_cast %212 : vector<1x64x128xbf16> to vector<64x128xbf16>
    %214 = tpu.concatenate %211, %141 in 1 : vector<2x32xf32>, vector<2x32xf32> -> vector<2x64xf32>
    %215 = arith.truncf %214 : vector<2x64xf32> to vector<2x64xbf16>
    %cst_78 = arith.constant dense<0.000000e+00> : vector<2x128xf32>
    %216 = tpu.matmul %215, %213, %cst_78 {dimension_numbers = #tpu.dot_dimension_numbers<[1], [0], [0], [1], [0, 0, 1, 1], [], []>} : vector<2x64xbf16>, vector<64x128xbf16>, vector<2x128xf32> -> vector<2x128xf32>
    %217 = arith.addf %216, %15 : vector<2x128xf32>
    %218 = vector.extract_strided_slice %217 {offsets = [0, 0], sizes = [2, 64], strides = [1, 1]} : vector<2x128xf32> to vector<2x64xf32>
    %219 = arith.negf %218 : vector<2x64xf32>
    %220 = math.exp %219 : vector<2x64xf32>
    %cst_79 = arith.constant 1.000000e+00 : f32
    %221 = vector.broadcast %cst_79 : f32 to vector<2x64xf32>
    %222 = arith.addf %221, %220 : vector<2x64xf32>
    %223 = arith.divf %221, %222 : vector<2x64xf32>
    %224 = vector.extract_strided_slice %223 {offsets = [0, 0], sizes = [2, 32], strides = [1, 1]} : vector<2x64xf32> to vector<2x32xf32>
    %225 = vector.extract_strided_slice %223 {offsets = [0, 32], sizes = [2, 32], strides = [1, 1]} : vector<2x64xf32> to vector<2x32xf32>
    %226 = vector.extract_strided_slice %217 {offsets = [0, 64], sizes = [2, 32], strides = [1, 1]} : vector<2x128xf32> to vector<2x32xf32>
    %227 = vector.extract_strided_slice %217 {offsets = [0, 96], sizes = [2, 32], strides = [1, 1]} : vector<2x128xf32> to vector<2x32xf32>
    %228 = arith.mulf %224, %227 : vector<2x32xf32>
    %229 = arith.addf %226, %228 : vector<2x32xf32>
    %230 = math.tanh %229 : vector<2x32xf32>
    %cst_80 = arith.constant 1.000000e+00 : f32
    %231 = vector.broadcast %cst_80 : f32 to vector<2x32xf32>
    %232 = arith.subf %231, %225 : vector<2x32xf32>
    %233 = arith.mulf %232, %230 : vector<2x32xf32>
    %234 = arith.mulf %225, %141 : vector<2x32xf32>
    %235 = arith.addf %233, %234 : vector<2x32xf32>
    %236 = vector.extract_strided_slice %43 {offsets = [4, 0], sizes = [2, 128], strides = [1, 1]} : vector<16x128xf32> to vector<2x128xf32>
    %237 = arith.truncf %163 : vector<2x32xf32> to vector<2x32xbf16>
    %cst_81 = arith.constant dense<0.000000e+00> : vector<2x128xf32>
    %238 = tpu.matmul %237, %0, %cst_81 {dimension_numbers = #tpu.dot_dimension_numbers<[1], [0], [0], [1], [0, 0, 1, 1], [], []>} : vector<2x32xbf16>, vector<32x128xbf16>, vector<2x128xf32> -> vector<2x128xf32>
    %239 = arith.addf %236, %238 : vector<2x128xf32>
    %240 = vector.extract_strided_slice %239 {offsets = [0, 0], sizes = [2, 64], strides = [1, 1]} : vector<2x128xf32> to vector<2x64xf32>
    %241 = arith.negf %240 : vector<2x64xf32>
    %242 = math.exp %241 : vector<2x64xf32>
    %cst_82 = arith.constant 1.000000e+00 : f32
    %243 = vector.broadcast %cst_82 : f32 to vector<2x64xf32>
    %244 = arith.addf %243, %242 : vector<2x64xf32>
    %245 = arith.divf %243, %244 : vector<2x64xf32>
    %246 = vector.extract_strided_slice %245 {offsets = [0, 0], sizes = [2, 32], strides = [1, 1]} : vector<2x64xf32> to vector<2x32xf32>
    %247 = vector.extract_strided_slice %245 {offsets = [0, 32], sizes = [2, 32], strides = [1, 1]} : vector<2x64xf32> to vector<2x32xf32>
    %248 = vector.extract_strided_slice %239 {offsets = [0, 64], sizes = [2, 32], strides = [1, 1]} : vector<2x128xf32> to vector<2x32xf32>
    %249 = vector.extract_strided_slice %239 {offsets = [0, 96], sizes = [2, 32], strides = [1, 1]} : vector<2x128xf32> to vector<2x32xf32>
    %250 = arith.mulf %246, %249 : vector<2x32xf32>
    %251 = arith.addf %248, %250 : vector<2x32xf32>
    %252 = math.tanh %251 : vector<2x32xf32>
    %cst_83 = arith.constant 1.000000e+00 : f32
    %253 = vector.broadcast %cst_83 : f32 to vector<2x32xf32>
    %254 = arith.subf %253, %247 : vector<2x32xf32>
    %255 = arith.mulf %254, %252 : vector<2x32xf32>
    %256 = arith.mulf %247, %163 : vector<2x32xf32>
    %257 = arith.addf %255, %256 : vector<2x32xf32>
    %c0_84 = arith.constant 0 : index
    %c0_85 = arith.constant 0 : index
    %c0_86 = arith.constant 0 : index
    %258 = vector.load %arg5[%c0_84, %c0_85, %c0_86] : memref<3x64x128xbf16, #tpu.memory_space<vmem>>, vector<1x64x128xbf16>
    %259 = vector.shape_cast %258 : vector<1x64x128xbf16> to vector<64x128xbf16>
    %260 = tpu.concatenate %257, %187 in 1 : vector<2x32xf32>, vector<2x32xf32> -> vector<2x64xf32>
    %261 = arith.truncf %260 : vector<2x64xf32> to vector<2x64xbf16>
    %cst_87 = arith.constant dense<0.000000e+00> : vector<2x128xf32>
    %262 = tpu.matmul %261, %259, %cst_87 {dimension_numbers = #tpu.dot_dimension_numbers<[1], [0], [0], [1], [0, 0, 1, 1], [], []>} : vector<2x64xbf16>, vector<64x128xbf16>, vector<2x128xf32> -> vector<2x128xf32>
    %263 = arith.addf %262, %7 : vector<2x128xf32>
    %264 = vector.extract_strided_slice %263 {offsets = [0, 0], sizes = [2, 64], strides = [1, 1]} : vector<2x128xf32> to vector<2x64xf32>
    %265 = arith.negf %264 : vector<2x64xf32>
    %266 = math.exp %265 : vector<2x64xf32>
    %cst_88 = arith.constant 1.000000e+00 : f32
    %267 = vector.broadcast %cst_88 : f32 to vector<2x64xf32>
    %268 = arith.addf %267, %266 : vector<2x64xf32>
    %269 = arith.divf %267, %268 : vector<2x64xf32>
    %270 = vector.extract_strided_slice %269 {offsets = [0, 0], sizes = [2, 32], strides = [1, 1]} : vector<2x64xf32> to vector<2x32xf32>
    %271 = vector.extract_strided_slice %269 {offsets = [0, 32], sizes = [2, 32], strides = [1, 1]} : vector<2x64xf32> to vector<2x32xf32>
    %272 = vector.extract_strided_slice %263 {offsets = [0, 64], sizes = [2, 32], strides = [1, 1]} : vector<2x128xf32> to vector<2x32xf32>
    %273 = vector.extract_strided_slice %263 {offsets = [0, 96], sizes = [2, 32], strides = [1, 1]} : vector<2x128xf32> to vector<2x32xf32>
    %274 = arith.mulf %270, %273 : vector<2x32xf32>
    %275 = arith.addf %272, %274 : vector<2x32xf32>
    %276 = math.tanh %275 : vector<2x32xf32>
    %cst_89 = arith.constant 1.000000e+00 : f32
    %277 = vector.broadcast %cst_89 : f32 to vector<2x32xf32>
    %278 = arith.subf %277, %271 : vector<2x32xf32>
    %279 = arith.mulf %278, %276 : vector<2x32xf32>
    %280 = arith.mulf %271, %187 : vector<2x32xf32>
    %281 = arith.addf %279, %280 : vector<2x32xf32>
    %c1_90 = arith.constant 1 : index
    %c0_91 = arith.constant 0 : index
    %c0_92 = arith.constant 0 : index
    %282 = vector.load %arg5[%c1_90, %c0_91, %c0_92] : memref<3x64x128xbf16, #tpu.memory_space<vmem>>, vector<1x64x128xbf16>
    %283 = vector.shape_cast %282 : vector<1x64x128xbf16> to vector<64x128xbf16>
    %284 = tpu.concatenate %281, %211 in 1 : vector<2x32xf32>, vector<2x32xf32> -> vector<2x64xf32>
    %285 = arith.truncf %284 : vector<2x64xf32> to vector<2x64xbf16>
    %cst_93 = arith.constant dense<0.000000e+00> : vector<2x128xf32>
    %286 = tpu.matmul %285, %283, %cst_93 {dimension_numbers = #tpu.dot_dimension_numbers<[1], [0], [0], [1], [0, 0, 1, 1], [], []>} : vector<2x64xbf16>, vector<64x128xbf16>, vector<2x128xf32> -> vector<2x128xf32>
    %287 = arith.addf %286, %11 : vector<2x128xf32>
    %288 = vector.extract_strided_slice %287 {offsets = [0, 0], sizes = [2, 64], strides = [1, 1]} : vector<2x128xf32> to vector<2x64xf32>
    %289 = arith.negf %288 : vector<2x64xf32>
    %290 = math.exp %289 : vector<2x64xf32>
    %cst_94 = arith.constant 1.000000e+00 : f32
    %291 = vector.broadcast %cst_94 : f32 to vector<2x64xf32>
    %292 = arith.addf %291, %290 : vector<2x64xf32>
    %293 = arith.divf %291, %292 : vector<2x64xf32>
    %294 = vector.extract_strided_slice %293 {offsets = [0, 0], sizes = [2, 32], strides = [1, 1]} : vector<2x64xf32> to vector<2x32xf32>
    %295 = vector.extract_strided_slice %293 {offsets = [0, 32], sizes = [2, 32], strides = [1, 1]} : vector<2x64xf32> to vector<2x32xf32>
    %296 = vector.extract_strided_slice %287 {offsets = [0, 64], sizes = [2, 32], strides = [1, 1]} : vector<2x128xf32> to vector<2x32xf32>
    %297 = vector.extract_strided_slice %287 {offsets = [0, 96], sizes = [2, 32], strides = [1, 1]} : vector<2x128xf32> to vector<2x32xf32>
    %298 = arith.mulf %294, %297 : vector<2x32xf32>
    %299 = arith.addf %296, %298 : vector<2x32xf32>
    %300 = math.tanh %299 : vector<2x32xf32>
    %cst_95 = arith.constant 1.000000e+00 : f32
    %301 = vector.broadcast %cst_95 : f32 to vector<2x32xf32>
    %302 = arith.subf %301, %295 : vector<2x32xf32>
    %303 = arith.mulf %302, %300 : vector<2x32xf32>
    %304 = arith.mulf %295, %211 : vector<2x32xf32>
    %305 = arith.addf %303, %304 : vector<2x32xf32>
    %c2_96 = arith.constant 2 : index
    %c0_97 = arith.constant 0 : index
    %c0_98 = arith.constant 0 : index
    %306 = vector.load %arg5[%c2_96, %c0_97, %c0_98] : memref<3x64x128xbf16, #tpu.memory_space<vmem>>, vector<1x64x128xbf16>
    %307 = vector.shape_cast %306 : vector<1x64x128xbf16> to vector<64x128xbf16>
    %308 = tpu.concatenate %305, %235 in 1 : vector<2x32xf32>, vector<2x32xf32> -> vector<2x64xf32>
    %309 = arith.truncf %308 : vector<2x64xf32> to vector<2x64xbf16>
    %cst_99 = arith.constant dense<0.000000e+00> : vector<2x128xf32>
    %310 = tpu.matmul %309, %307, %cst_99 {dimension_numbers = #tpu.dot_dimension_numbers<[1], [0], [0], [1], [0, 0, 1, 1], [], []>} : vector<2x64xbf16>, vector<64x128xbf16>, vector<2x128xf32> -> vector<2x128xf32>
    %311 = arith.addf %310, %15 : vector<2x128xf32>
    %312 = vector.extract_strided_slice %311 {offsets = [0, 0], sizes = [2, 64], strides = [1, 1]} : vector<2x128xf32> to vector<2x64xf32>
    %313 = arith.negf %312 : vector<2x64xf32>
    %314 = math.exp %313 : vector<2x64xf32>
    %cst_100 = arith.constant 1.000000e+00 : f32
    %315 = vector.broadcast %cst_100 : f32 to vector<2x64xf32>
    %316 = arith.addf %315, %314 : vector<2x64xf32>
    %317 = arith.divf %315, %316 : vector<2x64xf32>
    %318 = vector.extract_strided_slice %317 {offsets = [0, 0], sizes = [2, 32], strides = [1, 1]} : vector<2x64xf32> to vector<2x32xf32>
    %319 = vector.extract_strided_slice %317 {offsets = [0, 32], sizes = [2, 32], strides = [1, 1]} : vector<2x64xf32> to vector<2x32xf32>
    %320 = vector.extract_strided_slice %311 {offsets = [0, 64], sizes = [2, 32], strides = [1, 1]} : vector<2x128xf32> to vector<2x32xf32>
    %321 = vector.extract_strided_slice %311 {offsets = [0, 96], sizes = [2, 32], strides = [1, 1]} : vector<2x128xf32> to vector<2x32xf32>
    %322 = arith.mulf %318, %321 : vector<2x32xf32>
    %323 = arith.addf %320, %322 : vector<2x32xf32>
    %324 = math.tanh %323 : vector<2x32xf32>
    %cst_101 = arith.constant 1.000000e+00 : f32
    %325 = vector.broadcast %cst_101 : f32 to vector<2x32xf32>
    %326 = arith.subf %325, %319 : vector<2x32xf32>
    %327 = arith.mulf %326, %324 : vector<2x32xf32>
    %328 = arith.mulf %319, %235 : vector<2x32xf32>
    %329 = arith.addf %327, %328 : vector<2x32xf32>
    %330 = vector.extract_strided_slice %43 {offsets = [6, 0], sizes = [2, 128], strides = [1, 1]} : vector<16x128xf32> to vector<2x128xf32>
    %331 = arith.truncf %257 : vector<2x32xf32> to vector<2x32xbf16>
    %cst_102 = arith.constant dense<0.000000e+00> : vector<2x128xf32>
    %332 = tpu.matmul %331, %0, %cst_102 {dimension_numbers = #tpu.dot_dimension_numbers<[1], [0], [0], [1], [0, 0, 1, 1], [], []>} : vector<2x32xbf16>, vector<32x128xbf16>, vector<2x128xf32> -> vector<2x128xf32>
    %333 = arith.addf %330, %332 : vector<2x128xf32>
    %334 = vector.extract_strided_slice %333 {offsets = [0, 0], sizes = [2, 64], strides = [1, 1]} : vector<2x128xf32> to vector<2x64xf32>
    %335 = arith.negf %334 : vector<2x64xf32>
    %336 = math.exp %335 : vector<2x64xf32>
    %cst_103 = arith.constant 1.000000e+00 : f32
    %337 = vector.broadcast %cst_103 : f32 to vector<2x64xf32>
    %338 = arith.addf %337, %336 : vector<2x64xf32>
    %339 = arith.divf %337, %338 : vector<2x64xf32>
    %340 = vector.extract_strided_slice %339 {offsets = [0, 0], sizes = [2, 32], strides = [1, 1]} : vector<2x64xf32> to vector<2x32xf32>
    %341 = vector.extract_strided_slice %339 {offsets = [0, 32], sizes = [2, 32], strides = [1, 1]} : vector<2x64xf32> to vector<2x32xf32>
    %342 = vector.extract_strided_slice %333 {offsets = [0, 64], sizes = [2, 32], strides = [1, 1]} : vector<2x128xf32> to vector<2x32xf32>
    %343 = vector.extract_strided_slice %333 {offsets = [0, 96], sizes = [2, 32], strides = [1, 1]} : vector<2x128xf32> to vector<2x32xf32>
    %344 = arith.mulf %340, %343 : vector<2x32xf32>
    %345 = arith.addf %342, %344 : vector<2x32xf32>
    %346 = math.tanh %345 : vector<2x32xf32>
    %cst_104 = arith.constant 1.000000e+00 : f32
    %347 = vector.broadcast %cst_104 : f32 to vector<2x32xf32>
    %348 = arith.subf %347, %341 : vector<2x32xf32>
    %349 = arith.mulf %348, %346 : vector<2x32xf32>
    %350 = arith.mulf %341, %257 : vector<2x32xf32>
    %351 = arith.addf %349, %350 : vector<2x32xf32>
    %c0_105 = arith.constant 0 : index
    %c0_106 = arith.constant 0 : index
    %c0_107 = arith.constant 0 : index
    %352 = vector.load %arg5[%c0_105, %c0_106, %c0_107] : memref<3x64x128xbf16, #tpu.memory_space<vmem>>, vector<1x64x128xbf16>
    %353 = vector.shape_cast %352 : vector<1x64x128xbf16> to vector<64x128xbf16>
    %354 = tpu.concatenate %351, %281 in 1 : vector<2x32xf32>, vector<2x32xf32> -> vector<2x64xf32>
    %355 = arith.truncf %354 : vector<2x64xf32> to vector<2x64xbf16>
    %cst_108 = arith.constant dense<0.000000e+00> : vector<2x128xf32>
    %356 = tpu.matmul %355, %353, %cst_108 {dimension_numbers = #tpu.dot_dimension_numbers<[1], [0], [0], [1], [0, 0, 1, 1], [], []>} : vector<2x64xbf16>, vector<64x128xbf16>, vector<2x128xf32> -> vector<2x128xf32>
    %357 = arith.addf %356, %7 : vector<2x128xf32>
    %358 = vector.extract_strided_slice %357 {offsets = [0, 0], sizes = [2, 64], strides = [1, 1]} : vector<2x128xf32> to vector<2x64xf32>
    %359 = arith.negf %358 : vector<2x64xf32>
    %360 = math.exp %359 : vector<2x64xf32>
    %cst_109 = arith.constant 1.000000e+00 : f32
    %361 = vector.broadcast %cst_109 : f32 to vector<2x64xf32>
    %362 = arith.addf %361, %360 : vector<2x64xf32>
    %363 = arith.divf %361, %362 : vector<2x64xf32>
    %364 = vector.extract_strided_slice %363 {offsets = [0, 0], sizes = [2, 32], strides = [1, 1]} : vector<2x64xf32> to vector<2x32xf32>
    %365 = vector.extract_strided_slice %363 {offsets = [0, 32], sizes = [2, 32], strides = [1, 1]} : vector<2x64xf32> to vector<2x32xf32>
    %366 = vector.extract_strided_slice %357 {offsets = [0, 64], sizes = [2, 32], strides = [1, 1]} : vector<2x128xf32> to vector<2x32xf32>
    %367 = vector.extract_strided_slice %357 {offsets = [0, 96], sizes = [2, 32], strides = [1, 1]} : vector<2x128xf32> to vector<2x32xf32>
    %368 = arith.mulf %364, %367 : vector<2x32xf32>
    %369 = arith.addf %366, %368 : vector<2x32xf32>
    %370 = math.tanh %369 : vector<2x32xf32>
    %cst_110 = arith.constant 1.000000e+00 : f32
    %371 = vector.broadcast %cst_110 : f32 to vector<2x32xf32>
    %372 = arith.subf %371, %365 : vector<2x32xf32>
    %373 = arith.mulf %372, %370 : vector<2x32xf32>
    %374 = arith.mulf %365, %281 : vector<2x32xf32>
    %375 = arith.addf %373, %374 : vector<2x32xf32>
    %c1_111 = arith.constant 1 : index
    %c0_112 = arith.constant 0 : index
    %c0_113 = arith.constant 0 : index
    %376 = vector.load %arg5[%c1_111, %c0_112, %c0_113] : memref<3x64x128xbf16, #tpu.memory_space<vmem>>, vector<1x64x128xbf16>
    %377 = vector.shape_cast %376 : vector<1x64x128xbf16> to vector<64x128xbf16>
    %378 = tpu.concatenate %375, %305 in 1 : vector<2x32xf32>, vector<2x32xf32> -> vector<2x64xf32>
    %379 = arith.truncf %378 : vector<2x64xf32> to vector<2x64xbf16>
    %cst_114 = arith.constant dense<0.000000e+00> : vector<2x128xf32>
    %380 = tpu.matmul %379, %377, %cst_114 {dimension_numbers = #tpu.dot_dimension_numbers<[1], [0], [0], [1], [0, 0, 1, 1], [], []>} : vector<2x64xbf16>, vector<64x128xbf16>, vector<2x128xf32> -> vector<2x128xf32>
    %381 = arith.addf %380, %11 : vector<2x128xf32>
    %382 = vector.extract_strided_slice %381 {offsets = [0, 0], sizes = [2, 64], strides = [1, 1]} : vector<2x128xf32> to vector<2x64xf32>
    %383 = arith.negf %382 : vector<2x64xf32>
    %384 = math.exp %383 : vector<2x64xf32>
    %cst_115 = arith.constant 1.000000e+00 : f32
    %385 = vector.broadcast %cst_115 : f32 to vector<2x64xf32>
    %386 = arith.addf %385, %384 : vector<2x64xf32>
    %387 = arith.divf %385, %386 : vector<2x64xf32>
    %388 = vector.extract_strided_slice %387 {offsets = [0, 0], sizes = [2, 32], strides = [1, 1]} : vector<2x64xf32> to vector<2x32xf32>
    %389 = vector.extract_strided_slice %387 {offsets = [0, 32], sizes = [2, 32], strides = [1, 1]} : vector<2x64xf32> to vector<2x32xf32>
    %390 = vector.extract_strided_slice %381 {offsets = [0, 64], sizes = [2, 32], strides = [1, 1]} : vector<2x128xf32> to vector<2x32xf32>
    %391 = vector.extract_strided_slice %381 {offsets = [0, 96], sizes = [2, 32], strides = [1, 1]} : vector<2x128xf32> to vector<2x32xf32>
    %392 = arith.mulf %388, %391 : vector<2x32xf32>
    %393 = arith.addf %390, %392 : vector<2x32xf32>
    %394 = math.tanh %393 : vector<2x32xf32>
    %cst_116 = arith.constant 1.000000e+00 : f32
    %395 = vector.broadcast %cst_116 : f32 to vector<2x32xf32>
    %396 = arith.subf %395, %389 : vector<2x32xf32>
    %397 = arith.mulf %396, %394 : vector<2x32xf32>
    %398 = arith.mulf %389, %305 : vector<2x32xf32>
    %399 = arith.addf %397, %398 : vector<2x32xf32>
    %c2_117 = arith.constant 2 : index
    %c0_118 = arith.constant 0 : index
    %c0_119 = arith.constant 0 : index
    %400 = vector.load %arg5[%c2_117, %c0_118, %c0_119] : memref<3x64x128xbf16, #tpu.memory_space<vmem>>, vector<1x64x128xbf16>
    %401 = vector.shape_cast %400 : vector<1x64x128xbf16> to vector<64x128xbf16>
    %402 = tpu.concatenate %399, %329 in 1 : vector<2x32xf32>, vector<2x32xf32> -> vector<2x64xf32>
    %403 = arith.truncf %402 : vector<2x64xf32> to vector<2x64xbf16>
    %cst_120 = arith.constant dense<0.000000e+00> : vector<2x128xf32>
    %404 = tpu.matmul %403, %401, %cst_120 {dimension_numbers = #tpu.dot_dimension_numbers<[1], [0], [0], [1], [0, 0, 1, 1], [], []>} : vector<2x64xbf16>, vector<64x128xbf16>, vector<2x128xf32> -> vector<2x128xf32>
    %405 = arith.addf %404, %15 : vector<2x128xf32>
    %406 = vector.extract_strided_slice %405 {offsets = [0, 0], sizes = [2, 64], strides = [1, 1]} : vector<2x128xf32> to vector<2x64xf32>
    %407 = arith.negf %406 : vector<2x64xf32>
    %408 = math.exp %407 : vector<2x64xf32>
    %cst_121 = arith.constant 1.000000e+00 : f32
    %409 = vector.broadcast %cst_121 : f32 to vector<2x64xf32>
    %410 = arith.addf %409, %408 : vector<2x64xf32>
    %411 = arith.divf %409, %410 : vector<2x64xf32>
    %412 = vector.extract_strided_slice %411 {offsets = [0, 0], sizes = [2, 32], strides = [1, 1]} : vector<2x64xf32> to vector<2x32xf32>
    %413 = vector.extract_strided_slice %411 {offsets = [0, 32], sizes = [2, 32], strides = [1, 1]} : vector<2x64xf32> to vector<2x32xf32>
    %414 = vector.extract_strided_slice %405 {offsets = [0, 64], sizes = [2, 32], strides = [1, 1]} : vector<2x128xf32> to vector<2x32xf32>
    %415 = vector.extract_strided_slice %405 {offsets = [0, 96], sizes = [2, 32], strides = [1, 1]} : vector<2x128xf32> to vector<2x32xf32>
    %416 = arith.mulf %412, %415 : vector<2x32xf32>
    %417 = arith.addf %414, %416 : vector<2x32xf32>
    %418 = math.tanh %417 : vector<2x32xf32>
    %cst_122 = arith.constant 1.000000e+00 : f32
    %419 = vector.broadcast %cst_122 : f32 to vector<2x32xf32>
    %420 = arith.subf %419, %413 : vector<2x32xf32>
    %421 = arith.mulf %420, %418 : vector<2x32xf32>
    %422 = arith.mulf %413, %329 : vector<2x32xf32>
    %423 = arith.addf %421, %422 : vector<2x32xf32>
    %424 = vector.extract_strided_slice %43 {offsets = [8, 0], sizes = [2, 128], strides = [1, 1]} : vector<16x128xf32> to vector<2x128xf32>
    %425 = arith.truncf %351 : vector<2x32xf32> to vector<2x32xbf16>
    %cst_123 = arith.constant dense<0.000000e+00> : vector<2x128xf32>
    %426 = tpu.matmul %425, %0, %cst_123 {dimension_numbers = #tpu.dot_dimension_numbers<[1], [0], [0], [1], [0, 0, 1, 1], [], []>} : vector<2x32xbf16>, vector<32x128xbf16>, vector<2x128xf32> -> vector<2x128xf32>
    %427 = arith.addf %424, %426 : vector<2x128xf32>
    %428 = vector.extract_strided_slice %427 {offsets = [0, 0], sizes = [2, 64], strides = [1, 1]} : vector<2x128xf32> to vector<2x64xf32>
    %429 = arith.negf %428 : vector<2x64xf32>
    %430 = math.exp %429 : vector<2x64xf32>
    %cst_124 = arith.constant 1.000000e+00 : f32
    %431 = vector.broadcast %cst_124 : f32 to vector<2x64xf32>
    %432 = arith.addf %431, %430 : vector<2x64xf32>
    %433 = arith.divf %431, %432 : vector<2x64xf32>
    %434 = vector.extract_strided_slice %433 {offsets = [0, 0], sizes = [2, 32], strides = [1, 1]} : vector<2x64xf32> to vector<2x32xf32>
    %435 = vector.extract_strided_slice %433 {offsets = [0, 32], sizes = [2, 32], strides = [1, 1]} : vector<2x64xf32> to vector<2x32xf32>
    %436 = vector.extract_strided_slice %427 {offsets = [0, 64], sizes = [2, 32], strides = [1, 1]} : vector<2x128xf32> to vector<2x32xf32>
    %437 = vector.extract_strided_slice %427 {offsets = [0, 96], sizes = [2, 32], strides = [1, 1]} : vector<2x128xf32> to vector<2x32xf32>
    %438 = arith.mulf %434, %437 : vector<2x32xf32>
    %439 = arith.addf %436, %438 : vector<2x32xf32>
    %440 = math.tanh %439 : vector<2x32xf32>
    %cst_125 = arith.constant 1.000000e+00 : f32
    %441 = vector.broadcast %cst_125 : f32 to vector<2x32xf32>
    %442 = arith.subf %441, %435 : vector<2x32xf32>
    %443 = arith.mulf %442, %440 : vector<2x32xf32>
    %444 = arith.mulf %435, %351 : vector<2x32xf32>
    %445 = arith.addf %443, %444 : vector<2x32xf32>
    %c0_126 = arith.constant 0 : index
    %c0_127 = arith.constant 0 : index
    %c0_128 = arith.constant 0 : index
    %446 = vector.load %arg5[%c0_126, %c0_127, %c0_128] : memref<3x64x128xbf16, #tpu.memory_space<vmem>>, vector<1x64x128xbf16>
    %447 = vector.shape_cast %446 : vector<1x64x128xbf16> to vector<64x128xbf16>
    %448 = tpu.concatenate %445, %375 in 1 : vector<2x32xf32>, vector<2x32xf32> -> vector<2x64xf32>
    %449 = arith.truncf %448 : vector<2x64xf32> to vector<2x64xbf16>
    %cst_129 = arith.constant dense<0.000000e+00> : vector<2x128xf32>
    %450 = tpu.matmul %449, %447, %cst_129 {dimension_numbers = #tpu.dot_dimension_numbers<[1], [0], [0], [1], [0, 0, 1, 1], [], []>} : vector<2x64xbf16>, vector<64x128xbf16>, vector<2x128xf32> -> vector<2x128xf32>
    %451 = arith.addf %450, %7 : vector<2x128xf32>
    %452 = vector.extract_strided_slice %451 {offsets = [0, 0], sizes = [2, 64], strides = [1, 1]} : vector<2x128xf32> to vector<2x64xf32>
    %453 = arith.negf %452 : vector<2x64xf32>
    %454 = math.exp %453 : vector<2x64xf32>
    %cst_130 = arith.constant 1.000000e+00 : f32
    %455 = vector.broadcast %cst_130 : f32 to vector<2x64xf32>
    %456 = arith.addf %455, %454 : vector<2x64xf32>
    %457 = arith.divf %455, %456 : vector<2x64xf32>
    %458 = vector.extract_strided_slice %457 {offsets = [0, 0], sizes = [2, 32], strides = [1, 1]} : vector<2x64xf32> to vector<2x32xf32>
    %459 = vector.extract_strided_slice %457 {offsets = [0, 32], sizes = [2, 32], strides = [1, 1]} : vector<2x64xf32> to vector<2x32xf32>
    %460 = vector.extract_strided_slice %451 {offsets = [0, 64], sizes = [2, 32], strides = [1, 1]} : vector<2x128xf32> to vector<2x32xf32>
    %461 = vector.extract_strided_slice %451 {offsets = [0, 96], sizes = [2, 32], strides = [1, 1]} : vector<2x128xf32> to vector<2x32xf32>
    %462 = arith.mulf %458, %461 : vector<2x32xf32>
    %463 = arith.addf %460, %462 : vector<2x32xf32>
    %464 = math.tanh %463 : vector<2x32xf32>
    %cst_131 = arith.constant 1.000000e+00 : f32
    %465 = vector.broadcast %cst_131 : f32 to vector<2x32xf32>
    %466 = arith.subf %465, %459 : vector<2x32xf32>
    %467 = arith.mulf %466, %464 : vector<2x32xf32>
    %468 = arith.mulf %459, %375 : vector<2x32xf32>
    %469 = arith.addf %467, %468 : vector<2x32xf32>
    %c1_132 = arith.constant 1 : index
    %c0_133 = arith.constant 0 : index
    %c0_134 = arith.constant 0 : index
    %470 = vector.load %arg5[%c1_132, %c0_133, %c0_134] : memref<3x64x128xbf16, #tpu.memory_space<vmem>>, vector<1x64x128xbf16>
    %471 = vector.shape_cast %470 : vector<1x64x128xbf16> to vector<64x128xbf16>
    %472 = tpu.concatenate %469, %399 in 1 : vector<2x32xf32>, vector<2x32xf32> -> vector<2x64xf32>
    %473 = arith.truncf %472 : vector<2x64xf32> to vector<2x64xbf16>
    %cst_135 = arith.constant dense<0.000000e+00> : vector<2x128xf32>
    %474 = tpu.matmul %473, %471, %cst_135 {dimension_numbers = #tpu.dot_dimension_numbers<[1], [0], [0], [1], [0, 0, 1, 1], [], []>} : vector<2x64xbf16>, vector<64x128xbf16>, vector<2x128xf32> -> vector<2x128xf32>
    %475 = arith.addf %474, %11 : vector<2x128xf32>
    %476 = vector.extract_strided_slice %475 {offsets = [0, 0], sizes = [2, 64], strides = [1, 1]} : vector<2x128xf32> to vector<2x64xf32>
    %477 = arith.negf %476 : vector<2x64xf32>
    %478 = math.exp %477 : vector<2x64xf32>
    %cst_136 = arith.constant 1.000000e+00 : f32
    %479 = vector.broadcast %cst_136 : f32 to vector<2x64xf32>
    %480 = arith.addf %479, %478 : vector<2x64xf32>
    %481 = arith.divf %479, %480 : vector<2x64xf32>
    %482 = vector.extract_strided_slice %481 {offsets = [0, 0], sizes = [2, 32], strides = [1, 1]} : vector<2x64xf32> to vector<2x32xf32>
    %483 = vector.extract_strided_slice %481 {offsets = [0, 32], sizes = [2, 32], strides = [1, 1]} : vector<2x64xf32> to vector<2x32xf32>
    %484 = vector.extract_strided_slice %475 {offsets = [0, 64], sizes = [2, 32], strides = [1, 1]} : vector<2x128xf32> to vector<2x32xf32>
    %485 = vector.extract_strided_slice %475 {offsets = [0, 96], sizes = [2, 32], strides = [1, 1]} : vector<2x128xf32> to vector<2x32xf32>
    %486 = arith.mulf %482, %485 : vector<2x32xf32>
    %487 = arith.addf %484, %486 : vector<2x32xf32>
    %488 = math.tanh %487 : vector<2x32xf32>
    %cst_137 = arith.constant 1.000000e+00 : f32
    %489 = vector.broadcast %cst_137 : f32 to vector<2x32xf32>
    %490 = arith.subf %489, %483 : vector<2x32xf32>
    %491 = arith.mulf %490, %488 : vector<2x32xf32>
    %492 = arith.mulf %483, %399 : vector<2x32xf32>
    %493 = arith.addf %491, %492 : vector<2x32xf32>
    %c2_138 = arith.constant 2 : index
    %c0_139 = arith.constant 0 : index
    %c0_140 = arith.constant 0 : index
    %494 = vector.load %arg5[%c2_138, %c0_139, %c0_140] : memref<3x64x128xbf16, #tpu.memory_space<vmem>>, vector<1x64x128xbf16>
    %495 = vector.shape_cast %494 : vector<1x64x128xbf16> to vector<64x128xbf16>
    %496 = tpu.concatenate %493, %423 in 1 : vector<2x32xf32>, vector<2x32xf32> -> vector<2x64xf32>
    %497 = arith.truncf %496 : vector<2x64xf32> to vector<2x64xbf16>
    %cst_141 = arith.constant dense<0.000000e+00> : vector<2x128xf32>
    %498 = tpu.matmul %497, %495, %cst_141 {dimension_numbers = #tpu.dot_dimension_numbers<[1], [0], [0], [1], [0, 0, 1, 1], [], []>} : vector<2x64xbf16>, vector<64x128xbf16>, vector<2x128xf32> -> vector<2x128xf32>
    %499 = arith.addf %498, %15 : vector<2x128xf32>
    %500 = vector.extract_strided_slice %499 {offsets = [0, 0], sizes = [2, 64], strides = [1, 1]} : vector<2x128xf32> to vector<2x64xf32>
    %501 = arith.negf %500 : vector<2x64xf32>
    %502 = math.exp %501 : vector<2x64xf32>
    %cst_142 = arith.constant 1.000000e+00 : f32
    %503 = vector.broadcast %cst_142 : f32 to vector<2x64xf32>
    %504 = arith.addf %503, %502 : vector<2x64xf32>
    %505 = arith.divf %503, %504 : vector<2x64xf32>
    %506 = vector.extract_strided_slice %505 {offsets = [0, 0], sizes = [2, 32], strides = [1, 1]} : vector<2x64xf32> to vector<2x32xf32>
    %507 = vector.extract_strided_slice %505 {offsets = [0, 32], sizes = [2, 32], strides = [1, 1]} : vector<2x64xf32> to vector<2x32xf32>
    %508 = vector.extract_strided_slice %499 {offsets = [0, 64], sizes = [2, 32], strides = [1, 1]} : vector<2x128xf32> to vector<2x32xf32>
    %509 = vector.extract_strided_slice %499 {offsets = [0, 96], sizes = [2, 32], strides = [1, 1]} : vector<2x128xf32> to vector<2x32xf32>
    %510 = arith.mulf %506, %509 : vector<2x32xf32>
    %511 = arith.addf %508, %510 : vector<2x32xf32>
    %512 = math.tanh %511 : vector<2x32xf32>
    %cst_143 = arith.constant 1.000000e+00 : f32
    %513 = vector.broadcast %cst_143 : f32 to vector<2x32xf32>
    %514 = arith.subf %513, %507 : vector<2x32xf32>
    %515 = arith.mulf %514, %512 : vector<2x32xf32>
    %516 = arith.mulf %507, %423 : vector<2x32xf32>
    %517 = arith.addf %515, %516 : vector<2x32xf32>
    %518 = vector.extract_strided_slice %43 {offsets = [10, 0], sizes = [2, 128], strides = [1, 1]} : vector<16x128xf32> to vector<2x128xf32>
    %519 = arith.truncf %445 : vector<2x32xf32> to vector<2x32xbf16>
    %cst_144 = arith.constant dense<0.000000e+00> : vector<2x128xf32>
    %520 = tpu.matmul %519, %0, %cst_144 {dimension_numbers = #tpu.dot_dimension_numbers<[1], [0], [0], [1], [0, 0, 1, 1], [], []>} : vector<2x32xbf16>, vector<32x128xbf16>, vector<2x128xf32> -> vector<2x128xf32>
    %521 = arith.addf %518, %520 : vector<2x128xf32>
    %522 = vector.extract_strided_slice %521 {offsets = [0, 0], sizes = [2, 64], strides = [1, 1]} : vector<2x128xf32> to vector<2x64xf32>
    %523 = arith.negf %522 : vector<2x64xf32>
    %524 = math.exp %523 : vector<2x64xf32>
    %cst_145 = arith.constant 1.000000e+00 : f32
    %525 = vector.broadcast %cst_145 : f32 to vector<2x64xf32>
    %526 = arith.addf %525, %524 : vector<2x64xf32>
    %527 = arith.divf %525, %526 : vector<2x64xf32>
    %528 = vector.extract_strided_slice %527 {offsets = [0, 0], sizes = [2, 32], strides = [1, 1]} : vector<2x64xf32> to vector<2x32xf32>
    %529 = vector.extract_strided_slice %527 {offsets = [0, 32], sizes = [2, 32], strides = [1, 1]} : vector<2x64xf32> to vector<2x32xf32>
    %530 = vector.extract_strided_slice %521 {offsets = [0, 64], sizes = [2, 32], strides = [1, 1]} : vector<2x128xf32> to vector<2x32xf32>
    %531 = vector.extract_strided_slice %521 {offsets = [0, 96], sizes = [2, 32], strides = [1, 1]} : vector<2x128xf32> to vector<2x32xf32>
    %532 = arith.mulf %528, %531 : vector<2x32xf32>
    %533 = arith.addf %530, %532 : vector<2x32xf32>
    %534 = math.tanh %533 : vector<2x32xf32>
    %cst_146 = arith.constant 1.000000e+00 : f32
    %535 = vector.broadcast %cst_146 : f32 to vector<2x32xf32>
    %536 = arith.subf %535, %529 : vector<2x32xf32>
    %537 = arith.mulf %536, %534 : vector<2x32xf32>
    %538 = arith.mulf %529, %445 : vector<2x32xf32>
    %539 = arith.addf %537, %538 : vector<2x32xf32>
    %c0_147 = arith.constant 0 : index
    %c0_148 = arith.constant 0 : index
    %c0_149 = arith.constant 0 : index
    %540 = vector.load %arg5[%c0_147, %c0_148, %c0_149] : memref<3x64x128xbf16, #tpu.memory_space<vmem>>, vector<1x64x128xbf16>
    %541 = vector.shape_cast %540 : vector<1x64x128xbf16> to vector<64x128xbf16>
    %542 = tpu.concatenate %539, %469 in 1 : vector<2x32xf32>, vector<2x32xf32> -> vector<2x64xf32>
    %543 = arith.truncf %542 : vector<2x64xf32> to vector<2x64xbf16>
    %cst_150 = arith.constant dense<0.000000e+00> : vector<2x128xf32>
    %544 = tpu.matmul %543, %541, %cst_150 {dimension_numbers = #tpu.dot_dimension_numbers<[1], [0], [0], [1], [0, 0, 1, 1], [], []>} : vector<2x64xbf16>, vector<64x128xbf16>, vector<2x128xf32> -> vector<2x128xf32>
    %545 = arith.addf %544, %7 : vector<2x128xf32>
    %546 = vector.extract_strided_slice %545 {offsets = [0, 0], sizes = [2, 64], strides = [1, 1]} : vector<2x128xf32> to vector<2x64xf32>
    %547 = arith.negf %546 : vector<2x64xf32>
    %548 = math.exp %547 : vector<2x64xf32>
    %cst_151 = arith.constant 1.000000e+00 : f32
    %549 = vector.broadcast %cst_151 : f32 to vector<2x64xf32>
    %550 = arith.addf %549, %548 : vector<2x64xf32>
    %551 = arith.divf %549, %550 : vector<2x64xf32>
    %552 = vector.extract_strided_slice %551 {offsets = [0, 0], sizes = [2, 32], strides = [1, 1]} : vector<2x64xf32> to vector<2x32xf32>
    %553 = vector.extract_strided_slice %551 {offsets = [0, 32], sizes = [2, 32], strides = [1, 1]} : vector<2x64xf32> to vector<2x32xf32>
    %554 = vector.extract_strided_slice %545 {offsets = [0, 64], sizes = [2, 32], strides = [1, 1]} : vector<2x128xf32> to vector<2x32xf32>
    %555 = vector.extract_strided_slice %545 {offsets = [0, 96], sizes = [2, 32], strides = [1, 1]} : vector<2x128xf32> to vector<2x32xf32>
    %556 = arith.mulf %552, %555 : vector<2x32xf32>
    %557 = arith.addf %554, %556 : vector<2x32xf32>
    %558 = math.tanh %557 : vector<2x32xf32>
    %cst_152 = arith.constant 1.000000e+00 : f32
    %559 = vector.broadcast %cst_152 : f32 to vector<2x32xf32>
    %560 = arith.subf %559, %553 : vector<2x32xf32>
    %561 = arith.mulf %560, %558 : vector<2x32xf32>
    %562 = arith.mulf %553, %469 : vector<2x32xf32>
    %563 = arith.addf %561, %562 : vector<2x32xf32>
    %c1_153 = arith.constant 1 : index
    %c0_154 = arith.constant 0 : index
    %c0_155 = arith.constant 0 : index
    %564 = vector.load %arg5[%c1_153, %c0_154, %c0_155] : memref<3x64x128xbf16, #tpu.memory_space<vmem>>, vector<1x64x128xbf16>
    %565 = vector.shape_cast %564 : vector<1x64x128xbf16> to vector<64x128xbf16>
    %566 = tpu.concatenate %563, %493 in 1 : vector<2x32xf32>, vector<2x32xf32> -> vector<2x64xf32>
    %567 = arith.truncf %566 : vector<2x64xf32> to vector<2x64xbf16>
    %cst_156 = arith.constant dense<0.000000e+00> : vector<2x128xf32>
    %568 = tpu.matmul %567, %565, %cst_156 {dimension_numbers = #tpu.dot_dimension_numbers<[1], [0], [0], [1], [0, 0, 1, 1], [], []>} : vector<2x64xbf16>, vector<64x128xbf16>, vector<2x128xf32> -> vector<2x128xf32>
    %569 = arith.addf %568, %11 : vector<2x128xf32>
    %570 = vector.extract_strided_slice %569 {offsets = [0, 0], sizes = [2, 64], strides = [1, 1]} : vector<2x128xf32> to vector<2x64xf32>
    %571 = arith.negf %570 : vector<2x64xf32>
    %572 = math.exp %571 : vector<2x64xf32>
    %cst_157 = arith.constant 1.000000e+00 : f32
    %573 = vector.broadcast %cst_157 : f32 to vector<2x64xf32>
    %574 = arith.addf %573, %572 : vector<2x64xf32>
    %575 = arith.divf %573, %574 : vector<2x64xf32>
    %576 = vector.extract_strided_slice %575 {offsets = [0, 0], sizes = [2, 32], strides = [1, 1]} : vector<2x64xf32> to vector<2x32xf32>
    %577 = vector.extract_strided_slice %575 {offsets = [0, 32], sizes = [2, 32], strides = [1, 1]} : vector<2x64xf32> to vector<2x32xf32>
    %578 = vector.extract_strided_slice %569 {offsets = [0, 64], sizes = [2, 32], strides = [1, 1]} : vector<2x128xf32> to vector<2x32xf32>
    %579 = vector.extract_strided_slice %569 {offsets = [0, 96], sizes = [2, 32], strides = [1, 1]} : vector<2x128xf32> to vector<2x32xf32>
    %580 = arith.mulf %576, %579 : vector<2x32xf32>
    %581 = arith.addf %578, %580 : vector<2x32xf32>
    %582 = math.tanh %581 : vector<2x32xf32>
    %cst_158 = arith.constant 1.000000e+00 : f32
    %583 = vector.broadcast %cst_158 : f32 to vector<2x32xf32>
    %584 = arith.subf %583, %577 : vector<2x32xf32>
    %585 = arith.mulf %584, %582 : vector<2x32xf32>
    %586 = arith.mulf %577, %493 : vector<2x32xf32>
    %587 = arith.addf %585, %586 : vector<2x32xf32>
    %c2_159 = arith.constant 2 : index
    %c0_160 = arith.constant 0 : index
    %c0_161 = arith.constant 0 : index
    %588 = vector.load %arg5[%c2_159, %c0_160, %c0_161] : memref<3x64x128xbf16, #tpu.memory_space<vmem>>, vector<1x64x128xbf16>
    %589 = vector.shape_cast %588 : vector<1x64x128xbf16> to vector<64x128xbf16>
    %590 = tpu.concatenate %587, %517 in 1 : vector<2x32xf32>, vector<2x32xf32> -> vector<2x64xf32>
    %591 = arith.truncf %590 : vector<2x64xf32> to vector<2x64xbf16>
    %cst_162 = arith.constant dense<0.000000e+00> : vector<2x128xf32>
    %592 = tpu.matmul %591, %589, %cst_162 {dimension_numbers = #tpu.dot_dimension_numbers<[1], [0], [0], [1], [0, 0, 1, 1], [], []>} : vector<2x64xbf16>, vector<64x128xbf16>, vector<2x128xf32> -> vector<2x128xf32>
    %593 = arith.addf %592, %15 : vector<2x128xf32>
    %594 = vector.extract_strided_slice %593 {offsets = [0, 0], sizes = [2, 64], strides = [1, 1]} : vector<2x128xf32> to vector<2x64xf32>
    %595 = arith.negf %594 : vector<2x64xf32>
    %596 = math.exp %595 : vector<2x64xf32>
    %cst_163 = arith.constant 1.000000e+00 : f32
    %597 = vector.broadcast %cst_163 : f32 to vector<2x64xf32>
    %598 = arith.addf %597, %596 : vector<2x64xf32>
    %599 = arith.divf %597, %598 : vector<2x64xf32>
    %600 = vector.extract_strided_slice %599 {offsets = [0, 0], sizes = [2, 32], strides = [1, 1]} : vector<2x64xf32> to vector<2x32xf32>
    %601 = vector.extract_strided_slice %599 {offsets = [0, 32], sizes = [2, 32], strides = [1, 1]} : vector<2x64xf32> to vector<2x32xf32>
    %602 = vector.extract_strided_slice %593 {offsets = [0, 64], sizes = [2, 32], strides = [1, 1]} : vector<2x128xf32> to vector<2x32xf32>
    %603 = vector.extract_strided_slice %593 {offsets = [0, 96], sizes = [2, 32], strides = [1, 1]} : vector<2x128xf32> to vector<2x32xf32>
    %604 = arith.mulf %600, %603 : vector<2x32xf32>
    %605 = arith.addf %602, %604 : vector<2x32xf32>
    %606 = math.tanh %605 : vector<2x32xf32>
    %cst_164 = arith.constant 1.000000e+00 : f32
    %607 = vector.broadcast %cst_164 : f32 to vector<2x32xf32>
    %608 = arith.subf %607, %601 : vector<2x32xf32>
    %609 = arith.mulf %608, %606 : vector<2x32xf32>
    %610 = arith.mulf %601, %517 : vector<2x32xf32>
    %611 = arith.addf %609, %610 : vector<2x32xf32>
    %612 = vector.extract_strided_slice %43 {offsets = [12, 0], sizes = [2, 128], strides = [1, 1]} : vector<16x128xf32> to vector<2x128xf32>
    %613 = arith.truncf %539 : vector<2x32xf32> to vector<2x32xbf16>
    %cst_165 = arith.constant dense<0.000000e+00> : vector<2x128xf32>
    %614 = tpu.matmul %613, %0, %cst_165 {dimension_numbers = #tpu.dot_dimension_numbers<[1], [0], [0], [1], [0, 0, 1, 1], [], []>} : vector<2x32xbf16>, vector<32x128xbf16>, vector<2x128xf32> -> vector<2x128xf32>
    %615 = arith.addf %612, %614 : vector<2x128xf32>
    %616 = vector.extract_strided_slice %615 {offsets = [0, 0], sizes = [2, 64], strides = [1, 1]} : vector<2x128xf32> to vector<2x64xf32>
    %617 = arith.negf %616 : vector<2x64xf32>
    %618 = math.exp %617 : vector<2x64xf32>
    %cst_166 = arith.constant 1.000000e+00 : f32
    %619 = vector.broadcast %cst_166 : f32 to vector<2x64xf32>
    %620 = arith.addf %619, %618 : vector<2x64xf32>
    %621 = arith.divf %619, %620 : vector<2x64xf32>
    %622 = vector.extract_strided_slice %621 {offsets = [0, 0], sizes = [2, 32], strides = [1, 1]} : vector<2x64xf32> to vector<2x32xf32>
    %623 = vector.extract_strided_slice %621 {offsets = [0, 32], sizes = [2, 32], strides = [1, 1]} : vector<2x64xf32> to vector<2x32xf32>
    %624 = vector.extract_strided_slice %615 {offsets = [0, 64], sizes = [2, 32], strides = [1, 1]} : vector<2x128xf32> to vector<2x32xf32>
    %625 = vector.extract_strided_slice %615 {offsets = [0, 96], sizes = [2, 32], strides = [1, 1]} : vector<2x128xf32> to vector<2x32xf32>
    %626 = arith.mulf %622, %625 : vector<2x32xf32>
    %627 = arith.addf %624, %626 : vector<2x32xf32>
    %628 = math.tanh %627 : vector<2x32xf32>
    %cst_167 = arith.constant 1.000000e+00 : f32
    %629 = vector.broadcast %cst_167 : f32 to vector<2x32xf32>
    %630 = arith.subf %629, %623 : vector<2x32xf32>
    %631 = arith.mulf %630, %628 : vector<2x32xf32>
    %632 = arith.mulf %623, %539 : vector<2x32xf32>
    %633 = arith.addf %631, %632 : vector<2x32xf32>
    %c0_168 = arith.constant 0 : index
    %c0_169 = arith.constant 0 : index
    %c0_170 = arith.constant 0 : index
    %634 = vector.load %arg5[%c0_168, %c0_169, %c0_170] : memref<3x64x128xbf16, #tpu.memory_space<vmem>>, vector<1x64x128xbf16>
    %635 = vector.shape_cast %634 : vector<1x64x128xbf16> to vector<64x128xbf16>
    %636 = tpu.concatenate %633, %563 in 1 : vector<2x32xf32>, vector<2x32xf32> -> vector<2x64xf32>
    %637 = arith.truncf %636 : vector<2x64xf32> to vector<2x64xbf16>
    %cst_171 = arith.constant dense<0.000000e+00> : vector<2x128xf32>
    %638 = tpu.matmul %637, %635, %cst_171 {dimension_numbers = #tpu.dot_dimension_numbers<[1], [0], [0], [1], [0, 0, 1, 1], [], []>} : vector<2x64xbf16>, vector<64x128xbf16>, vector<2x128xf32> -> vector<2x128xf32>
    %639 = arith.addf %638, %7 : vector<2x128xf32>
    %640 = vector.extract_strided_slice %639 {offsets = [0, 0], sizes = [2, 64], strides = [1, 1]} : vector<2x128xf32> to vector<2x64xf32>
    %641 = arith.negf %640 : vector<2x64xf32>
    %642 = math.exp %641 : vector<2x64xf32>
    %cst_172 = arith.constant 1.000000e+00 : f32
    %643 = vector.broadcast %cst_172 : f32 to vector<2x64xf32>
    %644 = arith.addf %643, %642 : vector<2x64xf32>
    %645 = arith.divf %643, %644 : vector<2x64xf32>
    %646 = vector.extract_strided_slice %645 {offsets = [0, 0], sizes = [2, 32], strides = [1, 1]} : vector<2x64xf32> to vector<2x32xf32>
    %647 = vector.extract_strided_slice %645 {offsets = [0, 32], sizes = [2, 32], strides = [1, 1]} : vector<2x64xf32> to vector<2x32xf32>
    %648 = vector.extract_strided_slice %639 {offsets = [0, 64], sizes = [2, 32], strides = [1, 1]} : vector<2x128xf32> to vector<2x32xf32>
    %649 = vector.extract_strided_slice %639 {offsets = [0, 96], sizes = [2, 32], strides = [1, 1]} : vector<2x128xf32> to vector<2x32xf32>
    %650 = arith.mulf %646, %649 : vector<2x32xf32>
    %651 = arith.addf %648, %650 : vector<2x32xf32>
    %652 = math.tanh %651 : vector<2x32xf32>
    %cst_173 = arith.constant 1.000000e+00 : f32
    %653 = vector.broadcast %cst_173 : f32 to vector<2x32xf32>
    %654 = arith.subf %653, %647 : vector<2x32xf32>
    %655 = arith.mulf %654, %652 : vector<2x32xf32>
    %656 = arith.mulf %647, %563 : vector<2x32xf32>
    %657 = arith.addf %655, %656 : vector<2x32xf32>
    %c1_174 = arith.constant 1 : index
    %c0_175 = arith.constant 0 : index
    %c0_176 = arith.constant 0 : index
    %658 = vector.load %arg5[%c1_174, %c0_175, %c0_176] : memref<3x64x128xbf16, #tpu.memory_space<vmem>>, vector<1x64x128xbf16>
    %659 = vector.shape_cast %658 : vector<1x64x128xbf16> to vector<64x128xbf16>
    %660 = tpu.concatenate %657, %587 in 1 : vector<2x32xf32>, vector<2x32xf32> -> vector<2x64xf32>
    %661 = arith.truncf %660 : vector<2x64xf32> to vector<2x64xbf16>
    %cst_177 = arith.constant dense<0.000000e+00> : vector<2x128xf32>
    %662 = tpu.matmul %661, %659, %cst_177 {dimension_numbers = #tpu.dot_dimension_numbers<[1], [0], [0], [1], [0, 0, 1, 1], [], []>} : vector<2x64xbf16>, vector<64x128xbf16>, vector<2x128xf32> -> vector<2x128xf32>
    %663 = arith.addf %662, %11 : vector<2x128xf32>
    %664 = vector.extract_strided_slice %663 {offsets = [0, 0], sizes = [2, 64], strides = [1, 1]} : vector<2x128xf32> to vector<2x64xf32>
    %665 = arith.negf %664 : vector<2x64xf32>
    %666 = math.exp %665 : vector<2x64xf32>
    %cst_178 = arith.constant 1.000000e+00 : f32
    %667 = vector.broadcast %cst_178 : f32 to vector<2x64xf32>
    %668 = arith.addf %667, %666 : vector<2x64xf32>
    %669 = arith.divf %667, %668 : vector<2x64xf32>
    %670 = vector.extract_strided_slice %669 {offsets = [0, 0], sizes = [2, 32], strides = [1, 1]} : vector<2x64xf32> to vector<2x32xf32>
    %671 = vector.extract_strided_slice %669 {offsets = [0, 32], sizes = [2, 32], strides = [1, 1]} : vector<2x64xf32> to vector<2x32xf32>
    %672 = vector.extract_strided_slice %663 {offsets = [0, 64], sizes = [2, 32], strides = [1, 1]} : vector<2x128xf32> to vector<2x32xf32>
    %673 = vector.extract_strided_slice %663 {offsets = [0, 96], sizes = [2, 32], strides = [1, 1]} : vector<2x128xf32> to vector<2x32xf32>
    %674 = arith.mulf %670, %673 : vector<2x32xf32>
    %675 = arith.addf %672, %674 : vector<2x32xf32>
    %676 = math.tanh %675 : vector<2x32xf32>
    %cst_179 = arith.constant 1.000000e+00 : f32
    %677 = vector.broadcast %cst_179 : f32 to vector<2x32xf32>
    %678 = arith.subf %677, %671 : vector<2x32xf32>
    %679 = arith.mulf %678, %676 : vector<2x32xf32>
    %680 = arith.mulf %671, %587 : vector<2x32xf32>
    %681 = arith.addf %679, %680 : vector<2x32xf32>
    %c2_180 = arith.constant 2 : index
    %c0_181 = arith.constant 0 : index
    %c0_182 = arith.constant 0 : index
    %682 = vector.load %arg5[%c2_180, %c0_181, %c0_182] : memref<3x64x128xbf16, #tpu.memory_space<vmem>>, vector<1x64x128xbf16>
    %683 = vector.shape_cast %682 : vector<1x64x128xbf16> to vector<64x128xbf16>
    %684 = tpu.concatenate %681, %611 in 1 : vector<2x32xf32>, vector<2x32xf32> -> vector<2x64xf32>
    %685 = arith.truncf %684 : vector<2x64xf32> to vector<2x64xbf16>
    %cst_183 = arith.constant dense<0.000000e+00> : vector<2x128xf32>
    %686 = tpu.matmul %685, %683, %cst_183 {dimension_numbers = #tpu.dot_dimension_numbers<[1], [0], [0], [1], [0, 0, 1, 1], [], []>} : vector<2x64xbf16>, vector<64x128xbf16>, vector<2x128xf32> -> vector<2x128xf32>
    %687 = arith.addf %686, %15 : vector<2x128xf32>
    %688 = vector.extract_strided_slice %687 {offsets = [0, 0], sizes = [2, 64], strides = [1, 1]} : vector<2x128xf32> to vector<2x64xf32>
    %689 = arith.negf %688 : vector<2x64xf32>
    %690 = math.exp %689 : vector<2x64xf32>
    %cst_184 = arith.constant 1.000000e+00 : f32
    %691 = vector.broadcast %cst_184 : f32 to vector<2x64xf32>
    %692 = arith.addf %691, %690 : vector<2x64xf32>
    %693 = arith.divf %691, %692 : vector<2x64xf32>
    %694 = vector.extract_strided_slice %693 {offsets = [0, 0], sizes = [2, 32], strides = [1, 1]} : vector<2x64xf32> to vector<2x32xf32>
    %695 = vector.extract_strided_slice %693 {offsets = [0, 32], sizes = [2, 32], strides = [1, 1]} : vector<2x64xf32> to vector<2x32xf32>
    %696 = vector.extract_strided_slice %687 {offsets = [0, 64], sizes = [2, 32], strides = [1, 1]} : vector<2x128xf32> to vector<2x32xf32>
    %697 = vector.extract_strided_slice %687 {offsets = [0, 96], sizes = [2, 32], strides = [1, 1]} : vector<2x128xf32> to vector<2x32xf32>
    %698 = arith.mulf %694, %697 : vector<2x32xf32>
    %699 = arith.addf %696, %698 : vector<2x32xf32>
    %700 = math.tanh %699 : vector<2x32xf32>
    %cst_185 = arith.constant 1.000000e+00 : f32
    %701 = vector.broadcast %cst_185 : f32 to vector<2x32xf32>
    %702 = arith.subf %701, %695 : vector<2x32xf32>
    %703 = arith.mulf %702, %700 : vector<2x32xf32>
    %704 = arith.mulf %695, %611 : vector<2x32xf32>
    %705 = arith.addf %703, %704 : vector<2x32xf32>
    %706 = vector.extract_strided_slice %43 {offsets = [14, 0], sizes = [2, 128], strides = [1, 1]} : vector<16x128xf32> to vector<2x128xf32>
    %707 = arith.truncf %633 : vector<2x32xf32> to vector<2x32xbf16>
    %cst_186 = arith.constant dense<0.000000e+00> : vector<2x128xf32>
    %708 = tpu.matmul %707, %0, %cst_186 {dimension_numbers = #tpu.dot_dimension_numbers<[1], [0], [0], [1], [0, 0, 1, 1], [], []>} : vector<2x32xbf16>, vector<32x128xbf16>, vector<2x128xf32> -> vector<2x128xf32>
    %709 = arith.addf %706, %708 : vector<2x128xf32>
    %710 = vector.extract_strided_slice %709 {offsets = [0, 0], sizes = [2, 64], strides = [1, 1]} : vector<2x128xf32> to vector<2x64xf32>
    %711 = arith.negf %710 : vector<2x64xf32>
    %712 = math.exp %711 : vector<2x64xf32>
    %cst_187 = arith.constant 1.000000e+00 : f32
    %713 = vector.broadcast %cst_187 : f32 to vector<2x64xf32>
    %714 = arith.addf %713, %712 : vector<2x64xf32>
    %715 = arith.divf %713, %714 : vector<2x64xf32>
    %716 = vector.extract_strided_slice %715 {offsets = [0, 0], sizes = [2, 32], strides = [1, 1]} : vector<2x64xf32> to vector<2x32xf32>
    %717 = vector.extract_strided_slice %715 {offsets = [0, 32], sizes = [2, 32], strides = [1, 1]} : vector<2x64xf32> to vector<2x32xf32>
    %718 = vector.extract_strided_slice %709 {offsets = [0, 64], sizes = [2, 32], strides = [1, 1]} : vector<2x128xf32> to vector<2x32xf32>
    %719 = vector.extract_strided_slice %709 {offsets = [0, 96], sizes = [2, 32], strides = [1, 1]} : vector<2x128xf32> to vector<2x32xf32>
    %720 = arith.mulf %716, %719 : vector<2x32xf32>
    %721 = arith.addf %718, %720 : vector<2x32xf32>
    %722 = math.tanh %721 : vector<2x32xf32>
    %cst_188 = arith.constant 1.000000e+00 : f32
    %723 = vector.broadcast %cst_188 : f32 to vector<2x32xf32>
    %724 = arith.subf %723, %717 : vector<2x32xf32>
    %725 = arith.mulf %724, %722 : vector<2x32xf32>
    %726 = arith.mulf %717, %633 : vector<2x32xf32>
    %727 = arith.addf %725, %726 : vector<2x32xf32>
    %c0_189 = arith.constant 0 : index
    %c0_190 = arith.constant 0 : index
    %c0_191 = arith.constant 0 : index
    %728 = vector.load %arg5[%c0_189, %c0_190, %c0_191] : memref<3x64x128xbf16, #tpu.memory_space<vmem>>, vector<1x64x128xbf16>
    %729 = vector.shape_cast %728 : vector<1x64x128xbf16> to vector<64x128xbf16>
    %730 = tpu.concatenate %727, %657 in 1 : vector<2x32xf32>, vector<2x32xf32> -> vector<2x64xf32>
    %731 = arith.truncf %730 : vector<2x64xf32> to vector<2x64xbf16>
    %cst_192 = arith.constant dense<0.000000e+00> : vector<2x128xf32>
    %732 = tpu.matmul %731, %729, %cst_192 {dimension_numbers = #tpu.dot_dimension_numbers<[1], [0], [0], [1], [0, 0, 1, 1], [], []>} : vector<2x64xbf16>, vector<64x128xbf16>, vector<2x128xf32> -> vector<2x128xf32>
    %733 = arith.addf %732, %7 : vector<2x128xf32>
    %734 = vector.extract_strided_slice %733 {offsets = [0, 0], sizes = [2, 64], strides = [1, 1]} : vector<2x128xf32> to vector<2x64xf32>
    %735 = arith.negf %734 : vector<2x64xf32>
    %736 = math.exp %735 : vector<2x64xf32>
    %cst_193 = arith.constant 1.000000e+00 : f32
    %737 = vector.broadcast %cst_193 : f32 to vector<2x64xf32>
    %738 = arith.addf %737, %736 : vector<2x64xf32>
    %739 = arith.divf %737, %738 : vector<2x64xf32>
    %740 = vector.extract_strided_slice %739 {offsets = [0, 0], sizes = [2, 32], strides = [1, 1]} : vector<2x64xf32> to vector<2x32xf32>
    %741 = vector.extract_strided_slice %739 {offsets = [0, 32], sizes = [2, 32], strides = [1, 1]} : vector<2x64xf32> to vector<2x32xf32>
    %742 = vector.extract_strided_slice %733 {offsets = [0, 64], sizes = [2, 32], strides = [1, 1]} : vector<2x128xf32> to vector<2x32xf32>
    %743 = vector.extract_strided_slice %733 {offsets = [0, 96], sizes = [2, 32], strides = [1, 1]} : vector<2x128xf32> to vector<2x32xf32>
    %744 = arith.mulf %740, %743 : vector<2x32xf32>
    %745 = arith.addf %742, %744 : vector<2x32xf32>
    %746 = math.tanh %745 : vector<2x32xf32>
    %cst_194 = arith.constant 1.000000e+00 : f32
    %747 = vector.broadcast %cst_194 : f32 to vector<2x32xf32>
    %748 = arith.subf %747, %741 : vector<2x32xf32>
    %749 = arith.mulf %748, %746 : vector<2x32xf32>
    %750 = arith.mulf %741, %657 : vector<2x32xf32>
    %751 = arith.addf %749, %750 : vector<2x32xf32>
    %c1_195 = arith.constant 1 : index
    %c0_196 = arith.constant 0 : index
    %c0_197 = arith.constant 0 : index
    %752 = vector.load %arg5[%c1_195, %c0_196, %c0_197] : memref<3x64x128xbf16, #tpu.memory_space<vmem>>, vector<1x64x128xbf16>
    %753 = vector.shape_cast %752 : vector<1x64x128xbf16> to vector<64x128xbf16>
    %754 = tpu.concatenate %751, %681 in 1 : vector<2x32xf32>, vector<2x32xf32> -> vector<2x64xf32>
    %755 = arith.truncf %754 : vector<2x64xf32> to vector<2x64xbf16>
    %cst_198 = arith.constant dense<0.000000e+00> : vector<2x128xf32>
    %756 = tpu.matmul %755, %753, %cst_198 {dimension_numbers = #tpu.dot_dimension_numbers<[1], [0], [0], [1], [0, 0, 1, 1], [], []>} : vector<2x64xbf16>, vector<64x128xbf16>, vector<2x128xf32> -> vector<2x128xf32>
    %757 = arith.addf %756, %11 : vector<2x128xf32>
    %758 = vector.extract_strided_slice %757 {offsets = [0, 0], sizes = [2, 64], strides = [1, 1]} : vector<2x128xf32> to vector<2x64xf32>
    %759 = arith.negf %758 : vector<2x64xf32>
    %760 = math.exp %759 : vector<2x64xf32>
    %cst_199 = arith.constant 1.000000e+00 : f32
    %761 = vector.broadcast %cst_199 : f32 to vector<2x64xf32>
    %762 = arith.addf %761, %760 : vector<2x64xf32>
    %763 = arith.divf %761, %762 : vector<2x64xf32>
    %764 = vector.extract_strided_slice %763 {offsets = [0, 0], sizes = [2, 32], strides = [1, 1]} : vector<2x64xf32> to vector<2x32xf32>
    %765 = vector.extract_strided_slice %763 {offsets = [0, 32], sizes = [2, 32], strides = [1, 1]} : vector<2x64xf32> to vector<2x32xf32>
    %766 = vector.extract_strided_slice %757 {offsets = [0, 64], sizes = [2, 32], strides = [1, 1]} : vector<2x128xf32> to vector<2x32xf32>
    %767 = vector.extract_strided_slice %757 {offsets = [0, 96], sizes = [2, 32], strides = [1, 1]} : vector<2x128xf32> to vector<2x32xf32>
    %768 = arith.mulf %764, %767 : vector<2x32xf32>
    %769 = arith.addf %766, %768 : vector<2x32xf32>
    %770 = math.tanh %769 : vector<2x32xf32>
    %cst_200 = arith.constant 1.000000e+00 : f32
    %771 = vector.broadcast %cst_200 : f32 to vector<2x32xf32>
    %772 = arith.subf %771, %765 : vector<2x32xf32>
    %773 = arith.mulf %772, %770 : vector<2x32xf32>
    %774 = arith.mulf %765, %681 : vector<2x32xf32>
    %775 = arith.addf %773, %774 : vector<2x32xf32>
    %c2_201 = arith.constant 2 : index
    %c0_202 = arith.constant 0 : index
    %c0_203 = arith.constant 0 : index
    %776 = vector.load %arg5[%c2_201, %c0_202, %c0_203] : memref<3x64x128xbf16, #tpu.memory_space<vmem>>, vector<1x64x128xbf16>
    %777 = vector.shape_cast %776 : vector<1x64x128xbf16> to vector<64x128xbf16>
    %778 = tpu.concatenate %775, %705 in 1 : vector<2x32xf32>, vector<2x32xf32> -> vector<2x64xf32>
    %779 = arith.truncf %778 : vector<2x64xf32> to vector<2x64xbf16>
    %cst_204 = arith.constant dense<0.000000e+00> : vector<2x128xf32>
    %780 = tpu.matmul %779, %777, %cst_204 {dimension_numbers = #tpu.dot_dimension_numbers<[1], [0], [0], [1], [0, 0, 1, 1], [], []>} : vector<2x64xbf16>, vector<64x128xbf16>, vector<2x128xf32> -> vector<2x128xf32>
    %781 = arith.addf %780, %15 : vector<2x128xf32>
    %782 = vector.extract_strided_slice %781 {offsets = [0, 0], sizes = [2, 64], strides = [1, 1]} : vector<2x128xf32> to vector<2x64xf32>
    %783 = arith.negf %782 : vector<2x64xf32>
    %784 = math.exp %783 : vector<2x64xf32>
    %cst_205 = arith.constant 1.000000e+00 : f32
    %785 = vector.broadcast %cst_205 : f32 to vector<2x64xf32>
    %786 = arith.addf %785, %784 : vector<2x64xf32>
    %787 = arith.divf %785, %786 : vector<2x64xf32>
    %788 = vector.extract_strided_slice %787 {offsets = [0, 0], sizes = [2, 32], strides = [1, 1]} : vector<2x64xf32> to vector<2x32xf32>
    %789 = vector.extract_strided_slice %787 {offsets = [0, 32], sizes = [2, 32], strides = [1, 1]} : vector<2x64xf32> to vector<2x32xf32>
    %790 = vector.extract_strided_slice %781 {offsets = [0, 64], sizes = [2, 32], strides = [1, 1]} : vector<2x128xf32> to vector<2x32xf32>
    %791 = vector.extract_strided_slice %781 {offsets = [0, 96], sizes = [2, 32], strides = [1, 1]} : vector<2x128xf32> to vector<2x32xf32>
    %792 = arith.mulf %788, %791 : vector<2x32xf32>
    %793 = arith.addf %790, %792 : vector<2x32xf32>
    %794 = math.tanh %793 : vector<2x32xf32>
    %cst_206 = arith.constant 1.000000e+00 : f32
    %795 = vector.broadcast %cst_206 : f32 to vector<2x32xf32>
    %796 = arith.subf %795, %789 : vector<2x32xf32>
    %797 = arith.mulf %796, %794 : vector<2x32xf32>
    %798 = arith.mulf %789, %705 : vector<2x32xf32>
    %799 = arith.addf %797, %798 : vector<2x32xf32>
    %800 = tpu.concatenate %141, %235, %329, %423, %517, %611, %705, %799 in 0 : vector<2x32xf32>, vector<2x32xf32>, vector<2x32xf32>, vector<2x32xf32>, vector<2x32xf32>, vector<2x32xf32>, vector<2x32xf32>, vector<2x32xf32> -> vector<16x32xf32>
    %c0_207 = arith.constant 0 : index
    %c0_208 = arith.constant 0 : index
    %801 = vector.load %arg15[%c0_207, %c0_208] : memref<16x32xf32, #tpu.memory_space<vmem>>, vector<16x32xf32>
    tpu.vector_store %arg15[%c0_207, %c0_208], %800 {strides = array<i32>} : memref<16x32xf32, #tpu.memory_space<vmem>>, vector<16x32xf32>,
    %802 = tpu.concatenate %727, %751, %775, %799 in 0 : vector<2x32xf32>, vector<2x32xf32>, vector<2x32xf32>, vector<2x32xf32> -> vector<8x32xf32>
    %c0_209 = arith.constant 0 : index
    %c0_210 = arith.constant 0 : index
    %803 = vector.load %arg16[%c0_209, %c0_210] : memref<8x32xf32, #tpu.memory_space<vmem>>, vector<8x32xf32>
    tpu.vector_store %arg16[%c0_209, %c0_210], %802 {strides = array<i32>} : memref<8x32xf32, #tpu.memory_space<vmem>>, vector<8x32xf32>,
    %c0_211 = arith.constant 0 : index
    %c0_212 = arith.constant 0 : index
    %804 = vector.load %arg0[%c0_211, %c0_212] : memref<16x4xf32, #tpu.memory_space<vmem>>, vector<2x4xf32>
    %cst_213 = arith.constant 0.000000e+00 : f32
    %805 = vector.broadcast %cst_213 : f32 to vector<2x4xf32>
    %806 = tpu.concatenate %804, %727 in 1 : vector<2x4xf32>, vector<2x32xf32> -> vector<2x36xf32>
    %807 = arith.truncf %806 : vector<2x36xf32> to vector<2x36xbf16>
    %cst_214 = arith.constant dense<0.000000e+00> : vector<2x128xf32>
    %808 = tpu.matmul %807, %1, %cst_214 {dimension_numbers = #tpu.dot_dimension_numbers<[1], [0], [0], [1], [0, 0, 1, 1], [], []>} : vector<2x36xbf16>, vector<36x128xbf16>, vector<2x128xf32> -> vector<2x128xf32>
    %809 = arith.addf %808, %30 : vector<2x128xf32>
    %810 = vector.extract_strided_slice %809 {offsets = [0, 0], sizes = [2, 64], strides = [1, 1]} : vector<2x128xf32> to vector<2x64xf32>
    %811 = arith.negf %810 : vector<2x64xf32>
    %812 = math.exp %811 : vector<2x64xf32>
    %cst_215 = arith.constant 1.000000e+00 : f32
    %813 = vector.broadcast %cst_215 : f32 to vector<2x64xf32>
    %814 = arith.addf %813, %812 : vector<2x64xf32>
    %815 = arith.divf %813, %814 : vector<2x64xf32>
    %816 = vector.extract_strided_slice %815 {offsets = [0, 0], sizes = [2, 32], strides = [1, 1]} : vector<2x64xf32> to vector<2x32xf32>
    %817 = vector.extract_strided_slice %815 {offsets = [0, 32], sizes = [2, 32], strides = [1, 1]} : vector<2x64xf32> to vector<2x32xf32>
    %818 = vector.extract_strided_slice %809 {offsets = [0, 64], sizes = [2, 32], strides = [1, 1]} : vector<2x128xf32> to vector<2x32xf32>
    %819 = vector.extract_strided_slice %809 {offsets = [0, 96], sizes = [2, 32], strides = [1, 1]} : vector<2x128xf32> to vector<2x32xf32>
    %820 = arith.mulf %816, %819 : vector<2x32xf32>
    %821 = arith.addf %818, %820 : vector<2x32xf32>
    %822 = math.tanh %821 : vector<2x32xf32>
    %cst_216 = arith.constant 1.000000e+00 : f32
    %823 = vector.broadcast %cst_216 : f32 to vector<2x32xf32>
    %824 = arith.subf %823, %817 : vector<2x32xf32>
    %825 = arith.mulf %824, %822 : vector<2x32xf32>
    %826 = arith.mulf %817, %727 : vector<2x32xf32>
    %827 = arith.addf %825, %826 : vector<2x32xf32>
    %c0_217 = arith.constant 0 : index
    %c0_218 = arith.constant 0 : index
    %c0_219 = arith.constant 0 : index
    %828 = vector.load %arg9[%c0_217, %c0_218, %c0_219] : memref<3x64x128xbf16, #tpu.memory_space<vmem>>, vector<1x64x128xbf16>
    %829 = vector.shape_cast %828 : vector<1x64x128xbf16> to vector<64x128xbf16>
    %830 = tpu.concatenate %827, %751 in 1 : vector<2x32xf32>, vector<2x32xf32> -> vector<2x64xf32>
    %831 = arith.truncf %830 : vector<2x64xf32> to vector<2x64xbf16>
    %cst_220 = arith.constant dense<0.000000e+00> : vector<2x128xf32>
    %832 = tpu.matmul %831, %829, %cst_220 {dimension_numbers = #tpu.dot_dimension_numbers<[1], [0], [0], [1], [0, 0, 1, 1], [], []>} : vector<2x64xbf16>, vector<64x128xbf16>, vector<2x128xf32> -> vector<2x128xf32>
    %833 = arith.addf %832, %19 : vector<2x128xf32>
    %834 = vector.extract_strided_slice %833 {offsets = [0, 0], sizes = [2, 64], strides = [1, 1]} : vector<2x128xf32> to vector<2x64xf32>
    %835 = arith.negf %834 : vector<2x64xf32>
    %836 = math.exp %835 : vector<2x64xf32>
    %cst_221 = arith.constant 1.000000e+00 : f32
    %837 = vector.broadcast %cst_221 : f32 to vector<2x64xf32>
    %838 = arith.addf %837, %836 : vector<2x64xf32>
    %839 = arith.divf %837, %838 : vector<2x64xf32>
    %840 = vector.extract_strided_slice %839 {offsets = [0, 0], sizes = [2, 32], strides = [1, 1]} : vector<2x64xf32> to vector<2x32xf32>
    %841 = vector.extract_strided_slice %839 {offsets = [0, 32], sizes = [2, 32], strides = [1, 1]} : vector<2x64xf32> to vector<2x32xf32>
    %842 = vector.extract_strided_slice %833 {offsets = [0, 64], sizes = [2, 32], strides = [1, 1]} : vector<2x128xf32> to vector<2x32xf32>
    %843 = vector.extract_strided_slice %833 {offsets = [0, 96], sizes = [2, 32], strides = [1, 1]} : vector<2x128xf32> to vector<2x32xf32>
    %844 = arith.mulf %840, %843 : vector<2x32xf32>
    %845 = arith.addf %842, %844 : vector<2x32xf32>
    %846 = math.tanh %845 : vector<2x32xf32>
    %cst_222 = arith.constant 1.000000e+00 : f32
    %847 = vector.broadcast %cst_222 : f32 to vector<2x32xf32>
    %848 = arith.subf %847, %841 : vector<2x32xf32>
    %849 = arith.mulf %848, %846 : vector<2x32xf32>
    %850 = arith.mulf %841, %751 : vector<2x32xf32>
    %851 = arith.addf %849, %850 : vector<2x32xf32>
    %c1_223 = arith.constant 1 : index
    %c0_224 = arith.constant 0 : index
    %c0_225 = arith.constant 0 : index
    %852 = vector.load %arg9[%c1_223, %c0_224, %c0_225] : memref<3x64x128xbf16, #tpu.memory_space<vmem>>, vector<1x64x128xbf16>
    %853 = vector.shape_cast %852 : vector<1x64x128xbf16> to vector<64x128xbf16>
    %854 = tpu.concatenate %851, %775 in 1 : vector<2x32xf32>, vector<2x32xf32> -> vector<2x64xf32>
    %855 = arith.truncf %854 : vector<2x64xf32> to vector<2x64xbf16>
    %cst_226 = arith.constant dense<0.000000e+00> : vector<2x128xf32>
    %856 = tpu.matmul %855, %853, %cst_226 {dimension_numbers = #tpu.dot_dimension_numbers<[1], [0], [0], [1], [0, 0, 1, 1], [], []>} : vector<2x64xbf16>, vector<64x128xbf16>, vector<2x128xf32> -> vector<2x128xf32>
    %857 = arith.addf %856, %23 : vector<2x128xf32>
    %858 = vector.extract_strided_slice %857 {offsets = [0, 0], sizes = [2, 64], strides = [1, 1]} : vector<2x128xf32> to vector<2x64xf32>
    %859 = arith.negf %858 : vector<2x64xf32>
    %860 = math.exp %859 : vector<2x64xf32>
    %cst_227 = arith.constant 1.000000e+00 : f32
    %861 = vector.broadcast %cst_227 : f32 to vector<2x64xf32>
    %862 = arith.addf %861, %860 : vector<2x64xf32>
    %863 = arith.divf %861, %862 : vector<2x64xf32>
    %864 = vector.extract_strided_slice %863 {offsets = [0, 0], sizes = [2, 32], strides = [1, 1]} : vector<2x64xf32> to vector<2x32xf32>
    %865 = vector.extract_strided_slice %863 {offsets = [0, 32], sizes = [2, 32], strides = [1, 1]} : vector<2x64xf32> to vector<2x32xf32>
    %866 = vector.extract_strided_slice %857 {offsets = [0, 64], sizes = [2, 32], strides = [1, 1]} : vector<2x128xf32> to vector<2x32xf32>
    %867 = vector.extract_strided_slice %857 {offsets = [0, 96], sizes = [2, 32], strides = [1, 1]} : vector<2x128xf32> to vector<2x32xf32>
    %868 = arith.mulf %864, %867 : vector<2x32xf32>
    %869 = arith.addf %866, %868 : vector<2x32xf32>
    %870 = math.tanh %869 : vector<2x32xf32>
    %cst_228 = arith.constant 1.000000e+00 : f32
    %871 = vector.broadcast %cst_228 : f32 to vector<2x32xf32>
    %872 = arith.subf %871, %865 : vector<2x32xf32>
    %873 = arith.mulf %872, %870 : vector<2x32xf32>
    %874 = arith.mulf %865, %775 : vector<2x32xf32>
    %875 = arith.addf %873, %874 : vector<2x32xf32>
    %c2_229 = arith.constant 2 : index
    %c0_230 = arith.constant 0 : index
    %c0_231 = arith.constant 0 : index
    %876 = vector.load %arg9[%c2_229, %c0_230, %c0_231] : memref<3x64x128xbf16, #tpu.memory_space<vmem>>, vector<1x64x128xbf16>
    %877 = vector.shape_cast %876 : vector<1x64x128xbf16> to vector<64x128xbf16>
    %878 = tpu.concatenate %875, %799 in 1 : vector<2x32xf32>, vector<2x32xf32> -> vector<2x64xf32>
    %879 = arith.truncf %878 : vector<2x64xf32> to vector<2x64xbf16>
    %cst_232 = arith.constant dense<0.000000e+00> : vector<2x128xf32>
    %880 = tpu.matmul %879, %877, %cst_232 {dimension_numbers = #tpu.dot_dimension_numbers<[1], [0], [0], [1], [0, 0, 1, 1], [], []>} : vector<2x64xbf16>, vector<64x128xbf16>, vector<2x128xf32> -> vector<2x128xf32>
    %881 = arith.addf %880, %27 : vector<2x128xf32>
    %882 = vector.extract_strided_slice %881 {offsets = [0, 0], sizes = [2, 64], strides = [1, 1]} : vector<2x128xf32> to vector<2x64xf32>
    %883 = arith.negf %882 : vector<2x64xf32>
    %884 = math.exp %883 : vector<2x64xf32>
    %cst_233 = arith.constant 1.000000e+00 : f32
    %885 = vector.broadcast %cst_233 : f32 to vector<2x64xf32>
    %886 = arith.addf %885, %884 : vector<2x64xf32>
    %887 = arith.divf %885, %886 : vector<2x64xf32>
    %888 = vector.extract_strided_slice %887 {offsets = [0, 0], sizes = [2, 32], strides = [1, 1]} : vector<2x64xf32> to vector<2x32xf32>
    %889 = vector.extract_strided_slice %887 {offsets = [0, 32], sizes = [2, 32], strides = [1, 1]} : vector<2x64xf32> to vector<2x32xf32>
    %890 = vector.extract_strided_slice %881 {offsets = [0, 64], sizes = [2, 32], strides = [1, 1]} : vector<2x128xf32> to vector<2x32xf32>
    %891 = vector.extract_strided_slice %881 {offsets = [0, 96], sizes = [2, 32], strides = [1, 1]} : vector<2x128xf32> to vector<2x32xf32>
    %892 = arith.mulf %888, %891 : vector<2x32xf32>
    %893 = arith.addf %890, %892 : vector<2x32xf32>
    %894 = math.tanh %893 : vector<2x32xf32>
    %cst_234 = arith.constant 1.000000e+00 : f32
    %895 = vector.broadcast %cst_234 : f32 to vector<2x32xf32>
    %896 = arith.subf %895, %889 : vector<2x32xf32>
    %897 = arith.mulf %896, %894 : vector<2x32xf32>
    %898 = arith.mulf %889, %799 : vector<2x32xf32>
    %899 = arith.addf %897, %898 : vector<2x32xf32>
    %900 = arith.truncf %899 : vector<2x32xf32> to vector<2x32xbf16>
    %cst_235 = arith.constant dense<0.000000e+00> : vector<2x32xf32>
    %901 = tpu.matmul %900, %2, %cst_235 {dimension_numbers = #tpu.dot_dimension_numbers<[1], [0], [0], [1], [0, 0, 1, 1], [], []>} : vector<2x32xbf16>, vector<32x32xbf16>, vector<2x32xf32> -> vector<2x32xf32>
    %902 = arith.addf %901, %33 : vector<2x32xf32>
    %cst_236 = arith.constant 0.000000e+00 : f32
    %903 = vector.broadcast %cst_236 : f32 to vector<2x32xf32>
    %904 = arith.maximumf %902, %903 : vector<2x32xf32>
    %905 = arith.truncf %904 : vector<2x32xf32> to vector<2x32xbf16>
    %cst_237 = arith.constant dense<0.000000e+00> : vector<2x4xf32>
    %906 = tpu.matmul %905, %3, %cst_237 {dimension_numbers = #tpu.dot_dimension_numbers<[1], [0], [0], [1], [0, 0, 1, 1], [], []>} : vector<2x32xbf16>, vector<32x4xbf16>, vector<2x4xf32> -> vector<2x4xf32>
    %907 = arith.addf %906, %36 : vector<2x4xf32>
    %c2_238 = arith.constant 2 : index
    %c0_239 = arith.constant 0 : index
    %908 = vector.load %arg1[%c2_238, %c0_239] : memref<16x4xf32, #tpu.memory_space<vmem>>, vector<2x4xf32>
    %909 = arith.subf %907, %908 : vector<2x4xf32>
    %910 = arith.mulf %909, %909 : vector<2x4xf32>
    %911 = arith.addf %805, %910 : vector<2x4xf32>
    %912 = tpu.concatenate %907, %827 in 1 : vector<2x4xf32>, vector<2x32xf32> -> vector<2x36xf32>
    %913 = arith.truncf %912 : vector<2x36xf32> to vector<2x36xbf16>
    %cst_240 = arith.constant dense<0.000000e+00> : vector<2x128xf32>
    %914 = tpu.matmul %913, %1, %cst_240 {dimension_numbers = #tpu.dot_dimension_numbers<[1], [0], [0], [1], [0, 0, 1, 1], [], []>} : vector<2x36xbf16>, vector<36x128xbf16>, vector<2x128xf32> -> vector<2x128xf32>
    %915 = arith.addf %914, %30 : vector<2x128xf32>
    %916 = vector.extract_strided_slice %915 {offsets = [0, 0], sizes = [2, 64], strides = [1, 1]} : vector<2x128xf32> to vector<2x64xf32>
    %917 = arith.negf %916 : vector<2x64xf32>
    %918 = math.exp %917 : vector<2x64xf32>
    %cst_241 = arith.constant 1.000000e+00 : f32
    %919 = vector.broadcast %cst_241 : f32 to vector<2x64xf32>
    %920 = arith.addf %919, %918 : vector<2x64xf32>
    %921 = arith.divf %919, %920 : vector<2x64xf32>
    %922 = vector.extract_strided_slice %921 {offsets = [0, 0], sizes = [2, 32], strides = [1, 1]} : vector<2x64xf32> to vector<2x32xf32>
    %923 = vector.extract_strided_slice %921 {offsets = [0, 32], sizes = [2, 32], strides = [1, 1]} : vector<2x64xf32> to vector<2x32xf32>
    %924 = vector.extract_strided_slice %915 {offsets = [0, 64], sizes = [2, 32], strides = [1, 1]} : vector<2x128xf32> to vector<2x32xf32>
    %925 = vector.extract_strided_slice %915 {offsets = [0, 96], sizes = [2, 32], strides = [1, 1]} : vector<2x128xf32> to vector<2x32xf32>
    %926 = arith.mulf %922, %925 : vector<2x32xf32>
    %927 = arith.addf %924, %926 : vector<2x32xf32>
    %928 = math.tanh %927 : vector<2x32xf32>
    %cst_242 = arith.constant 1.000000e+00 : f32
    %929 = vector.broadcast %cst_242 : f32 to vector<2x32xf32>
    %930 = arith.subf %929, %923 : vector<2x32xf32>
    %931 = arith.mulf %930, %928 : vector<2x32xf32>
    %932 = arith.mulf %923, %827 : vector<2x32xf32>
    %933 = arith.addf %931, %932 : vector<2x32xf32>
    %c0_243 = arith.constant 0 : index
    %c0_244 = arith.constant 0 : index
    %c0_245 = arith.constant 0 : index
    %934 = vector.load %arg9[%c0_243, %c0_244, %c0_245] : memref<3x64x128xbf16, #tpu.memory_space<vmem>>, vector<1x64x128xbf16>
    %935 = vector.shape_cast %934 : vector<1x64x128xbf16> to vector<64x128xbf16>
    %936 = tpu.concatenate %933, %851 in 1 : vector<2x32xf32>, vector<2x32xf32> -> vector<2x64xf32>
    %937 = arith.truncf %936 : vector<2x64xf32> to vector<2x64xbf16>
    %cst_246 = arith.constant dense<0.000000e+00> : vector<2x128xf32>
    %938 = tpu.matmul %937, %935, %cst_246 {dimension_numbers = #tpu.dot_dimension_numbers<[1], [0], [0], [1], [0, 0, 1, 1], [], []>} : vector<2x64xbf16>, vector<64x128xbf16>, vector<2x128xf32> -> vector<2x128xf32>
    %939 = arith.addf %938, %19 : vector<2x128xf32>
    %940 = vector.extract_strided_slice %939 {offsets = [0, 0], sizes = [2, 64], strides = [1, 1]} : vector<2x128xf32> to vector<2x64xf32>
    %941 = arith.negf %940 : vector<2x64xf32>
    %942 = math.exp %941 : vector<2x64xf32>
    %cst_247 = arith.constant 1.000000e+00 : f32
    %943 = vector.broadcast %cst_247 : f32 to vector<2x64xf32>
    %944 = arith.addf %943, %942 : vector<2x64xf32>
    %945 = arith.divf %943, %944 : vector<2x64xf32>
    %946 = vector.extract_strided_slice %945 {offsets = [0, 0], sizes = [2, 32], strides = [1, 1]} : vector<2x64xf32> to vector<2x32xf32>
    %947 = vector.extract_strided_slice %945 {offsets = [0, 32], sizes = [2, 32], strides = [1, 1]} : vector<2x64xf32> to vector<2x32xf32>
    %948 = vector.extract_strided_slice %939 {offsets = [0, 64], sizes = [2, 32], strides = [1, 1]} : vector<2x128xf32> to vector<2x32xf32>
    %949 = vector.extract_strided_slice %939 {offsets = [0, 96], sizes = [2, 32], strides = [1, 1]} : vector<2x128xf32> to vector<2x32xf32>
    %950 = arith.mulf %946, %949 : vector<2x32xf32>
    %951 = arith.addf %948, %950 : vector<2x32xf32>
    %952 = math.tanh %951 : vector<2x32xf32>
    %cst_248 = arith.constant 1.000000e+00 : f32
    %953 = vector.broadcast %cst_248 : f32 to vector<2x32xf32>
    %954 = arith.subf %953, %947 : vector<2x32xf32>
    %955 = arith.mulf %954, %952 : vector<2x32xf32>
    %956 = arith.mulf %947, %851 : vector<2x32xf32>
    %957 = arith.addf %955, %956 : vector<2x32xf32>
    %c1_249 = arith.constant 1 : index
    %c0_250 = arith.constant 0 : index
    %c0_251 = arith.constant 0 : index
    %958 = vector.load %arg9[%c1_249, %c0_250, %c0_251] : memref<3x64x128xbf16, #tpu.memory_space<vmem>>, vector<1x64x128xbf16>
    %959 = vector.shape_cast %958 : vector<1x64x128xbf16> to vector<64x128xbf16>
    %960 = tpu.concatenate %957, %875 in 1 : vector<2x32xf32>, vector<2x32xf32> -> vector<2x64xf32>
    %961 = arith.truncf %960 : vector<2x64xf32> to vector<2x64xbf16>
    %cst_252 = arith.constant dense<0.000000e+00> : vector<2x128xf32>
    %962 = tpu.matmul %961, %959, %cst_252 {dimension_numbers = #tpu.dot_dimension_numbers<[1], [0], [0], [1], [0, 0, 1, 1], [], []>} : vector<2x64xbf16>, vector<64x128xbf16>, vector<2x128xf32> -> vector<2x128xf32>
    %963 = arith.addf %962, %23 : vector<2x128xf32>
    %964 = vector.extract_strided_slice %963 {offsets = [0, 0], sizes = [2, 64], strides = [1, 1]} : vector<2x128xf32> to vector<2x64xf32>
    %965 = arith.negf %964 : vector<2x64xf32>
    %966 = math.exp %965 : vector<2x64xf32>
    %cst_253 = arith.constant 1.000000e+00 : f32
    %967 = vector.broadcast %cst_253 : f32 to vector<2x64xf32>
    %968 = arith.addf %967, %966 : vector<2x64xf32>
    %969 = arith.divf %967, %968 : vector<2x64xf32>
    %970 = vector.extract_strided_slice %969 {offsets = [0, 0], sizes = [2, 32], strides = [1, 1]} : vector<2x64xf32> to vector<2x32xf32>
    %971 = vector.extract_strided_slice %969 {offsets = [0, 32], sizes = [2, 32], strides = [1, 1]} : vector<2x64xf32> to vector<2x32xf32>
    %972 = vector.extract_strided_slice %963 {offsets = [0, 64], sizes = [2, 32], strides = [1, 1]} : vector<2x128xf32> to vector<2x32xf32>
    %973 = vector.extract_strided_slice %963 {offsets = [0, 96], sizes = [2, 32], strides = [1, 1]} : vector<2x128xf32> to vector<2x32xf32>
    %974 = arith.mulf %970, %973 : vector<2x32xf32>
    %975 = arith.addf %972, %974 : vector<2x32xf32>
    %976 = math.tanh %975 : vector<2x32xf32>
    %cst_254 = arith.constant 1.000000e+00 : f32
    %977 = vector.broadcast %cst_254 : f32 to vector<2x32xf32>
    %978 = arith.subf %977, %971 : vector<2x32xf32>
    %979 = arith.mulf %978, %976 : vector<2x32xf32>
    %980 = arith.mulf %971, %875 : vector<2x32xf32>
    %981 = arith.addf %979, %980 : vector<2x32xf32>
    %c2_255 = arith.constant 2 : index
    %c0_256 = arith.constant 0 : index
    %c0_257 = arith.constant 0 : index
    %982 = vector.load %arg9[%c2_255, %c0_256, %c0_257] : memref<3x64x128xbf16, #tpu.memory_space<vmem>>, vector<1x64x128xbf16>
    %983 = vector.shape_cast %982 : vector<1x64x128xbf16> to vector<64x128xbf16>
    %984 = tpu.concatenate %981, %899 in 1 : vector<2x32xf32>, vector<2x32xf32> -> vector<2x64xf32>
    %985 = arith.truncf %984 : vector<2x64xf32> to vector<2x64xbf16>
    %cst_258 = arith.constant dense<0.000000e+00> : vector<2x128xf32>
    %986 = tpu.matmul %985, %983, %cst_258 {dimension_numbers = #tpu.dot_dimension_numbers<[1], [0], [0], [1], [0, 0, 1, 1], [], []>} : vector<2x64xbf16>, vector<64x128xbf16>, vector<2x128xf32> -> vector<2x128xf32>
    %987 = arith.addf %986, %27 : vector<2x128xf32>
    %988 = vector.extract_strided_slice %987 {offsets = [0, 0], sizes = [2, 64], strides = [1, 1]} : vector<2x128xf32> to vector<2x64xf32>
    %989 = arith.negf %988 : vector<2x64xf32>
    %990 = math.exp %989 : vector<2x64xf32>
    %cst_259 = arith.constant 1.000000e+00 : f32
    %991 = vector.broadcast %cst_259 : f32 to vector<2x64xf32>
    %992 = arith.addf %991, %990 : vector<2x64xf32>
    %993 = arith.divf %991, %992 : vector<2x64xf32>
    %994 = vector.extract_strided_slice %993 {offsets = [0, 0], sizes = [2, 32], strides = [1, 1]} : vector<2x64xf32> to vector<2x32xf32>
    %995 = vector.extract_strided_slice %993 {offsets = [0, 32], sizes = [2, 32], strides = [1, 1]} : vector<2x64xf32> to vector<2x32xf32>
    %996 = vector.extract_strided_slice %987 {offsets = [0, 64], sizes = [2, 32], strides = [1, 1]} : vector<2x128xf32> to vector<2x32xf32>
    %997 = vector.extract_strided_slice %987 {offsets = [0, 96], sizes = [2, 32], strides = [1, 1]} : vector<2x128xf32> to vector<2x32xf32>
    %998 = arith.mulf %994, %997 : vector<2x32xf32>
    %999 = arith.addf %996, %998 : vector<2x32xf32>
    %1000 = math.tanh %999 : vector<2x32xf32>
    %cst_260 = arith.constant 1.000000e+00 : f32
    %1001 = vector.broadcast %cst_260 : f32 to vector<2x32xf32>
    %1002 = arith.subf %1001, %995 : vector<2x32xf32>
    %1003 = arith.mulf %1002, %1000 : vector<2x32xf32>
    %1004 = arith.mulf %995, %899 : vector<2x32xf32>
    %1005 = arith.addf %1003, %1004 : vector<2x32xf32>
    %1006 = arith.truncf %1005 : vector<2x32xf32> to vector<2x32xbf16>
    %cst_261 = arith.constant dense<0.000000e+00> : vector<2x32xf32>
    %1007 = tpu.matmul %1006, %2, %cst_261 {dimension_numbers = #tpu.dot_dimension_numbers<[1], [0], [0], [1], [0, 0, 1, 1], [], []>} : vector<2x32xbf16>, vector<32x32xbf16>, vector<2x32xf32> -> vector<2x32xf32>
    %1008 = arith.addf %1007, %33 : vector<2x32xf32>
    %cst_262 = arith.constant 0.000000e+00 : f32
    %1009 = vector.broadcast %cst_262 : f32 to vector<2x32xf32>
    %1010 = arith.maximumf %1008, %1009 : vector<2x32xf32>
    %1011 = arith.truncf %1010 : vector<2x32xf32> to vector<2x32xbf16>
    %cst_263 = arith.constant dense<0.000000e+00> : vector<2x4xf32>
    %1012 = tpu.matmul %1011, %3, %cst_263 {dimension_numbers = #tpu.dot_dimension_numbers<[1], [0], [0], [1], [0, 0, 1, 1], [], []>} : vector<2x32xbf16>, vector<32x4xbf16>, vector<2x4xf32> -> vector<2x4xf32>
    %1013 = arith.addf %1012, %36 : vector<2x4xf32>
    %c4 = arith.constant 4 : index
    %c0_264 = arith.constant 0 : index
    %1014 = vector.load %arg1[%c4, %c0_264] : memref<16x4xf32, #tpu.memory_space<vmem>>, vector<2x4xf32>
    %1015 = arith.subf %1013, %1014 : vector<2x4xf32>
    %1016 = arith.mulf %1015, %1015 : vector<2x4xf32>
    %1017 = arith.addf %911, %1016 : vector<2x4xf32>
    %1018 = tpu.concatenate %1013, %933 in 1 : vector<2x4xf32>, vector<2x32xf32> -> vector<2x36xf32>
    %1019 = arith.truncf %1018 : vector<2x36xf32> to vector<2x36xbf16>
    %cst_265 = arith.constant dense<0.000000e+00> : vector<2x128xf32>
    %1020 = tpu.matmul %1019, %1, %cst_265 {dimension_numbers = #tpu.dot_dimension_numbers<[1], [0], [0], [1], [0, 0, 1, 1], [], []>} : vector<2x36xbf16>, vector<36x128xbf16>, vector<2x128xf32> -> vector<2x128xf32>
    %1021 = arith.addf %1020, %30 : vector<2x128xf32>
    %1022 = vector.extract_strided_slice %1021 {offsets = [0, 0], sizes = [2, 64], strides = [1, 1]} : vector<2x128xf32> to vector<2x64xf32>
    %1023 = arith.negf %1022 : vector<2x64xf32>
    %1024 = math.exp %1023 : vector<2x64xf32>
    %cst_266 = arith.constant 1.000000e+00 : f32
    %1025 = vector.broadcast %cst_266 : f32 to vector<2x64xf32>
    %1026 = arith.addf %1025, %1024 : vector<2x64xf32>
    %1027 = arith.divf %1025, %1026 : vector<2x64xf32>
    %1028 = vector.extract_strided_slice %1027 {offsets = [0, 0], sizes = [2, 32], strides = [1, 1]} : vector<2x64xf32> to vector<2x32xf32>
    %1029 = vector.extract_strided_slice %1027 {offsets = [0, 32], sizes = [2, 32], strides = [1, 1]} : vector<2x64xf32> to vector<2x32xf32>
    %1030 = vector.extract_strided_slice %1021 {offsets = [0, 64], sizes = [2, 32], strides = [1, 1]} : vector<2x128xf32> to vector<2x32xf32>
    %1031 = vector.extract_strided_slice %1021 {offsets = [0, 96], sizes = [2, 32], strides = [1, 1]} : vector<2x128xf32> to vector<2x32xf32>
    %1032 = arith.mulf %1028, %1031 : vector<2x32xf32>
    %1033 = arith.addf %1030, %1032 : vector<2x32xf32>
    %1034 = math.tanh %1033 : vector<2x32xf32>
    %cst_267 = arith.constant 1.000000e+00 : f32
    %1035 = vector.broadcast %cst_267 : f32 to vector<2x32xf32>
    %1036 = arith.subf %1035, %1029 : vector<2x32xf32>
    %1037 = arith.mulf %1036, %1034 : vector<2x32xf32>
    %1038 = arith.mulf %1029, %933 : vector<2x32xf32>
    %1039 = arith.addf %1037, %1038 : vector<2x32xf32>
    %c0_268 = arith.constant 0 : index
    %c0_269 = arith.constant 0 : index
    %c0_270 = arith.constant 0 : index
    %1040 = vector.load %arg9[%c0_268, %c0_269, %c0_270] : memref<3x64x128xbf16, #tpu.memory_space<vmem>>, vector<1x64x128xbf16>
    %1041 = vector.shape_cast %1040 : vector<1x64x128xbf16> to vector<64x128xbf16>
    %1042 = tpu.concatenate %1039, %957 in 1 : vector<2x32xf32>, vector<2x32xf32> -> vector<2x64xf32>
    %1043 = arith.truncf %1042 : vector<2x64xf32> to vector<2x64xbf16>
    %cst_271 = arith.constant dense<0.000000e+00> : vector<2x128xf32>
    %1044 = tpu.matmul %1043, %1041, %cst_271 {dimension_numbers = #tpu.dot_dimension_numbers<[1], [0], [0], [1], [0, 0, 1, 1], [], []>} : vector<2x64xbf16>, vector<64x128xbf16>, vector<2x128xf32> -> vector<2x128xf32>
    %1045 = arith.addf %1044, %19 : vector<2x128xf32>
    %1046 = vector.extract_strided_slice %1045 {offsets = [0, 0], sizes = [2, 64], strides = [1, 1]} : vector<2x128xf32> to vector<2x64xf32>
    %1047 = arith.negf %1046 : vector<2x64xf32>
    %1048 = math.exp %1047 : vector<2x64xf32>
    %cst_272 = arith.constant 1.000000e+00 : f32
    %1049 = vector.broadcast %cst_272 : f32 to vector<2x64xf32>
    %1050 = arith.addf %1049, %1048 : vector<2x64xf32>
    %1051 = arith.divf %1049, %1050 : vector<2x64xf32>
    %1052 = vector.extract_strided_slice %1051 {offsets = [0, 0], sizes = [2, 32], strides = [1, 1]} : vector<2x64xf32> to vector<2x32xf32>
    %1053 = vector.extract_strided_slice %1051 {offsets = [0, 32], sizes = [2, 32], strides = [1, 1]} : vector<2x64xf32> to vector<2x32xf32>
    %1054 = vector.extract_strided_slice %1045 {offsets = [0, 64], sizes = [2, 32], strides = [1, 1]} : vector<2x128xf32> to vector<2x32xf32>
    %1055 = vector.extract_strided_slice %1045 {offsets = [0, 96], sizes = [2, 32], strides = [1, 1]} : vector<2x128xf32> to vector<2x32xf32>
    %1056 = arith.mulf %1052, %1055 : vector<2x32xf32>
    %1057 = arith.addf %1054, %1056 : vector<2x32xf32>
    %1058 = math.tanh %1057 : vector<2x32xf32>
    %cst_273 = arith.constant 1.000000e+00 : f32
    %1059 = vector.broadcast %cst_273 : f32 to vector<2x32xf32>
    %1060 = arith.subf %1059, %1053 : vector<2x32xf32>
    %1061 = arith.mulf %1060, %1058 : vector<2x32xf32>
    %1062 = arith.mulf %1053, %957 : vector<2x32xf32>
    %1063 = arith.addf %1061, %1062 : vector<2x32xf32>
    %c1_274 = arith.constant 1 : index
    %c0_275 = arith.constant 0 : index
    %c0_276 = arith.constant 0 : index
    %1064 = vector.load %arg9[%c1_274, %c0_275, %c0_276] : memref<3x64x128xbf16, #tpu.memory_space<vmem>>, vector<1x64x128xbf16>
    %1065 = vector.shape_cast %1064 : vector<1x64x128xbf16> to vector<64x128xbf16>
    %1066 = tpu.concatenate %1063, %981 in 1 : vector<2x32xf32>, vector<2x32xf32> -> vector<2x64xf32>
    %1067 = arith.truncf %1066 : vector<2x64xf32> to vector<2x64xbf16>
    %cst_277 = arith.constant dense<0.000000e+00> : vector<2x128xf32>
    %1068 = tpu.matmul %1067, %1065, %cst_277 {dimension_numbers = #tpu.dot_dimension_numbers<[1], [0], [0], [1], [0, 0, 1, 1], [], []>} : vector<2x64xbf16>, vector<64x128xbf16>, vector<2x128xf32> -> vector<2x128xf32>
    %1069 = arith.addf %1068, %23 : vector<2x128xf32>
    %1070 = vector.extract_strided_slice %1069 {offsets = [0, 0], sizes = [2, 64], strides = [1, 1]} : vector<2x128xf32> to vector<2x64xf32>
    %1071 = arith.negf %1070 : vector<2x64xf32>
    %1072 = math.exp %1071 : vector<2x64xf32>
    %cst_278 = arith.constant 1.000000e+00 : f32
    %1073 = vector.broadcast %cst_278 : f32 to vector<2x64xf32>
    %1074 = arith.addf %1073, %1072 : vector<2x64xf32>
    %1075 = arith.divf %1073, %1074 : vector<2x64xf32>
    %1076 = vector.extract_strided_slice %1075 {offsets = [0, 0], sizes = [2, 32], strides = [1, 1]} : vector<2x64xf32> to vector<2x32xf32>
    %1077 = vector.extract_strided_slice %1075 {offsets = [0, 32], sizes = [2, 32], strides = [1, 1]} : vector<2x64xf32> to vector<2x32xf32>
    %1078 = vector.extract_strided_slice %1069 {offsets = [0, 64], sizes = [2, 32], strides = [1, 1]} : vector<2x128xf32> to vector<2x32xf32>
    %1079 = vector.extract_strided_slice %1069 {offsets = [0, 96], sizes = [2, 32], strides = [1, 1]} : vector<2x128xf32> to vector<2x32xf32>
    %1080 = arith.mulf %1076, %1079 : vector<2x32xf32>
    %1081 = arith.addf %1078, %1080 : vector<2x32xf32>
    %1082 = math.tanh %1081 : vector<2x32xf32>
    %cst_279 = arith.constant 1.000000e+00 : f32
    %1083 = vector.broadcast %cst_279 : f32 to vector<2x32xf32>
    %1084 = arith.subf %1083, %1077 : vector<2x32xf32>
    %1085 = arith.mulf %1084, %1082 : vector<2x32xf32>
    %1086 = arith.mulf %1077, %981 : vector<2x32xf32>
    %1087 = arith.addf %1085, %1086 : vector<2x32xf32>
    %c2_280 = arith.constant 2 : index
    %c0_281 = arith.constant 0 : index
    %c0_282 = arith.constant 0 : index
    %1088 = vector.load %arg9[%c2_280, %c0_281, %c0_282] : memref<3x64x128xbf16, #tpu.memory_space<vmem>>, vector<1x64x128xbf16>
    %1089 = vector.shape_cast %1088 : vector<1x64x128xbf16> to vector<64x128xbf16>
    %1090 = tpu.concatenate %1087, %1005 in 1 : vector<2x32xf32>, vector<2x32xf32> -> vector<2x64xf32>
    %1091 = arith.truncf %1090 : vector<2x64xf32> to vector<2x64xbf16>
    %cst_283 = arith.constant dense<0.000000e+00> : vector<2x128xf32>
    %1092 = tpu.matmul %1091, %1089, %cst_283 {dimension_numbers = #tpu.dot_dimension_numbers<[1], [0], [0], [1], [0, 0, 1, 1], [], []>} : vector<2x64xbf16>, vector<64x128xbf16>, vector<2x128xf32> -> vector<2x128xf32>
    %1093 = arith.addf %1092, %27 : vector<2x128xf32>
    %1094 = vector.extract_strided_slice %1093 {offsets = [0, 0], sizes = [2, 64], strides = [1, 1]} : vector<2x128xf32> to vector<2x64xf32>
    %1095 = arith.negf %1094 : vector<2x64xf32>
    %1096 = math.exp %1095 : vector<2x64xf32>
    %cst_284 = arith.constant 1.000000e+00 : f32
    %1097 = vector.broadcast %cst_284 : f32 to vector<2x64xf32>
    %1098 = arith.addf %1097, %1096 : vector<2x64xf32>
    %1099 = arith.divf %1097, %1098 : vector<2x64xf32>
    %1100 = vector.extract_strided_slice %1099 {offsets = [0, 0], sizes = [2, 32], strides = [1, 1]} : vector<2x64xf32> to vector<2x32xf32>
    %1101 = vector.extract_strided_slice %1099 {offsets = [0, 32], sizes = [2, 32], strides = [1, 1]} : vector<2x64xf32> to vector<2x32xf32>
    %1102 = vector.extract_strided_slice %1093 {offsets = [0, 64], sizes = [2, 32], strides = [1, 1]} : vector<2x128xf32> to vector<2x32xf32>
    %1103 = vector.extract_strided_slice %1093 {offsets = [0, 96], sizes = [2, 32], strides = [1, 1]} : vector<2x128xf32> to vector<2x32xf32>
    %1104 = arith.mulf %1100, %1103 : vector<2x32xf32>
    %1105 = arith.addf %1102, %1104 : vector<2x32xf32>
    %1106 = math.tanh %1105 : vector<2x32xf32>
    %cst_285 = arith.constant 1.000000e+00 : f32
    %1107 = vector.broadcast %cst_285 : f32 to vector<2x32xf32>
    %1108 = arith.subf %1107, %1101 : vector<2x32xf32>
    %1109 = arith.mulf %1108, %1106 : vector<2x32xf32>
    %1110 = arith.mulf %1101, %1005 : vector<2x32xf32>
    %1111 = arith.addf %1109, %1110 : vector<2x32xf32>
    %1112 = arith.truncf %1111 : vector<2x32xf32> to vector<2x32xbf16>
    %cst_286 = arith.constant dense<0.000000e+00> : vector<2x32xf32>
    %1113 = tpu.matmul %1112, %2, %cst_286 {dimension_numbers = #tpu.dot_dimension_numbers<[1], [0], [0], [1], [0, 0, 1, 1], [], []>} : vector<2x32xbf16>, vector<32x32xbf16>, vector<2x32xf32> -> vector<2x32xf32>
    %1114 = arith.addf %1113, %33 : vector<2x32xf32>
    %cst_287 = arith.constant 0.000000e+00 : f32
    %1115 = vector.broadcast %cst_287 : f32 to vector<2x32xf32>
    %1116 = arith.maximumf %1114, %1115 : vector<2x32xf32>
    %1117 = arith.truncf %1116 : vector<2x32xf32> to vector<2x32xbf16>
    %cst_288 = arith.constant dense<0.000000e+00> : vector<2x4xf32>
    %1118 = tpu.matmul %1117, %3, %cst_288 {dimension_numbers = #tpu.dot_dimension_numbers<[1], [0], [0], [1], [0, 0, 1, 1], [], []>} : vector<2x32xbf16>, vector<32x4xbf16>, vector<2x4xf32> -> vector<2x4xf32>
    %1119 = arith.addf %1118, %36 : vector<2x4xf32>
    %c6 = arith.constant 6 : index
    %c0_289 = arith.constant 0 : index
    %1120 = vector.load %arg1[%c6, %c0_289] : memref<16x4xf32, #tpu.memory_space<vmem>>, vector<2x4xf32>
    %1121 = arith.subf %1119, %1120 : vector<2x4xf32>
    %1122 = arith.mulf %1121, %1121 : vector<2x4xf32>
    %1123 = arith.addf %1017, %1122 : vector<2x4xf32>
    %1124 = tpu.concatenate %1119, %1039 in 1 : vector<2x4xf32>, vector<2x32xf32> -> vector<2x36xf32>
    %1125 = arith.truncf %1124 : vector<2x36xf32> to vector<2x36xbf16>
    %cst_290 = arith.constant dense<0.000000e+00> : vector<2x128xf32>
    %1126 = tpu.matmul %1125, %1, %cst_290 {dimension_numbers = #tpu.dot_dimension_numbers<[1], [0], [0], [1], [0, 0, 1, 1], [], []>} : vector<2x36xbf16>, vector<36x128xbf16>, vector<2x128xf32> -> vector<2x128xf32>
    %1127 = arith.addf %1126, %30 : vector<2x128xf32>
    %1128 = vector.extract_strided_slice %1127 {offsets = [0, 0], sizes = [2, 64], strides = [1, 1]} : vector<2x128xf32> to vector<2x64xf32>
    %1129 = arith.negf %1128 : vector<2x64xf32>
    %1130 = math.exp %1129 : vector<2x64xf32>
    %cst_291 = arith.constant 1.000000e+00 : f32
    %1131 = vector.broadcast %cst_291 : f32 to vector<2x64xf32>
    %1132 = arith.addf %1131, %1130 : vector<2x64xf32>
    %1133 = arith.divf %1131, %1132 : vector<2x64xf32>
    %1134 = vector.extract_strided_slice %1133 {offsets = [0, 0], sizes = [2, 32], strides = [1, 1]} : vector<2x64xf32> to vector<2x32xf32>
    %1135 = vector.extract_strided_slice %1133 {offsets = [0, 32], sizes = [2, 32], strides = [1, 1]} : vector<2x64xf32> to vector<2x32xf32>
    %1136 = vector.extract_strided_slice %1127 {offsets = [0, 64], sizes = [2, 32], strides = [1, 1]} : vector<2x128xf32> to vector<2x32xf32>
    %1137 = vector.extract_strided_slice %1127 {offsets = [0, 96], sizes = [2, 32], strides = [1, 1]} : vector<2x128xf32> to vector<2x32xf32>
    %1138 = arith.mulf %1134, %1137 : vector<2x32xf32>
    %1139 = arith.addf %1136, %1138 : vector<2x32xf32>
    %1140 = math.tanh %1139 : vector<2x32xf32>
    %cst_292 = arith.constant 1.000000e+00 : f32
    %1141 = vector.broadcast %cst_292 : f32 to vector<2x32xf32>
    %1142 = arith.subf %1141, %1135 : vector<2x32xf32>
    %1143 = arith.mulf %1142, %1140 : vector<2x32xf32>
    %1144 = arith.mulf %1135, %1039 : vector<2x32xf32>
    %1145 = arith.addf %1143, %1144 : vector<2x32xf32>
    %c0_293 = arith.constant 0 : index
    %c0_294 = arith.constant 0 : index
    %c0_295 = arith.constant 0 : index
    %1146 = vector.load %arg9[%c0_293, %c0_294, %c0_295] : memref<3x64x128xbf16, #tpu.memory_space<vmem>>, vector<1x64x128xbf16>
    %1147 = vector.shape_cast %1146 : vector<1x64x128xbf16> to vector<64x128xbf16>
    %1148 = tpu.concatenate %1145, %1063 in 1 : vector<2x32xf32>, vector<2x32xf32> -> vector<2x64xf32>
    %1149 = arith.truncf %1148 : vector<2x64xf32> to vector<2x64xbf16>
    %cst_296 = arith.constant dense<0.000000e+00> : vector<2x128xf32>
    %1150 = tpu.matmul %1149, %1147, %cst_296 {dimension_numbers = #tpu.dot_dimension_numbers<[1], [0], [0], [1], [0, 0, 1, 1], [], []>} : vector<2x64xbf16>, vector<64x128xbf16>, vector<2x128xf32> -> vector<2x128xf32>
    %1151 = arith.addf %1150, %19 : vector<2x128xf32>
    %1152 = vector.extract_strided_slice %1151 {offsets = [0, 0], sizes = [2, 64], strides = [1, 1]} : vector<2x128xf32> to vector<2x64xf32>
    %1153 = arith.negf %1152 : vector<2x64xf32>
    %1154 = math.exp %1153 : vector<2x64xf32>
    %cst_297 = arith.constant 1.000000e+00 : f32
    %1155 = vector.broadcast %cst_297 : f32 to vector<2x64xf32>
    %1156 = arith.addf %1155, %1154 : vector<2x64xf32>
    %1157 = arith.divf %1155, %1156 : vector<2x64xf32>
    %1158 = vector.extract_strided_slice %1157 {offsets = [0, 0], sizes = [2, 32], strides = [1, 1]} : vector<2x64xf32> to vector<2x32xf32>
    %1159 = vector.extract_strided_slice %1157 {offsets = [0, 32], sizes = [2, 32], strides = [1, 1]} : vector<2x64xf32> to vector<2x32xf32>
    %1160 = vector.extract_strided_slice %1151 {offsets = [0, 64], sizes = [2, 32], strides = [1, 1]} : vector<2x128xf32> to vector<2x32xf32>
    %1161 = vector.extract_strided_slice %1151 {offsets = [0, 96], sizes = [2, 32], strides = [1, 1]} : vector<2x128xf32> to vector<2x32xf32>
    %1162 = arith.mulf %1158, %1161 : vector<2x32xf32>
    %1163 = arith.addf %1160, %1162 : vector<2x32xf32>
    %1164 = math.tanh %1163 : vector<2x32xf32>
    %cst_298 = arith.constant 1.000000e+00 : f32
    %1165 = vector.broadcast %cst_298 : f32 to vector<2x32xf32>
    %1166 = arith.subf %1165, %1159 : vector<2x32xf32>
    %1167 = arith.mulf %1166, %1164 : vector<2x32xf32>
    %1168 = arith.mulf %1159, %1063 : vector<2x32xf32>
    %1169 = arith.addf %1167, %1168 : vector<2x32xf32>
    %c1_299 = arith.constant 1 : index
    %c0_300 = arith.constant 0 : index
    %c0_301 = arith.constant 0 : index
    %1170 = vector.load %arg9[%c1_299, %c0_300, %c0_301] : memref<3x64x128xbf16, #tpu.memory_space<vmem>>, vector<1x64x128xbf16>
    %1171 = vector.shape_cast %1170 : vector<1x64x128xbf16> to vector<64x128xbf16>
    %1172 = tpu.concatenate %1169, %1087 in 1 : vector<2x32xf32>, vector<2x32xf32> -> vector<2x64xf32>
    %1173 = arith.truncf %1172 : vector<2x64xf32> to vector<2x64xbf16>
    %cst_302 = arith.constant dense<0.000000e+00> : vector<2x128xf32>
    %1174 = tpu.matmul %1173, %1171, %cst_302 {dimension_numbers = #tpu.dot_dimension_numbers<[1], [0], [0], [1], [0, 0, 1, 1], [], []>} : vector<2x64xbf16>, vector<64x128xbf16>, vector<2x128xf32> -> vector<2x128xf32>
    %1175 = arith.addf %1174, %23 : vector<2x128xf32>
    %1176 = vector.extract_strided_slice %1175 {offsets = [0, 0], sizes = [2, 64], strides = [1, 1]} : vector<2x128xf32> to vector<2x64xf32>
    %1177 = arith.negf %1176 : vector<2x64xf32>
    %1178 = math.exp %1177 : vector<2x64xf32>
    %cst_303 = arith.constant 1.000000e+00 : f32
    %1179 = vector.broadcast %cst_303 : f32 to vector<2x64xf32>
    %1180 = arith.addf %1179, %1178 : vector<2x64xf32>
    %1181 = arith.divf %1179, %1180 : vector<2x64xf32>
    %1182 = vector.extract_strided_slice %1181 {offsets = [0, 0], sizes = [2, 32], strides = [1, 1]} : vector<2x64xf32> to vector<2x32xf32>
    %1183 = vector.extract_strided_slice %1181 {offsets = [0, 32], sizes = [2, 32], strides = [1, 1]} : vector<2x64xf32> to vector<2x32xf32>
    %1184 = vector.extract_strided_slice %1175 {offsets = [0, 64], sizes = [2, 32], strides = [1, 1]} : vector<2x128xf32> to vector<2x32xf32>
    %1185 = vector.extract_strided_slice %1175 {offsets = [0, 96], sizes = [2, 32], strides = [1, 1]} : vector<2x128xf32> to vector<2x32xf32>
    %1186 = arith.mulf %1182, %1185 : vector<2x32xf32>
    %1187 = arith.addf %1184, %1186 : vector<2x32xf32>
    %1188 = math.tanh %1187 : vector<2x32xf32>
    %cst_304 = arith.constant 1.000000e+00 : f32
    %1189 = vector.broadcast %cst_304 : f32 to vector<2x32xf32>
    %1190 = arith.subf %1189, %1183 : vector<2x32xf32>
    %1191 = arith.mulf %1190, %1188 : vector<2x32xf32>
    %1192 = arith.mulf %1183, %1087 : vector<2x32xf32>
    %1193 = arith.addf %1191, %1192 : vector<2x32xf32>
    %c2_305 = arith.constant 2 : index
    %c0_306 = arith.constant 0 : index
    %c0_307 = arith.constant 0 : index
    %1194 = vector.load %arg9[%c2_305, %c0_306, %c0_307] : memref<3x64x128xbf16, #tpu.memory_space<vmem>>, vector<1x64x128xbf16>
    %1195 = vector.shape_cast %1194 : vector<1x64x128xbf16> to vector<64x128xbf16>
    %1196 = tpu.concatenate %1193, %1111 in 1 : vector<2x32xf32>, vector<2x32xf32> -> vector<2x64xf32>
    %1197 = arith.truncf %1196 : vector<2x64xf32> to vector<2x64xbf16>
    %cst_308 = arith.constant dense<0.000000e+00> : vector<2x128xf32>
    %1198 = tpu.matmul %1197, %1195, %cst_308 {dimension_numbers = #tpu.dot_dimension_numbers<[1], [0], [0], [1], [0, 0, 1, 1], [], []>} : vector<2x64xbf16>, vector<64x128xbf16>, vector<2x128xf32> -> vector<2x128xf32>
    %1199 = arith.addf %1198, %27 : vector<2x128xf32>
    %1200 = vector.extract_strided_slice %1199 {offsets = [0, 0], sizes = [2, 64], strides = [1, 1]} : vector<2x128xf32> to vector<2x64xf32>
    %1201 = arith.negf %1200 : vector<2x64xf32>
    %1202 = math.exp %1201 : vector<2x64xf32>
    %cst_309 = arith.constant 1.000000e+00 : f32
    %1203 = vector.broadcast %cst_309 : f32 to vector<2x64xf32>
    %1204 = arith.addf %1203, %1202 : vector<2x64xf32>
    %1205 = arith.divf %1203, %1204 : vector<2x64xf32>
    %1206 = vector.extract_strided_slice %1205 {offsets = [0, 0], sizes = [2, 32], strides = [1, 1]} : vector<2x64xf32> to vector<2x32xf32>
    %1207 = vector.extract_strided_slice %1205 {offsets = [0, 32], sizes = [2, 32], strides = [1, 1]} : vector<2x64xf32> to vector<2x32xf32>
    %1208 = vector.extract_strided_slice %1199 {offsets = [0, 64], sizes = [2, 32], strides = [1, 1]} : vector<2x128xf32> to vector<2x32xf32>
    %1209 = vector.extract_strided_slice %1199 {offsets = [0, 96], sizes = [2, 32], strides = [1, 1]} : vector<2x128xf32> to vector<2x32xf32>
    %1210 = arith.mulf %1206, %1209 : vector<2x32xf32>
    %1211 = arith.addf %1208, %1210 : vector<2x32xf32>
    %1212 = math.tanh %1211 : vector<2x32xf32>
    %cst_310 = arith.constant 1.000000e+00 : f32
    %1213 = vector.broadcast %cst_310 : f32 to vector<2x32xf32>
    %1214 = arith.subf %1213, %1207 : vector<2x32xf32>
    %1215 = arith.mulf %1214, %1212 : vector<2x32xf32>
    %1216 = arith.mulf %1207, %1111 : vector<2x32xf32>
    %1217 = arith.addf %1215, %1216 : vector<2x32xf32>
    %1218 = arith.truncf %1217 : vector<2x32xf32> to vector<2x32xbf16>
    %cst_311 = arith.constant dense<0.000000e+00> : vector<2x32xf32>
    %1219 = tpu.matmul %1218, %2, %cst_311 {dimension_numbers = #tpu.dot_dimension_numbers<[1], [0], [0], [1], [0, 0, 1, 1], [], []>} : vector<2x32xbf16>, vector<32x32xbf16>, vector<2x32xf32> -> vector<2x32xf32>
    %1220 = arith.addf %1219, %33 : vector<2x32xf32>
    %cst_312 = arith.constant 0.000000e+00 : f32
    %1221 = vector.broadcast %cst_312 : f32 to vector<2x32xf32>
    %1222 = arith.maximumf %1220, %1221 : vector<2x32xf32>
    %1223 = arith.truncf %1222 : vector<2x32xf32> to vector<2x32xbf16>
    %cst_313 = arith.constant dense<0.000000e+00> : vector<2x4xf32>
    %1224 = tpu.matmul %1223, %3, %cst_313 {dimension_numbers = #tpu.dot_dimension_numbers<[1], [0], [0], [1], [0, 0, 1, 1], [], []>} : vector<2x32xbf16>, vector<32x4xbf16>, vector<2x4xf32> -> vector<2x4xf32>
    %1225 = arith.addf %1224, %36 : vector<2x4xf32>
    %c8 = arith.constant 8 : index
    %c0_314 = arith.constant 0 : index
    %1226 = vector.load %arg1[%c8, %c0_314] : memref<16x4xf32, #tpu.memory_space<vmem>>, vector<2x4xf32>
    %1227 = arith.subf %1225, %1226 : vector<2x4xf32>
    %1228 = arith.mulf %1227, %1227 : vector<2x4xf32>
    %1229 = arith.addf %1123, %1228 : vector<2x4xf32>
    %1230 = tpu.concatenate %1225, %1145 in 1 : vector<2x4xf32>, vector<2x32xf32> -> vector<2x36xf32>
    %1231 = arith.truncf %1230 : vector<2x36xf32> to vector<2x36xbf16>
    %cst_315 = arith.constant dense<0.000000e+00> : vector<2x128xf32>
    %1232 = tpu.matmul %1231, %1, %cst_315 {dimension_numbers = #tpu.dot_dimension_numbers<[1], [0], [0], [1], [0, 0, 1, 1], [], []>} : vector<2x36xbf16>, vector<36x128xbf16>, vector<2x128xf32> -> vector<2x128xf32>
    %1233 = arith.addf %1232, %30 : vector<2x128xf32>
    %1234 = vector.extract_strided_slice %1233 {offsets = [0, 0], sizes = [2, 64], strides = [1, 1]} : vector<2x128xf32> to vector<2x64xf32>
    %1235 = arith.negf %1234 : vector<2x64xf32>
    %1236 = math.exp %1235 : vector<2x64xf32>
    %cst_316 = arith.constant 1.000000e+00 : f32
    %1237 = vector.broadcast %cst_316 : f32 to vector<2x64xf32>
    %1238 = arith.addf %1237, %1236 : vector<2x64xf32>
    %1239 = arith.divf %1237, %1238 : vector<2x64xf32>
    %1240 = vector.extract_strided_slice %1239 {offsets = [0, 0], sizes = [2, 32], strides = [1, 1]} : vector<2x64xf32> to vector<2x32xf32>
    %1241 = vector.extract_strided_slice %1239 {offsets = [0, 32], sizes = [2, 32], strides = [1, 1]} : vector<2x64xf32> to vector<2x32xf32>
    %1242 = vector.extract_strided_slice %1233 {offsets = [0, 64], sizes = [2, 32], strides = [1, 1]} : vector<2x128xf32> to vector<2x32xf32>
    %1243 = vector.extract_strided_slice %1233 {offsets = [0, 96], sizes = [2, 32], strides = [1, 1]} : vector<2x128xf32> to vector<2x32xf32>
    %1244 = arith.mulf %1240, %1243 : vector<2x32xf32>
    %1245 = arith.addf %1242, %1244 : vector<2x32xf32>
    %1246 = math.tanh %1245 : vector<2x32xf32>
    %cst_317 = arith.constant 1.000000e+00 : f32
    %1247 = vector.broadcast %cst_317 : f32 to vector<2x32xf32>
    %1248 = arith.subf %1247, %1241 : vector<2x32xf32>
    %1249 = arith.mulf %1248, %1246 : vector<2x32xf32>
    %1250 = arith.mulf %1241, %1145 : vector<2x32xf32>
    %1251 = arith.addf %1249, %1250 : vector<2x32xf32>
    %c0_318 = arith.constant 0 : index
    %c0_319 = arith.constant 0 : index
    %c0_320 = arith.constant 0 : index
    %1252 = vector.load %arg9[%c0_318, %c0_319, %c0_320] : memref<3x64x128xbf16, #tpu.memory_space<vmem>>, vector<1x64x128xbf16>
    %1253 = vector.shape_cast %1252 : vector<1x64x128xbf16> to vector<64x128xbf16>
    %1254 = tpu.concatenate %1251, %1169 in 1 : vector<2x32xf32>, vector<2x32xf32> -> vector<2x64xf32>
    %1255 = arith.truncf %1254 : vector<2x64xf32> to vector<2x64xbf16>
    %cst_321 = arith.constant dense<0.000000e+00> : vector<2x128xf32>
    %1256 = tpu.matmul %1255, %1253, %cst_321 {dimension_numbers = #tpu.dot_dimension_numbers<[1], [0], [0], [1], [0, 0, 1, 1], [], []>} : vector<2x64xbf16>, vector<64x128xbf16>, vector<2x128xf32> -> vector<2x128xf32>
    %1257 = arith.addf %1256, %19 : vector<2x128xf32>
    %1258 = vector.extract_strided_slice %1257 {offsets = [0, 0], sizes = [2, 64], strides = [1, 1]} : vector<2x128xf32> to vector<2x64xf32>
    %1259 = arith.negf %1258 : vector<2x64xf32>
    %1260 = math.exp %1259 : vector<2x64xf32>
    %cst_322 = arith.constant 1.000000e+00 : f32
    %1261 = vector.broadcast %cst_322 : f32 to vector<2x64xf32>
    %1262 = arith.addf %1261, %1260 : vector<2x64xf32>
    %1263 = arith.divf %1261, %1262 : vector<2x64xf32>
    %1264 = vector.extract_strided_slice %1263 {offsets = [0, 0], sizes = [2, 32], strides = [1, 1]} : vector<2x64xf32> to vector<2x32xf32>
    %1265 = vector.extract_strided_slice %1263 {offsets = [0, 32], sizes = [2, 32], strides = [1, 1]} : vector<2x64xf32> to vector<2x32xf32>
    %1266 = vector.extract_strided_slice %1257 {offsets = [0, 64], sizes = [2, 32], strides = [1, 1]} : vector<2x128xf32> to vector<2x32xf32>
    %1267 = vector.extract_strided_slice %1257 {offsets = [0, 96], sizes = [2, 32], strides = [1, 1]} : vector<2x128xf32> to vector<2x32xf32>
    %1268 = arith.mulf %1264, %1267 : vector<2x32xf32>
    %1269 = arith.addf %1266, %1268 : vector<2x32xf32>
    %1270 = math.tanh %1269 : vector<2x32xf32>
    %cst_323 = arith.constant 1.000000e+00 : f32
    %1271 = vector.broadcast %cst_323 : f32 to vector<2x32xf32>
    %1272 = arith.subf %1271, %1265 : vector<2x32xf32>
    %1273 = arith.mulf %1272, %1270 : vector<2x32xf32>
    %1274 = arith.mulf %1265, %1169 : vector<2x32xf32>
    %1275 = arith.addf %1273, %1274 : vector<2x32xf32>
    %c1_324 = arith.constant 1 : index
    %c0_325 = arith.constant 0 : index
    %c0_326 = arith.constant 0 : index
    %1276 = vector.load %arg9[%c1_324, %c0_325, %c0_326] : memref<3x64x128xbf16, #tpu.memory_space<vmem>>, vector<1x64x128xbf16>
    %1277 = vector.shape_cast %1276 : vector<1x64x128xbf16> to vector<64x128xbf16>
    %1278 = tpu.concatenate %1275, %1193 in 1 : vector<2x32xf32>, vector<2x32xf32> -> vector<2x64xf32>
    %1279 = arith.truncf %1278 : vector<2x64xf32> to vector<2x64xbf16>
    %cst_327 = arith.constant dense<0.000000e+00> : vector<2x128xf32>
    %1280 = tpu.matmul %1279, %1277, %cst_327 {dimension_numbers = #tpu.dot_dimension_numbers<[1], [0], [0], [1], [0, 0, 1, 1], [], []>} : vector<2x64xbf16>, vector<64x128xbf16>, vector<2x128xf32> -> vector<2x128xf32>
    %1281 = arith.addf %1280, %23 : vector<2x128xf32>
    %1282 = vector.extract_strided_slice %1281 {offsets = [0, 0], sizes = [2, 64], strides = [1, 1]} : vector<2x128xf32> to vector<2x64xf32>
    %1283 = arith.negf %1282 : vector<2x64xf32>
    %1284 = math.exp %1283 : vector<2x64xf32>
    %cst_328 = arith.constant 1.000000e+00 : f32
    %1285 = vector.broadcast %cst_328 : f32 to vector<2x64xf32>
    %1286 = arith.addf %1285, %1284 : vector<2x64xf32>
    %1287 = arith.divf %1285, %1286 : vector<2x64xf32>
    %1288 = vector.extract_strided_slice %1287 {offsets = [0, 0], sizes = [2, 32], strides = [1, 1]} : vector<2x64xf32> to vector<2x32xf32>
    %1289 = vector.extract_strided_slice %1287 {offsets = [0, 32], sizes = [2, 32], strides = [1, 1]} : vector<2x64xf32> to vector<2x32xf32>
    %1290 = vector.extract_strided_slice %1281 {offsets = [0, 64], sizes = [2, 32], strides = [1, 1]} : vector<2x128xf32> to vector<2x32xf32>
    %1291 = vector.extract_strided_slice %1281 {offsets = [0, 96], sizes = [2, 32], strides = [1, 1]} : vector<2x128xf32> to vector<2x32xf32>
    %1292 = arith.mulf %1288, %1291 : vector<2x32xf32>
    %1293 = arith.addf %1290, %1292 : vector<2x32xf32>
    %1294 = math.tanh %1293 : vector<2x32xf32>
    %cst_329 = arith.constant 1.000000e+00 : f32
    %1295 = vector.broadcast %cst_329 : f32 to vector<2x32xf32>
    %1296 = arith.subf %1295, %1289 : vector<2x32xf32>
    %1297 = arith.mulf %1296, %1294 : vector<2x32xf32>
    %1298 = arith.mulf %1289, %1193 : vector<2x32xf32>
    %1299 = arith.addf %1297, %1298 : vector<2x32xf32>
    %c2_330 = arith.constant 2 : index
    %c0_331 = arith.constant 0 : index
    %c0_332 = arith.constant 0 : index
    %1300 = vector.load %arg9[%c2_330, %c0_331, %c0_332] : memref<3x64x128xbf16, #tpu.memory_space<vmem>>, vector<1x64x128xbf16>
    %1301 = vector.shape_cast %1300 : vector<1x64x128xbf16> to vector<64x128xbf16>
    %1302 = tpu.concatenate %1299, %1217 in 1 : vector<2x32xf32>, vector<2x32xf32> -> vector<2x64xf32>
    %1303 = arith.truncf %1302 : vector<2x64xf32> to vector<2x64xbf16>
    %cst_333 = arith.constant dense<0.000000e+00> : vector<2x128xf32>
    %1304 = tpu.matmul %1303, %1301, %cst_333 {dimension_numbers = #tpu.dot_dimension_numbers<[1], [0], [0], [1], [0, 0, 1, 1], [], []>} : vector<2x64xbf16>, vector<64x128xbf16>, vector<2x128xf32> -> vector<2x128xf32>
    %1305 = arith.addf %1304, %27 : vector<2x128xf32>
    %1306 = vector.extract_strided_slice %1305 {offsets = [0, 0], sizes = [2, 64], strides = [1, 1]} : vector<2x128xf32> to vector<2x64xf32>
    %1307 = arith.negf %1306 : vector<2x64xf32>
    %1308 = math.exp %1307 : vector<2x64xf32>
    %cst_334 = arith.constant 1.000000e+00 : f32
    %1309 = vector.broadcast %cst_334 : f32 to vector<2x64xf32>
    %1310 = arith.addf %1309, %1308 : vector<2x64xf32>
    %1311 = arith.divf %1309, %1310 : vector<2x64xf32>
    %1312 = vector.extract_strided_slice %1311 {offsets = [0, 0], sizes = [2, 32], strides = [1, 1]} : vector<2x64xf32> to vector<2x32xf32>
    %1313 = vector.extract_strided_slice %1311 {offsets = [0, 32], sizes = [2, 32], strides = [1, 1]} : vector<2x64xf32> to vector<2x32xf32>
    %1314 = vector.extract_strided_slice %1305 {offsets = [0, 64], sizes = [2, 32], strides = [1, 1]} : vector<2x128xf32> to vector<2x32xf32>
    %1315 = vector.extract_strided_slice %1305 {offsets = [0, 96], sizes = [2, 32], strides = [1, 1]} : vector<2x128xf32> to vector<2x32xf32>
    %1316 = arith.mulf %1312, %1315 : vector<2x32xf32>
    %1317 = arith.addf %1314, %1316 : vector<2x32xf32>
    %1318 = math.tanh %1317 : vector<2x32xf32>
    %cst_335 = arith.constant 1.000000e+00 : f32
    %1319 = vector.broadcast %cst_335 : f32 to vector<2x32xf32>
    %1320 = arith.subf %1319, %1313 : vector<2x32xf32>
    %1321 = arith.mulf %1320, %1318 : vector<2x32xf32>
    %1322 = arith.mulf %1313, %1217 : vector<2x32xf32>
    %1323 = arith.addf %1321, %1322 : vector<2x32xf32>
    %1324 = arith.truncf %1323 : vector<2x32xf32> to vector<2x32xbf16>
    %cst_336 = arith.constant dense<0.000000e+00> : vector<2x32xf32>
    %1325 = tpu.matmul %1324, %2, %cst_336 {dimension_numbers = #tpu.dot_dimension_numbers<[1], [0], [0], [1], [0, 0, 1, 1], [], []>} : vector<2x32xbf16>, vector<32x32xbf16>, vector<2x32xf32> -> vector<2x32xf32>
    %1326 = arith.addf %1325, %33 : vector<2x32xf32>
    %cst_337 = arith.constant 0.000000e+00 : f32
    %1327 = vector.broadcast %cst_337 : f32 to vector<2x32xf32>
    %1328 = arith.maximumf %1326, %1327 : vector<2x32xf32>
    %1329 = arith.truncf %1328 : vector<2x32xf32> to vector<2x32xbf16>
    %cst_338 = arith.constant dense<0.000000e+00> : vector<2x4xf32>
    %1330 = tpu.matmul %1329, %3, %cst_338 {dimension_numbers = #tpu.dot_dimension_numbers<[1], [0], [0], [1], [0, 0, 1, 1], [], []>} : vector<2x32xbf16>, vector<32x4xbf16>, vector<2x4xf32> -> vector<2x4xf32>
    %1331 = arith.addf %1330, %36 : vector<2x4xf32>
    %c10 = arith.constant 10 : index
    %c0_339 = arith.constant 0 : index
    %1332 = vector.load %arg1[%c10, %c0_339] : memref<16x4xf32, #tpu.memory_space<vmem>>, vector<2x4xf32>
    %1333 = arith.subf %1331, %1332 : vector<2x4xf32>
    %1334 = arith.mulf %1333, %1333 : vector<2x4xf32>
    %1335 = arith.addf %1229, %1334 : vector<2x4xf32>
    %1336 = tpu.concatenate %1331, %1251 in 1 : vector<2x4xf32>, vector<2x32xf32> -> vector<2x36xf32>
    %1337 = arith.truncf %1336 : vector<2x36xf32> to vector<2x36xbf16>
    %cst_340 = arith.constant dense<0.000000e+00> : vector<2x128xf32>
    %1338 = tpu.matmul %1337, %1, %cst_340 {dimension_numbers = #tpu.dot_dimension_numbers<[1], [0], [0], [1], [0, 0, 1, 1], [], []>} : vector<2x36xbf16>, vector<36x128xbf16>, vector<2x128xf32> -> vector<2x128xf32>
    %1339 = arith.addf %1338, %30 : vector<2x128xf32>
    %1340 = vector.extract_strided_slice %1339 {offsets = [0, 0], sizes = [2, 64], strides = [1, 1]} : vector<2x128xf32> to vector<2x64xf32>
    %1341 = arith.negf %1340 : vector<2x64xf32>
    %1342 = math.exp %1341 : vector<2x64xf32>
    %cst_341 = arith.constant 1.000000e+00 : f32
    %1343 = vector.broadcast %cst_341 : f32 to vector<2x64xf32>
    %1344 = arith.addf %1343, %1342 : vector<2x64xf32>
    %1345 = arith.divf %1343, %1344 : vector<2x64xf32>
    %1346 = vector.extract_strided_slice %1345 {offsets = [0, 0], sizes = [2, 32], strides = [1, 1]} : vector<2x64xf32> to vector<2x32xf32>
    %1347 = vector.extract_strided_slice %1345 {offsets = [0, 32], sizes = [2, 32], strides = [1, 1]} : vector<2x64xf32> to vector<2x32xf32>
    %1348 = vector.extract_strided_slice %1339 {offsets = [0, 64], sizes = [2, 32], strides = [1, 1]} : vector<2x128xf32> to vector<2x32xf32>
    %1349 = vector.extract_strided_slice %1339 {offsets = [0, 96], sizes = [2, 32], strides = [1, 1]} : vector<2x128xf32> to vector<2x32xf32>
    %1350 = arith.mulf %1346, %1349 : vector<2x32xf32>
    %1351 = arith.addf %1348, %1350 : vector<2x32xf32>
    %1352 = math.tanh %1351 : vector<2x32xf32>
    %cst_342 = arith.constant 1.000000e+00 : f32
    %1353 = vector.broadcast %cst_342 : f32 to vector<2x32xf32>
    %1354 = arith.subf %1353, %1347 : vector<2x32xf32>
    %1355 = arith.mulf %1354, %1352 : vector<2x32xf32>
    %1356 = arith.mulf %1347, %1251 : vector<2x32xf32>
    %1357 = arith.addf %1355, %1356 : vector<2x32xf32>
    %c0_343 = arith.constant 0 : index
    %c0_344 = arith.constant 0 : index
    %c0_345 = arith.constant 0 : index
    %1358 = vector.load %arg9[%c0_343, %c0_344, %c0_345] : memref<3x64x128xbf16, #tpu.memory_space<vmem>>, vector<1x64x128xbf16>
    %1359 = vector.shape_cast %1358 : vector<1x64x128xbf16> to vector<64x128xbf16>
    %1360 = tpu.concatenate %1357, %1275 in 1 : vector<2x32xf32>, vector<2x32xf32> -> vector<2x64xf32>
    %1361 = arith.truncf %1360 : vector<2x64xf32> to vector<2x64xbf16>
    %cst_346 = arith.constant dense<0.000000e+00> : vector<2x128xf32>
    %1362 = tpu.matmul %1361, %1359, %cst_346 {dimension_numbers = #tpu.dot_dimension_numbers<[1], [0], [0], [1], [0, 0, 1, 1], [], []>} : vector<2x64xbf16>, vector<64x128xbf16>, vector<2x128xf32> -> vector<2x128xf32>
    %1363 = arith.addf %1362, %19 : vector<2x128xf32>
    %1364 = vector.extract_strided_slice %1363 {offsets = [0, 0], sizes = [2, 64], strides = [1, 1]} : vector<2x128xf32> to vector<2x64xf32>
    %1365 = arith.negf %1364 : vector<2x64xf32>
    %1366 = math.exp %1365 : vector<2x64xf32>
    %cst_347 = arith.constant 1.000000e+00 : f32
    %1367 = vector.broadcast %cst_347 : f32 to vector<2x64xf32>
    %1368 = arith.addf %1367, %1366 : vector<2x64xf32>
    %1369 = arith.divf %1367, %1368 : vector<2x64xf32>
    %1370 = vector.extract_strided_slice %1369 {offsets = [0, 0], sizes = [2, 32], strides = [1, 1]} : vector<2x64xf32> to vector<2x32xf32>
    %1371 = vector.extract_strided_slice %1369 {offsets = [0, 32], sizes = [2, 32], strides = [1, 1]} : vector<2x64xf32> to vector<2x32xf32>
    %1372 = vector.extract_strided_slice %1363 {offsets = [0, 64], sizes = [2, 32], strides = [1, 1]} : vector<2x128xf32> to vector<2x32xf32>
    %1373 = vector.extract_strided_slice %1363 {offsets = [0, 96], sizes = [2, 32], strides = [1, 1]} : vector<2x128xf32> to vector<2x32xf32>
    %1374 = arith.mulf %1370, %1373 : vector<2x32xf32>
    %1375 = arith.addf %1372, %1374 : vector<2x32xf32>
    %1376 = math.tanh %1375 : vector<2x32xf32>
    %cst_348 = arith.constant 1.000000e+00 : f32
    %1377 = vector.broadcast %cst_348 : f32 to vector<2x32xf32>
    %1378 = arith.subf %1377, %1371 : vector<2x32xf32>
    %1379 = arith.mulf %1378, %1376 : vector<2x32xf32>
    %1380 = arith.mulf %1371, %1275 : vector<2x32xf32>
    %1381 = arith.addf %1379, %1380 : vector<2x32xf32>
    %c1_349 = arith.constant 1 : index
    %c0_350 = arith.constant 0 : index
    %c0_351 = arith.constant 0 : index
    %1382 = vector.load %arg9[%c1_349, %c0_350, %c0_351] : memref<3x64x128xbf16, #tpu.memory_space<vmem>>, vector<1x64x128xbf16>
    %1383 = vector.shape_cast %1382 : vector<1x64x128xbf16> to vector<64x128xbf16>
    %1384 = tpu.concatenate %1381, %1299 in 1 : vector<2x32xf32>, vector<2x32xf32> -> vector<2x64xf32>
    %1385 = arith.truncf %1384 : vector<2x64xf32> to vector<2x64xbf16>
    %cst_352 = arith.constant dense<0.000000e+00> : vector<2x128xf32>
    %1386 = tpu.matmul %1385, %1383, %cst_352 {dimension_numbers = #tpu.dot_dimension_numbers<[1], [0], [0], [1], [0, 0, 1, 1], [], []>} : vector<2x64xbf16>, vector<64x128xbf16>, vector<2x128xf32> -> vector<2x128xf32>
    %1387 = arith.addf %1386, %23 : vector<2x128xf32>
    %1388 = vector.extract_strided_slice %1387 {offsets = [0, 0], sizes = [2, 64], strides = [1, 1]} : vector<2x128xf32> to vector<2x64xf32>
    %1389 = arith.negf %1388 : vector<2x64xf32>
    %1390 = math.exp %1389 : vector<2x64xf32>
    %cst_353 = arith.constant 1.000000e+00 : f32
    %1391 = vector.broadcast %cst_353 : f32 to vector<2x64xf32>
    %1392 = arith.addf %1391, %1390 : vector<2x64xf32>
    %1393 = arith.divf %1391, %1392 : vector<2x64xf32>
    %1394 = vector.extract_strided_slice %1393 {offsets = [0, 0], sizes = [2, 32], strides = [1, 1]} : vector<2x64xf32> to vector<2x32xf32>
    %1395 = vector.extract_strided_slice %1393 {offsets = [0, 32], sizes = [2, 32], strides = [1, 1]} : vector<2x64xf32> to vector<2x32xf32>
    %1396 = vector.extract_strided_slice %1387 {offsets = [0, 64], sizes = [2, 32], strides = [1, 1]} : vector<2x128xf32> to vector<2x32xf32>
    %1397 = vector.extract_strided_slice %1387 {offsets = [0, 96], sizes = [2, 32], strides = [1, 1]} : vector<2x128xf32> to vector<2x32xf32>
    %1398 = arith.mulf %1394, %1397 : vector<2x32xf32>
    %1399 = arith.addf %1396, %1398 : vector<2x32xf32>
    %1400 = math.tanh %1399 : vector<2x32xf32>
    %cst_354 = arith.constant 1.000000e+00 : f32
    %1401 = vector.broadcast %cst_354 : f32 to vector<2x32xf32>
    %1402 = arith.subf %1401, %1395 : vector<2x32xf32>
    %1403 = arith.mulf %1402, %1400 : vector<2x32xf32>
    %1404 = arith.mulf %1395, %1299 : vector<2x32xf32>
    %1405 = arith.addf %1403, %1404 : vector<2x32xf32>
    %c2_355 = arith.constant 2 : index
    %c0_356 = arith.constant 0 : index
    %c0_357 = arith.constant 0 : index
    %1406 = vector.load %arg9[%c2_355, %c0_356, %c0_357] : memref<3x64x128xbf16, #tpu.memory_space<vmem>>, vector<1x64x128xbf16>
    %1407 = vector.shape_cast %1406 : vector<1x64x128xbf16> to vector<64x128xbf16>
    %1408 = tpu.concatenate %1405, %1323 in 1 : vector<2x32xf32>, vector<2x32xf32> -> vector<2x64xf32>
    %1409 = arith.truncf %1408 : vector<2x64xf32> to vector<2x64xbf16>
    %cst_358 = arith.constant dense<0.000000e+00> : vector<2x128xf32>
    %1410 = tpu.matmul %1409, %1407, %cst_358 {dimension_numbers = #tpu.dot_dimension_numbers<[1], [0], [0], [1], [0, 0, 1, 1], [], []>} : vector<2x64xbf16>, vector<64x128xbf16>, vector<2x128xf32> -> vector<2x128xf32>
    %1411 = arith.addf %1410, %27 : vector<2x128xf32>
    %1412 = vector.extract_strided_slice %1411 {offsets = [0, 0], sizes = [2, 64], strides = [1, 1]} : vector<2x128xf32> to vector<2x64xf32>
    %1413 = arith.negf %1412 : vector<2x64xf32>
    %1414 = math.exp %1413 : vector<2x64xf32>
    %cst_359 = arith.constant 1.000000e+00 : f32
    %1415 = vector.broadcast %cst_359 : f32 to vector<2x64xf32>
    %1416 = arith.addf %1415, %1414 : vector<2x64xf32>
    %1417 = arith.divf %1415, %1416 : vector<2x64xf32>
    %1418 = vector.extract_strided_slice %1417 {offsets = [0, 0], sizes = [2, 32], strides = [1, 1]} : vector<2x64xf32> to vector<2x32xf32>
    %1419 = vector.extract_strided_slice %1417 {offsets = [0, 32], sizes = [2, 32], strides = [1, 1]} : vector<2x64xf32> to vector<2x32xf32>
    %1420 = vector.extract_strided_slice %1411 {offsets = [0, 64], sizes = [2, 32], strides = [1, 1]} : vector<2x128xf32> to vector<2x32xf32>
    %1421 = vector.extract_strided_slice %1411 {offsets = [0, 96], sizes = [2, 32], strides = [1, 1]} : vector<2x128xf32> to vector<2x32xf32>
    %1422 = arith.mulf %1418, %1421 : vector<2x32xf32>
    %1423 = arith.addf %1420, %1422 : vector<2x32xf32>
    %1424 = math.tanh %1423 : vector<2x32xf32>
    %cst_360 = arith.constant 1.000000e+00 : f32
    %1425 = vector.broadcast %cst_360 : f32 to vector<2x32xf32>
    %1426 = arith.subf %1425, %1419 : vector<2x32xf32>
    %1427 = arith.mulf %1426, %1424 : vector<2x32xf32>
    %1428 = arith.mulf %1419, %1323 : vector<2x32xf32>
    %1429 = arith.addf %1427, %1428 : vector<2x32xf32>
    %1430 = arith.truncf %1429 : vector<2x32xf32> to vector<2x32xbf16>
    %cst_361 = arith.constant dense<0.000000e+00> : vector<2x32xf32>
    %1431 = tpu.matmul %1430, %2, %cst_361 {dimension_numbers = #tpu.dot_dimension_numbers<[1], [0], [0], [1], [0, 0, 1, 1], [], []>} : vector<2x32xbf16>, vector<32x32xbf16>, vector<2x32xf32> -> vector<2x32xf32>
    %1432 = arith.addf %1431, %33 : vector<2x32xf32>
    %cst_362 = arith.constant 0.000000e+00 : f32
    %1433 = vector.broadcast %cst_362 : f32 to vector<2x32xf32>
    %1434 = arith.maximumf %1432, %1433 : vector<2x32xf32>
    %1435 = arith.truncf %1434 : vector<2x32xf32> to vector<2x32xbf16>
    %cst_363 = arith.constant dense<0.000000e+00> : vector<2x4xf32>
    %1436 = tpu.matmul %1435, %3, %cst_363 {dimension_numbers = #tpu.dot_dimension_numbers<[1], [0], [0], [1], [0, 0, 1, 1], [], []>} : vector<2x32xbf16>, vector<32x4xbf16>, vector<2x4xf32> -> vector<2x4xf32>
    %1437 = arith.addf %1436, %36 : vector<2x4xf32>
    %c12 = arith.constant 12 : index
    %c0_364 = arith.constant 0 : index
    %1438 = vector.load %arg1[%c12, %c0_364] : memref<16x4xf32, #tpu.memory_space<vmem>>, vector<2x4xf32>
    %1439 = arith.subf %1437, %1438 : vector<2x4xf32>
    %1440 = arith.mulf %1439, %1439 : vector<2x4xf32>
    %1441 = arith.addf %1335, %1440 : vector<2x4xf32>
    %1442 = tpu.concatenate %1437, %1357 in 1 : vector<2x4xf32>, vector<2x32xf32> -> vector<2x36xf32>
    %1443 = arith.truncf %1442 : vector<2x36xf32> to vector<2x36xbf16>
    %cst_365 = arith.constant dense<0.000000e+00> : vector<2x128xf32>
    %1444 = tpu.matmul %1443, %1, %cst_365 {dimension_numbers = #tpu.dot_dimension_numbers<[1], [0], [0], [1], [0, 0, 1, 1], [], []>} : vector<2x36xbf16>, vector<36x128xbf16>, vector<2x128xf32> -> vector<2x128xf32>
    %1445 = arith.addf %1444, %30 : vector<2x128xf32>
    %1446 = vector.extract_strided_slice %1445 {offsets = [0, 0], sizes = [2, 64], strides = [1, 1]} : vector<2x128xf32> to vector<2x64xf32>
    %1447 = arith.negf %1446 : vector<2x64xf32>
    %1448 = math.exp %1447 : vector<2x64xf32>
    %cst_366 = arith.constant 1.000000e+00 : f32
    %1449 = vector.broadcast %cst_366 : f32 to vector<2x64xf32>
    %1450 = arith.addf %1449, %1448 : vector<2x64xf32>
    %1451 = arith.divf %1449, %1450 : vector<2x64xf32>
    %1452 = vector.extract_strided_slice %1451 {offsets = [0, 0], sizes = [2, 32], strides = [1, 1]} : vector<2x64xf32> to vector<2x32xf32>
    %1453 = vector.extract_strided_slice %1451 {offsets = [0, 32], sizes = [2, 32], strides = [1, 1]} : vector<2x64xf32> to vector<2x32xf32>
    %1454 = vector.extract_strided_slice %1445 {offsets = [0, 64], sizes = [2, 32], strides = [1, 1]} : vector<2x128xf32> to vector<2x32xf32>
    %1455 = vector.extract_strided_slice %1445 {offsets = [0, 96], sizes = [2, 32], strides = [1, 1]} : vector<2x128xf32> to vector<2x32xf32>
    %1456 = arith.mulf %1452, %1455 : vector<2x32xf32>
    %1457 = arith.addf %1454, %1456 : vector<2x32xf32>
    %1458 = math.tanh %1457 : vector<2x32xf32>
    %cst_367 = arith.constant 1.000000e+00 : f32
    %1459 = vector.broadcast %cst_367 : f32 to vector<2x32xf32>
    %1460 = arith.subf %1459, %1453 : vector<2x32xf32>
    %1461 = arith.mulf %1460, %1458 : vector<2x32xf32>
    %1462 = arith.mulf %1453, %1357 : vector<2x32xf32>
    %1463 = arith.addf %1461, %1462 : vector<2x32xf32>
    %c0_368 = arith.constant 0 : index
    %c0_369 = arith.constant 0 : index
    %c0_370 = arith.constant 0 : index
    %1464 = vector.load %arg9[%c0_368, %c0_369, %c0_370] : memref<3x64x128xbf16, #tpu.memory_space<vmem>>, vector<1x64x128xbf16>
    %1465 = vector.shape_cast %1464 : vector<1x64x128xbf16> to vector<64x128xbf16>
    %1466 = tpu.concatenate %1463, %1381 in 1 : vector<2x32xf32>, vector<2x32xf32> -> vector<2x64xf32>
    %1467 = arith.truncf %1466 : vector<2x64xf32> to vector<2x64xbf16>
    %cst_371 = arith.constant dense<0.000000e+00> : vector<2x128xf32>
    %1468 = tpu.matmul %1467, %1465, %cst_371 {dimension_numbers = #tpu.dot_dimension_numbers<[1], [0], [0], [1], [0, 0, 1, 1], [], []>} : vector<2x64xbf16>, vector<64x128xbf16>, vector<2x128xf32> -> vector<2x128xf32>
    %1469 = arith.addf %1468, %19 : vector<2x128xf32>
    %1470 = vector.extract_strided_slice %1469 {offsets = [0, 0], sizes = [2, 64], strides = [1, 1]} : vector<2x128xf32> to vector<2x64xf32>
    %1471 = arith.negf %1470 : vector<2x64xf32>
    %1472 = math.exp %1471 : vector<2x64xf32>
    %cst_372 = arith.constant 1.000000e+00 : f32
    %1473 = vector.broadcast %cst_372 : f32 to vector<2x64xf32>
    %1474 = arith.addf %1473, %1472 : vector<2x64xf32>
    %1475 = arith.divf %1473, %1474 : vector<2x64xf32>
    %1476 = vector.extract_strided_slice %1475 {offsets = [0, 0], sizes = [2, 32], strides = [1, 1]} : vector<2x64xf32> to vector<2x32xf32>
    %1477 = vector.extract_strided_slice %1475 {offsets = [0, 32], sizes = [2, 32], strides = [1, 1]} : vector<2x64xf32> to vector<2x32xf32>
    %1478 = vector.extract_strided_slice %1469 {offsets = [0, 64], sizes = [2, 32], strides = [1, 1]} : vector<2x128xf32> to vector<2x32xf32>
    %1479 = vector.extract_strided_slice %1469 {offsets = [0, 96], sizes = [2, 32], strides = [1, 1]} : vector<2x128xf32> to vector<2x32xf32>
    %1480 = arith.mulf %1476, %1479 : vector<2x32xf32>
    %1481 = arith.addf %1478, %1480 : vector<2x32xf32>
    %1482 = math.tanh %1481 : vector<2x32xf32>
    %cst_373 = arith.constant 1.000000e+00 : f32
    %1483 = vector.broadcast %cst_373 : f32 to vector<2x32xf32>
    %1484 = arith.subf %1483, %1477 : vector<2x32xf32>
    %1485 = arith.mulf %1484, %1482 : vector<2x32xf32>
    %1486 = arith.mulf %1477, %1381 : vector<2x32xf32>
    %1487 = arith.addf %1485, %1486 : vector<2x32xf32>
    %c1_374 = arith.constant 1 : index
    %c0_375 = arith.constant 0 : index
    %c0_376 = arith.constant 0 : index
    %1488 = vector.load %arg9[%c1_374, %c0_375, %c0_376] : memref<3x64x128xbf16, #tpu.memory_space<vmem>>, vector<1x64x128xbf16>
    %1489 = vector.shape_cast %1488 : vector<1x64x128xbf16> to vector<64x128xbf16>
    %1490 = tpu.concatenate %1487, %1405 in 1 : vector<2x32xf32>, vector<2x32xf32> -> vector<2x64xf32>
    %1491 = arith.truncf %1490 : vector<2x64xf32> to vector<2x64xbf16>
    %cst_377 = arith.constant dense<0.000000e+00> : vector<2x128xf32>
    %1492 = tpu.matmul %1491, %1489, %cst_377 {dimension_numbers = #tpu.dot_dimension_numbers<[1], [0], [0], [1], [0, 0, 1, 1], [], []>} : vector<2x64xbf16>, vector<64x128xbf16>, vector<2x128xf32> -> vector<2x128xf32>
    %1493 = arith.addf %1492, %23 : vector<2x128xf32>
    %1494 = vector.extract_strided_slice %1493 {offsets = [0, 0], sizes = [2, 64], strides = [1, 1]} : vector<2x128xf32> to vector<2x64xf32>
    %1495 = arith.negf %1494 : vector<2x64xf32>
    %1496 = math.exp %1495 : vector<2x64xf32>
    %cst_378 = arith.constant 1.000000e+00 : f32
    %1497 = vector.broadcast %cst_378 : f32 to vector<2x64xf32>
    %1498 = arith.addf %1497, %1496 : vector<2x64xf32>
    %1499 = arith.divf %1497, %1498 : vector<2x64xf32>
    %1500 = vector.extract_strided_slice %1499 {offsets = [0, 0], sizes = [2, 32], strides = [1, 1]} : vector<2x64xf32> to vector<2x32xf32>
    %1501 = vector.extract_strided_slice %1499 {offsets = [0, 32], sizes = [2, 32], strides = [1, 1]} : vector<2x64xf32> to vector<2x32xf32>
    %1502 = vector.extract_strided_slice %1493 {offsets = [0, 64], sizes = [2, 32], strides = [1, 1]} : vector<2x128xf32> to vector<2x32xf32>
    %1503 = vector.extract_strided_slice %1493 {offsets = [0, 96], sizes = [2, 32], strides = [1, 1]} : vector<2x128xf32> to vector<2x32xf32>
    %1504 = arith.mulf %1500, %1503 : vector<2x32xf32>
    %1505 = arith.addf %1502, %1504 : vector<2x32xf32>
    %1506 = math.tanh %1505 : vector<2x32xf32>
    %cst_379 = arith.constant 1.000000e+00 : f32
    %1507 = vector.broadcast %cst_379 : f32 to vector<2x32xf32>
    %1508 = arith.subf %1507, %1501 : vector<2x32xf32>
    %1509 = arith.mulf %1508, %1506 : vector<2x32xf32>
    %1510 = arith.mulf %1501, %1405 : vector<2x32xf32>
    %1511 = arith.addf %1509, %1510 : vector<2x32xf32>
    %c2_380 = arith.constant 2 : index
    %c0_381 = arith.constant 0 : index
    %c0_382 = arith.constant 0 : index
    %1512 = vector.load %arg9[%c2_380, %c0_381, %c0_382] : memref<3x64x128xbf16, #tpu.memory_space<vmem>>, vector<1x64x128xbf16>
    %1513 = vector.shape_cast %1512 : vector<1x64x128xbf16> to vector<64x128xbf16>
    %1514 = tpu.concatenate %1511, %1429 in 1 : vector<2x32xf32>, vector<2x32xf32> -> vector<2x64xf32>
    %1515 = arith.truncf %1514 : vector<2x64xf32> to vector<2x64xbf16>
    %cst_383 = arith.constant dense<0.000000e+00> : vector<2x128xf32>
    %1516 = tpu.matmul %1515, %1513, %cst_383 {dimension_numbers = #tpu.dot_dimension_numbers<[1], [0], [0], [1], [0, 0, 1, 1], [], []>} : vector<2x64xbf16>, vector<64x128xbf16>, vector<2x128xf32> -> vector<2x128xf32>
    %1517 = arith.addf %1516, %27 : vector<2x128xf32>
    %1518 = vector.extract_strided_slice %1517 {offsets = [0, 0], sizes = [2, 64], strides = [1, 1]} : vector<2x128xf32> to vector<2x64xf32>
    %1519 = arith.negf %1518 : vector<2x64xf32>
    %1520 = math.exp %1519 : vector<2x64xf32>
    %cst_384 = arith.constant 1.000000e+00 : f32
    %1521 = vector.broadcast %cst_384 : f32 to vector<2x64xf32>
    %1522 = arith.addf %1521, %1520 : vector<2x64xf32>
    %1523 = arith.divf %1521, %1522 : vector<2x64xf32>
    %1524 = vector.extract_strided_slice %1523 {offsets = [0, 0], sizes = [2, 32], strides = [1, 1]} : vector<2x64xf32> to vector<2x32xf32>
    %1525 = vector.extract_strided_slice %1523 {offsets = [0, 32], sizes = [2, 32], strides = [1, 1]} : vector<2x64xf32> to vector<2x32xf32>
    %1526 = vector.extract_strided_slice %1517 {offsets = [0, 64], sizes = [2, 32], strides = [1, 1]} : vector<2x128xf32> to vector<2x32xf32>
    %1527 = vector.extract_strided_slice %1517 {offsets = [0, 96], sizes = [2, 32], strides = [1, 1]} : vector<2x128xf32> to vector<2x32xf32>
    %1528 = arith.mulf %1524, %1527 : vector<2x32xf32>
    %1529 = arith.addf %1526, %1528 : vector<2x32xf32>
    %1530 = math.tanh %1529 : vector<2x32xf32>
    %cst_385 = arith.constant 1.000000e+00 : f32
    %1531 = vector.broadcast %cst_385 : f32 to vector<2x32xf32>
    %1532 = arith.subf %1531, %1525 : vector<2x32xf32>
    %1533 = arith.mulf %1532, %1530 : vector<2x32xf32>
    %1534 = arith.mulf %1525, %1429 : vector<2x32xf32>
    %1535 = arith.addf %1533, %1534 : vector<2x32xf32>
    %1536 = arith.truncf %1535 : vector<2x32xf32> to vector<2x32xbf16>
    %cst_386 = arith.constant dense<0.000000e+00> : vector<2x32xf32>
    %1537 = tpu.matmul %1536, %2, %cst_386 {dimension_numbers = #tpu.dot_dimension_numbers<[1], [0], [0], [1], [0, 0, 1, 1], [], []>} : vector<2x32xbf16>, vector<32x32xbf16>, vector<2x32xf32> -> vector<2x32xf32>
    %1538 = arith.addf %1537, %33 : vector<2x32xf32>
    %cst_387 = arith.constant 0.000000e+00 : f32
    %1539 = vector.broadcast %cst_387 : f32 to vector<2x32xf32>
    %1540 = arith.maximumf %1538, %1539 : vector<2x32xf32>
    %1541 = arith.truncf %1540 : vector<2x32xf32> to vector<2x32xbf16>
    %cst_388 = arith.constant dense<0.000000e+00> : vector<2x4xf32>
    %1542 = tpu.matmul %1541, %3, %cst_388 {dimension_numbers = #tpu.dot_dimension_numbers<[1], [0], [0], [1], [0, 0, 1, 1], [], []>} : vector<2x32xbf16>, vector<32x4xbf16>, vector<2x4xf32> -> vector<2x4xf32>
    %1543 = arith.addf %1542, %36 : vector<2x4xf32>
    %c14 = arith.constant 14 : index
    %c0_389 = arith.constant 0 : index
    %1544 = vector.load %arg1[%c14, %c0_389] : memref<16x4xf32, #tpu.memory_space<vmem>>, vector<2x4xf32>
    %1545 = arith.subf %1543, %1544 : vector<2x4xf32>
    %1546 = arith.mulf %1545, %1545 : vector<2x4xf32>
    %1547 = arith.addf %1441, %1546 : vector<2x4xf32>
    %1548 = tpu.concatenate %804, %907, %1013, %1119, %1225, %1331, %1437, %1543 in 0 : vector<2x4xf32>, vector<2x4xf32>, vector<2x4xf32>, vector<2x4xf32>, vector<2x4xf32>, vector<2x4xf32>, vector<2x4xf32>, vector<2x4xf32> -> vector<16x4xf32>
    %c0_390 = arith.constant 0 : index
    %c0_391 = arith.constant 0 : index
    %1549 = vector.load %arg17[%c0_390, %c0_391] : memref<16x4xf32, #tpu.memory_space<vmem>>, vector<16x4xf32>
    tpu.vector_store %arg17[%c0_390, %c0_391], %1548 {strides = array<i32>} : memref<16x4xf32, #tpu.memory_space<vmem>>, vector<16x4xf32>,
    %1550 = tpu.concatenate %1463, %1487, %1511, %1535 in 0 : vector<2x32xf32>, vector<2x32xf32>, vector<2x32xf32>, vector<2x32xf32> -> vector<8x32xf32>
    %c0_392 = arith.constant 0 : index
    %c0_393 = arith.constant 0 : index
    %1551 = vector.load %arg18[%c0_392, %c0_393] : memref<8x32xf32, #tpu.memory_space<vmem>>, vector<8x32xf32>
    tpu.vector_store %arg18[%c0_392, %c0_393], %1550 {strides = array<i32>} : memref<8x32xf32, #tpu.memory_space<vmem>>, vector<8x32xf32>,
    %1552 = vector.shape_cast %1547 : vector<2x4xf32> to vector<1x2x4xf32>
    %cst_394 = arith.constant dense<0.000000e+00> : vector<1xf32>
    %1553 = vector.multi_reduction <add>, %1552, %cst_394 [1, 2] : vector<1x2x4xf32> to vector<1xf32>
    %1554 = vector.shape_cast %1553 : vector<1xf32> to vector<1x1x1xf32>
    %1555 = vector.extract %1554[0, 0, 0] : f32 from vector<1x1x1xf32>
    %cst_395 = arith.constant 1.250000e-01 : f32
    %1556 = arith.mulf %1555, %cst_395 : f32
    %1557 = vector.broadcast %1556 : f32 to vector<1x1xf32>
    %c0_396 = arith.constant 0 : index
    %c0_397 = arith.constant 0 : index
    %1558 = vector.load %arg19[%c0_396, %c0_397] : memref<1x1xf32, #tpu.memory_space<vmem>>, vector<1x1xf32>
    tpu.vector_store %arg19[%c0_396, %c0_397], %1557 {strides = array<i32>} : memref<1x1xf32, #tpu.memory_space<vmem>>, vector<1x1xf32>,
    return
  }
}

</mosaic_0001>

<llo_original>
// kernel: tpu_custom_call.1
$region0: #{tpu_custom_call.1}
  #allocation0 [shape = 'u32[]', space=smem, size = 0x4, offset = 0x4, fixed_abs, tag = 'smem constant byte address 0x4 - core index']
  #allocation1 [shape = 'u32[144,128]{1,0:T(1,128)}', space=vmem, size = 0x12000, scoped, tag = 'internal scratch']
  %s0 = inlined_call_operand.vmem [shape: f32[16,4], index: 0, kind: input, shape index: {}]
  %s1 = inlined_call_operand.vmem [shape: f32[16,4], index: 1, kind: input, shape index: {}]
  %s2 = inlined_call_operand.vmem [shape: bf16[4,128], index: 2, kind: input, shape index: {}]
  %s3 = inlined_call_operand.vmem [shape: bf16[32,128], index: 3, kind: input, shape index: {}]
  %s4 = inlined_call_operand.vmem [shape: f32[1,128], index: 4, kind: input, shape index: {}]
  %s5 = inlined_call_operand.hbm [shape: bf16[3,64,128], index: 5, kind: input, shape index: {}]
  %s6 = inlined_call_operand.vmem [shape: f32[3,1,128], index: 6, kind: input, shape index: {}]
  %s7 = inlined_call_operand.vmem [shape: bf16[36,128], index: 7, kind: input, shape index: {}]
  %s8 = inlined_call_operand.vmem [shape: f32[1,128], index: 8, kind: input, shape index: {}]
  %s9 = inlined_call_operand.hbm [shape: bf16[3,64,128], index: 9, kind: input, shape index: {}]
  %s10 = inlined_call_operand.vmem [shape: f32[3,1,128], index: 10, kind: input, shape index: {}]
  %s11 = inlined_call_operand.vmem [shape: bf16[32,32], index: 11, kind: input, shape index: {}]
  %s12 = inlined_call_operand.vmem [shape: f32[1,32], index: 12, kind: input, shape index: {}]
  %s13 = inlined_call_operand.vmem [shape: bf16[32,4], index: 13, kind: input, shape index: {}]
  %s14 = inlined_call_operand.vmem [shape: f32[1,4], index: 14, kind: input, shape index: {}]
  %s15 = inlined_call_operand.hbm [shape: f32[16,32], index: 15, kind: output, shape index: {0}]
  %s16 = inlined_call_operand.hbm [shape: f32[8,32], index: 16, kind: output, shape index: {1}]
  %s17 = inlined_call_operand.vmem [shape: f32[16,4], index: 17, kind: output, shape index: {2}]
  %s18 = inlined_call_operand.hbm [shape: f32[8,32], index: 18, kind: output, shape index: {3}]
  %s19 = inlined_call_operand.hbm [shape: f32[1,1], index: 19, kind: output, shape index: {4}]
  %20 = xla_tuple %s15, %s16, %s17, %s18, %s19
  %s21 = sld [smem:[#allocation0]]
  $region110: #{tpu_custom_call.1} parent=0
    _
  %s23 = ssub.s32 1, %s21
  %s24 = scalar_select 0, %s23, %s21
  $region1: #{tpu_custom_call.1} parent=0
    #allocation2 [shape = 'u8[49152]{0}', space=vmem, size = 0xc000, scoped, tag = 'input window, operand 5, single buffered']
    #allocation3 [shape = 's32[1]{0}', space=sflag, size = 0x4, scoped, tag = 'scoped memory for tpu_custom_call.1']
    #allocation4 [shape = 's32[1]{0}', space=sflag, size = 0x4, scoped, tag = 'scoped memory for tpu_custom_call.1']
    #allocation5 [shape = 'u8[49152]{0}', space=vmem, size = 0xc000, scoped, tag = 'input window, operand 9, single buffered']
    #allocation6 [shape = 's32[1]{0}', space=sflag, size = 0x4, scoped, tag = 'scoped memory for tpu_custom_call.1']
    #allocation7 [shape = 'u8[8192]{0}', space=vmem, size = 0x2000, scoped, tag = 'output window, operand 0, single buffered']
    #allocation8 [shape = 'u8[4096]{0}', space=vmem, size = 0x1000, scoped, tag = 'output window, operand 1, single buffered']
    #allocation9 [shape = 's32[1]{0}', space=sflag, size = 0x4, scoped, tag = 'scoped memory for tpu_custom_call.1']
    #allocation10 [shape = 'u8[4096]{0}', space=vmem, size = 0x1000, scoped, tag = 'output window, operand 3, single buffered']
    #allocation11 [shape = 'u8[512]{0}', space=vmem, size = 0x400, scoped, tag = 'output window, operand 4, single buffered']
    #allocation12 [shape = 's32[1]{0}', space=sflag, size = 0x4, scoped, tag = 'scoped memory for tpu_custom_call.1']
    %25 = vsyncpa [#allocation3], 0
    %26 = vsyncpa [#allocation6], 0
    %27 = vsyncpa [#allocation4], 0
    %28 = vsyncpa [#allocation9], 0
    %29 = vsyncpa [#allocation12], 0
    // Predicated region
    $region2: #{tpu_custom_call.1} parent=1 // pred_check
      _
    $region3: #{tpu_custom_call.1} parent=1 // pred_check_branch
      %31 = sbr.rel (0) target = $region5
    $region4: #{tpu_custom_call.1} parent=1 // pred_region
      _
    $region5: #{tpu_custom_call.1} parent=1 // pred_fallthru
      _
    // Predicated region
    $region6: #{tpu_custom_call.1} parent=1 // pred_check
      _
    $region7: #{tpu_custom_call.1} parent=1 // pred_check_branch
      %33 = sbr.rel (0) target = $region9
    $region8: #{tpu_custom_call.1} parent=1 // pred_region
      _
    $region9: #{tpu_custom_call.1} parent=1 // pred_fallthru
      _
    // Predicated region
    $region10: #{tpu_custom_call.1} parent=1 // pred_check
      _
    $region11: #{tpu_custom_call.1} parent=1 // pred_check_branch
      %35 = sbr.rel (0) target = $region13
    $region12: #{tpu_custom_call.1} parent=1 // pred_region
      _
    $region13: #{tpu_custom_call.1} parent=1 // pred_fallthru
      _
    // Predicated region
    $region14: #{tpu_custom_call.1} parent=1 // pred_check
      _
    $region15: #{tpu_custom_call.1} parent=1 // pred_check_branch
      %37 = sbr.rel (0) target = $region17
    $region16: #{tpu_custom_call.1} parent=1 // pred_region
      _
    $region17: #{tpu_custom_call.1} parent=1 // pred_fallthru
      _
    // Predicated region
    $region18: #{tpu_custom_call.1} parent=1 // pred_check
      _
    $region19: #{tpu_custom_call.1} parent=1 // pred_check_branch
      %39 = sbr.rel (0) target = $region21
    $region20: #{tpu_custom_call.1} parent=1 // pred_region
      _
    $region21: #{tpu_custom_call.1} parent=1 // pred_fallthru
      _
    // Predicated region
    $region22: #{tpu_custom_call.1} parent=1 // pred_check
      _
    $region23: #{tpu_custom_call.1} parent=1 // pred_check_branch
      %41 = sbr.rel (0) target = $region25
    $region24: #{tpu_custom_call.1} parent=1 // pred_region
      %s43 = ssub.s32 1536, 1536
      %44 = vsyncadd [#allocation3], %s43
      %s45 = sshll.u32 [#allocation2], 4
      %s46 = int_to_ptr.vmem [resolvable:$true] %s45
      %51 = dma.hbm_to_vmem [thread:$0]  %s5, 1536, %s46, [#allocation3], 64, 64, 4
    $region25: #{tpu_custom_call.1} parent=1 // pred_fallthru
      _
    // Predicated region
    $region26: #{tpu_custom_call.1} parent=1 // pred_check
      _
    $region27: #{tpu_custom_call.1} parent=1 // pred_check_branch
      %53 = sbr.rel (0) target = $region29
    $region28: #{tpu_custom_call.1} parent=1 // pred_region
      _
    $region29: #{tpu_custom_call.1} parent=1 // pred_fallthru
      _
    // Predicated region
    $region30: #{tpu_custom_call.1} parent=1 // pred_check
      _
    $region31: #{tpu_custom_call.1} parent=1 // pred_check_branch
      %55 = sbr.rel (0) target = $region33
    $region32: #{tpu_custom_call.1} parent=1 // pred_region
      _
    $region33: #{tpu_custom_call.1} parent=1 // pred_fallthru
      _
    // Predicated region
    $region34: #{tpu_custom_call.1} parent=1 // pred_check
      _
    $region35: #{tpu_custom_call.1} parent=1 // pred_check_branch
      %57 = sbr.rel (0) target = $region37
    $region36: #{tpu_custom_call.1} parent=1 // pred_region
      _
    $region37: #{tpu_custom_call.1} parent=1 // pred_fallthru
      _
    // Predicated region
    $region38: #{tpu_custom_call.1} parent=1 // pred_check
      _
    $region39: #{tpu_custom_call.1} parent=1 // pred_check_branch
      %59 = sbr.rel (0) target = $region41
    $region40: #{tpu_custom_call.1} parent=1 // pred_region
      %s61 = ssub.s32 1536, 1536
      %62 = vsyncadd [#allocation6], %s61
      %s63 = sshll.u32 [#allocation5], 4
      %s64 = int_to_ptr.vmem [resolvable:$true] %s63
      %69 = dma.hbm_to_vmem [thread:$0]  %s9, 1536, %s64, [#allocation6], 64, 64, 4
    $region41: #{tpu_custom_call.1} parent=1 // pred_fallthru
      _
    // Predicated region
    $region42: #{tpu_custom_call.1} parent=1 // pred_check
      _
    $region43: #{tpu_custom_call.1} parent=1 // pred_check_branch
      %71 = sbr.rel (0) target = $region45
    $region44: #{tpu_custom_call.1} parent=1 // pred_region
      _
    $region45: #{tpu_custom_call.1} parent=1 // pred_fallthru
      _
    // Predicated region
    $region46: #{tpu_custom_call.1} parent=1 // pred_check
      _
    $region47: #{tpu_custom_call.1} parent=1 // pred_check_branch
      %73 = sbr.rel (0) target = $region49
    $region48: #{tpu_custom_call.1} parent=1 // pred_region
      _
    $region49: #{tpu_custom_call.1} parent=1 // pred_fallthru
      _
    // Predicated region
    $region50: #{tpu_custom_call.1} parent=1 // pred_check
      _
    $region51: #{tpu_custom_call.1} parent=1 // pred_check_branch
      %75 = sbr.rel (0) target = $region53
    $region52: #{tpu_custom_call.1} parent=1 // pred_region
      _
    $region53: #{tpu_custom_call.1} parent=1 // pred_fallthru
      _
    // Predicated region
    $region54: #{tpu_custom_call.1} parent=1 // pred_check
      _
    $region55: #{tpu_custom_call.1} parent=1 // pred_check_branch
      %77 = sbr.rel (0) target = $region57
    $region56: #{tpu_custom_call.1} parent=1 // pred_region
      _
    $region57: #{tpu_custom_call.1} parent=1 // pred_fallthru
      _
    // Predicated region
    $region58: #{tpu_custom_call.1} parent=1 // pred_check
      _
    $region59: #{tpu_custom_call.1} parent=1 // pred_check_branch
      %79 = sbr.rel (0) target = $region61
    $region60: #{tpu_custom_call.1} parent=1 // pred_region
      _
    $region61: #{tpu_custom_call.1} parent=1 // pred_fallthru
      _
    // Predicated region
    $region62: #{tpu_custom_call.1} parent=1 // pred_check
      _
    $region63: #{tpu_custom_call.1} parent=1 // pred_check_branch
      %81 = sbr.rel (0) target = $region65
    $region64: #{tpu_custom_call.1} parent=1 // pred_region
      %82 = dma.done [#allocation3], 1536
    $region65: #{tpu_custom_call.1} parent=1 // pred_fallthru
      _
    // Predicated region
    $region66: #{tpu_custom_call.1} parent=1 // pred_check
      _
    $region67: #{tpu_custom_call.1} parent=1 // pred_check_branch
      %84 = sbr.rel (0) target = $region69
    $region68: #{tpu_custom_call.1} parent=1 // pred_region
      %85 = dma.done [#allocation6], 1536
    $region69: #{tpu_custom_call.1} parent=1 // pred_fallthru
      _
    %v87 = vld [vmem:[%s3] sm:$0xf]
    %v88 = vld [vmem:[%s3 + $0x4] sm:$0xf]
    %v89 = vld [vmem:[%s3 + $0x8] sm:$0xf]
    %v90 = vld [vmem:[%s3 + $0xc] sm:$0xf]
    %v91 = vld [vmem:[%s7] sm:$0xf]
    %v92 = vld [vmem:[%s7 + $0x4] sm:$0xf]
    %v93 = vld [vmem:[%s7 + $0x8] sm:$0xf]
    %v94 = vld [vmem:[%s7 + $0xc] sm:$0xf]
    %v95 = vld [vmem:[%s7 + $0x10] sm:$0x3]
    %v96 = vld [vmem:[%s11] sm:$0xf]
    %v97 = vld [vmem:[%s11 + $0x4] sm:$0xf]
    %v98 = vld [vmem:[%s11 + $0x8] sm:$0xf]
    %v99 = vld [vmem:[%s11 + $0xc] sm:$0xf]
    %v100 = vld [vmem:[%s13] sm:$0xf]
    %v101 = vld [vmem:[%s13 + $0x4] sm:$0xf]
    %v102 = vld [vmem:[%s13 + $0x8] sm:$0xf]
    %v103 = vld [vmem:[%s13 + $0xc] sm:$0xf]
    %v104 = vld [vmem:[%s6] sm:$0x1]
    %v106 = vlaneseq
    %v107 = vshrl.u32 %v106, 7
    %v108 = vsub.s32 0, %v107
    %v109 = vrot.slane %v104, %v108
    %s111 = scalar_lea.vmem %s6, 1
    %v112 = vld [vmem:[%s111] sm:$0x1]
    %v114 = vlaneseq
    %v115 = vshrl.u32 %v114, 7
    %v116 = vsub.s32 0, %v115
    %v117 = vrot.slane %v112, %v116
    %s119 = scalar_lea.vmem %s6, 2
    %v120 = vld [vmem:[%s119] sm:$0x1]
    %v122 = vlaneseq
    %v123 = vshrl.u32 %v122, 7
    %v124 = vsub.s32 0, %v123
    %v125 = vrot.slane %v120, %v124
    %v127 = vld [vmem:[%s10] sm:$0x1]
    %v129 = vlaneseq
    %v130 = vshrl.u32 %v129, 7
    %v131 = vsub.s32 0, %v130
    %v132 = vrot.slane %v127, %v131
    %s134 = scalar_lea.vmem %s10, 1
    %v135 = vld [vmem:[%s134] sm:$0x1]
    %v137 = vlaneseq
    %v138 = vshrl.u32 %v137, 7
    %v139 = vsub.s32 0, %v138
    %v140 = vrot.slane %v135, %v139
    %s142 = scalar_lea.vmem %s10, 2
    %v143 = vld [vmem:[%s142] sm:$0x1]
    %v145 = vlaneseq
    %v146 = vshrl.u32 %v145, 7
    %v147 = vsub.s32 0, %v146
    %v148 = vrot.slane %v143, %v147
    %v150 = vld [vmem:[%s8] sm:$0x1]
    %v152 = vlaneseq
    %v153 = vshrl.u32 %v152, 7
    %v154 = vsub.s32 0, %v153
    %v155 = vrot.slane %v150, %v154
    %v157 = vld [vmem:[%s12] sm:$0x1]
    %v159 = vlaneseq
    %v160 = vshrl.u32 %v159, 7
    %v161 = vsub.s32 0, %v160
    %v162 = vrot.slane %v157, %v161
    %v164 = vld [vmem:[%s14] sm:$0x1]
    %v166 = vlaneseq
    %v167 = vshrl.u32 %v166, 7
    %v168 = vsub.s32 0, %v167
    %v169 = vrot.slane %v164, %v168
    %v171 = vld [vmem:[%s0] sm:$0xff]
    %v172 = vld [vmem:[%s0 + $0x8] sm:$0xff]
    %v173 = vpack.c.bf16 %v172, %v171
    %v174 = vld [vmem:[%s2] sm:$0x3]
    %v175 = vld [vmem:[%s4] sm:$0x1]
    %v177 = vlaneseq
    %v178 = vshrl.u32 %v177, 7
    %v179 = vsub.s32 0, %v178
    %v180 = vrot.slane %v175, %v179
    %vm182 = vcmask 31744
    %v184 = vsel %vm182, %v173, 0
    %vm186 = vcmask 1041408
    %v188 = vsel %vm186, %v174, 0
    %190 = vmatprep.subr.bf16.mxu0 0
    %191 = vmatpush1.bf16.msra.mxu0 %v188
    %192 = vmatprep.subr.bf16.mxu0 0
    %193 = vmatpush1.bf16.msra.mxu0 0
    %194 = vmatprep.subr.bf16.mxu0 0
    %195 = vmatpush1.bf16.msra.mxu0 0
    %196 = vmatprep.subr.bf16.mxu0 0
    %197 = vmatpush1.bf16.msra.mxu0 0
    %198 = vmatprep.subr.bf16.mxu0 0
    %199 = vmatpush1.bf16.msra.mxu0 0
    %200 = vmatprep.subr.bf16.mxu0 0
    %201 = vmatpush1.bf16.msra.mxu0 0
    %202 = vmatprep.subr.bf16.mxu0 0
    %203 = vmatpush1.bf16.msra.mxu0 0
    %204 = vmatprep.subr.bf16.mxu0 0
    %205 = vmatpush1.bf16.msra.mxu0 0
    %206 = vmatprep.subr.bf16.mxu0 0
    %207 = vmatpush1.bf16.msra.mxu0 0
    %208 = vmatprep.subr.bf16.mxu0 0
    %209 = vmatpush1.bf16.msra.mxu0 0
    %210 = vmatprep.subr.bf16.mxu0 0
    %211 = vmatpush1.bf16.msra.mxu0 0
    %212 = vmatprep.subr.bf16.mxu0 0
    %213 = vmatpush1.bf16.msra.mxu0 0
    %214 = vmatprep.subr.bf16.mxu0 0
    %215 = vmatpush1.bf16.msra.mxu0 0
    %216 = vmatprep.subr.bf16.mxu0 0
    %217 = vmatpush1.bf16.msra.mxu0 0
    %218 = vmatprep.subr.bf16.mxu0 0
    %219 = vmatpush1.bf16.msra.mxu0 0
    %220 = vmatprep.subr.bf16.mxu0 0
    %221 = vmatpush1.bf16.msra.mxu0 0
    %222 = vmatprep.mubr.bf16.mxu0 0
    %223 = vmatmul.mubr.bf16.gmra.mrb[0].mxu0 %v184
    %v224 = vpop.f32.mrb[0].mxu0
    %v225 = vadd.f32 %v180, %v224
    %v226 = vpop.f32.mrb[0].mxu0
    %v227 = vpop.f32.mrb[0].mxu0
    %v228 = vadd.f32 %v180, %v227
    %v229 = vpop.f32.mrb[0].mxu0
    %230 = vdwg.mxu0
    %v235 = vunpack.c.l.b16 %v87
    %v236 = vunpack.c.l.b16 %v88
    %v237 = vunpack.c.l.b16 %v89
    %v238 = vunpack.c.l.b16 %v90
    %v239 = vpack.c.b16 %v236, %v235
    %v240 = vpack.c.b16 %v238, %v237
    %vm243 = vcmask 261120
    %v245 = vsel %vm243, 0, 0
    %247 = vmatprep.subr.bf16.mxu0 0
    %248 = vmatpush1.bf16.msra.mxu0 %v239
    %249 = vmatprep.subr.bf16.mxu0 0
    %250 = vmatpush1.bf16.msra.mxu0 %v240
    %251 = vmatprep.subr.bf16.mxu0 0
    %252 = vmatpush1.bf16.msra.mxu0 0
    %253 = vmatprep.subr.bf16.mxu0 0
    %254 = vmatpush1.bf16.msra.mxu0 0
    %255 = vmatprep.subr.bf16.mxu0 0
    %256 = vmatpush1.bf16.msra.mxu0 0
    %257 = vmatprep.subr.bf16.mxu0 0
    %258 = vmatpush1.bf16.msra.mxu0 0
    %259 = vmatprep.subr.bf16.mxu0 0
    %260 = vmatpush1.bf16.msra.mxu0 0
    %261 = vmatprep.subr.bf16.mxu0 0
    %262 = vmatpush1.bf16.msra.mxu0 0
    %263 = vmatprep.subr.bf16.mxu0 0
    %264 = vmatpush1.bf16.msra.mxu0 0
    %265 = vmatprep.subr.bf16.mxu0 0
    %266 = vmatpush1.bf16.msra.mxu0 0
    %267 = vmatprep.subr.bf16.mxu0 0
    %268 = vmatpush1.bf16.msra.mxu0 0
    %269 = vmatprep.subr.bf16.mxu0 0
    %270 = vmatpush1.bf16.msra.mxu0 0
    %271 = vmatprep.subr.bf16.mxu0 0
    %272 = vmatpush1.bf16.msra.mxu0 0
    %273 = vmatprep.subr.bf16.mxu0 0
    %274 = vmatpush1.bf16.msra.mxu0 0
    %275 = vmatprep.subr.bf16.mxu0 0
    %276 = vmatpush1.bf16.msra.mxu0 0
    %277 = vmatprep.subr.bf16.mxu0 0
    %278 = vmatpush1.bf16.msra.mxu0 0
    %279 = vmatprep.mubr.bf16.mxu0 0
    %280 = vmatmul.mubr.bf16.gmra.mrb[0].mxu0 %v245
    %v281 = vpop.f32.mrb[0].mxu0
    %v282 = vadd.f32 0.0, %v281
    %v283 = vpop.f32.mrb[0].mxu0
    %v284 = vpop.f32.mrb[0].mxu0
    %v285 = vpop.f32.mrb[0].mxu0
    %286 = vdwg.mxu0
    %v287 = vadd.f32 %v225, %v282
    %v288 = vxor.u32 %v287, 2147483648
    %v289 = vmul.f32 %v288, 1.442695
    %v290 = vpow.pop %v289
    %v291 = vadd.f32 %v290, 1.0
    %v292 = vrcp.pop %v291
    %v293 = vmul.f32 1.0, %v292
    %295 = vrot.lane.b32.xlu0 %v287, 32
    %v296 = vpop.permute.xlu0 %295
    %v298 = vmul.f32 %v293, %v296
    %300 = vrot.lane.b32.xlu0 %v298, 64
    %v301 = vpop.permute.xlu0 %300
    %v303 = vadd.f32 %v287, %v301
    %v304 = vtanh.pop %v303
    %v305 = vsub.f32 1.0, %v293
    %307 = vrot.lane.b32.xlu0 %v304, 96
    %v308 = vpop.permute.xlu0 %307
    %v310 = vmul.f32 %v305, %v308
    %v311 = vmul.f32 %v293, 0.0
    %v312 = vadd.f32 %v310, %v311
    %v313 = vld [vmem:[#allocation2] sm:$0xf]
    %v314 = vld [vmem:[#allocation2 + $0x4] sm:$0xf]
    %v315 = vld [vmem:[#allocation2 + $0x8] sm:$0xf]
    %v316 = vld [vmem:[#allocation2 + $0xc] sm:$0xf]
    %v317 = vld [vmem:[#allocation2 + $0x10] sm:$0xf]
    %v318 = vld [vmem:[#allocation2 + $0x14] sm:$0xf]
    %v319 = vld [vmem:[#allocation2 + $0x18] sm:$0xf]
    %v320 = vld [vmem:[#allocation2 + $0x1c] sm:$0xf]
    %322 = vrot.lane.b32.xlu0 %v312, 96
    %v323 = vpop.permute.xlu0 %322
    %v325 = vsel %vm243, %v323, 0.0
    %v326 = vpack.c.bf16 %v325, %v325
    %v335 = vunpack.c.l.b16 %v313
    %v336 = vunpack.c.l.b16 %v314
    %v337 = vunpack.c.l.b16 %v315
    %v338 = vunpack.c.l.b16 %v316
    %v339 = vunpack.c.l.b16 %v317
    %v340 = vunpack.c.l.b16 %v318
    %v341 = vunpack.c.l.b16 %v319
    %v342 = vunpack.c.l.b16 %v320
    %v343 = vpack.c.b16 %v336, %v335
    %v344 = vpack.c.b16 %v338, %v337
    %v345 = vpack.c.b16 %v340, %v339
    %v346 = vpack.c.b16 %v342, %v341
    %vm351 = vcmask 523264
    %v353 = vsel %vm351, %v326, 0
    %355 = vmatprep.subr.bf16.mxu0 0
    %356 = vmatpush1.bf16.msra.mxu0 %v343
    %357 = vmatprep.subr.bf16.mxu0 0
    %358 = vmatpush1.bf16.msra.mxu0 %v344
    %359 = vmatprep.subr.bf16.mxu0 0
    %360 = vmatpush1.bf16.msra.mxu0 %v345
    %361 = vmatprep.subr.bf16.mxu0 0
    %362 = vmatpush1.bf16.msra.mxu0 %v346
    %363 = vmatprep.subr.bf16.mxu0 0
    %364 = vmatpush1.bf16.msra.mxu0 0
    %365 = vmatprep.subr.bf16.mxu0 0
    %366 = vmatpush1.bf16.msra.mxu0 0
    %367 = vmatprep.subr.bf16.mxu0 0
    %368 = vmatpush1.bf16.msra.mxu0 0
    %369 = vmatprep.subr.bf16.mxu0 0
    %370 = vmatpush1.bf16.msra.mxu0 0
    %371 = vmatprep.subr.bf16.mxu0 0
    %372 = vmatpush1.bf16.msra.mxu0 0
    %373 = vmatprep.subr.bf16.mxu0 0
    %374 = vmatpush1.bf16.msra.mxu0 0
    %375 = vmatprep.subr.bf16.mxu0 0
    %376 = vmatpush1.bf16.msra.mxu0 0
    %377 = vmatprep.subr.bf16.mxu0 0
    %378 = vmatpush1.bf16.msra.mxu0 0
    %379 = vmatprep.subr.bf16.mxu0 0
    %380 = vmatpush1.bf16.msra.mxu0 0
    %381 = vmatprep.subr.bf16.mxu0 0
    %382 = vmatpush1.bf16.msra.mxu0 0
    %383 = vmatprep.subr.bf16.mxu0 0
    %384 = vmatpush1.bf16.msra.mxu0 0
    %385 = vmatprep.subr.bf16.mxu0 0
    %386 = vmatpush1.bf16.msra.mxu0 0
    %387 = vmatprep.mubr.bf16.mxu0 0
    %388 = vmatmul.mubr.bf16.gmra.mrb[0].mxu0 %v353
    %v389 = vpop.f32.mrb[0].mxu0
    %v390 = vadd.f32 %v109, %v389
    %v391 = vpop.f32.mrb[0].mxu0
    %v392 = vpop.f32.mrb[0].mxu0
    %v393 = vpop.f32.mrb[0].mxu0
    %394 = vdwg.mxu0
    %v395 = vxor.u32 %v390, 2147483648
    %v396 = vmul.f32 %v395, 1.442695
    %v397 = vpow.pop %v396
    %v398 = vadd.f32 %v397, 1.0
    %v399 = vrcp.pop %v398
    %v400 = vmul.f32 1.0, %v399
    %402 = vrot.lane.b32.xlu0 %v390, 32
    %v403 = vpop.permute.xlu0 %402
    %v405 = vmul.f32 %v400, %v403
    %407 = vrot.lane.b32.xlu0 %v405, 64
    %v408 = vpop.permute.xlu0 %407
    %v410 = vadd.f32 %v390, %v408
    %v411 = vtanh.pop %v410
    %v412 = vsub.f32 1.0, %v400
    %414 = vrot.lane.b32.xlu0 %v411, 96
    %v415 = vpop.permute.xlu0 %414
    %v417 = vmul.f32 %v412, %v415
    %v418 = vmul.f32 %v400, 0.0
    %v419 = vadd.f32 %v417, %v418
    %s420 = scalar_lea.vmem [#allocation2], 32
    %v421 = vld [vmem:[%s420] sm:$0xf]
    %v422 = vld [vmem:[%s420 + $0x4] sm:$0xf]
    %v423 = vld [vmem:[%s420 + $0x8] sm:$0xf]
    %v424 = vld [vmem:[%s420 + $0xc] sm:$0xf]
    %v425 = vld [vmem:[%s420 + $0x10] sm:$0xf]
    %v426 = vld [vmem:[%s420 + $0x14] sm:$0xf]
    %v427 = vld [vmem:[%s420 + $0x18] sm:$0xf]
    %v428 = vld [vmem:[%s420 + $0x1c] sm:$0xf]
    %430 = vrot.lane.b32.xlu0 %v419, 96
    %v431 = vpop.permute.xlu0 %430
    %v433 = vsel %vm243, %v431, 0.0
    %v434 = vpack.c.bf16 %v433, %v433
    %v443 = vunpack.c.l.b16 %v421
    %v444 = vunpack.c.l.b16 %v422
    %v445 = vunpack.c.l.b16 %v423
    %v446 = vunpack.c.l.b16 %v424
    %v447 = vunpack.c.l.b16 %v425
    %v448 = vunpack.c.l.b16 %v426
    %v449 = vunpack.c.l.b16 %v427
    %v450 = vunpack.c.l.b16 %v428
    %v451 = vpack.c.b16 %v444, %v443
    %v452 = vpack.c.b16 %v446, %v445
    %v453 = vpack.c.b16 %v448, %v447
    %v454 = vpack.c.b16 %v450, %v449
    %v460 = vsel %vm351, %v434, 0
    %462 = vmatprep.subr.bf16.mxu0 0
    %463 = vmatpush1.bf16.msra.mxu0 %v451
    %464 = vmatprep.subr.bf16.mxu0 0
    %465 = vmatpush1.bf16.msra.mxu0 %v452
    %466 = vmatprep.subr.bf16.mxu0 0
    %467 = vmatpush1.bf16.msra.mxu0 %v453
    %468 = vmatprep.subr.bf16.mxu0 0
    %469 = vmatpush1.bf16.msra.mxu0 %v454
    %470 = vmatprep.subr.bf16.mxu0 0
    %471 = vmatpush1.bf16.msra.mxu0 0
    %472 = vmatprep.subr.bf16.mxu0 0
    %473 = vmatpush1.bf16.msra.mxu0 0
    %474 = vmatprep.subr.bf16.mxu0 0
    %475 = vmatpush1.bf16.msra.mxu0 0
    %476 = vmatprep.subr.bf16.mxu0 0
    %477 = vmatpush1.bf16.msra.mxu0 0
    %478 = vmatprep.subr.bf16.mxu0 0
    %479 = vmatpush1.bf16.msra.mxu0 0
    %480 = vmatprep.subr.bf16.mxu0 0
    %481 = vmatpush1.bf16.msra.mxu0 0
    %482 = vmatprep.subr.bf16.mxu0 0
    %483 = vmatpush1.bf16.msra.mxu0 0
    %484 = vmatprep.subr.bf16.mxu0 0
    %485 = vmatpush1.bf16.msra.mxu0 0
    %486 = vmatprep.subr.bf16.mxu0 0
    %487 = vmatpush1.bf16.msra.mxu0 0
    %488 = vmatprep.subr.bf16.mxu0 0
    %489 = vmatpush1.bf16.msra.mxu0 0
    %490 = vmatprep.subr.bf16.mxu0 0
    %491 = vmatpush1.bf16.msra.mxu0 0
    %492 = vmatprep.subr.bf16.mxu0 0
    %493 = vmatpush1.bf16.msra.mxu0 0
    %494 = vmatprep.mubr.bf16.mxu0 0
    %495 = vmatmul.mubr.bf16.gmra.mrb[0].mxu0 %v460
    %v496 = vpop.f32.mrb[0].mxu0
    %v497 = vadd.f32 %v117, %v496
    %v498 = vpop.f32.mrb[0].mxu0
    %v499 = vpop.f32.mrb[0].mxu0
    %v500 = vpop.f32.mrb[0].mxu0
    %501 = vdwg.mxu0
    %v502 = vxor.u32 %v497, 2147483648
    %v503 = vmul.f32 %v502, 1.442695
    %v504 = vpow.pop %v503
    %v505 = vadd.f32 %v504, 1.0
    %v506 = vrcp.pop %v505
    %v507 = vmul.f32 1.0, %v506
    %509 = vrot.lane.b32.xlu0 %v497, 32
    %v510 = vpop.permute.xlu0 %509
    %v512 = vmul.f32 %v507, %v510
    %514 = vrot.lane.b32.xlu0 %v512, 64
    %v515 = vpop.permute.xlu0 %514
    %v517 = vadd.f32 %v497, %v515
    %v518 = vtanh.pop %v517
    %v519 = vsub.f32 1.0, %v507
    %521 = vrot.lane.b32.xlu0 %v518, 96
    %v522 = vpop.permute.xlu0 %521
    %v524 = vmul.f32 %v519, %v522
    %v525 = vmul.f32 %v507, 0.0
    %v526 = vadd.f32 %v524, %v525
    %s527 = scalar_lea.vmem [#allocation2], 64
    %v528 = vld [vmem:[%s527] sm:$0xf]
    %v529 = vld [vmem:[%s527 + $0x4] sm:$0xf]
    %v530 = vld [vmem:[%s527 + $0x8] sm:$0xf]
    %v531 = vld [vmem:[%s527 + $0xc] sm:$0xf]
    %v532 = vld [vmem:[%s527 + $0x10] sm:$0xf]
    %v533 = vld [vmem:[%s527 + $0x14] sm:$0xf]
    %v534 = vld [vmem:[%s527 + $0x18] sm:$0xf]
    %v535 = vld [vmem:[%s527 + $0x1c] sm:$0xf]
    %537 = vrot.lane.b32.xlu0 %v526, 96
    %v538 = vpop.permute.xlu0 %537
    %v540 = vsel %vm243, %v538, 0.0
    %v541 = vpack.c.bf16 %v540, %v540
    %v550 = vunpack.c.l.b16 %v528
    %v551 = vunpack.c.l.b16 %v529
    %v552 = vunpack.c.l.b16 %v530
    %v553 = vunpack.c.l.b16 %v531
    %v554 = vunpack.c.l.b16 %v532
    %v555 = vunpack.c.l.b16 %v533
    %v556 = vunpack.c.l.b16 %v534
    %v557 = vunpack.c.l.b16 %v535
    %v558 = vpack.c.b16 %v551, %v550
    %v559 = vpack.c.b16 %v553, %v552
    %v560 = vpack.c.b16 %v555, %v554
    %v561 = vpack.c.b16 %v557, %v556
    %v567 = vsel %vm351, %v541, 0
    %569 = vmatprep.subr.bf16.mxu0 0
    %570 = vmatpush1.bf16.msra.mxu0 %v558
    %571 = vmatprep.subr.bf16.mxu0 0
    %572 = vmatpush1.bf16.msra.mxu0 %v559
    %573 = vmatprep.subr.bf16.mxu0 0
    %574 = vmatpush1.bf16.msra.mxu0 %v560
    %575 = vmatprep.subr.bf16.mxu0 0
    %576 = vmatpush1.bf16.msra.mxu0 %v561
    %577 = vmatprep.subr.bf16.mxu0 0
    %578 = vmatpush1.bf16.msra.mxu0 0
    %579 = vmatprep.subr.bf16.mxu0 0
    %580 = vmatpush1.bf16.msra.mxu0 0
    %581 = vmatprep.subr.bf16.mxu0 0
    %582 = vmatpush1.bf16.msra.mxu0 0
    %583 = vmatprep.subr.bf16.mxu0 0
    %584 = vmatpush1.bf16.msra.mxu0 0
    %585 = vmatprep.subr.bf16.mxu0 0
    %586 = vmatpush1.bf16.msra.mxu0 0
    %587 = vmatprep.subr.bf16.mxu0 0
    %588 = vmatpush1.bf16.msra.mxu0 0
    %589 = vmatprep.subr.bf16.mxu0 0
    %590 = vmatpush1.bf16.msra.mxu0 0
    %591 = vmatprep.subr.bf16.mxu0 0
    %592 = vmatpush1.bf16.msra.mxu0 0
    %593 = vmatprep.subr.bf16.mxu0 0
    %594 = vmatpush1.bf16.msra.mxu0 0
    %595 = vmatprep.subr.bf16.mxu0 0
    %596 = vmatpush1.bf16.msra.mxu0 0
    %597 = vmatprep.subr.bf16.mxu0 0
    %598 = vmatpush1.bf16.msra.mxu0 0
    %599 = vmatprep.subr.bf16.mxu0 0
    %600 = vmatpush1.bf16.msra.mxu0 0
    %601 = vmatprep.mubr.bf16.mxu0 0
    %602 = vmatmul.mubr.bf16.gmra.mrb[0].mxu0 %v567
    %v603 = vpop.f32.mrb[0].mxu0
    %v604 = vadd.f32 %v125, %v603
    %v605 = vpop.f32.mrb[0].mxu0
    %v606 = vpop.f32.mrb[0].mxu0
    %v607 = vpop.f32.mrb[0].mxu0
    %608 = vdwg.mxu0
    %v609 = vxor.u32 %v604, 2147483648
    %v610 = vmul.f32 %v609, 1.442695
    %v611 = vpow.pop %v610
    %v612 = vadd.f32 %v611, 1.0
    %v613 = vrcp.pop %v612
    %v614 = vmul.f32 1.0, %v613
    %616 = vrot.lane.b32.xlu0 %v604, 32
    %v617 = vpop.permute.xlu0 %616
    %v619 = vmul.f32 %v614, %v617
    %621 = vrot.lane.b32.xlu0 %v619, 64
    %v622 = vpop.permute.xlu0 %621
    %v624 = vadd.f32 %v604, %v622
    %v625 = vtanh.pop %v624
    %v626 = vsub.f32 1.0, %v614
    %628 = vrot.lane.b32.xlu0 %v625, 96
    %v629 = vpop.permute.xlu0 %628
    %v631 = vmul.f32 %v626, %v629
    %v632 = vmul.f32 %v614, 0.0
    %v633 = vadd.f32 %v631, %v632
    %v634 = vpack.c.bf16 %v312, %v312
    %636 = vrot.lane.b32.xlu0 %v634, 96
    %v637 = vpop.permute.xlu0 %636
    %v639 = vsel %vm243, %v637, 0
    %641 = vmatprep.subr.bf16.mxu0 0
    %642 = vmatpush1.bf16.msra.mxu0 %v239
    %643 = vmatprep.subr.bf16.mxu0 0
    %644 = vmatpush1.bf16.msra.mxu0 %v240
    %645 = vmatprep.subr.bf16.mxu0 0
    %646 = vmatpush1.bf16.msra.mxu0 0
    %647 = vmatprep.subr.bf16.mxu0 0
    %648 = vmatpush1.bf16.msra.mxu0 0
    %649 = vmatprep.subr.bf16.mxu0 0
    %650 = vmatpush1.bf16.msra.mxu0 0
    %651 = vmatprep.subr.bf16.mxu0 0
    %652 = vmatpush1.bf16.msra.mxu0 0
    %653 = vmatprep.subr.bf16.mxu0 0
    %654 = vmatpush1.bf16.msra.mxu0 0
    %655 = vmatprep.subr.bf16.mxu0 0
    %656 = vmatpush1.bf16.msra.mxu0 0
    %657 = vmatprep.subr.bf16.mxu0 0
    %658 = vmatpush1.bf16.msra.mxu0 0
    %659 = vmatprep.subr.bf16.mxu0 0
    %660 = vmatpush1.bf16.msra.mxu0 0
    %661 = vmatprep.subr.bf16.mxu0 0
    %662 = vmatpush1.bf16.msra.mxu0 0
    %663 = vmatprep.subr.bf16.mxu0 0
    %664 = vmatpush1.bf16.msra.mxu0 0
    %665 = vmatprep.subr.bf16.mxu0 0
    %666 = vmatpush1.bf16.msra.mxu0 0
    %667 = vmatprep.subr.bf16.mxu0 0
    %668 = vmatpush1.bf16.msra.mxu0 0
    %669 = vmatprep.subr.bf16.mxu0 0
    %670 = vmatpush1.bf16.msra.mxu0 0
    %671 = vmatprep.subr.bf16.mxu0 0
    %672 = vmatpush1.bf16.msra.mxu0 0
    %673 = vmatprep.mubr.bf16.mxu0 0
    %674 = vmatmul.mubr.bf16.gmra.mrb[0].mxu0 %v639
    %v675 = vpop.f32.mrb[0].mxu0
    %v676 = vadd.f32 0.0, %v675
    %v677 = vpop.f32.mrb[0].mxu0
    %v678 = vpop.f32.mrb[0].mxu0
    %v679 = vpop.f32.mrb[0].mxu0
    %680 = vdwg.mxu0
    %v682 = vrot.slane %v676, 6
    %v684 = vadd.f32 %v225, %v682
    %v685 = vxor.u32 %v684, 2147483648
    %v686 = vmul.f32 %v685, 1.442695
    %v687 = vpow.pop %v686
    %v688 = vadd.f32 %v687, 1.0
    %v689 = vrcp.pop %v688
    %v690 = vmul.f32 1.0, %v689
    %692 = vrot.lane.b32.xlu0 %v684, 32
    %v693 = vpop.permute.xlu0 %692
    %v695 = vmul.f32 %v690, %v693
    %697 = vrot.lane.b32.xlu0 %v695, 64
    %v698 = vpop.permute.xlu0 %697
    %v700 = vadd.f32 %v684, %v698
    %v701 = vtanh.pop %v700
    %v702 = vsub.f32 1.0, %v690
    %704 = vrot.lane.b32.xlu0 %v701, 96
    %v705 = vpop.permute.xlu0 %704
    %v707 = vmul.f32 %v702, %v705
    %v708 = vrot.slane %v312, 6
    %v710 = vmul.f32 %v690, %v708
    %v711 = vadd.f32 %v707, %v710
    %713 = vrot.lane.b32.xlu0 %v711, 96
    %v714 = vpop.permute.xlu0 %713
    %v716 = vrot.slane %v419, 6
    %v718 = vsel %vm243, %v714, %v716
    %v719 = vpack.c.bf16 %v718, %v718
    %v721 = vrot.slane %v719, 1
    %v723 = vsel %vm351, %v721, 0
    %725 = vmatprep.subr.bf16.mxu0 0
    %726 = vmatpush1.bf16.msra.mxu0 %v343
    %727 = vmatprep.subr.bf16.mxu0 0
    %728 = vmatpush1.bf16.msra.mxu0 %v344
    %729 = vmatprep.subr.bf16.mxu0 0
    %730 = vmatpush1.bf16.msra.mxu0 %v345
    %731 = vmatprep.subr.bf16.mxu0 0
    %732 = vmatpush1.bf16.msra.mxu0 %v346
    %733 = vmatprep.subr.bf16.mxu0 0
    %734 = vmatpush1.bf16.msra.mxu0 0
    %735 = vmatprep.subr.bf16.mxu0 0
    %736 = vmatpush1.bf16.msra.mxu0 0
    %737 = vmatprep.subr.bf16.mxu0 0
    %738 = vmatpush1.bf16.msra.mxu0 0
    %739 = vmatprep.subr.bf16.mxu0 0
    %740 = vmatpush1.bf16.msra.mxu0 0
    %741 = vmatprep.subr.bf16.mxu0 0
    %742 = vmatpush1.bf16.msra.mxu0 0
    %743 = vmatprep.subr.bf16.mxu0 0
    %744 = vmatpush1.bf16.msra.mxu0 0
    %745 = vmatprep.subr.bf16.mxu0 0
    %746 = vmatpush1.bf16.msra.mxu0 0
    %747 = vmatprep.subr.bf16.mxu0 0
    %748 = vmatpush1.bf16.msra.mxu0 0
    %749 = vmatprep.subr.bf16.mxu0 0
    %750 = vmatpush1.bf16.msra.mxu0 0
    %751 = vmatprep.subr.bf16.mxu0 0
    %752 = vmatpush1.bf16.msra.mxu0 0
    %753 = vmatprep.subr.bf16.mxu0 0
    %754 = vmatpush1.bf16.msra.mxu0 0
    %755 = vmatprep.subr.bf16.mxu0 0
    %756 = vmatpush1.bf16.msra.mxu0 0
    %757 = vmatprep.mubr.bf16.mxu0 0
    %758 = vmatmul.mubr.bf16.gmra.mrb[0].mxu0 %v723
    %v759 = vpop.f32.mrb[0].mxu0
    %v760 = vadd.f32 %v109, %v759
    %v761 = vpop.f32.mrb[0].mxu0
    %v762 = vpop.f32.mrb[0].mxu0
    %v763 = vpop.f32.mrb[0].mxu0
    %764 = vdwg.mxu0
    %v765 = vxor.u32 %v760, 2147483648
    %v766 = vmul.f32 %v765, 1.442695
    %v767 = vpow.pop %v766
    %v768 = vadd.f32 %v767, 1.0
    %v769 = vrcp.pop %v768
    %v770 = vmul.f32 1.0, %v769
    %772 = vrot.lane.b32.xlu0 %v760, 32
    %v773 = vpop.permute.xlu0 %772
    %v775 = vmul.f32 %v770, %v773
    %777 = vrot.lane.b32.xlu0 %v775, 64
    %v778 = vpop.permute.xlu0 %777
    %v780 = vadd.f32 %v760, %v778
    %v781 = vtanh.pop %v780
    %v782 = vsub.f32 1.0, %v770
    %784 = vrot.lane.b32.xlu0 %v781, 96
    %v785 = vpop.permute.xlu0 %784
    %v787 = vmul.f32 %v782, %v785
    %v788 = vmul.f32 %v770, %v419
    %v789 = vadd.f32 %v787, %v788
    %791 = vrot.lane.b32.xlu0 %v789, 96
    %v792 = vpop.permute.xlu0 %791
    %v794 = vsel %vm243, %v792, %v526
    %v795 = vpack.c.bf16 %v794, %v794
    %v797 = vsel %vm351, %v795, 0
    %799 = vmatprep.subr.bf16.mxu0 0
    %800 = vmatpush1.bf16.msra.mxu0 %v451
    %801 = vmatprep.subr.bf16.mxu0 0
    %802 = vmatpush1.bf16.msra.mxu0 %v452
    %803 = vmatprep.subr.bf16.mxu0 0
    %804 = vmatpush1.bf16.msra.mxu0 %v453
    %805 = vmatprep.subr.bf16.mxu0 0
    %806 = vmatpush1.bf16.msra.mxu0 %v454
    %807 = vmatprep.subr.bf16.mxu0 0
    %808 = vmatpush1.bf16.msra.mxu0 0
    %809 = vmatprep.subr.bf16.mxu0 0
    %810 = vmatpush1.bf16.msra.mxu0 0
    %811 = vmatprep.subr.bf16.mxu0 0
    %812 = vmatpush1.bf16.msra.mxu0 0
    %813 = vmatprep.subr.bf16.mxu0 0
    %814 = vmatpush1.bf16.msra.mxu0 0
    %815 = vmatprep.subr.bf16.mxu0 0
    %816 = vmatpush1.bf16.msra.mxu0 0
    %817 = vmatprep.subr.bf16.mxu0 0
    %818 = vmatpush1.bf16.msra.mxu0 0
    %819 = vmatprep.subr.bf16.mxu0 0
    %820 = vmatpush1.bf16.msra.mxu0 0
    %821 = vmatprep.subr.bf16.mxu0 0
    %822 = vmatpush1.bf16.msra.mxu0 0
    %823 = vmatprep.subr.bf16.mxu0 0
    %824 = vmatpush1.bf16.msra.mxu0 0
    %825 = vmatprep.subr.bf16.mxu0 0
    %826 = vmatpush1.bf16.msra.mxu0 0
    %827 = vmatprep.subr.bf16.mxu0 0
    %828 = vmatpush1.bf16.msra.mxu0 0
    %829 = vmatprep.subr.bf16.mxu0 0
    %830 = vmatpush1.bf16.msra.mxu0 0
    %831 = vmatprep.mubr.bf16.mxu0 0
    %832 = vmatmul.mubr.bf16.gmra.mrb[0].mxu0 %v797
    %v833 = vpop.f32.mrb[0].mxu0
    %v834 = vadd.f32 %v117, %v833
    %v835 = vpop.f32.mrb[0].mxu0
    %v836 = vpop.f32.mrb[0].mxu0
    %v837 = vpop.f32.mrb[0].mxu0
    %838 = vdwg.mxu0
    %v839 = vxor.u32 %v834, 2147483648
    %v840 = vmul.f32 %v839, 1.442695
    %v841 = vpow.pop %v840
    %v842 = vadd.f32 %v841, 1.0
    %v843 = vrcp.pop %v842
    %v844 = vmul.f32 1.0, %v843
    %846 = vrot.lane.b32.xlu0 %v834, 32
    %v847 = vpop.permute.xlu0 %846
    %v849 = vmul.f32 %v844, %v847
    %851 = vrot.lane.b32.xlu0 %v849, 64
    %v852 = vpop.permute.xlu0 %851
    %v854 = vadd.f32 %v834, %v852
    %v855 = vtanh.pop %v854
    %v856 = vsub.f32 1.0, %v844
    %858 = vrot.lane.b32.xlu0 %v855, 96
    %v859 = vpop.permute.xlu0 %858
    %v861 = vmul.f32 %v856, %v859
    %v862 = vmul.f32 %v844, %v526
    %v863 = vadd.f32 %v861, %v862
    %865 = vrot.lane.b32.xlu0 %v863, 96
    %v866 = vpop.permute.xlu0 %865
    %v868 = vsel %vm243, %v866, %v633
    %v869 = vpack.c.bf16 %v868, %v868
    %v871 = vsel %vm351, %v869, 0
    %873 = vmatprep.subr.bf16.mxu0 0
    %874 = vmatpush1.bf16.msra.mxu0 %v558
    %875 = vmatprep.subr.bf16.mxu0 0
    %876 = vmatpush1.bf16.msra.mxu0 %v559
    %877 = vmatprep.subr.bf16.mxu0 0
    %878 = vmatpush1.bf16.msra.mxu0 %v560
    %879 = vmatprep.subr.bf16.mxu0 0
    %880 = vmatpush1.bf16.msra.mxu0 %v561
    %881 = vmatprep.subr.bf16.mxu0 0
    %882 = vmatpush1.bf16.msra.mxu0 0
    %883 = vmatprep.subr.bf16.mxu0 0
    %884 = vmatpush1.bf16.msra.mxu0 0
    %885 = vmatprep.subr.bf16.mxu0 0
    %886 = vmatpush1.bf16.msra.mxu0 0
    %887 = vmatprep.subr.bf16.mxu0 0
    %888 = vmatpush1.bf16.msra.mxu0 0
    %889 = vmatprep.subr.bf16.mxu0 0
    %890 = vmatpush1.bf16.msra.mxu0 0
    %891 = vmatprep.subr.bf16.mxu0 0
    %892 = vmatpush1.bf16.msra.mxu0 0
    %893 = vmatprep.subr.bf16.mxu0 0
    %894 = vmatpush1.bf16.msra.mxu0 0
    %895 = vmatprep.subr.bf16.mxu0 0
    %896 = vmatpush1.bf16.msra.mxu0 0
    %897 = vmatprep.subr.bf16.mxu0 0
    %898 = vmatpush1.bf16.msra.mxu0 0
    %899 = vmatprep.subr.bf16.mxu0 0
    %900 = vmatpush1.bf16.msra.mxu0 0
    %901 = vmatprep.subr.bf16.mxu0 0
    %902 = vmatpush1.bf16.msra.mxu0 0
    %903 = vmatprep.subr.bf16.mxu0 0
    %904 = vmatpush1.bf16.msra.mxu0 0
    %905 = vmatprep.mubr.bf16.mxu0 0
    %906 = vmatmul.mubr.bf16.gmra.mrb[0].mxu0 %v871
    %v907 = vpop.f32.mrb[0].mxu0
    %v908 = vadd.f32 %v125, %v907
    %v909 = vpop.f32.mrb[0].mxu0
    %v910 = vpop.f32.mrb[0].mxu0
    %v911 = vpop.f32.mrb[0].mxu0
    %912 = vdwg.mxu0
    %v913 = vxor.u32 %v908, 2147483648
    %v914 = vmul.f32 %v913, 1.442695
    %v915 = vpow.pop %v914
    %v916 = vadd.f32 %v915, 1.0
    %v917 = vrcp.pop %v916
    %v918 = vmul.f32 1.0, %v917
    %920 = vrot.lane.b32.xlu0 %v908, 32
    %v921 = vpop.permute.xlu0 %920
    %v923 = vmul.f32 %v918, %v921
    %925 = vrot.lane.b32.xlu0 %v923, 64
    %v926 = vpop.permute.xlu0 %925
    %v928 = vadd.f32 %v908, %v926
    %v929 = vtanh.pop %v928
    %v930 = vsub.f32 1.0, %v918
    %932 = vrot.lane.b32.xlu0 %v929, 96
    %v933 = vpop.permute.xlu0 %932
    %v935 = vmul.f32 %v930, %v933
    %v936 = vmul.f32 %v918, %v633
    %v937 = vadd.f32 %v935, %v936
    %v938 = vpack.c.bf16 %v711, %v711
    %v940 = vrot.slane %v938, 1
    %941 = vrot.lane.b32.xlu0 %v940, 96
    %v942 = vpop.permute.xlu0 %941
    %v944 = vsel %vm243, %v942, 0
    %946 = vmatprep.subr.bf16.mxu0 0
    %947 = vmatpush1.bf16.msra.mxu0 %v239
    %948 = vmatprep.subr.bf16.mxu0 0
    %949 = vmatpush1.bf16.msra.mxu0 %v240
    %950 = vmatprep.subr.bf16.mxu0 0
    %951 = vmatpush1.bf16.msra.mxu0 0
    %952 = vmatprep.subr.bf16.mxu0 0
    %953 = vmatpush1.bf16.msra.mxu0 0
    %954 = vmatprep.subr.bf16.mxu0 0
    %955 = vmatpush1.bf16.msra.mxu0 0
    %956 = vmatprep.subr.bf16.mxu0 0
    %957 = vmatpush1.bf16.msra.mxu0 0
    %958 = vmatprep.subr.bf16.mxu0 0
    %959 = vmatpush1.bf16.msra.mxu0 0
    %960 = vmatprep.subr.bf16.mxu0 0
    %961 = vmatpush1.bf16.msra.mxu0 0
    %962 = vmatprep.subr.bf16.mxu0 0
    %963 = vmatpush1.bf16.msra.mxu0 0
    %964 = vmatprep.subr.bf16.mxu0 0
    %965 = vmatpush1.bf16.msra.mxu0 0
    %966 = vmatprep.subr.bf16.mxu0 0
    %967 = vmatpush1.bf16.msra.mxu0 0
    %968 = vmatprep.subr.bf16.mxu0 0
    %969 = vmatpush1.bf16.msra.mxu0 0
    %970 = vmatprep.subr.bf16.mxu0 0
    %971 = vmatpush1.bf16.msra.mxu0 0
    %972 = vmatprep.subr.bf16.mxu0 0
    %973 = vmatpush1.bf16.msra.mxu0 0
    %974 = vmatprep.subr.bf16.mxu0 0
    %975 = vmatpush1.bf16.msra.mxu0 0
    %976 = vmatprep.subr.bf16.mxu0 0
    %977 = vmatpush1.bf16.msra.mxu0 0
    %978 = vmatprep.mubr.bf16.mxu0 0
    %979 = vmatmul.mubr.bf16.gmra.mrb[0].mxu0 %v944
    %v980 = vpop.f32.mrb[0].mxu0
    %v981 = vadd.f32 0.0, %v980
    %v982 = vpop.f32.mrb[0].mxu0
    %v983 = vpop.f32.mrb[0].mxu0
    %v984 = vpop.f32.mrb[0].mxu0
    %985 = vdwg.mxu0
    %v987 = vrot.slane %v981, 4
    %v989 = vadd.f32 %v225, %v987
    %v990 = vxor.u32 %v989, 2147483648
    %v991 = vmul.f32 %v990, 1.442695
    %v992 = vpow.pop %v991
    %v993 = vadd.f32 %v992, 1.0
    %v994 = vrcp.pop %v993
    %v995 = vmul.f32 1.0, %v994
    %997 = vrot.lane.b32.xlu0 %v989, 32
    %v998 = vpop.permute.xlu0 %997
    %v1000 = vmul.f32 %v995, %v998
    %1002 = vrot.lane.b32.xlu0 %v1000, 64
    %v1003 = vpop.permute.xlu0 %1002
    %v1005 = vadd.f32 %v989, %v1003
    %v1006 = vtanh.pop %v1005
    %v1007 = vsub.f32 1.0, %v995
    %1009 = vrot.lane.b32.xlu0 %v1006, 96
    %v1010 = vpop.permute.xlu0 %1009
    %v1012 = vmul.f32 %v1007, %v1010
    %v1013 = vrot.slane %v711, 6
    %v1015 = vmul.f32 %v995, %v1013
    %v1016 = vadd.f32 %v1012, %v1015
    %1018 = vrot.lane.b32.xlu0 %v1016, 96
    %v1019 = vpop.permute.xlu0 %1018
    %v1021 = vrot.slane %v789, 4
    %v1023 = vsel %vm243, %v1019, %v1021
    %v1024 = vpack.c.bf16 %v1023, %v1023
    %v1026 = vrot.slane %v1024, 2
    %v1028 = vsel %vm351, %v1026, 0
    %1030 = vmatprep.subr.bf16.mxu0 0
    %1031 = vmatpush1.bf16.msra.mxu0 %v343
    %1032 = vmatprep.subr.bf16.mxu0 0
    %1033 = vmatpush1.bf16.msra.mxu0 %v344
    %1034 = vmatprep.subr.bf16.mxu0 0
    %1035 = vmatpush1.bf16.msra.mxu0 %v345
    %1036 = vmatprep.subr.bf16.mxu0 0
    %1037 = vmatpush1.bf16.msra.mxu0 %v346
    %1038 = vmatprep.subr.bf16.mxu0 0
    %1039 = vmatpush1.bf16.msra.mxu0 0
    %1040 = vmatprep.subr.bf16.mxu0 0
    %1041 = vmatpush1.bf16.msra.mxu0 0
    %1042 = vmatprep.subr.bf16.mxu0 0
    %1043 = vmatpush1.bf16.msra.mxu0 0
    %1044 = vmatprep.subr.bf16.mxu0 0
    %1045 = vmatpush1.bf16.msra.mxu0 0
    %1046 = vmatprep.subr.bf16.mxu0 0
    %1047 = vmatpush1.bf16.msra.mxu0 0
    %1048 = vmatprep.subr.bf16.mxu0 0
    %1049 = vmatpush1.bf16.msra.mxu0 0
    %1050 = vmatprep.subr.bf16.mxu0 0
    %1051 = vmatpush1.bf16.msra.mxu0 0
    %1052 = vmatprep.subr.bf16.mxu0 0
    %1053 = vmatpush1.bf16.msra.mxu0 0
    %1054 = vmatprep.subr.bf16.mxu0 0
    %1055 = vmatpush1.bf16.msra.mxu0 0
    %1056 = vmatprep.subr.bf16.mxu0 0
    %1057 = vmatpush1.bf16.msra.mxu0 0
    %1058 = vmatprep.subr.bf16.mxu0 0
    %1059 = vmatpush1.bf16.msra.mxu0 0
    %1060 = vmatprep.subr.bf16.mxu0 0
    %1061 = vmatpush1.bf16.msra.mxu0 0
    %1062 = vmatprep.mubr.bf16.mxu0 0
    %1063 = vmatmul.mubr.bf16.gmra.mrb[0].mxu0 %v1028
    %v1064 = vpop.f32.mrb[0].mxu0
    %v1065 = vadd.f32 %v109, %v1064
    %v1066 = vpop.f32.mrb[0].mxu0
    %v1067 = vpop.f32.mrb[0].mxu0
    %v1068 = vpop.f32.mrb[0].mxu0
    %1069 = vdwg.mxu0
    %v1070 = vxor.u32 %v1065, 2147483648
    %v1071 = vmul.f32 %v1070, 1.442695
    %v1072 = vpow.pop %v1071
    %v1073 = vadd.f32 %v1072, 1.0
    %v1074 = vrcp.pop %v1073
    %v1075 = vmul.f32 1.0, %v1074
    %1077 = vrot.lane.b32.xlu0 %v1065, 32
    %v1078 = vpop.permute.xlu0 %1077
    %v1080 = vmul.f32 %v1075, %v1078
    %1082 = vrot.lane.b32.xlu0 %v1080, 64
    %v1083 = vpop.permute.xlu0 %1082
    %v1085 = vadd.f32 %v1065, %v1083
    %v1086 = vtanh.pop %v1085
    %v1087 = vsub.f32 1.0, %v1075
    %1089 = vrot.lane.b32.xlu0 %v1086, 96
    %v1090 = vpop.permute.xlu0 %1089
    %v1092 = vmul.f32 %v1087, %v1090
    %v1093 = vmul.f32 %v1075, %v789
    %v1094 = vadd.f32 %v1092, %v1093
    %1096 = vrot.lane.b32.xlu0 %v1094, 96
    %v1097 = vpop.permute.xlu0 %1096
    %v1099 = vsel %vm243, %v1097, %v863
    %v1100 = vpack.c.bf16 %v1099, %v1099
    %v1102 = vsel %vm351, %v1100, 0
    %1104 = vmatprep.subr.bf16.mxu0 0
    %1105 = vmatpush1.bf16.msra.mxu0 %v451
    %1106 = vmatprep.subr.bf16.mxu0 0
    %1107 = vmatpush1.bf16.msra.mxu0 %v452
    %1108 = vmatprep.subr.bf16.mxu0 0
    %1109 = vmatpush1.bf16.msra.mxu0 %v453
    %1110 = vmatprep.subr.bf16.mxu0 0
    %1111 = vmatpush1.bf16.msra.mxu0 %v454
    %1112 = vmatprep.subr.bf16.mxu0 0
    %1113 = vmatpush1.bf16.msra.mxu0 0
    %1114 = vmatprep.subr.bf16.mxu0 0
    %1115 = vmatpush1.bf16.msra.mxu0 0
    %1116 = vmatprep.subr.bf16.mxu0 0
    %1117 = vmatpush1.bf16.msra.mxu0 0
    %1118 = vmatprep.subr.bf16.mxu0 0
    %1119 = vmatpush1.bf16.msra.mxu0 0
    %1120 = vmatprep.subr.bf16.mxu0 0
    %1121 = vmatpush1.bf16.msra.mxu0 0
    %1122 = vmatprep.subr.bf16.mxu0 0
    %1123 = vmatpush1.bf16.msra.mxu0 0
    %1124 = vmatprep.subr.bf16.mxu0 0
    %1125 = vmatpush1.bf16.msra.mxu0 0
    %1126 = vmatprep.subr.bf16.mxu0 0
    %1127 = vmatpush1.bf16.msra.mxu0 0
    %1128 = vmatprep.subr.bf16.mxu0 0
    %1129 = vmatpush1.bf16.msra.mxu0 0
    %1130 = vmatprep.subr.bf16.mxu0 0
    %1131 = vmatpush1.bf16.msra.mxu0 0
    %1132 = vmatprep.subr.bf16.mxu0 0
    %1133 = vmatpush1.bf16.msra.mxu0 0
    %1134 = vmatprep.subr.bf16.mxu0 0
    %1135 = vmatpush1.bf16.msra.mxu0 0
    %1136 = vmatprep.mubr.bf16.mxu0 0
    %1137 = vmatmul.mubr.bf16.gmra.mrb[0].mxu0 %v1102
    %v1138 = vpop.f32.mrb[0].mxu0
    %v1139 = vadd.f32 %v117, %v1138
    %v1140 = vpop.f32.mrb[0].mxu0
    %v1141 = vpop.f32.mrb[0].mxu0
    %v1142 = vpop.f32.mrb[0].mxu0
    %1143 = vdwg.mxu0
    %v1144 = vxor.u32 %v1139, 2147483648
    %v1145 = vmul.f32 %v1144, 1.442695
    %v1146 = vpow.pop %v1145
    %v1147 = vadd.f32 %v1146, 1.0
    %v1148 = vrcp.pop %v1147
    %v1149 = vmul.f32 1.0, %v1148
    %1151 = vrot.lane.b32.xlu0 %v1139, 32
    %v1152 = vpop.permute.xlu0 %1151
    %v1154 = vmul.f32 %v1149, %v1152
    %1156 = vrot.lane.b32.xlu0 %v1154, 64
    %v1157 = vpop.permute.xlu0 %1156
    %v1159 = vadd.f32 %v1139, %v1157
    %v1160 = vtanh.pop %v1159
    %v1161 = vsub.f32 1.0, %v1149
    %1163 = vrot.lane.b32.xlu0 %v1160, 96
    %v1164 = vpop.permute.xlu0 %1163
    %v1166 = vmul.f32 %v1161, %v1164
    %v1167 = vmul.f32 %v1149, %v863
    %v1168 = vadd.f32 %v1166, %v1167
    %1170 = vrot.lane.b32.xlu0 %v1168, 96
    %v1171 = vpop.permute.xlu0 %1170
    %v1173 = vsel %vm243, %v1171, %v937
    %v1174 = vpack.c.bf16 %v1173, %v1173
    %v1176 = vsel %vm351, %v1174, 0
    %1178 = vmatprep.subr.bf16.mxu0 0
    %1179 = vmatpush1.bf16.msra.mxu0 %v558
    %1180 = vmatprep.subr.bf16.mxu0 0
    %1181 = vmatpush1.bf16.msra.mxu0 %v559
    %1182 = vmatprep.subr.bf16.mxu0 0
    %1183 = vmatpush1.bf16.msra.mxu0 %v560
    %1184 = vmatprep.subr.bf16.mxu0 0
    %1185 = vmatpush1.bf16.msra.mxu0 %v561
    %1186 = vmatprep.subr.bf16.mxu0 0
    %1187 = vmatpush1.bf16.msra.mxu0 0
    %1188 = vmatprep.subr.bf16.mxu0 0
    %1189 = vmatpush1.bf16.msra.mxu0 0
    %1190 = vmatprep.subr.bf16.mxu0 0
    %1191 = vmatpush1.bf16.msra.mxu0 0
    %1192 = vmatprep.subr.bf16.mxu0 0
    %1193 = vmatpush1.bf16.msra.mxu0 0
    %1194 = vmatprep.subr.bf16.mxu0 0
    %1195 = vmatpush1.bf16.msra.mxu0 0
    %1196 = vmatprep.subr.bf16.mxu0 0
    %1197 = vmatpush1.bf16.msra.mxu0 0
    %1198 = vmatprep.subr.bf16.mxu0 0
    %1199 = vmatpush1.bf16.msra.mxu0 0
    %1200 = vmatprep.subr.bf16.mxu0 0
    %1201 = vmatpush1.bf16.msra.mxu0 0
    %1202 = vmatprep.subr.bf16.mxu0 0
    %1203 = vmatpush1.bf16.msra.mxu0 0
    %1204 = vmatprep.subr.bf16.mxu0 0
    %1205 = vmatpush1.bf16.msra.mxu0 0
    %1206 = vmatprep.subr.bf16.mxu0 0
    %1207 = vmatpush1.bf16.msra.mxu0 0
    %1208 = vmatprep.subr.bf16.mxu0 0
    %1209 = vmatpush1.bf16.msra.mxu0 0
    %1210 = vmatprep.mubr.bf16.mxu0 0
    %1211 = vmatmul.mubr.bf16.gmra.mrb[0].mxu0 %v1176
    %v1212 = vpop.f32.mrb[0].mxu0
    %v1213 = vadd.f32 %v125, %v1212
    %v1214 = vpop.f32.mrb[0].mxu0
    %v1215 = vpop.f32.mrb[0].mxu0
    %v1216 = vpop.f32.mrb[0].mxu0
    %1217 = vdwg.mxu0
    %v1218 = vxor.u32 %v1213, 2147483648
    %v1219 = vmul.f32 %v1218, 1.442695
    %v1220 = vpow.pop %v1219
    %v1221 = vadd.f32 %v1220, 1.0
    %v1222 = vrcp.pop %v1221
    %v1223 = vmul.f32 1.0, %v1222
    %1225 = vrot.lane.b32.xlu0 %v1213, 32
    %v1226 = vpop.permute.xlu0 %1225
    %v1228 = vmul.f32 %v1223, %v1226
    %1230 = vrot.lane.b32.xlu0 %v1228, 64
    %v1231 = vpop.permute.xlu0 %1230
    %v1233 = vadd.f32 %v1213, %v1231
    %v1234 = vtanh.pop %v1233
    %v1235 = vsub.f32 1.0, %v1223
    %1237 = vrot.lane.b32.xlu0 %v1234, 96
    %v1238 = vpop.permute.xlu0 %1237
    %v1240 = vmul.f32 %v1235, %v1238
    %v1241 = vmul.f32 %v1223, %v937
    %v1242 = vadd.f32 %v1240, %v1241
    %v1243 = vpack.c.bf16 %v1016, %v1016
    %v1245 = vrot.slane %v1243, 2
    %1246 = vrot.lane.b32.xlu0 %v1245, 96
    %v1247 = vpop.permute.xlu0 %1246
    %v1249 = vsel %vm243, %v1247, 0
    %1251 = vmatprep.subr.bf16.mxu0 0
    %1252 = vmatpush1.bf16.msra.mxu0 %v239
    %1253 = vmatprep.subr.bf16.mxu0 0
    %1254 = vmatpush1.bf16.msra.mxu0 %v240
    %1255 = vmatprep.subr.bf16.mxu0 0
    %1256 = vmatpush1.bf16.msra.mxu0 0
    %1257 = vmatprep.subr.bf16.mxu0 0
    %1258 = vmatpush1.bf16.msra.mxu0 0
    %1259 = vmatprep.subr.bf16.mxu0 0
    %1260 = vmatpush1.bf16.msra.mxu0 0
    %1261 = vmatprep.subr.bf16.mxu0 0
    %1262 = vmatpush1.bf16.msra.mxu0 0
    %1263 = vmatprep.subr.bf16.mxu0 0
    %1264 = vmatpush1.bf16.msra.mxu0 0
    %1265 = vmatprep.subr.bf16.mxu0 0
    %1266 = vmatpush1.bf16.msra.mxu0 0
    %1267 = vmatprep.subr.bf16.mxu0 0
    %1268 = vmatpush1.bf16.msra.mxu0 0
    %1269 = vmatprep.subr.bf16.mxu0 0
    %1270 = vmatpush1.bf16.msra.mxu0 0
    %1271 = vmatprep.subr.bf16.mxu0 0
    %1272 = vmatpush1.bf16.msra.mxu0 0
    %1273 = vmatprep.subr.bf16.mxu0 0
    %1274 = vmatpush1.bf16.msra.mxu0 0
    %1275 = vmatprep.subr.bf16.mxu0 0
    %1276 = vmatpush1.bf16.msra.mxu0 0
    %1277 = vmatprep.subr.bf16.mxu0 0
    %1278 = vmatpush1.bf16.msra.mxu0 0
    %1279 = vmatprep.subr.bf16.mxu0 0
    %1280 = vmatpush1.bf16.msra.mxu0 0
    %1281 = vmatprep.subr.bf16.mxu0 0
    %1282 = vmatpush1.bf16.msra.mxu0 0
    %1283 = vmatprep.mubr.bf16.mxu0 0
    %1284 = vmatmul.mubr.bf16.gmra.mrb[0].mxu0 %v1249
    %v1285 = vpop.f32.mrb[0].mxu0
    %v1286 = vadd.f32 0.0, %v1285
    %v1287 = vpop.f32.mrb[0].mxu0
    %v1288 = vpop.f32.mrb[0].mxu0
    %v1289 = vpop.f32.mrb[0].mxu0
    %1290 = vdwg.mxu0
    %v1292 = vrot.slane %v1286, 2
    %v1294 = vadd.f32 %v225, %v1292
    %v1295 = vxor.u32 %v1294, 2147483648
    %v1296 = vmul.f32 %v1295, 1.442695
    %v1297 = vpow.pop %v1296
    %v1298 = vadd.f32 %v1297, 1.0
    %v1299 = vrcp.pop %v1298
    %v1300 = vmul.f32 1.0, %v1299
    %1302 = vrot.lane.b32.xlu0 %v1294, 32
    %v1303 = vpop.permute.xlu0 %1302
    %v1305 = vmul.f32 %v1300, %v1303
    %1307 = vrot.lane.b32.xlu0 %v1305, 64
    %v1308 = vpop.permute.xlu0 %1307
    %v1310 = vadd.f32 %v1294, %v1308
    %v1311 = vtanh.pop %v1310
    %v1312 = vsub.f32 1.0, %v1300
    %1314 = vrot.lane.b32.xlu0 %v1311, 96
    %v1315 = vpop.permute.xlu0 %1314
    %v1317 = vmul.f32 %v1312, %v1315
    %v1318 = vrot.slane %v1016, 6
    %v1320 = vmul.f32 %v1300, %v1318
    %v1321 = vadd.f32 %v1317, %v1320
    %1323 = vrot.lane.b32.xlu0 %v1321, 96
    %v1324 = vpop.permute.xlu0 %1323
    %v1326 = vrot.slane %v1094, 2
    %v1328 = vsel %vm243, %v1324, %v1326
    %v1329 = vpack.c.bf16 %v1328, %v1328
    %v1331 = vrot.slane %v1329, 3
    %v1333 = vsel %vm351, %v1331, 0
    %1335 = vmatprep.subr.bf16.mxu0 0
    %1336 = vmatpush1.bf16.msra.mxu0 %v343
    %1337 = vmatprep.subr.bf16.mxu0 0
    %1338 = vmatpush1.bf16.msra.mxu0 %v344
    %1339 = vmatprep.subr.bf16.mxu0 0
    %1340 = vmatpush1.bf16.msra.mxu0 %v345
    %1341 = vmatprep.subr.bf16.mxu0 0
    %1342 = vmatpush1.bf16.msra.mxu0 %v346
    %1343 = vmatprep.subr.bf16.mxu0 0
    %1344 = vmatpush1.bf16.msra.mxu0 0
    %1345 = vmatprep.subr.bf16.mxu0 0
    %1346 = vmatpush1.bf16.msra.mxu0 0
    %1347 = vmatprep.subr.bf16.mxu0 0
    %1348 = vmatpush1.bf16.msra.mxu0 0
    %1349 = vmatprep.subr.bf16.mxu0 0
    %1350 = vmatpush1.bf16.msra.mxu0 0
    %1351 = vmatprep.subr.bf16.mxu0 0
    %1352 = vmatpush1.bf16.msra.mxu0 0
    %1353 = vmatprep.subr.bf16.mxu0 0
    %1354 = vmatpush1.bf16.msra.mxu0 0
    %1355 = vmatprep.subr.bf16.mxu0 0
    %1356 = vmatpush1.bf16.msra.mxu0 0
    %1357 = vmatprep.subr.bf16.mxu0 0
    %1358 = vmatpush1.bf16.msra.mxu0 0
    %1359 = vmatprep.subr.bf16.mxu0 0
    %1360 = vmatpush1.bf16.msra.mxu0 0
    %1361 = vmatprep.subr.bf16.mxu0 0
    %1362 = vmatpush1.bf16.msra.mxu0 0
    %1363 = vmatprep.subr.bf16.mxu0 0
    %1364 = vmatpush1.bf16.msra.mxu0 0
    %1365 = vmatprep.subr.bf16.mxu0 0
    %1366 = vmatpush1.bf16.msra.mxu0 0
    %1367 = vmatprep.mubr.bf16.mxu0 0
    %1368 = vmatmul.mubr.bf16.gmra.mrb[0].mxu0 %v1333
    %v1369 = vpop.f32.mrb[0].mxu0
    %v1370 = vadd.f32 %v109, %v1369
    %v1371 = vpop.f32.mrb[0].mxu0
    %v1372 = vpop.f32.mrb[0].mxu0
    %v1373 = vpop.f32.mrb[0].mxu0
    %1374 = vdwg.mxu0
    %v1375 = vxor.u32 %v1370, 2147483648
    %v1376 = vmul.f32 %v1375, 1.442695
    %v1377 = vpow.pop %v1376
    %v1378 = vadd.f32 %v1377, 1.0
    %v1379 = vrcp.pop %v1378
    %v1380 = vmul.f32 1.0, %v1379
    %1382 = vrot.lane.b32.xlu0 %v1370, 32
    %v1383 = vpop.permute.xlu0 %1382
    %v1385 = vmul.f32 %v1380, %v1383
    %1387 = vrot.lane.b32.xlu0 %v1385, 64
    %v1388 = vpop.permute.xlu0 %1387
    %v1390 = vadd.f32 %v1370, %v1388
    %v1391 = vtanh.pop %v1390
    %v1392 = vsub.f32 1.0, %v1380
    %1394 = vrot.lane.b32.xlu0 %v1391, 96
    %v1395 = vpop.permute.xlu0 %1394
    %v1397 = vmul.f32 %v1392, %v1395
    %v1398 = vmul.f32 %v1380, %v1094
    %v1399 = vadd.f32 %v1397, %v1398
    %1401 = vrot.lane.b32.xlu0 %v1399, 96
    %v1402 = vpop.permute.xlu0 %1401
    %v1404 = vsel %vm243, %v1402, %v1168
    %v1405 = vpack.c.bf16 %v1404, %v1404
    %v1407 = vsel %vm351, %v1405, 0
    %1409 = vmatprep.subr.bf16.mxu0 0
    %1410 = vmatpush1.bf16.msra.mxu0 %v451
    %1411 = vmatprep.subr.bf16.mxu0 0
    %1412 = vmatpush1.bf16.msra.mxu0 %v452
    %1413 = vmatprep.subr.bf16.mxu0 0
    %1414 = vmatpush1.bf16.msra.mxu0 %v453
    %1415 = vmatprep.subr.bf16.mxu0 0
    %1416 = vmatpush1.bf16.msra.mxu0 %v454
    %1417 = vmatprep.subr.bf16.mxu0 0
    %1418 = vmatpush1.bf16.msra.mxu0 0
    %1419 = vmatprep.subr.bf16.mxu0 0
    %1420 = vmatpush1.bf16.msra.mxu0 0
    %1421 = vmatprep.subr.bf16.mxu0 0
    %1422 = vmatpush1.bf16.msra.mxu0 0
    %1423 = vmatprep.subr.bf16.mxu0 0
    %1424 = vmatpush1.bf16.msra.mxu0 0
    %1425 = vmatprep.subr.bf16.mxu0 0
    %1426 = vmatpush1.bf16.msra.mxu0 0
    %1427 = vmatprep.subr.bf16.mxu0 0
    %1428 = vmatpush1.bf16.msra.mxu0 0
    %1429 = vmatprep.subr.bf16.mxu0 0
    %1430 = vmatpush1.bf16.msra.mxu0 0
    %1431 = vmatprep.subr.bf16.mxu0 0
    %1432 = vmatpush1.bf16.msra.mxu0 0
    %1433 = vmatprep.subr.bf16.mxu0 0
    %1434 = vmatpush1.bf16.msra.mxu0 0
    %1435 = vmatprep.subr.bf16.mxu0 0
    %1436 = vmatpush1.bf16.msra.mxu0 0
    %1437 = vmatprep.subr.bf16.mxu0 0
    %1438 = vmatpush1.bf16.msra.mxu0 0
    %1439 = vmatprep.subr.bf16.mxu0 0
    %1440 = vmatpush1.bf16.msra.mxu0 0
    %1441 = vmatprep.mubr.bf16.mxu0 0
    %1442 = vmatmul.mubr.bf16.gmra.mrb[0].mxu0 %v1407
    %v1443 = vpop.f32.mrb[0].mxu0
    %v1444 = vadd.f32 %v117, %v1443
    %v1445 = vpop.f32.mrb[0].mxu0
    %v1446 = vpop.f32.mrb[0].mxu0
    %v1447 = vpop.f32.mrb[0].mxu0
    %1448 = vdwg.mxu0
    %v1449 = vxor.u32 %v1444, 2147483648
    %v1450 = vmul.f32 %v1449, 1.442695
    %v1451 = vpow.pop %v1450
    %v1452 = vadd.f32 %v1451, 1.0
    %v1453 = vrcp.pop %v1452
    %v1454 = vmul.f32 1.0, %v1453
    %1456 = vrot.lane.b32.xlu0 %v1444, 32
    %v1457 = vpop.permute.xlu0 %1456
    %v1459 = vmul.f32 %v1454, %v1457
    %1461 = vrot.lane.b32.xlu0 %v1459, 64
    %v1462 = vpop.permute.xlu0 %1461
    %v1464 = vadd.f32 %v1444, %v1462
    %v1465 = vtanh.pop %v1464
    %v1466 = vsub.f32 1.0, %v1454
    %1468 = vrot.lane.b32.xlu0 %v1465, 96
    %v1469 = vpop.permute.xlu0 %1468
    %v1471 = vmul.f32 %v1466, %v1469
    %v1472 = vmul.f32 %v1454, %v1168
    %v1473 = vadd.f32 %v1471, %v1472
    %1475 = vrot.lane.b32.xlu0 %v1473, 96
    %v1476 = vpop.permute.xlu0 %1475
    %v1478 = vsel %vm243, %v1476, %v1242
    %v1479 = vpack.c.bf16 %v1478, %v1478
    %v1481 = vsel %vm351, %v1479, 0
    %1483 = vmatprep.subr.bf16.mxu0 0
    %1484 = vmatpush1.bf16.msra.mxu0 %v558
    %1485 = vmatprep.subr.bf16.mxu0 0
    %1486 = vmatpush1.bf16.msra.mxu0 %v559
    %1487 = vmatprep.subr.bf16.mxu0 0
    %1488 = vmatpush1.bf16.msra.mxu0 %v560
    %1489 = vmatprep.subr.bf16.mxu0 0
    %1490 = vmatpush1.bf16.msra.mxu0 %v561
    %1491 = vmatprep.subr.bf16.mxu0 0
    %1492 = vmatpush1.bf16.msra.mxu0 0
    %1493 = vmatprep.subr.bf16.mxu0 0
    %1494 = vmatpush1.bf16.msra.mxu0 0
    %1495 = vmatprep.subr.bf16.mxu0 0
    %1496 = vmatpush1.bf16.msra.mxu0 0
    %1497 = vmatprep.subr.bf16.mxu0 0
    %1498 = vmatpush1.bf16.msra.mxu0 0
    %1499 = vmatprep.subr.bf16.mxu0 0
    %1500 = vmatpush1.bf16.msra.mxu0 0
    %1501 = vmatprep.subr.bf16.mxu0 0
    %1502 = vmatpush1.bf16.msra.mxu0 0
    %1503 = vmatprep.subr.bf16.mxu0 0
    %1504 = vmatpush1.bf16.msra.mxu0 0
    %1505 = vmatprep.subr.bf16.mxu0 0
    %1506 = vmatpush1.bf16.msra.mxu0 0
    %1507 = vmatprep.subr.bf16.mxu0 0
    %1508 = vmatpush1.bf16.msra.mxu0 0
    %1509 = vmatprep.subr.bf16.mxu0 0
    %1510 = vmatpush1.bf16.msra.mxu0 0
    %1511 = vmatprep.subr.bf16.mxu0 0
    %1512 = vmatpush1.bf16.msra.mxu0 0
    %1513 = vmatprep.subr.bf16.mxu0 0
    %1514 = vmatpush1.bf16.msra.mxu0 0
    %1515 = vmatprep.mubr.bf16.mxu0 0
    %1516 = vmatmul.mubr.bf16.gmra.mrb[0].mxu0 %v1481
    %v1517 = vpop.f32.mrb[0].mxu0
    %v1518 = vadd.f32 %v125, %v1517
    %v1519 = vpop.f32.mrb[0].mxu0
    %v1520 = vpop.f32.mrb[0].mxu0
    %v1521 = vpop.f32.mrb[0].mxu0
    %1522 = vdwg.mxu0
    %v1523 = vxor.u32 %v1518, 2147483648
    %v1524 = vmul.f32 %v1523, 1.442695
    %v1525 = vpow.pop %v1524
    %v1526 = vadd.f32 %v1525, 1.0
    %v1527 = vrcp.pop %v1526
    %v1528 = vmul.f32 1.0, %v1527
    %1530 = vrot.lane.b32.xlu0 %v1518, 32
    %v1531 = vpop.permute.xlu0 %1530
    %v1533 = vmul.f32 %v1528, %v1531
    %1535 = vrot.lane.b32.xlu0 %v1533, 64
    %v1536 = vpop.permute.xlu0 %1535
    %v1538 = vadd.f32 %v1518, %v1536
    %v1539 = vtanh.pop %v1538
    %v1540 = vsub.f32 1.0, %v1528
    %1542 = vrot.lane.b32.xlu0 %v1539, 96
    %v1543 = vpop.permute.xlu0 %1542
    %v1545 = vmul.f32 %v1540, %v1543
    %v1546 = vmul.f32 %v1528, %v1242
    %v1547 = vadd.f32 %v1545, %v1546
    %v1548 = vpack.c.bf16 %v1321, %v1321
    %v1550 = vrot.slane %v1548, 3
    %1551 = vrot.lane.b32.xlu0 %v1550, 96
    %v1552 = vpop.permute.xlu0 %1551
    %v1554 = vsel %vm243, %v1552, 0
    %1556 = vmatprep.subr.bf16.mxu0 0
    %1557 = vmatpush1.bf16.msra.mxu0 %v239
    %1558 = vmatprep.subr.bf16.mxu0 0
    %1559 = vmatpush1.bf16.msra.mxu0 %v240
    %1560 = vmatprep.subr.bf16.mxu0 0
    %1561 = vmatpush1.bf16.msra.mxu0 0
    %1562 = vmatprep.subr.bf16.mxu0 0
    %1563 = vmatpush1.bf16.msra.mxu0 0
    %1564 = vmatprep.subr.bf16.mxu0 0
    %1565 = vmatpush1.bf16.msra.mxu0 0
    %1566 = vmatprep.subr.bf16.mxu0 0
    %1567 = vmatpush1.bf16.msra.mxu0 0
    %1568 = vmatprep.subr.bf16.mxu0 0
    %1569 = vmatpush1.bf16.msra.mxu0 0
    %1570 = vmatprep.subr.bf16.mxu0 0
    %1571 = vmatpush1.bf16.msra.mxu0 0
    %1572 = vmatprep.subr.bf16.mxu0 0
    %1573 = vmatpush1.bf16.msra.mxu0 0
    %1574 = vmatprep.subr.bf16.mxu0 0
    %1575 = vmatpush1.bf16.msra.mxu0 0
    %1576 = vmatprep.subr.bf16.mxu0 0
    %1577 = vmatpush1.bf16.msra.mxu0 0
    %1578 = vmatprep.subr.bf16.mxu0 0
    %1579 = vmatpush1.bf16.msra.mxu0 0
    %1580 = vmatprep.subr.bf16.mxu0 0
    %1581 = vmatpush1.bf16.msra.mxu0 0
    %1582 = vmatprep.subr.bf16.mxu0 0
    %1583 = vmatpush1.bf16.msra.mxu0 0
    %1584 = vmatprep.subr.bf16.mxu0 0
    %1585 = vmatpush1.bf16.msra.mxu0 0
    %1586 = vmatprep.subr.bf16.mxu0 0
    %1587 = vmatpush1.bf16.msra.mxu0 0
    %1588 = vmatprep.mubr.bf16.mxu0 0
    %1589 = vmatmul.mubr.bf16.gmra.mrb[0].mxu0 %v1554
    %v1590 = vpop.f32.mrb[0].mxu0
    %v1591 = vadd.f32 0.0, %v1590
    %v1592 = vpop.f32.mrb[0].mxu0
    %v1593 = vpop.f32.mrb[0].mxu0
    %v1594 = vpop.f32.mrb[0].mxu0
    %1595 = vdwg.mxu0
    %v1596 = vadd.f32 %v228, %v1591
    %v1597 = vxor.u32 %v1596, 2147483648
    %v1598 = vmul.f32 %v1597, 1.442695
    %v1599 = vpow.pop %v1598
    %v1600 = vadd.f32 %v1599, 1.0
    %v1601 = vrcp.pop %v1600
    %v1602 = vmul.f32 1.0, %v1601
    %1604 = vrot.lane.b32.xlu0 %v1596, 32
    %v1605 = vpop.permute.xlu0 %1604
    %v1607 = vmul.f32 %v1602, %v1605
    %1609 = vrot.lane.b32.xlu0 %v1607, 64
    %v1610 = vpop.permute.xlu0 %1609
    %v1612 = vadd.f32 %v1596, %v1610
    %v1613 = vtanh.pop %v1612
    %v1614 = vsub.f32 1.0, %v1602
    %1616 = vrot.lane.b32.xlu0 %v1613, 96
    %v1617 = vpop.permute.xlu0 %1616
    %v1619 = vmul.f32 %v1614, %v1617
    %v1620 = vrot.slane %v1321, 6
    %v1622 = vmul.f32 %v1602, %v1620
    %v1623 = vadd.f32 %v1619, %v1622
    %1625 = vrot.lane.b32.xlu0 %v1623, 96
    %v1626 = vpop.permute.xlu0 %1625
    %v1628 = vsel %vm243, %v1626, %v1399
    %v1629 = vpack.c.bf16 %v1628, %v1628
    %v1631 = vsel %vm351, %v1629, 0
    %1633 = vmatprep.subr.bf16.mxu0 0
    %1634 = vmatpush1.bf16.msra.mxu0 %v343
    %1635 = vmatprep.subr.bf16.mxu0 0
    %1636 = vmatpush1.bf16.msra.mxu0 %v344
    %1637 = vmatprep.subr.bf16.mxu0 0
    %1638 = vmatpush1.bf16.msra.mxu0 %v345
    %1639 = vmatprep.subr.bf16.mxu0 0
    %1640 = vmatpush1.bf16.msra.mxu0 %v346
    %1641 = vmatprep.subr.bf16.mxu0 0
    %1642 = vmatpush1.bf16.msra.mxu0 0
    %1643 = vmatprep.subr.bf16.mxu0 0
    %1644 = vmatpush1.bf16.msra.mxu0 0
    %1645 = vmatprep.subr.bf16.mxu0 0
    %1646 = vmatpush1.bf16.msra.mxu0 0
    %1647 = vmatprep.subr.bf16.mxu0 0
    %1648 = vmatpush1.bf16.msra.mxu0 0
    %1649 = vmatprep.subr.bf16.mxu0 0
    %1650 = vmatpush1.bf16.msra.mxu0 0
    %1651 = vmatprep.subr.bf16.mxu0 0
    %1652 = vmatpush1.bf16.msra.mxu0 0
    %1653 = vmatprep.subr.bf16.mxu0 0
    %1654 = vmatpush1.bf16.msra.mxu0 0
    %1655 = vmatprep.subr.bf16.mxu0 0
    %1656 = vmatpush1.bf16.msra.mxu0 0
    %1657 = vmatprep.subr.bf16.mxu0 0
    %1658 = vmatpush1.bf16.msra.mxu0 0
    %1659 = vmatprep.subr.bf16.mxu0 0
    %1660 = vmatpush1.bf16.msra.mxu0 0
    %1661 = vmatprep.subr.bf16.mxu0 0
    %1662 = vmatpush1.bf16.msra.mxu0 0
    %1663 = vmatprep.subr.bf16.mxu0 0
    %1664 = vmatpush1.bf16.msra.mxu0 0
    %1665 = vmatprep.mubr.bf16.mxu0 0
    %1666 = vmatmul.mubr.bf16.gmra.mrb[0].mxu0 %v1631
    %v1667 = vpop.f32.mrb[0].mxu0
    %v1668 = vadd.f32 %v109, %v1667
    %v1669 = vpop.f32.mrb[0].mxu0
    %v1670 = vpop.f32.mrb[0].mxu0
    %v1671 = vpop.f32.mrb[0].mxu0
    %1672 = vdwg.mxu0
    %v1673 = vxor.u32 %v1668, 2147483648
    %v1674 = vmul.f32 %v1673, 1.442695
    %v1675 = vpow.pop %v1674
    %v1676 = vadd.f32 %v1675, 1.0
    %v1677 = vrcp.pop %v1676
    %v1678 = vmul.f32 1.0, %v1677
    %1680 = vrot.lane.b32.xlu0 %v1668, 32
    %v1681 = vpop.permute.xlu0 %1680
    %v1683 = vmul.f32 %v1678, %v1681
    %1685 = vrot.lane.b32.xlu0 %v1683, 64
    %v1686 = vpop.permute.xlu0 %1685
    %v1688 = vadd.f32 %v1668, %v1686
    %v1689 = vtanh.pop %v1688
    %v1690 = vsub.f32 1.0, %v1678
    %1692 = vrot.lane.b32.xlu0 %v1689, 96
    %v1693 = vpop.permute.xlu0 %1692
    %v1695 = vmul.f32 %v1690, %v1693
    %v1696 = vmul.f32 %v1678, %v1399
    %v1697 = vadd.f32 %v1695, %v1696
    %1699 = vrot.lane.b32.xlu0 %v1697, 96
    %v1700 = vpop.permute.xlu0 %1699
    %v1702 = vsel %vm243, %v1700, %v1473
    %v1703 = vpack.c.bf16 %v1702, %v1702
    %v1705 = vsel %vm351, %v1703, 0
    %1707 = vmatprep.subr.bf16.mxu0 0
    %1708 = vmatpush1.bf16.msra.mxu0 %v451
    %1709 = vmatprep.subr.bf16.mxu0 0
    %1710 = vmatpush1.bf16.msra.mxu0 %v452
    %1711 = vmatprep.subr.bf16.mxu0 0
    %1712 = vmatpush1.bf16.msra.mxu0 %v453
    %1713 = vmatprep.subr.bf16.mxu0 0
    %1714 = vmatpush1.bf16.msra.mxu0 %v454
    %1715 = vmatprep.subr.bf16.mxu0 0
    %1716 = vmatpush1.bf16.msra.mxu0 0
    %1717 = vmatprep.subr.bf16.mxu0 0
    %1718 = vmatpush1.bf16.msra.mxu0 0
    %1719 = vmatprep.subr.bf16.mxu0 0
    %1720 = vmatpush1.bf16.msra.mxu0 0
    %1721 = vmatprep.subr.bf16.mxu0 0
    %1722 = vmatpush1.bf16.msra.mxu0 0
    %1723 = vmatprep.subr.bf16.mxu0 0
    %1724 = vmatpush1.bf16.msra.mxu0 0
    %1725 = vmatprep.subr.bf16.mxu0 0
    %1726 = vmatpush1.bf16.msra.mxu0 0
    %1727 = vmatprep.subr.bf16.mxu0 0
    %1728 = vmatpush1.bf16.msra.mxu0 0
    %1729 = vmatprep.subr.bf16.mxu0 0
    %1730 = vmatpush1.bf16.msra.mxu0 0
    %1731 = vmatprep.subr.bf16.mxu0 0
    %1732 = vmatpush1.bf16.msra.mxu0 0
    %1733 = vmatprep.subr.bf16.mxu0 0
    %1734 = vmatpush1.bf16.msra.mxu0 0
    %1735 = vmatprep.subr.bf16.mxu0 0
    %1736 = vmatpush1.bf16.msra.mxu0 0
    %1737 = vmatprep.subr.bf16.mxu0 0
    %1738 = vmatpush1.bf16.msra.mxu0 0
    %1739 = vmatprep.mubr.bf16.mxu0 0
    %1740 = vmatmul.mubr.bf16.gmra.mrb[0].mxu0 %v1705
    %v1741 = vpop.f32.mrb[0].mxu0
    %v1742 = vadd.f32 %v117, %v1741
    %v1743 = vpop.f32.mrb[0].mxu0
    %v1744 = vpop.f32.mrb[0].mxu0
    %v1745 = vpop.f32.mrb[0].mxu0
    %1746 = vdwg.mxu0
    %v1747 = vxor.u32 %v1742, 2147483648
    %v1748 = vmul.f32 %v1747, 1.442695
    %v1749 = vpow.pop %v1748
    %v1750 = vadd.f32 %v1749, 1.0
    %v1751 = vrcp.pop %v1750
    %v1752 = vmul.f32 1.0, %v1751
    %1754 = vrot.lane.b32.xlu0 %v1742, 32
    %v1755 = vpop.permute.xlu0 %1754
    %v1757 = vmul.f32 %v1752, %v1755
    %1759 = vrot.lane.b32.xlu0 %v1757, 64
    %v1760 = vpop.permute.xlu0 %1759
    %v1762 = vadd.f32 %v1742, %v1760
    %v1763 = vtanh.pop %v1762
    %v1764 = vsub.f32 1.0, %v1752
    %1766 = vrot.lane.b32.xlu0 %v1763, 96
    %v1767 = vpop.permute.xlu0 %1766
    %v1769 = vmul.f32 %v1764, %v1767
    %v1770 = vmul.f32 %v1752, %v1473
    %v1771 = vadd.f32 %v1769, %v1770
    %1773 = vrot.lane.b32.xlu0 %v1771, 96
    %v1774 = vpop.permute.xlu0 %1773
    %v1776 = vsel %vm243, %v1774, %v1547
    %v1777 = vpack.c.bf16 %v1776, %v1776
    %v1779 = vsel %vm351, %v1777, 0
    %1781 = vmatprep.subr.bf16.mxu0 0
    %1782 = vmatpush1.bf16.msra.mxu0 %v558
    %1783 = vmatprep.subr.bf16.mxu0 0
    %1784 = vmatpush1.bf16.msra.mxu0 %v559
    %1785 = vmatprep.subr.bf16.mxu0 0
    %1786 = vmatpush1.bf16.msra.mxu0 %v560
    %1787 = vmatprep.subr.bf16.mxu0 0
    %1788 = vmatpush1.bf16.msra.mxu0 %v561
    %1789 = vmatprep.subr.bf16.mxu0 0
    %1790 = vmatpush1.bf16.msra.mxu0 0
    %1791 = vmatprep.subr.bf16.mxu0 0
    %1792 = vmatpush1.bf16.msra.mxu0 0
    %1793 = vmatprep.subr.bf16.mxu0 0
    %1794 = vmatpush1.bf16.msra.mxu0 0
    %1795 = vmatprep.subr.bf16.mxu0 0
    %1796 = vmatpush1.bf16.msra.mxu0 0
    %1797 = vmatprep.subr.bf16.mxu0 0
    %1798 = vmatpush1.bf16.msra.mxu0 0
    %1799 = vmatprep.subr.bf16.mxu0 0
    %1800 = vmatpush1.bf16.msra.mxu0 0
    %1801 = vmatprep.subr.bf16.mxu0 0
    %1802 = vmatpush1.bf16.msra.mxu0 0
    %1803 = vmatprep.subr.bf16.mxu0 0
    %1804 = vmatpush1.bf16.msra.mxu0 0
    %1805 = vmatprep.subr.bf16.mxu0 0
    %1806 = vmatpush1.bf16.msra.mxu0 0
    %1807 = vmatprep.subr.bf16.mxu0 0
    %1808 = vmatpush1.bf16.msra.mxu0 0
    %1809 = vmatprep.subr.bf16.mxu0 0
    %1810 = vmatpush1.bf16.msra.mxu0 0
    %1811 = vmatprep.subr.bf16.mxu0 0
    %1812 = vmatpush1.bf16.msra.mxu0 0
    %1813 = vmatprep.mubr.bf16.mxu0 0
    %1814 = vmatmul.mubr.bf16.gmra.mrb[0].mxu0 %v1779
    %v1815 = vpop.f32.mrb[0].mxu0
    %v1816 = vadd.f32 %v125, %v1815
    %v1817 = vpop.f32.mrb[0].mxu0
    %v1818 = vpop.f32.mrb[0].mxu0
    %v1819 = vpop.f32.mrb[0].mxu0
    %1820 = vdwg.mxu0
    %v1821 = vxor.u32 %v1816, 2147483648
    %v1822 = vmul.f32 %v1821, 1.442695
    %v1823 = vpow.pop %v1822
    %v1824 = vadd.f32 %v1823, 1.0
    %v1825 = vrcp.pop %v1824
    %v1826 = vmul.f32 1.0, %v1825
    %1828 = vrot.lane.b32.xlu0 %v1816, 32
    %v1829 = vpop.permute.xlu0 %1828
    %v1831 = vmul.f32 %v1826, %v1829
    %1833 = vrot.lane.b32.xlu0 %v1831, 64
    %v1834 = vpop.permute.xlu0 %1833
    %v1836 = vadd.f32 %v1816, %v1834
    %v1837 = vtanh.pop %v1836
    %v1838 = vsub.f32 1.0, %v1826
    %1840 = vrot.lane.b32.xlu0 %v1837, 96
    %v1841 = vpop.permute.xlu0 %1840
    %v1843 = vmul.f32 %v1838, %v1841
    %v1844 = vmul.f32 %v1826, %v1547
    %v1845 = vadd.f32 %v1843, %v1844
    %v1846 = vpack.c.bf16 %v1623, %v1623
    %1848 = vrot.lane.b32.xlu0 %v1846, 96
    %v1849 = vpop.permute.xlu0 %1848
    %v1851 = vsel %vm243, %v1849, 0
    %1853 = vmatprep.subr.bf16.mxu0 0
    %1854 = vmatpush1.bf16.msra.mxu0 %v239
    %1855 = vmatprep.subr.bf16.mxu0 0
    %1856 = vmatpush1.bf16.msra.mxu0 %v240
    %1857 = vmatprep.subr.bf16.mxu0 0
    %1858 = vmatpush1.bf16.msra.mxu0 0
    %1859 = vmatprep.subr.bf16.mxu0 0
    %1860 = vmatpush1.bf16.msra.mxu0 0
    %1861 = vmatprep.subr.bf16.mxu0 0
    %1862 = vmatpush1.bf16.msra.mxu0 0
    %1863 = vmatprep.subr.bf16.mxu0 0
    %1864 = vmatpush1.bf16.msra.mxu0 0
    %1865 = vmatprep.subr.bf16.mxu0 0
    %1866 = vmatpush1.bf16.msra.mxu0 0
    %1867 = vmatprep.subr.bf16.mxu0 0
    %1868 = vmatpush1.bf16.msra.mxu0 0
    %1869 = vmatprep.subr.bf16.mxu0 0
    %1870 = vmatpush1.bf16.msra.mxu0 0
    %1871 = vmatprep.subr.bf16.mxu0 0
    %1872 = vmatpush1.bf16.msra.mxu0 0
    %1873 = vmatprep.subr.bf16.mxu0 0
    %1874 = vmatpush1.bf16.msra.mxu0 0
    %1875 = vmatprep.subr.bf16.mxu0 0
    %1876 = vmatpush1.bf16.msra.mxu0 0
    %1877 = vmatprep.subr.bf16.mxu0 0
    %1878 = vmatpush1.bf16.msra.mxu0 0
    %1879 = vmatprep.subr.bf16.mxu0 0
    %1880 = vmatpush1.bf16.msra.mxu0 0
    %1881 = vmatprep.subr.bf16.mxu0 0
    %1882 = vmatpush1.bf16.msra.mxu0 0
    %1883 = vmatprep.subr.bf16.mxu0 0
    %1884 = vmatpush1.bf16.msra.mxu0 0
    %1885 = vmatprep.mubr.bf16.mxu0 0
    %1886 = vmatmul.mubr.bf16.gmra.mrb[0].mxu0 %v1851
    %v1887 = vpop.f32.mrb[0].mxu0
    %v1888 = vadd.f32 0.0, %v1887
    %v1889 = vpop.f32.mrb[0].mxu0
    %v1890 = vpop.f32.mrb[0].mxu0
    %v1891 = vpop.f32.mrb[0].mxu0
    %1892 = vdwg.mxu0
    %v1894 = vrot.slane %v1888, 6
    %v1896 = vadd.f32 %v228, %v1894
    %v1897 = vxor.u32 %v1896, 2147483648
    %v1898 = vmul.f32 %v1897, 1.442695
    %v1899 = vpow.pop %v1898
    %v1900 = vadd.f32 %v1899, 1.0
    %v1901 = vrcp.pop %v1900
    %v1902 = vmul.f32 1.0, %v1901
    %1904 = vrot.lane.b32.xlu0 %v1896, 32
    %v1905 = vpop.permute.xlu0 %1904
    %v1907 = vmul.f32 %v1902, %v1905
    %1909 = vrot.lane.b32.xlu0 %v1907, 64
    %v1910 = vpop.permute.xlu0 %1909
    %v1912 = vadd.f32 %v1896, %v1910
    %v1913 = vtanh.pop %v1912
    %v1914 = vsub.f32 1.0, %v1902
    %1916 = vrot.lane.b32.xlu0 %v1913, 96
    %v1917 = vpop.permute.xlu0 %1916
    %v1919 = vmul.f32 %v1914, %v1917
    %v1920 = vrot.slane %v1623, 6
    %v1922 = vmul.f32 %v1902, %v1920
    %v1923 = vadd.f32 %v1919, %v1922
    %1925 = vrot.lane.b32.xlu0 %v1923, 96
    %v1926 = vpop.permute.xlu0 %1925
    %v1928 = vrot.slane %v1697, 6
    %v1930 = vsel %vm243, %v1926, %v1928
    %v1931 = vpack.c.bf16 %v1930, %v1930
    %v1933 = vrot.slane %v1931, 1
    %v1935 = vsel %vm351, %v1933, 0
    %1937 = vmatprep.subr.bf16.mxu0 0
    %1938 = vmatpush1.bf16.msra.mxu0 %v343
    %1939 = vmatprep.subr.bf16.mxu0 0
    %1940 = vmatpush1.bf16.msra.mxu0 %v344
    %1941 = vmatprep.subr.bf16.mxu0 0
    %1942 = vmatpush1.bf16.msra.mxu0 %v345
    %1943 = vmatprep.subr.bf16.mxu0 0
    %1944 = vmatpush1.bf16.msra.mxu0 %v346
    %1945 = vmatprep.subr.bf16.mxu0 0
    %1946 = vmatpush1.bf16.msra.mxu0 0
    %1947 = vmatprep.subr.bf16.mxu0 0
    %1948 = vmatpush1.bf16.msra.mxu0 0
    %1949 = vmatprep.subr.bf16.mxu0 0
    %1950 = vmatpush1.bf16.msra.mxu0 0
    %1951 = vmatprep.subr.bf16.mxu0 0
    %1952 = vmatpush1.bf16.msra.mxu0 0
    %1953 = vmatprep.subr.bf16.mxu0 0
    %1954 = vmatpush1.bf16.msra.mxu0 0
    %1955 = vmatprep.subr.bf16.mxu0 0
    %1956 = vmatpush1.bf16.msra.mxu0 0
    %1957 = vmatprep.subr.bf16.mxu0 0
    %1958 = vmatpush1.bf16.msra.mxu0 0
    %1959 = vmatprep.subr.bf16.mxu0 0
    %1960 = vmatpush1.bf16.msra.mxu0 0
    %1961 = vmatprep.subr.bf16.mxu0 0
    %1962 = vmatpush1.bf16.msra.mxu0 0
    %1963 = vmatprep.subr.bf16.mxu0 0
    %1964 = vmatpush1.bf16.msra.mxu0 0
    %1965 = vmatprep.subr.bf16.mxu0 0
    %1966 = vmatpush1.bf16.msra.mxu0 0
    %1967 = vmatprep.subr.bf16.mxu0 0
    %1968 = vmatpush1.bf16.msra.mxu0 0
    %1969 = vmatprep.mubr.bf16.mxu0 0
    %1970 = vmatmul.mubr.bf16.gmra.mrb[0].mxu0 %v1935
    %v1971 = vpop.f32.mrb[0].mxu0
    %v1972 = vadd.f32 %v109, %v1971
    %v1973 = vpop.f32.mrb[0].mxu0
    %v1974 = vpop.f32.mrb[0].mxu0
    %v1975 = vpop.f32.mrb[0].mxu0
    %1976 = vdwg.mxu0
    %v1977 = vxor.u32 %v1972, 2147483648
    %v1978 = vmul.f32 %v1977, 1.442695
    %v1979 = vpow.pop %v1978
    %v1980 = vadd.f32 %v1979, 1.0
    %v1981 = vrcp.pop %v1980
    %v1982 = vmul.f32 1.0, %v1981
    %1984 = vrot.lane.b32.xlu0 %v1972, 32
    %v1985 = vpop.permute.xlu0 %1984
    %v1987 = vmul.f32 %v1982, %v1985
    %1989 = vrot.lane.b32.xlu0 %v1987, 64
    %v1990 = vpop.permute.xlu0 %1989
    %v1992 = vadd.f32 %v1972, %v1990
    %v1993 = vtanh.pop %v1992
    %v1994 = vsub.f32 1.0, %v1982
    %1996 = vrot.lane.b32.xlu0 %v1993, 96
    %v1997 = vpop.permute.xlu0 %1996
    %v1999 = vmul.f32 %v1994, %v1997
    %v2000 = vmul.f32 %v1982, %v1697
    %v2001 = vadd.f32 %v1999, %v2000
    %2003 = vrot.lane.b32.xlu0 %v2001, 96
    %v2004 = vpop.permute.xlu0 %2003
    %v2006 = vsel %vm243, %v2004, %v1771
    %v2007 = vpack.c.bf16 %v2006, %v2006
    %v2009 = vsel %vm351, %v2007, 0
    %2011 = vmatprep.subr.bf16.mxu0 0
    %2012 = vmatpush1.bf16.msra.mxu0 %v451
    %2013 = vmatprep.subr.bf16.mxu0 0
    %2014 = vmatpush1.bf16.msra.mxu0 %v452
    %2015 = vmatprep.subr.bf16.mxu0 0
    %2016 = vmatpush1.bf16.msra.mxu0 %v453
    %2017 = vmatprep.subr.bf16.mxu0 0
    %2018 = vmatpush1.bf16.msra.mxu0 %v454
    %2019 = vmatprep.subr.bf16.mxu0 0
    %2020 = vmatpush1.bf16.msra.mxu0 0
    %2021 = vmatprep.subr.bf16.mxu0 0
    %2022 = vmatpush1.bf16.msra.mxu0 0
    %2023 = vmatprep.subr.bf16.mxu0 0
    %2024 = vmatpush1.bf16.msra.mxu0 0
    %2025 = vmatprep.subr.bf16.mxu0 0
    %2026 = vmatpush1.bf16.msra.mxu0 0
    %2027 = vmatprep.subr.bf16.mxu0 0
    %2028 = vmatpush1.bf16.msra.mxu0 0
    %2029 = vmatprep.subr.bf16.mxu0 0
    %2030 = vmatpush1.bf16.msra.mxu0 0
    %2031 = vmatprep.subr.bf16.mxu0 0
    %2032 = vmatpush1.bf16.msra.mxu0 0
    %2033 = vmatprep.subr.bf16.mxu0 0
    %2034 = vmatpush1.bf16.msra.mxu0 0
    %2035 = vmatprep.subr.bf16.mxu0 0
    %2036 = vmatpush1.bf16.msra.mxu0 0
    %2037 = vmatprep.subr.bf16.mxu0 0
    %2038 = vmatpush1.bf16.msra.mxu0 0
    %2039 = vmatprep.subr.bf16.mxu0 0
    %2040 = vmatpush1.bf16.msra.mxu0 0
    %2041 = vmatprep.subr.bf16.mxu0 0
    %2042 = vmatpush1.bf16.msra.mxu0 0
    %2043 = vmatprep.mubr.bf16.mxu0 0
    %2044 = vmatmul.mubr.bf16.gmra.mrb[0].mxu0 %v2009
    %v2045 = vpop.f32.mrb[0].mxu0
    %v2046 = vadd.f32 %v117, %v2045
    %v2047 = vpop.f32.mrb[0].mxu0
    %v2048 = vpop.f32.mrb[0].mxu0
    %v2049 = vpop.f32.mrb[0].mxu0
    %2050 = vdwg.mxu0
    %v2051 = vxor.u32 %v2046, 2147483648
    %v2052 = vmul.f32 %v2051, 1.442695
    %v2053 = vpow.pop %v2052
    %v2054 = vadd.f32 %v2053, 1.0
    %v2055 = vrcp.pop %v2054
    %v2056 = vmul.f32 1.0, %v2055
    %2058 = vrot.lane.b32.xlu0 %v2046, 32
    %v2059 = vpop.permute.xlu0 %2058
    %v2061 = vmul.f32 %v2056, %v2059
    %2063 = vrot.lane.b32.xlu0 %v2061, 64
    %v2064 = vpop.permute.xlu0 %2063
    %v2066 = vadd.f32 %v2046, %v2064
    %v2067 = vtanh.pop %v2066
    %v2068 = vsub.f32 1.0, %v2056
    %2070 = vrot.lane.b32.xlu0 %v2067, 96
    %v2071 = vpop.permute.xlu0 %2070
    %v2073 = vmul.f32 %v2068, %v2071
    %v2074 = vmul.f32 %v2056, %v1771
    %v2075 = vadd.f32 %v2073, %v2074
    %2077 = vrot.lane.b32.xlu0 %v2075, 96
    %v2078 = vpop.permute.xlu0 %2077
    %v2080 = vsel %vm243, %v2078, %v1845
    %v2081 = vpack.c.bf16 %v2080, %v2080
    %v2083 = vsel %vm351, %v2081, 0
    %2085 = vmatprep.subr.bf16.mxu0 0
    %2086 = vmatpush1.bf16.msra.mxu0 %v558
    %2087 = vmatprep.subr.bf16.mxu0 0
    %2088 = vmatpush1.bf16.msra.mxu0 %v559
    %2089 = vmatprep.subr.bf16.mxu0 0
    %2090 = vmatpush1.bf16.msra.mxu0 %v560
    %2091 = vmatprep.subr.bf16.mxu0 0
    %2092 = vmatpush1.bf16.msra.mxu0 %v561
    %2093 = vmatprep.subr.bf16.mxu0 0
    %2094 = vmatpush1.bf16.msra.mxu0 0
    %2095 = vmatprep.subr.bf16.mxu0 0
    %2096 = vmatpush1.bf16.msra.mxu0 0
    %2097 = vmatprep.subr.bf16.mxu0 0
    %2098 = vmatpush1.bf16.msra.mxu0 0
    %2099 = vmatprep.subr.bf16.mxu0 0
    %2100 = vmatpush1.bf16.msra.mxu0 0
    %2101 = vmatprep.subr.bf16.mxu0 0
    %2102 = vmatpush1.bf16.msra.mxu0 0
    %2103 = vmatprep.subr.bf16.mxu0 0
    %2104 = vmatpush1.bf16.msra.mxu0 0
    %2105 = vmatprep.subr.bf16.mxu0 0
    %2106 = vmatpush1.bf16.msra.mxu0 0
    %2107 = vmatprep.subr.bf16.mxu0 0
    %2108 = vmatpush1.bf16.msra.mxu0 0
    %2109 = vmatprep.subr.bf16.mxu0 0
    %2110 = vmatpush1.bf16.msra.mxu0 0
    %2111 = vmatprep.subr.bf16.mxu0 0
    %2112 = vmatpush1.bf16.msra.mxu0 0
    %2113 = vmatprep.subr.bf16.mxu0 0
    %2114 = vmatpush1.bf16.msra.mxu0 0
    %2115 = vmatprep.subr.bf16.mxu0 0
    %2116 = vmatpush1.bf16.msra.mxu0 0
    %2117 = vmatprep.mubr.bf16.mxu0 0
    %2118 = vmatmul.mubr.bf16.gmra.mrb[0].mxu0 %v2083
    %v2119 = vpop.f32.mrb[0].mxu0
    %v2120 = vadd.f32 %v125, %v2119
    %v2121 = vpop.f32.mrb[0].mxu0
    %v2122 = vpop.f32.mrb[0].mxu0
    %v2123 = vpop.f32.mrb[0].mxu0
    %2124 = vdwg.mxu0
    %v2125 = vxor.u32 %v2120, 2147483648
    %v2126 = vmul.f32 %v2125, 1.442695
    %v2127 = vpow.pop %v2126
    %v2128 = vadd.f32 %v2127, 1.0
    %v2129 = vrcp.pop %v2128
    %v2130 = vmul.f32 1.0, %v2129
    %2132 = vrot.lane.b32.xlu0 %v2120, 32
    %v2133 = vpop.permute.xlu0 %2132
    %v2135 = vmul.f32 %v2130, %v2133
    %2137 = vrot.lane.b32.xlu0 %v2135, 64
    %v2138 = vpop.permute.xlu0 %2137
    %v2140 = vadd.f32 %v2120, %v2138
    %v2141 = vtanh.pop %v2140
    %v2142 = vsub.f32 1.0, %v2130
    %2144 = vrot.lane.b32.xlu0 %v2141, 96
    %v2145 = vpop.permute.xlu0 %2144
    %v2147 = vmul.f32 %v2142, %v2145
    %v2148 = vmul.f32 %v2130, %v1845
    %v2149 = vadd.f32 %v2147, %v2148
    %v2150 = vpack.c.bf16 %v1923, %v1923
    %v2152 = vrot.slane %v2150, 1
    %2153 = vrot.lane.b32.xlu0 %v2152, 96
    %v2154 = vpop.permute.xlu0 %2153
    %v2156 = vsel %vm243, %v2154, 0
    %2158 = vmatprep.subr.bf16.mxu0 0
    %2159 = vmatpush1.bf16.msra.mxu0 %v239
    %2160 = vmatprep.subr.bf16.mxu0 0
    %2161 = vmatpush1.bf16.msra.mxu0 %v240
    %2162 = vmatprep.subr.bf16.mxu0 0
    %2163 = vmatpush1.bf16.msra.mxu0 0
    %2164 = vmatprep.subr.bf16.mxu0 0
    %2165 = vmatpush1.bf16.msra.mxu0 0
    %2166 = vmatprep.subr.bf16.mxu0 0
    %2167 = vmatpush1.bf16.msra.mxu0 0
    %2168 = vmatprep.subr.bf16.mxu0 0
    %2169 = vmatpush1.bf16.msra.mxu0 0
    %2170 = vmatprep.subr.bf16.mxu0 0
    %2171 = vmatpush1.bf16.msra.mxu0 0
    %2172 = vmatprep.subr.bf16.mxu0 0
    %2173 = vmatpush1.bf16.msra.mxu0 0
    %2174 = vmatprep.subr.bf16.mxu0 0
    %2175 = vmatpush1.bf16.msra.mxu0 0
    %2176 = vmatprep.subr.bf16.mxu0 0
    %2177 = vmatpush1.bf16.msra.mxu0 0
    %2178 = vmatprep.subr.bf16.mxu0 0
    %2179 = vmatpush1.bf16.msra.mxu0 0
    %2180 = vmatprep.subr.bf16.mxu0 0
    %2181 = vmatpush1.bf16.msra.mxu0 0
    %2182 = vmatprep.subr.bf16.mxu0 0
    %2183 = vmatpush1.bf16.msra.mxu0 0
    %2184 = vmatprep.subr.bf16.mxu0 0
    %2185 = vmatpush1.bf16.msra.mxu0 0
    %2186 = vmatprep.subr.bf16.mxu0 0
    %2187 = vmatpush1.bf16.msra.mxu0 0
    %2188 = vmatprep.subr.bf16.mxu0 0
    %2189 = vmatpush1.bf16.msra.mxu0 0
    %2190 = vmatprep.mubr.bf16.mxu0 0
    %2191 = vmatmul.mubr.bf16.gmra.mrb[0].mxu0 %v2156
    %v2192 = vpop.f32.mrb[0].mxu0
    %v2193 = vadd.f32 0.0, %v2192
    %v2194 = vpop.f32.mrb[0].mxu0
    %v2195 = vpop.f32.mrb[0].mxu0
    %v2196 = vpop.f32.mrb[0].mxu0
    %2197 = vdwg.mxu0
    %v2199 = vrot.slane %v2193, 4
    %v2201 = vadd.f32 %v228, %v2199
    %v2202 = vxor.u32 %v2201, 2147483648
    %v2203 = vmul.f32 %v2202, 1.442695
    %v2204 = vpow.pop %v2203
    %v2205 = vadd.f32 %v2204, 1.0
    %v2206 = vrcp.pop %v2205
    %v2207 = vmul.f32 1.0, %v2206
    %2209 = vrot.lane.b32.xlu0 %v2201, 32
    %v2210 = vpop.permute.xlu0 %2209
    %v2212 = vmul.f32 %v2207, %v2210
    %2214 = vrot.lane.b32.xlu0 %v2212, 64
    %v2215 = vpop.permute.xlu0 %2214
    %v2217 = vadd.f32 %v2201, %v2215
    %v2218 = vtanh.pop %v2217
    %v2219 = vsub.f32 1.0, %v2207
    %2221 = vrot.lane.b32.xlu0 %v2218, 96
    %v2222 = vpop.permute.xlu0 %2221
    %v2224 = vmul.f32 %v2219, %v2222
    %v2225 = vrot.slane %v1923, 6
    %v2227 = vmul.f32 %v2207, %v2225
    %v2228 = vadd.f32 %v2224, %v2227
    %2230 = vrot.lane.b32.xlu0 %v2228, 96
    %v2231 = vpop.permute.xlu0 %2230
    %v2233 = vrot.slane %v2001, 4
    %v2235 = vsel %vm243, %v2231, %v2233
    %v2236 = vpack.c.bf16 %v2235, %v2235
    %v2238 = vrot.slane %v2236, 2
    %v2240 = vsel %vm351, %v2238, 0
    %2242 = vmatprep.subr.bf16.mxu0 0
    %2243 = vmatpush1.bf16.msra.mxu0 %v343
    %2244 = vmatprep.subr.bf16.mxu0 0
    %2245 = vmatpush1.bf16.msra.mxu0 %v344
    %2246 = vmatprep.subr.bf16.mxu0 0
    %2247 = vmatpush1.bf16.msra.mxu0 %v345
    %2248 = vmatprep.subr.bf16.mxu0 0
    %2249 = vmatpush1.bf16.msra.mxu0 %v346
    %2250 = vmatprep.subr.bf16.mxu0 0
    %2251 = vmatpush1.bf16.msra.mxu0 0
    %2252 = vmatprep.subr.bf16.mxu0 0
    %2253 = vmatpush1.bf16.msra.mxu0 0
    %2254 = vmatprep.subr.bf16.mxu0 0
    %2255 = vmatpush1.bf16.msra.mxu0 0
    %2256 = vmatprep.subr.bf16.mxu0 0
    %2257 = vmatpush1.bf16.msra.mxu0 0
    %2258 = vmatprep.subr.bf16.mxu0 0
    %2259 = vmatpush1.bf16.msra.mxu0 0
    %2260 = vmatprep.subr.bf16.mxu0 0
    %2261 = vmatpush1.bf16.msra.mxu0 0
    %2262 = vmatprep.subr.bf16.mxu0 0
    %2263 = vmatpush1.bf16.msra.mxu0 0
    %2264 = vmatprep.subr.bf16.mxu0 0
    %2265 = vmatpush1.bf16.msra.mxu0 0
    %2266 = vmatprep.subr.bf16.mxu0 0
    %2267 = vmatpush1.bf16.msra.mxu0 0
    %2268 = vmatprep.subr.bf16.mxu0 0
    %2269 = vmatpush1.bf16.msra.mxu0 0
    %2270 = vmatprep.subr.bf16.mxu0 0
    %2271 = vmatpush1.bf16.msra.mxu0 0
    %2272 = vmatprep.subr.bf16.mxu0 0
    %2273 = vmatpush1.bf16.msra.mxu0 0
    %2274 = vmatprep.mubr.bf16.mxu0 0
    %2275 = vmatmul.mubr.bf16.gmra.mrb[0].mxu0 %v2240
    %v2276 = vpop.f32.mrb[0].mxu0
    %v2277 = vadd.f32 %v109, %v2276
    %v2278 = vpop.f32.mrb[0].mxu0
    %v2279 = vpop.f32.mrb[0].mxu0
    %v2280 = vpop.f32.mrb[0].mxu0
    %2281 = vdwg.mxu0
    %v2282 = vxor.u32 %v2277, 2147483648
    %v2283 = vmul.f32 %v2282, 1.442695
    %v2284 = vpow.pop %v2283
    %v2285 = vadd.f32 %v2284, 1.0
    %v2286 = vrcp.pop %v2285
    %v2287 = vmul.f32 1.0, %v2286
    %2289 = vrot.lane.b32.xlu0 %v2277, 32
    %v2290 = vpop.permute.xlu0 %2289
    %v2292 = vmul.f32 %v2287, %v2290
    %2294 = vrot.lane.b32.xlu0 %v2292, 64
    %v2295 = vpop.permute.xlu0 %2294
    %v2297 = vadd.f32 %v2277, %v2295
    %v2298 = vtanh.pop %v2297
    %v2299 = vsub.f32 1.0, %v2287
    %2301 = vrot.lane.b32.xlu0 %v2298, 96
    %v2302 = vpop.permute.xlu0 %2301
    %v2304 = vmul.f32 %v2299, %v2302
    %v2305 = vmul.f32 %v2287, %v2001
    %v2306 = vadd.f32 %v2304, %v2305
    %2308 = vrot.lane.b32.xlu0 %v2306, 96
    %v2309 = vpop.permute.xlu0 %2308
    %v2311 = vsel %vm243, %v2309, %v2075
    %v2312 = vpack.c.bf16 %v2311, %v2311
    %v2314 = vsel %vm351, %v2312, 0
    %2316 = vmatprep.subr.bf16.mxu0 0
    %2317 = vmatpush1.bf16.msra.mxu0 %v451
    %2318 = vmatprep.subr.bf16.mxu0 0
    %2319 = vmatpush1.bf16.msra.mxu0 %v452
    %2320 = vmatprep.subr.bf16.mxu0 0
    %2321 = vmatpush1.bf16.msra.mxu0 %v453
    %2322 = vmatprep.subr.bf16.mxu0 0
    %2323 = vmatpush1.bf16.msra.mxu0 %v454
    %2324 = vmatprep.subr.bf16.mxu0 0
    %2325 = vmatpush1.bf16.msra.mxu0 0
    %2326 = vmatprep.subr.bf16.mxu0 0
    %2327 = vmatpush1.bf16.msra.mxu0 0
    %2328 = vmatprep.subr.bf16.mxu0 0
    %2329 = vmatpush1.bf16.msra.mxu0 0
    %2330 = vmatprep.subr.bf16.mxu0 0
    %2331 = vmatpush1.bf16.msra.mxu0 0
    %2332 = vmatprep.subr.bf16.mxu0 0
    %2333 = vmatpush1.bf16.msra.mxu0 0
    %2334 = vmatprep.subr.bf16.mxu0 0
    %2335 = vmatpush1.bf16.msra.mxu0 0
    %2336 = vmatprep.subr.bf16.mxu0 0
    %2337 = vmatpush1.bf16.msra.mxu0 0
    %2338 = vmatprep.subr.bf16.mxu0 0
    %2339 = vmatpush1.bf16.msra.mxu0 0
    %2340 = vmatprep.subr.bf16.mxu0 0
    %2341 = vmatpush1.bf16.msra.mxu0 0
    %2342 = vmatprep.subr.bf16.mxu0 0
    %2343 = vmatpush1.bf16.msra.mxu0 0
    %2344 = vmatprep.subr.bf16.mxu0 0
    %2345 = vmatpush1.bf16.msra.mxu0 0
    %2346 = vmatprep.subr.bf16.mxu0 0
    %2347 = vmatpush1.bf16.msra.mxu0 0
    %2348 = vmatprep.mubr.bf16.mxu0 0
    %2349 = vmatmul.mubr.bf16.gmra.mrb[0].mxu0 %v2314
    %v2350 = vpop.f32.mrb[0].mxu0
    %v2351 = vadd.f32 %v117, %v2350
    %v2352 = vpop.f32.mrb[0].mxu0
    %v2353 = vpop.f32.mrb[0].mxu0
    %v2354 = vpop.f32.mrb[0].mxu0
    %2355 = vdwg.mxu0
    %v2356 = vxor.u32 %v2351, 2147483648
    %v2357 = vmul.f32 %v2356, 1.442695
    %v2358 = vpow.pop %v2357
    %v2359 = vadd.f32 %v2358, 1.0
    %v2360 = vrcp.pop %v2359
    %v2361 = vmul.f32 1.0, %v2360
    %2363 = vrot.lane.b32.xlu0 %v2351, 32
    %v2364 = vpop.permute.xlu0 %2363
    %v2366 = vmul.f32 %v2361, %v2364
    %2368 = vrot.lane.b32.xlu0 %v2366, 64
    %v2369 = vpop.permute.xlu0 %2368
    %v2371 = vadd.f32 %v2351, %v2369
    %v2372 = vtanh.pop %v2371
    %v2373 = vsub.f32 1.0, %v2361
    %2375 = vrot.lane.b32.xlu0 %v2372, 96
    %v2376 = vpop.permute.xlu0 %2375
    %v2378 = vmul.f32 %v2373, %v2376
    %v2379 = vmul.f32 %v2361, %v2075
    %v2380 = vadd.f32 %v2378, %v2379
    %2382 = vrot.lane.b32.xlu0 %v2380, 96
    %v2383 = vpop.permute.xlu0 %2382
    %v2385 = vsel %vm243, %v2383, %v2149
    %v2386 = vpack.c.bf16 %v2385, %v2385
    %v2388 = vsel %vm351, %v2386, 0
    %2390 = vmatprep.subr.bf16.mxu0 0
    %2391 = vmatpush1.bf16.msra.mxu0 %v558
    %2392 = vmatprep.subr.bf16.mxu0 0
    %2393 = vmatpush1.bf16.msra.mxu0 %v559
    %2394 = vmatprep.subr.bf16.mxu0 0
    %2395 = vmatpush1.bf16.msra.mxu0 %v560
    %2396 = vmatprep.subr.bf16.mxu0 0
    %2397 = vmatpush1.bf16.msra.mxu0 %v561
    %2398 = vmatprep.subr.bf16.mxu0 0
    %2399 = vmatpush1.bf16.msra.mxu0 0
    %2400 = vmatprep.subr.bf16.mxu0 0
    %2401 = vmatpush1.bf16.msra.mxu0 0
    %2402 = vmatprep.subr.bf16.mxu0 0
    %2403 = vmatpush1.bf16.msra.mxu0 0
    %2404 = vmatprep.subr.bf16.mxu0 0
    %2405 = vmatpush1.bf16.msra.mxu0 0
    %2406 = vmatprep.subr.bf16.mxu0 0
    %2407 = vmatpush1.bf16.msra.mxu0 0
    %2408 = vmatprep.subr.bf16.mxu0 0
    %2409 = vmatpush1.bf16.msra.mxu0 0
    %2410 = vmatprep.subr.bf16.mxu0 0
    %2411 = vmatpush1.bf16.msra.mxu0 0
    %2412 = vmatprep.subr.bf16.mxu0 0
    %2413 = vmatpush1.bf16.msra.mxu0 0
    %2414 = vmatprep.subr.bf16.mxu0 0
    %2415 = vmatpush1.bf16.msra.mxu0 0
    %2416 = vmatprep.subr.bf16.mxu0 0
    %2417 = vmatpush1.bf16.msra.mxu0 0
    %2418 = vmatprep.subr.bf16.mxu0 0
    %2419 = vmatpush1.bf16.msra.mxu0 0
    %2420 = vmatprep.subr.bf16.mxu0 0
    %2421 = vmatpush1.bf16.msra.mxu0 0
    %2422 = vmatprep.mubr.bf16.mxu0 0
    %2423 = vmatmul.mubr.bf16.gmra.mrb[0].mxu0 %v2388
    %v2424 = vpop.f32.mrb[0].mxu0
    %v2425 = vadd.f32 %v125, %v2424
    %v2426 = vpop.f32.mrb[0].mxu0
    %v2427 = vpop.f32.mrb[0].mxu0
    %v2428 = vpop.f32.mrb[0].mxu0
    %2429 = vdwg.mxu0
    %v2430 = vxor.u32 %v2425, 2147483648
    %v2431 = vmul.f32 %v2430, 1.442695
    %v2432 = vpow.pop %v2431
    %v2433 = vadd.f32 %v2432, 1.0
    %v2434 = vrcp.pop %v2433
    %v2435 = vmul.f32 1.0, %v2434
    %2437 = vrot.lane.b32.xlu0 %v2425, 32
    %v2438 = vpop.permute.xlu0 %2437
    %v2440 = vmul.f32 %v2435, %v2438
    %2442 = vrot.lane.b32.xlu0 %v2440, 64
    %v2443 = vpop.permute.xlu0 %2442
    %v2445 = vadd.f32 %v2425, %v2443
    %v2446 = vtanh.pop %v2445
    %v2447 = vsub.f32 1.0, %v2435
    %2449 = vrot.lane.b32.xlu0 %v2446, 96
    %v2450 = vpop.permute.xlu0 %2449
    %v2452 = vmul.f32 %v2447, %v2450
    %v2453 = vmul.f32 %v2435, %v2149
    %v2454 = vadd.f32 %v2452, %v2453
    %v2455 = vpack.c.bf16 %v2228, %v2228
    %v2457 = vrot.slane %v2455, 2
    %2458 = vrot.lane.b32.xlu0 %v2457, 96
    %v2459 = vpop.permute.xlu0 %2458
    %v2461 = vsel %vm243, %v2459, 0
    %2463 = vmatprep.subr.bf16.mxu0 0
    %2464 = vmatpush1.bf16.msra.mxu0 %v239
    %2465 = vmatprep.subr.bf16.mxu0 0
    %2466 = vmatpush1.bf16.msra.mxu0 %v240
    %2467 = vmatprep.subr.bf16.mxu0 0
    %2468 = vmatpush1.bf16.msra.mxu0 0
    %2469 = vmatprep.subr.bf16.mxu0 0
    %2470 = vmatpush1.bf16.msra.mxu0 0
    %2471 = vmatprep.subr.bf16.mxu0 0
    %2472 = vmatpush1.bf16.msra.mxu0 0
    %2473 = vmatprep.subr.bf16.mxu0 0
    %2474 = vmatpush1.bf16.msra.mxu0 0
    %2475 = vmatprep.subr.bf16.mxu0 0
    %2476 = vmatpush1.bf16.msra.mxu0 0
    %2477 = vmatprep.subr.bf16.mxu0 0
    %2478 = vmatpush1.bf16.msra.mxu0 0
    %2479 = vmatprep.subr.bf16.mxu0 0
    %2480 = vmatpush1.bf16.msra.mxu0 0
    %2481 = vmatprep.subr.bf16.mxu0 0
    %2482 = vmatpush1.bf16.msra.mxu0 0
    %2483 = vmatprep.subr.bf16.mxu0 0
    %2484 = vmatpush1.bf16.msra.mxu0 0
    %2485 = vmatprep.subr.bf16.mxu0 0
    %2486 = vmatpush1.bf16.msra.mxu0 0
    %2487 = vmatprep.subr.bf16.mxu0 0
    %2488 = vmatpush1.bf16.msra.mxu0 0
    %2489 = vmatprep.subr.bf16.mxu0 0
    %2490 = vmatpush1.bf16.msra.mxu0 0
    %2491 = vmatprep.subr.bf16.mxu0 0
    %2492 = vmatpush1.bf16.msra.mxu0 0
    %2493 = vmatprep.subr.bf16.mxu0 0
    %2494 = vmatpush1.bf16.msra.mxu0 0
    %2495 = vmatprep.mubr.bf16.mxu0 0
    %2496 = vmatmul.mubr.bf16.gmra.mrb[0].mxu0 %v2461
    %v2497 = vpop.f32.mrb[0].mxu0
    %v2498 = vadd.f32 0.0, %v2497
    %v2499 = vpop.f32.mrb[0].mxu0
    %v2500 = vpop.f32.mrb[0].mxu0
    %v2501 = vpop.f32.mrb[0].mxu0
    %2502 = vdwg.mxu0
    %v2504 = vrot.slane %v2498, 2
    %v2506 = vadd.f32 %v228, %v2504
    %v2507 = vxor.u32 %v2506, 2147483648
    %v2508 = vmul.f32 %v2507, 1.442695
    %v2509 = vpow.pop %v2508
    %v2510 = vadd.f32 %v2509, 1.0
    %v2511 = vrcp.pop %v2510
    %v2512 = vmul.f32 1.0, %v2511
    %2514 = vrot.lane.b32.xlu0 %v2506, 32
    %v2515 = vpop.permute.xlu0 %2514
    %v2517 = vmul.f32 %v2512, %v2515
    %2519 = vrot.lane.b32.xlu0 %v2517, 64
    %v2520 = vpop.permute.xlu0 %2519
    %v2522 = vadd.f32 %v2506, %v2520
    %v2523 = vtanh.pop %v2522
    %v2524 = vsub.f32 1.0, %v2512
    %2526 = vrot.lane.b32.xlu0 %v2523, 96
    %v2527 = vpop.permute.xlu0 %2526
    %v2529 = vmul.f32 %v2524, %v2527
    %v2530 = vrot.slane %v2228, 6
    %v2532 = vmul.f32 %v2512, %v2530
    %v2533 = vadd.f32 %v2529, %v2532
    %2535 = vrot.lane.b32.xlu0 %v2533, 96
    %v2536 = vpop.permute.xlu0 %2535
    %v2538 = vrot.slane %v2306, 2
    %v2540 = vsel %vm243, %v2536, %v2538
    %v2541 = vpack.c.bf16 %v2540, %v2540
    %v2543 = vrot.slane %v2541, 3
    %v2545 = vsel %vm351, %v2543, 0
    %2547 = vmatprep.subr.bf16.mxu0 0
    %2548 = vmatpush1.bf16.msra.mxu0 %v343
    %2549 = vmatprep.subr.bf16.mxu0 0
    %2550 = vmatpush1.bf16.msra.mxu0 %v344
    %2551 = vmatprep.subr.bf16.mxu0 0
    %2552 = vmatpush1.bf16.msra.mxu0 %v345
    %2553 = vmatprep.subr.bf16.mxu0 0
    %2554 = vmatpush1.bf16.msra.mxu0 %v346
    %2555 = vmatprep.subr.bf16.mxu0 0
    %2556 = vmatpush1.bf16.msra.mxu0 0
    %2557 = vmatprep.subr.bf16.mxu0 0
    %2558 = vmatpush1.bf16.msra.mxu0 0
    %2559 = vmatprep.subr.bf16.mxu0 0
    %2560 = vmatpush1.bf16.msra.mxu0 0
    %2561 = vmatprep.subr.bf16.mxu0 0
    %2562 = vmatpush1.bf16.msra.mxu0 0
    %2563 = vmatprep.subr.bf16.mxu0 0
    %2564 = vmatpush1.bf16.msra.mxu0 0
    %2565 = vmatprep.subr.bf16.mxu0 0
    %2566 = vmatpush1.bf16.msra.mxu0 0
    %2567 = vmatprep.subr.bf16.mxu0 0
    %2568 = vmatpush1.bf16.msra.mxu0 0
    %2569 = vmatprep.subr.bf16.mxu0 0
    %2570 = vmatpush1.bf16.msra.mxu0 0
    %2571 = vmatprep.subr.bf16.mxu0 0
    %2572 = vmatpush1.bf16.msra.mxu0 0
    %2573 = vmatprep.subr.bf16.mxu0 0
    %2574 = vmatpush1.bf16.msra.mxu0 0
    %2575 = vmatprep.subr.bf16.mxu0 0
    %2576 = vmatpush1.bf16.msra.mxu0 0
    %2577 = vmatprep.subr.bf16.mxu0 0
    %2578 = vmatpush1.bf16.msra.mxu0 0
    %2579 = vmatprep.mubr.bf16.mxu0 0
    %2580 = vmatmul.mubr.bf16.gmra.mrb[0].mxu0 %v2545
    %v2581 = vpop.f32.mrb[0].mxu0
    %v2582 = vadd.f32 %v109, %v2581
    %v2583 = vpop.f32.mrb[0].mxu0
    %v2584 = vpop.f32.mrb[0].mxu0
    %v2585 = vpop.f32.mrb[0].mxu0
    %2586 = vdwg.mxu0
    %v2587 = vxor.u32 %v2582, 2147483648
    %v2588 = vmul.f32 %v2587, 1.442695
    %v2589 = vpow.pop %v2588
    %v2590 = vadd.f32 %v2589, 1.0
    %v2591 = vrcp.pop %v2590
    %v2592 = vmul.f32 1.0, %v2591
    %2594 = vrot.lane.b32.xlu0 %v2582, 32
    %v2595 = vpop.permute.xlu0 %2594
    %v2597 = vmul.f32 %v2592, %v2595
    %2599 = vrot.lane.b32.xlu0 %v2597, 64
    %v2600 = vpop.permute.xlu0 %2599
    %v2602 = vadd.f32 %v2582, %v2600
    %v2603 = vtanh.pop %v2602
    %v2604 = vsub.f32 1.0, %v2592
    %2606 = vrot.lane.b32.xlu0 %v2603, 96
    %v2607 = vpop.permute.xlu0 %2606
    %v2609 = vmul.f32 %v2604, %v2607
    %v2610 = vmul.f32 %v2592, %v2306
    %v2611 = vadd.f32 %v2609, %v2610
    %2613 = vrot.lane.b32.xlu0 %v2611, 96
    %v2614 = vpop.permute.xlu0 %2613
    %v2616 = vsel %vm243, %v2614, %v2380
    %v2617 = vpack.c.bf16 %v2616, %v2616
    %v2619 = vsel %vm351, %v2617, 0
    %2621 = vmatprep.subr.bf16.mxu0 0
    %2622 = vmatpush1.bf16.msra.mxu0 %v451
    %2623 = vmatprep.subr.bf16.mxu0 0
    %2624 = vmatpush1.bf16.msra.mxu0 %v452
    %2625 = vmatprep.subr.bf16.mxu0 0
    %2626 = vmatpush1.bf16.msra.mxu0 %v453
    %2627 = vmatprep.subr.bf16.mxu0 0
    %2628 = vmatpush1.bf16.msra.mxu0 %v454
    %2629 = vmatprep.subr.bf16.mxu0 0
    %2630 = vmatpush1.bf16.msra.mxu0 0
    %2631 = vmatprep.subr.bf16.mxu0 0
    %2632 = vmatpush1.bf16.msra.mxu0 0
    %2633 = vmatprep.subr.bf16.mxu0 0
    %2634 = vmatpush1.bf16.msra.mxu0 0
    %2635 = vmatprep.subr.bf16.mxu0 0
    %2636 = vmatpush1.bf16.msra.mxu0 0
    %2637 = vmatprep.subr.bf16.mxu0 0
    %2638 = vmatpush1.bf16.msra.mxu0 0
    %2639 = vmatprep.subr.bf16.mxu0 0
    %2640 = vmatpush1.bf16.msra.mxu0 0
    %2641 = vmatprep.subr.bf16.mxu0 0
    %2642 = vmatpush1.bf16.msra.mxu0 0
    %2643 = vmatprep.subr.bf16.mxu0 0
    %2644 = vmatpush1.bf16.msra.mxu0 0
    %2645 = vmatprep.subr.bf16.mxu0 0
    %2646 = vmatpush1.bf16.msra.mxu0 0
    %2647 = vmatprep.subr.bf16.mxu0 0
    %2648 = vmatpush1.bf16.msra.mxu0 0
    %2649 = vmatprep.subr.bf16.mxu0 0
    %2650 = vmatpush1.bf16.msra.mxu0 0
    %2651 = vmatprep.subr.bf16.mxu0 0
    %2652 = vmatpush1.bf16.msra.mxu0 0
    %2653 = vmatprep.mubr.bf16.mxu0 0
    %2654 = vmatmul.mubr.bf16.gmra.mrb[0].mxu0 %v2619
    %v2655 = vpop.f32.mrb[0].mxu0
    %v2656 = vadd.f32 %v117, %v2655
    %v2657 = vpop.f32.mrb[0].mxu0
    %v2658 = vpop.f32.mrb[0].mxu0
    %v2659 = vpop.f32.mrb[0].mxu0
    %2660 = vdwg.mxu0
    %v2661 = vxor.u32 %v2656, 2147483648
    %v2662 = vmul.f32 %v2661, 1.442695
    %v2663 = vpow.pop %v2662
    %v2664 = vadd.f32 %v2663, 1.0
    %v2665 = vrcp.pop %v2664
    %v2666 = vmul.f32 1.0, %v2665
    %2668 = vrot.lane.b32.xlu0 %v2656, 32
    %v2669 = vpop.permute.xlu0 %2668
    %v2671 = vmul.f32 %v2666, %v2669
    %2673 = vrot.lane.b32.xlu0 %v2671, 64
    %v2674 = vpop.permute.xlu0 %2673
    %v2676 = vadd.f32 %v2656, %v2674
    %v2677 = vtanh.pop %v2676
    %v2678 = vsub.f32 1.0, %v2666
    %2680 = vrot.lane.b32.xlu0 %v2677, 96
    %v2681 = vpop.permute.xlu0 %2680
    %v2683 = vmul.f32 %v2678, %v2681
    %v2684 = vmul.f32 %v2666, %v2380
    %v2685 = vadd.f32 %v2683, %v2684
    %2687 = vrot.lane.b32.xlu0 %v2685, 96
    %v2688 = vpop.permute.xlu0 %2687
    %v2690 = vsel %vm243, %v2688, %v2454
    %v2691 = vpack.c.bf16 %v2690, %v2690
    %v2693 = vsel %vm351, %v2691, 0
    %2695 = vmatprep.subr.bf16.mxu0 0
    %2696 = vmatpush1.bf16.msra.mxu0 %v558
    %2697 = vmatprep.subr.bf16.mxu0 0
    %2698 = vmatpush1.bf16.msra.mxu0 %v559
    %2699 = vmatprep.subr.bf16.mxu0 0
    %2700 = vmatpush1.bf16.msra.mxu0 %v560
    %2701 = vmatprep.subr.bf16.mxu0 0
    %2702 = vmatpush1.bf16.msra.mxu0 %v561
    %2703 = vmatprep.subr.bf16.mxu0 0
    %2704 = vmatpush1.bf16.msra.mxu0 0
    %2705 = vmatprep.subr.bf16.mxu0 0
    %2706 = vmatpush1.bf16.msra.mxu0 0
    %2707 = vmatprep.subr.bf16.mxu0 0
    %2708 = vmatpush1.bf16.msra.mxu0 0
    %2709 = vmatprep.subr.bf16.mxu0 0
    %2710 = vmatpush1.bf16.msra.mxu0 0
    %2711 = vmatprep.subr.bf16.mxu0 0
    %2712 = vmatpush1.bf16.msra.mxu0 0
    %2713 = vmatprep.subr.bf16.mxu0 0
    %2714 = vmatpush1.bf16.msra.mxu0 0
    %2715 = vmatprep.subr.bf16.mxu0 0
    %2716 = vmatpush1.bf16.msra.mxu0 0
    %2717 = vmatprep.subr.bf16.mxu0 0
    %2718 = vmatpush1.bf16.msra.mxu0 0
    %2719 = vmatprep.subr.bf16.mxu0 0
    %2720 = vmatpush1.bf16.msra.mxu0 0
    %2721 = vmatprep.subr.bf16.mxu0 0
    %2722 = vmatpush1.bf16.msra.mxu0 0
    %2723 = vmatprep.subr.bf16.mxu0 0
    %2724 = vmatpush1.bf16.msra.mxu0 0
    %2725 = vmatprep.subr.bf16.mxu0 0
    %2726 = vmatpush1.bf16.msra.mxu0 0
    %2727 = vmatprep.mubr.bf16.mxu0 0
    %2728 = vmatmul.mubr.bf16.gmra.mrb[0].mxu0 %v2693
    %v2729 = vpop.f32.mrb[0].mxu0
    %v2730 = vadd.f32 %v125, %v2729
    %v2731 = vpop.f32.mrb[0].mxu0
    %v2732 = vpop.f32.mrb[0].mxu0
    %v2733 = vpop.f32.mrb[0].mxu0
    %2734 = vdwg.mxu0
    %v2735 = vxor.u32 %v2730, 2147483648
    %v2736 = vmul.f32 %v2735, 1.442695
    %v2737 = vpow.pop %v2736
    %v2738 = vadd.f32 %v2737, 1.0
    %v2739 = vrcp.pop %v2738
    %v2740 = vmul.f32 1.0, %v2739
    %2742 = vrot.lane.b32.xlu0 %v2730, 32
    %v2743 = vpop.permute.xlu0 %2742
    %v2745 = vmul.f32 %v2740, %v2743
    %2747 = vrot.lane.b32.xlu0 %v2745, 64
    %v2748 = vpop.permute.xlu0 %2747
    %v2750 = vadd.f32 %v2730, %v2748
    %v2751 = vtanh.pop %v2750
    %v2752 = vsub.f32 1.0, %v2740
    %2754 = vrot.lane.b32.xlu0 %v2751, 96
    %v2755 = vpop.permute.xlu0 %2754
    %v2757 = vmul.f32 %v2752, %v2755
    %v2758 = vmul.f32 %v2740, %v2454
    %v2759 = vadd.f32 %v2757, %v2758
    %v2761 = vrot.slane %v937, 6
    %v2764 = vrot.slane %v1242, 4
    %v2767 = vrot.slane %v1547, 2
    %v2770 = vrot.slane %v2149, 6
    %v2773 = vrot.slane %v2454, 4
    %v2776 = vrot.slane %v2759, 2
    %v2778 = vsel %vm186, %v633, %v2761
    %vm2779 = vcmask 1043456
    %v2780 = vsel %vm2779, %v2778, %v2764
    %vm2781 = vcmask 1045504
    %v2782 = vsel %vm2781, %v2780, %v2767
    %v2783 = vsel %vm186, %v1845, %v2770
    %v2784 = vsel %vm2779, %v2783, %v2773
    %v2785 = vsel %vm2781, %v2784, %v2776
    %2788 = vrot.lane.b32.xlu0 %v2782, 96
    %v2789 = vpop.permute.xlu0 %2788
    %2790 = vrot.lane.b32.xlu0 %v2785, 96
    %v2791 = vpop.permute.xlu0 %2790
    %2794 = vst.msk [vmem:[#allocation7] sm:$0xff] %vm243, %v2789
    %2795 = vst.msk [vmem:[#allocation7 + $0x8] sm:$0xff] %vm243, %v2791
    %v2796 = vrot.slane %v2533, 6
    %v2798 = vrot.slane %v2611, 6
    %v2800 = vrot.slane %v2685, 4
    %v2802 = vsel %vm186, %v2796, %v2798
    %v2803 = vsel %vm2779, %v2802, %v2800
    %v2804 = vsel %vm2781, %v2803, %v2776
    %2806 = vrot.lane.b32.xlu0 %v2804, 96
    %v2807 = vpop.permute.xlu0 %2806
    %2809 = vst.msk [vmem:[#allocation8] sm:$0xff] %vm243, %v2807
    %v2810 = vld [vmem:[%s0] sm:$0x3]
    %2811 = vrot.lane.b32.xlu0 %v2796, 100
    %v2812 = vpop.permute.xlu0 %2811
    %v2814 = vsel %vm182, %v2810, %v2812
    %v2815 = vpack.c.bf16 %v2814, %v2814
    %v2821 = vunpack.c.l.b16 %v91
    %v2822 = vunpack.c.l.b16 %v92
    %v2823 = vunpack.c.l.b16 %v93
    %v2824 = vunpack.c.l.b16 %v94
    %v2825 = vunpack.c.l.b16 %v95
    %v2826 = vpack.c.b16 %v2822, %v2821
    %v2827 = vpack.c.b16 %v2824, %v2823
    %v2828 = vpack.c.b16 %v2825, %v2825
    %vm2831 = vcmask 293888
    %v2833 = vsel %vm2831, %v2815, 0
    %v2836 = vsel %vm186, %v2828, 0
    %2838 = vmatprep.subr.bf16.mxu0 0
    %2839 = vmatpush1.bf16.msra.mxu0 %v2826
    %2840 = vmatprep.subr.bf16.mxu0 0
    %2841 = vmatpush1.bf16.msra.mxu0 %v2827
    %2842 = vmatprep.subr.bf16.mxu0 0
    %2843 = vmatpush1.bf16.msra.mxu0 %v2836
    %2844 = vmatprep.subr.bf16.mxu0 0
    %2845 = vmatpush1.bf16.msra.mxu0 0
    %2846 = vmatprep.subr.bf16.mxu0 0
    %2847 = vmatpush1.bf16.msra.mxu0 0
    %2848 = vmatprep.subr.bf16.mxu0 0
    %2849 = vmatpush1.bf16.msra.mxu0 0
    %2850 = vmatprep.subr.bf16.mxu0 0
    %2851 = vmatpush1.bf16.msra.mxu0 0
    %2852 = vmatprep.subr.bf16.mxu0 0
    %2853 = vmatpush1.bf16.msra.mxu0 0
    %2854 = vmatprep.subr.bf16.mxu0 0
    %2855 = vmatpush1.bf16.msra.mxu0 0
    %2856 = vmatprep.subr.bf16.mxu0 0
    %2857 = vmatpush1.bf16.msra.mxu0 0
    %2858 = vmatprep.subr.bf16.mxu0 0
    %2859 = vmatpush1.bf16.msra.mxu0 0
    %2860 = vmatprep.subr.bf16.mxu0 0
    %2861 = vmatpush1.bf16.msra.mxu0 0
    %2862 = vmatprep.subr.bf16.mxu0 0
    %2863 = vmatpush1.bf16.msra.mxu0 0
    %2864 = vmatprep.subr.bf16.mxu0 0
    %2865 = vmatpush1.bf16.msra.mxu0 0
    %2866 = vmatprep.subr.bf16.mxu0 0
    %2867 = vmatpush1.bf16.msra.mxu0 0
    %2868 = vmatprep.subr.bf16.mxu0 0
    %2869 = vmatpush1.bf16.msra.mxu0 0
    %2870 = vmatprep.mubr.bf16.mxu0 0
    %2871 = vmatmul.mubr.bf16.gmra.mrb[0].mxu0 %v2833
    %v2872 = vpop.f32.mrb[0].mxu0
    %v2873 = vadd.f32 %v155, %v2872
    %v2874 = vpop.f32.mrb[0].mxu0
    %v2875 = vpop.f32.mrb[0].mxu0
    %v2876 = vpop.f32.mrb[0].mxu0
    %2877 = vdwg.mxu0
    %v2878 = vxor.u32 %v2873, 2147483648
    %v2879 = vmul.f32 %v2878, 1.442695
    %v2880 = vpow.pop %v2879
    %v2881 = vadd.f32 %v2880, 1.0
    %v2882 = vrcp.pop %v2881
    %v2883 = vmul.f32 1.0, %v2882
    %2885 = vrot.lane.b32.xlu0 %v2873, 32
    %v2886 = vpop.permute.xlu0 %2885
    %v2888 = vmul.f32 %v2883, %v2886
    %2890 = vrot.lane.b32.xlu0 %v2888, 64
    %v2891 = vpop.permute.xlu0 %2890
    %v2893 = vadd.f32 %v2873, %v2891
    %v2894 = vtanh.pop %v2893
    %v2895 = vsub.f32 1.0, %v2883
    %2897 = vrot.lane.b32.xlu0 %v2894, 96
    %v2898 = vpop.permute.xlu0 %2897
    %v2900 = vmul.f32 %v2895, %v2898
    %v2901 = vmul.f32 %v2883, %v2796
    %v2902 = vadd.f32 %v2900, %v2901
    %v2903 = vld [vmem:[#allocation5] sm:$0xf]
    %v2904 = vld [vmem:[#allocation5 + $0x4] sm:$0xf]
    %v2905 = vld [vmem:[#allocation5 + $0x8] sm:$0xf]
    %v2906 = vld [vmem:[#allocation5 + $0xc] sm:$0xf]
    %v2907 = vld [vmem:[#allocation5 + $0x10] sm:$0xf]
    %v2908 = vld [vmem:[#allocation5 + $0x14] sm:$0xf]
    %v2909 = vld [vmem:[#allocation5 + $0x18] sm:$0xf]
    %v2910 = vld [vmem:[#allocation5 + $0x1c] sm:$0xf]
    %2912 = vrot.lane.b32.xlu0 %v2902, 96
    %v2913 = vpop.permute.xlu0 %2912
    %v2915 = vsel %vm243, %v2913, %v2611
    %v2916 = vpack.c.bf16 %v2915, %v2915
    %v2925 = vunpack.c.l.b16 %v2903
    %v2926 = vunpack.c.l.b16 %v2904
    %v2927 = vunpack.c.l.b16 %v2905
    %v2928 = vunpack.c.l.b16 %v2906
    %v2929 = vunpack.c.l.b16 %v2907
    %v2930 = vunpack.c.l.b16 %v2908
    %v2931 = vunpack.c.l.b16 %v2909
    %v2932 = vunpack.c.l.b16 %v2910
    %v2933 = vpack.c.b16 %v2926, %v2925
    %v2934 = vpack.c.b16 %v2928, %v2927
    %v2935 = vpack.c.b16 %v2930, %v2929
    %v2936 = vpack.c.b16 %v2932, %v2931
    %v2942 = vsel %vm351, %v2916, 0
    %2944 = vmatprep.subr.bf16.mxu0 0
    %2945 = vmatpush1.bf16.msra.mxu0 %v2933
    %2946 = vmatprep.subr.bf16.mxu0 0
    %2947 = vmatpush1.bf16.msra.mxu0 %v2934
    %2948 = vmatprep.subr.bf16.mxu0 0
    %2949 = vmatpush1.bf16.msra.mxu0 %v2935
    %2950 = vmatprep.subr.bf16.mxu0 0
    %2951 = vmatpush1.bf16.msra.mxu0 %v2936
    %2952 = vmatprep.subr.bf16.mxu0 0
    %2953 = vmatpush1.bf16.msra.mxu0 0
    %2954 = vmatprep.subr.bf16.mxu0 0
    %2955 = vmatpush1.bf16.msra.mxu0 0
    %2956 = vmatprep.subr.bf16.mxu0 0
    %2957 = vmatpush1.bf16.msra.mxu0 0
    %2958 = vmatprep.subr.bf16.mxu0 0
    %2959 = vmatpush1.bf16.msra.mxu0 0
    %2960 = vmatprep.subr.bf16.mxu0 0
    %2961 = vmatpush1.bf16.msra.mxu0 0
    %2962 = vmatprep.subr.bf16.mxu0 0
    %2963 = vmatpush1.bf16.msra.mxu0 0
    %2964 = vmatprep.subr.bf16.mxu0 0
    %2965 = vmatpush1.bf16.msra.mxu0 0
    %2966 = vmatprep.subr.bf16.mxu0 0
    %2967 = vmatpush1.bf16.msra.mxu0 0
    %2968 = vmatprep.subr.bf16.mxu0 0
    %2969 = vmatpush1.bf16.msra.mxu0 0
    %2970 = vmatprep.subr.bf16.mxu0 0
    %2971 = vmatpush1.bf16.msra.mxu0 0
    %2972 = vmatprep.subr.bf16.mxu0 0
    %2973 = vmatpush1.bf16.msra.mxu0 0
    %2974 = vmatprep.subr.bf16.mxu0 0
    %2975 = vmatpush1.bf16.msra.mxu0 0
    %2976 = vmatprep.mubr.bf16.mxu0 0
    %2977 = vmatmul.mubr.bf16.gmra.mrb[0].mxu0 %v2942
    %v2978 = vpop.f32.mrb[0].mxu0
    %v2979 = vadd.f32 %v132, %v2978
    %v2980 = vpop.f32.mrb[0].mxu0
    %v2981 = vpop.f32.mrb[0].mxu0
    %v2982 = vpop.f32.mrb[0].mxu0
    %2983 = vdwg.mxu0
    %v2984 = vxor.u32 %v2979, 2147483648
    %v2985 = vmul.f32 %v2984, 1.442695
    %v2986 = vpow.pop %v2985
    %v2987 = vadd.f32 %v2986, 1.0
    %v2988 = vrcp.pop %v2987
    %v2989 = vmul.f32 1.0, %v2988
    %2991 = vrot.lane.b32.xlu0 %v2979, 32
    %v2992 = vpop.permute.xlu0 %2991
    %v2994 = vmul.f32 %v2989, %v2992
    %2996 = vrot.lane.b32.xlu0 %v2994, 64
    %v2997 = vpop.permute.xlu0 %2996
    %v2999 = vadd.f32 %v2979, %v2997
    %v3000 = vtanh.pop %v2999
    %v3001 = vsub.f32 1.0, %v2989
    %3003 = vrot.lane.b32.xlu0 %v3000, 96
    %v3004 = vpop.permute.xlu0 %3003
    %v3006 = vmul.f32 %v3001, %v3004
    %v3007 = vmul.f32 %v2989, %v2611
    %v3008 = vadd.f32 %v3006, %v3007
    %s3009 = scalar_lea.vmem [#allocation5], 32
    %v3010 = vld [vmem:[%s3009] sm:$0xf]
    %v3011 = vld [vmem:[%s3009 + $0x4] sm:$0xf]
    %v3012 = vld [vmem:[%s3009 + $0x8] sm:$0xf]
    %v3013 = vld [vmem:[%s3009 + $0xc] sm:$0xf]
    %v3014 = vld [vmem:[%s3009 + $0x10] sm:$0xf]
    %v3015 = vld [vmem:[%s3009 + $0x14] sm:$0xf]
    %v3016 = vld [vmem:[%s3009 + $0x18] sm:$0xf]
    %v3017 = vld [vmem:[%s3009 + $0x1c] sm:$0xf]
    %3019 = vrot.lane.b32.xlu0 %v3008, 96
    %v3020 = vpop.permute.xlu0 %3019
    %v3022 = vsel %vm243, %v3020, %v2685
    %v3023 = vpack.c.bf16 %v3022, %v3022
    %v3032 = vunpack.c.l.b16 %v3010
    %v3033 = vunpack.c.l.b16 %v3011
    %v3034 = vunpack.c.l.b16 %v3012
    %v3035 = vunpack.c.l.b16 %v3013
    %v3036 = vunpack.c.l.b16 %v3014
    %v3037 = vunpack.c.l.b16 %v3015
    %v3038 = vunpack.c.l.b16 %v3016
    %v3039 = vunpack.c.l.b16 %v3017
    %v3040 = vpack.c.b16 %v3033, %v3032
    %v3041 = vpack.c.b16 %v3035, %v3034
    %v3042 = vpack.c.b16 %v3037, %v3036
    %v3043 = vpack.c.b16 %v3039, %v3038
    %v3049 = vsel %vm351, %v3023, 0
    %3051 = vmatprep.subr.bf16.mxu0 0
    %3052 = vmatpush1.bf16.msra.mxu0 %v3040
    %3053 = vmatprep.subr.bf16.mxu0 0
    %3054 = vmatpush1.bf16.msra.mxu0 %v3041
    %3055 = vmatprep.subr.bf16.mxu0 0
    %3056 = vmatpush1.bf16.msra.mxu0 %v3042
    %3057 = vmatprep.subr.bf16.mxu0 0
    %3058 = vmatpush1.bf16.msra.mxu0 %v3043
    %3059 = vmatprep.subr.bf16.mxu0 0
    %3060 = vmatpush1.bf16.msra.mxu0 0
    %3061 = vmatprep.subr.bf16.mxu0 0
    %3062 = vmatpush1.bf16.msra.mxu0 0
    %3063 = vmatprep.subr.bf16.mxu0 0
    %3064 = vmatpush1.bf16.msra.mxu0 0
    %3065 = vmatprep.subr.bf16.mxu0 0
    %3066 = vmatpush1.bf16.msra.mxu0 0
    %3067 = vmatprep.subr.bf16.mxu0 0
    %3068 = vmatpush1.bf16.msra.mxu0 0
    %3069 = vmatprep.subr.bf16.mxu0 0
    %3070 = vmatpush1.bf16.msra.mxu0 0
    %3071 = vmatprep.subr.bf16.mxu0 0
    %3072 = vmatpush1.bf16.msra.mxu0 0
    %3073 = vmatprep.subr.bf16.mxu0 0
    %3074 = vmatpush1.bf16.msra.mxu0 0
    %3075 = vmatprep.subr.bf16.mxu0 0
    %3076 = vmatpush1.bf16.msra.mxu0 0
    %3077 = vmatprep.subr.bf16.mxu0 0
    %3078 = vmatpush1.bf16.msra.mxu0 0
    %3079 = vmatprep.subr.bf16.mxu0 0
    %3080 = vmatpush1.bf16.msra.mxu0 0
    %3081 = vmatprep.subr.bf16.mxu0 0
    %3082 = vmatpush1.bf16.msra.mxu0 0
    %3083 = vmatprep.mubr.bf16.mxu0 0
    %3084 = vmatmul.mubr.bf16.gmra.mrb[0].mxu0 %v3049
    %v3085 = vpop.f32.mrb[0].mxu0
    %v3086 = vadd.f32 %v140, %v3085
    %v3087 = vpop.f32.mrb[0].mxu0
    %v3088 = vpop.f32.mrb[0].mxu0
    %v3089 = vpop.f32.mrb[0].mxu0
    %3090 = vdwg.mxu0
    %v3091 = vxor.u32 %v3086, 2147483648
    %v3092 = vmul.f32 %v3091, 1.442695
    %v3093 = vpow.pop %v3092
    %v3094 = vadd.f32 %v3093, 1.0
    %v3095 = vrcp.pop %v3094
    %v3096 = vmul.f32 1.0, %v3095
    %3098 = vrot.lane.b32.xlu0 %v3086, 32
    %v3099 = vpop.permute.xlu0 %3098
    %v3101 = vmul.f32 %v3096, %v3099
    %3103 = vrot.lane.b32.xlu0 %v3101, 64
    %v3104 = vpop.permute.xlu0 %3103
    %v3106 = vadd.f32 %v3086, %v3104
    %v3107 = vtanh.pop %v3106
    %v3108 = vsub.f32 1.0, %v3096
    %3110 = vrot.lane.b32.xlu0 %v3107, 96
    %v3111 = vpop.permute.xlu0 %3110
    %v3113 = vmul.f32 %v3108, %v3111
    %v3114 = vmul.f32 %v3096, %v2685
    %v3115 = vadd.f32 %v3113, %v3114
    %s3116 = scalar_lea.vmem [#allocation5], 64
    %v3117 = vld [vmem:[%s3116] sm:$0xf]
    %v3118 = vld [vmem:[%s3116 + $0x4] sm:$0xf]
    %v3119 = vld [vmem:[%s3116 + $0x8] sm:$0xf]
    %v3120 = vld [vmem:[%s3116 + $0xc] sm:$0xf]
    %v3121 = vld [vmem:[%s3116 + $0x10] sm:$0xf]
    %v3122 = vld [vmem:[%s3116 + $0x14] sm:$0xf]
    %v3123 = vld [vmem:[%s3116 + $0x18] sm:$0xf]
    %v3124 = vld [vmem:[%s3116 + $0x1c] sm:$0xf]
    %3126 = vrot.lane.b32.xlu0 %v3115, 96
    %v3127 = vpop.permute.xlu0 %3126
    %v3129 = vsel %vm243, %v3127, %v2759
    %v3130 = vpack.c.bf16 %v3129, %v3129
    %v3139 = vunpack.c.l.b16 %v3117
    %v3140 = vunpack.c.l.b16 %v3118
    %v3141 = vunpack.c.l.b16 %v3119
    %v3142 = vunpack.c.l.b16 %v3120
    %v3143 = vunpack.c.l.b16 %v3121
    %v3144 = vunpack.c.l.b16 %v3122
    %v3145 = vunpack.c.l.b16 %v3123
    %v3146 = vunpack.c.l.b16 %v3124
    %v3147 = vpack.c.b16 %v3140, %v3139
    %v3148 = vpack.c.b16 %v3142, %v3141
    %v3149 = vpack.c.b16 %v3144, %v3143
    %v3150 = vpack.c.b16 %v3146, %v3145
    %v3156 = vsel %vm351, %v3130, 0
    %3158 = vmatprep.subr.bf16.mxu0 0
    %3159 = vmatpush1.bf16.msra.mxu0 %v3147
    %3160 = vmatprep.subr.bf16.mxu0 0
    %3161 = vmatpush1.bf16.msra.mxu0 %v3148
    %3162 = vmatprep.subr.bf16.mxu0 0
    %3163 = vmatpush1.bf16.msra.mxu0 %v3149
    %3164 = vmatprep.subr.bf16.mxu0 0
    %3165 = vmatpush1.bf16.msra.mxu0 %v3150
    %3166 = vmatprep.subr.bf16.mxu0 0
    %3167 = vmatpush1.bf16.msra.mxu0 0
    %3168 = vmatprep.subr.bf16.mxu0 0
    %3169 = vmatpush1.bf16.msra.mxu0 0
    %3170 = vmatprep.subr.bf16.mxu0 0
    %3171 = vmatpush1.bf16.msra.mxu0 0
    %3172 = vmatprep.subr.bf16.mxu0 0
    %3173 = vmatpush1.bf16.msra.mxu0 0
    %3174 = vmatprep.subr.bf16.mxu0 0
    %3175 = vmatpush1.bf16.msra.mxu0 0
    %3176 = vmatprep.subr.bf16.mxu0 0
    %3177 = vmatpush1.bf16.msra.mxu0 0
    %3178 = vmatprep.subr.bf16.mxu0 0
    %3179 = vmatpush1.bf16.msra.mxu0 0
    %3180 = vmatprep.subr.bf16.mxu0 0
    %3181 = vmatpush1.bf16.msra.mxu0 0
    %3182 = vmatprep.subr.bf16.mxu0 0
    %3183 = vmatpush1.bf16.msra.mxu0 0
    %3184 = vmatprep.subr.bf16.mxu0 0
    %3185 = vmatpush1.bf16.msra.mxu0 0
    %3186 = vmatprep.subr.bf16.mxu0 0
    %3187 = vmatpush1.bf16.msra.mxu0 0
    %3188 = vmatprep.subr.bf16.mxu0 0
    %3189 = vmatpush1.bf16.msra.mxu0 0
    %3190 = vmatprep.mubr.bf16.mxu0 0
    %3191 = vmatmul.mubr.bf16.gmra.mrb[0].mxu0 %v3156
    %v3192 = vpop.f32.mrb[0].mxu0
    %v3193 = vadd.f32 %v148, %v3192
    %v3194 = vpop.f32.mrb[0].mxu0
    %v3195 = vpop.f32.mrb[0].mxu0
    %v3196 = vpop.f32.mrb[0].mxu0
    %3197 = vdwg.mxu0
    %v3198 = vxor.u32 %v3193, 2147483648
    %v3199 = vmul.f32 %v3198, 1.442695
    %v3200 = vpow.pop %v3199
    %v3201 = vadd.f32 %v3200, 1.0
    %v3202 = vrcp.pop %v3201
    %v3203 = vmul.f32 1.0, %v3202
    %3205 = vrot.lane.b32.xlu0 %v3193, 32
    %v3206 = vpop.permute.xlu0 %3205
    %v3208 = vmul.f32 %v3203, %v3206
    %3210 = vrot.lane.b32.xlu0 %v3208, 64
    %v3211 = vpop.permute.xlu0 %3210
    %v3213 = vadd.f32 %v3193, %v3211
    %v3214 = vtanh.pop %v3213
    %v3215 = vsub.f32 1.0, %v3203
    %3217 = vrot.lane.b32.xlu0 %v3214, 96
    %v3218 = vpop.permute.xlu0 %3217
    %v3220 = vmul.f32 %v3215, %v3218
    %v3221 = vmul.f32 %v3203, %v2759
    %v3222 = vadd.f32 %v3220, %v3221
    %v3223 = vpack.c.bf16 %v3222, %v3222
    %3225 = vrot.lane.b32.xlu0 %v3223, 96
    %v3226 = vpop.permute.xlu0 %3225
    %v3231 = vunpack.c.l.b16 %v96
    %v3232 = vunpack.c.l.b16 %v97
    %v3233 = vunpack.c.l.b16 %v98
    %v3234 = vunpack.c.l.b16 %v99
    %v3235 = vpack.c.b16 %v3232, %v3231
    %v3236 = vpack.c.b16 %v3234, %v3233
    %v3240 = vsel %vm243, %v3226, 0
    %3242 = vmatprep.subr.bf16.mxu0 0
    %3243 = vmatpush1.bf16.msra.mxu0 %v3235
    %3244 = vmatprep.subr.bf16.mxu0 0
    %3245 = vmatpush1.bf16.msra.mxu0 %v3236
    %3246 = vmatprep.subr.bf16.mxu0 0
    %3247 = vmatpush1.bf16.msra.mxu0 0
    %3248 = vmatprep.subr.bf16.mxu0 0
    %3249 = vmatpush1.bf16.msra.mxu0 0
    %3250 = vmatprep.subr.bf16.mxu0 0
    %3251 = vmatpush1.bf16.msra.mxu0 0
    %3252 = vmatprep.subr.bf16.mxu0 0
    %3253 = vmatpush1.bf16.msra.mxu0 0
    %3254 = vmatprep.subr.bf16.mxu0 0
    %3255 = vmatpush1.bf16.msra.mxu0 0
    %3256 = vmatprep.subr.bf16.mxu0 0
    %3257 = vmatpush1.bf16.msra.mxu0 0
    %3258 = vmatprep.subr.bf16.mxu0 0
    %3259 = vmatpush1.bf16.msra.mxu0 0
    %3260 = vmatprep.subr.bf16.mxu0 0
    %3261 = vmatpush1.bf16.msra.mxu0 0
    %3262 = vmatprep.subr.bf16.mxu0 0
    %3263 = vmatpush1.bf16.msra.mxu0 0
    %3264 = vmatprep.subr.bf16.mxu0 0
    %3265 = vmatpush1.bf16.msra.mxu0 0
    %3266 = vmatprep.subr.bf16.mxu0 0
    %3267 = vmatpush1.bf16.msra.mxu0 0
    %3268 = vmatprep.subr.bf16.mxu0 0
    %3269 = vmatpush1.bf16.msra.mxu0 0
    %3270 = vmatprep.subr.bf16.mxu0 0
    %3271 = vmatpush1.bf16.msra.mxu0 0
    %3272 = vmatprep.subr.bf16.mxu0 0
    %3273 = vmatpush1.bf16.msra.mxu0 0
    %3274 = vmatprep.mubr.bf16.mxu0 0
    %3275 = vmatmul.mubr.bf16.gmra.mrb[0].mxu0 %v3240
    %v3276 = vpop.f32.mrb[0].mxu0
    %v3277 = vadd.f32 %v162, %v3276
    %v3278 = vpop.f32.mrb[0].mxu0
    %v3279 = vpop.f32.mrb[0].mxu0
    %v3280 = vpop.f32.mrb[0].mxu0
    %3281 = vdwg.mxu0
    %v3282 = vmax.f32 %v3277, 0.0
    %v3283 = vpack.c.bf16 %v3282, %v3282
    %v3288 = vunpack.c.l.b16 %v100
    %v3289 = vunpack.c.l.b16 %v101
    %v3290 = vunpack.c.l.b16 %v102
    %v3291 = vunpack.c.l.b16 %v103
    %v3292 = vpack.c.b16 %v3289, %v3288
    %v3293 = vpack.c.b16 %v3291, %v3290
    %v3297 = vsel %vm243, %v3283, 0
    %3299 = vmatprep.subr.bf16.mxu0 0
    %3300 = vmatpush1.bf16.msra.mxu0 %v3292
    %3301 = vmatprep.subr.bf16.mxu0 0
    %3302 = vmatpush1.bf16.msra.mxu0 %v3293
    %3303 = vmatprep.subr.bf16.mxu0 0
    %3304 = vmatpush1.bf16.msra.mxu0 0
    %3305 = vmatprep.subr.bf16.mxu0 0
    %3306 = vmatpush1.bf16.msra.mxu0 0
    %3307 = vmatprep.subr.bf16.mxu0 0
    %3308 = vmatpush1.bf16.msra.mxu0 0
    %3309 = vmatprep.subr.bf16.mxu0 0
    %3310 = vmatpush1.bf16.msra.mxu0 0
    %3311 = vmatprep.subr.bf16.mxu0 0
    %3312 = vmatpush1.bf16.msra.mxu0 0
    %3313 = vmatprep.subr.bf16.mxu0 0
    %3314 = vmatpush1.bf16.msra.mxu0 0
    %3315 = vmatprep.subr.bf16.mxu0 0
    %3316 = vmatpush1.bf16.msra.mxu0 0
    %3317 = vmatprep.subr.bf16.mxu0 0
    %3318 = vmatpush1.bf16.msra.mxu0 0
    %3319 = vmatprep.subr.bf16.mxu0 0
    %3320 = vmatpush1.bf16.msra.mxu0 0
    %3321 = vmatprep.subr.bf16.mxu0 0
    %3322 = vmatpush1.bf16.msra.mxu0 0
    %3323 = vmatprep.subr.bf16.mxu0 0
    %3324 = vmatpush1.bf16.msra.mxu0 0
    %3325 = vmatprep.subr.bf16.mxu0 0
    %3326 = vmatpush1.bf16.msra.mxu0 0
    %3327 = vmatprep.subr.bf16.mxu0 0
    %3328 = vmatpush1.bf16.msra.mxu0 0
    %3329 = vmatprep.subr.bf16.mxu0 0
    %3330 = vmatpush1.bf16.msra.mxu0 0
    %3331 = vmatprep.mubr.bf16.mxu0 0
    %3332 = vmatmul.mubr.bf16.gmra.mrb[0].mxu0 %v3297
    %v3333 = vpop.f32.mrb[0].mxu0
    %v3334 = vadd.f32 %v169, %v3333
    %v3335 = vpop.f32.mrb[0].mxu0
    %v3336 = vpop.f32.mrb[0].mxu0
    %v3337 = vpop.f32.mrb[0].mxu0
    %3338 = vdwg.mxu0
    %v3339 = vld [vmem:[%s1 + $0x2] sm:$0x3]
    %v3340 = vsub.f32 %v3334, %v3339
    %v3341 = vmul.f32 %v3340, %v3340
    %v3342 = vadd.f32 %v3341, 0.0
    %3343 = vrot.lane.b32.xlu0 %v2902, 100
    %v3344 = vpop.permute.xlu0 %3343
    %v3346 = vsel %vm182, %v3334, %v3344
    %v3347 = vpack.c.bf16 %v3346, %v3346
    %v3349 = vsel %vm2831, %v3347, 0
    %3351 = vmatprep.subr.bf16.mxu0 0
    %3352 = vmatpush1.bf16.msra.mxu0 %v2826
    %3353 = vmatprep.subr.bf16.mxu0 0
    %3354 = vmatpush1.bf16.msra.mxu0 %v2827
    %3355 = vmatprep.subr.bf16.mxu0 0
    %3356 = vmatpush1.bf16.msra.mxu0 %v2836
    %3357 = vmatprep.subr.bf16.mxu0 0
    %3358 = vmatpush1.bf16.msra.mxu0 0
    %3359 = vmatprep.subr.bf16.mxu0 0
    %3360 = vmatpush1.bf16.msra.mxu0 0
    %3361 = vmatprep.subr.bf16.mxu0 0
    %3362 = vmatpush1.bf16.msra.mxu0 0
    %3363 = vmatprep.subr.bf16.mxu0 0
    %3364 = vmatpush1.bf16.msra.mxu0 0
    %3365 = vmatprep.subr.bf16.mxu0 0
    %3366 = vmatpush1.bf16.msra.mxu0 0
    %3367 = vmatprep.subr.bf16.mxu0 0
    %3368 = vmatpush1.bf16.msra.mxu0 0
    %3369 = vmatprep.subr.bf16.mxu0 0
    %3370 = vmatpush1.bf16.msra.mxu0 0
    %3371 = vmatprep.subr.bf16.mxu0 0
    %3372 = vmatpush1.bf16.msra.mxu0 0
    %3373 = vmatprep.subr.bf16.mxu0 0
    %3374 = vmatpush1.bf16.msra.mxu0 0
    %3375 = vmatprep.subr.bf16.mxu0 0
    %3376 = vmatpush1.bf16.msra.mxu0 0
    %3377 = vmatprep.subr.bf16.mxu0 0
    %3378 = vmatpush1.bf16.msra.mxu0 0
    %3379 = vmatprep.subr.bf16.mxu0 0
    %3380 = vmatpush1.bf16.msra.mxu0 0
    %3381 = vmatprep.subr.bf16.mxu0 0
    %3382 = vmatpush1.bf16.msra.mxu0 0
    %3383 = vmatprep.mubr.bf16.mxu0 0
    %3384 = vmatmul.mubr.bf16.gmra.mrb[0].mxu0 %v3349
    %v3385 = vpop.f32.mrb[0].mxu0
    %v3386 = vadd.f32 %v155, %v3385
    %v3387 = vpop.f32.mrb[0].mxu0
    %v3388 = vpop.f32.mrb[0].mxu0
    %v3389 = vpop.f32.mrb[0].mxu0
    %3390 = vdwg.mxu0
    %v3391 = vxor.u32 %v3386, 2147483648
    %v3392 = vmul.f32 %v3391, 1.442695
    %v3393 = vpow.pop %v3392
    %v3394 = vadd.f32 %v3393, 1.0
    %v3395 = vrcp.pop %v3394
    %v3396 = vmul.f32 1.0, %v3395
    %3398 = vrot.lane.b32.xlu0 %v3386, 32
    %v3399 = vpop.permute.xlu0 %3398
    %v3401 = vmul.f32 %v3396, %v3399
    %3403 = vrot.lane.b32.xlu0 %v3401, 64
    %v3404 = vpop.permute.xlu0 %3403
    %v3406 = vadd.f32 %v3386, %v3404
    %v3407 = vtanh.pop %v3406
    %v3408 = vsub.f32 1.0, %v3396
    %3410 = vrot.lane.b32.xlu0 %v3407, 96
    %v3411 = vpop.permute.xlu0 %3410
    %v3413 = vmul.f32 %v3408, %v3411
    %v3414 = vmul.f32 %v3396, %v2902
    %v3415 = vadd.f32 %v3413, %v3414
    %3417 = vrot.lane.b32.xlu0 %v3415, 96
    %v3418 = vpop.permute.xlu0 %3417
    %v3420 = vsel %vm243, %v3418, %v3008
    %v3421 = vpack.c.bf16 %v3420, %v3420
    %v3423 = vsel %vm351, %v3421, 0
    %3425 = vmatprep.subr.bf16.mxu0 0
    %3426 = vmatpush1.bf16.msra.mxu0 %v2933
    %3427 = vmatprep.subr.bf16.mxu0 0
    %3428 = vmatpush1.bf16.msra.mxu0 %v2934
    %3429 = vmatprep.subr.bf16.mxu0 0
    %3430 = vmatpush1.bf16.msra.mxu0 %v2935
    %3431 = vmatprep.subr.bf16.mxu0 0
    %3432 = vmatpush1.bf16.msra.mxu0 %v2936
    %3433 = vmatprep.subr.bf16.mxu0 0
    %3434 = vmatpush1.bf16.msra.mxu0 0
    %3435 = vmatprep.subr.bf16.mxu0 0
    %3436 = vmatpush1.bf16.msra.mxu0 0
    %3437 = vmatprep.subr.bf16.mxu0 0
    %3438 = vmatpush1.bf16.msra.mxu0 0
    %3439 = vmatprep.subr.bf16.mxu0 0
    %3440 = vmatpush1.bf16.msra.mxu0 0
    %3441 = vmatprep.subr.bf16.mxu0 0
    %3442 = vmatpush1.bf16.msra.mxu0 0
    %3443 = vmatprep.subr.bf16.mxu0 0
    %3444 = vmatpush1.bf16.msra.mxu0 0
    %3445 = vmatprep.subr.bf16.mxu0 0
    %3446 = vmatpush1.bf16.msra.mxu0 0
    %3447 = vmatprep.subr.bf16.mxu0 0
    %3448 = vmatpush1.bf16.msra.mxu0 0
    %3449 = vmatprep.subr.bf16.mxu0 0
    %3450 = vmatpush1.bf16.msra.mxu0 0
    %3451 = vmatprep.subr.bf16.mxu0 0
    %3452 = vmatpush1.bf16.msra.mxu0 0
    %3453 = vmatprep.subr.bf16.mxu0 0
    %3454 = vmatpush1.bf16.msra.mxu0 0
    %3455 = vmatprep.subr.bf16.mxu0 0
    %3456 = vmatpush1.bf16.msra.mxu0 0
    %3457 = vmatprep.mubr.bf16.mxu0 0
    %3458 = vmatmul.mubr.bf16.gmra.mrb[0].mxu0 %v3423
    %v3459 = vpop.f32.mrb[0].mxu0
    %v3460 = vadd.f32 %v132, %v3459
    %v3461 = vpop.f32.mrb[0].mxu0
    %v3462 = vpop.f32.mrb[0].mxu0
    %v3463 = vpop.f32.mrb[0].mxu0
    %3464 = vdwg.mxu0
    %v3465 = vxor.u32 %v3460, 2147483648
    %v3466 = vmul.f32 %v3465, 1.442695
    %v3467 = vpow.pop %v3466
    %v3468 = vadd.f32 %v3467, 1.0
    %v3469 = vrcp.pop %v3468
    %v3470 = vmul.f32 1.0, %v3469
    %3472 = vrot.lane.b32.xlu0 %v3460, 32
    %v3473 = vpop.permute.xlu0 %3472
    %v3475 = vmul.f32 %v3470, %v3473
    %3477 = vrot.lane.b32.xlu0 %v3475, 64
    %v3478 = vpop.permute.xlu0 %3477
    %v3480 = vadd.f32 %v3460, %v3478
    %v3481 = vtanh.pop %v3480
    %v3482 = vsub.f32 1.0, %v3470
    %3484 = vrot.lane.b32.xlu0 %v3481, 96
    %v3485 = vpop.permute.xlu0 %3484
    %v3487 = vmul.f32 %v3482, %v3485
    %v3488 = vmul.f32 %v3470, %v3008
    %v3489 = vadd.f32 %v3487, %v3488
    %3491 = vrot.lane.b32.xlu0 %v3489, 96
    %v3492 = vpop.permute.xlu0 %3491
    %v3494 = vsel %vm243, %v3492, %v3115
    %v3495 = vpack.c.bf16 %v3494, %v3494
    %v3497 = vsel %vm351, %v3495, 0
    %3499 = vmatprep.subr.bf16.mxu0 0
    %3500 = vmatpush1.bf16.msra.mxu0 %v3040
    %3501 = vmatprep.subr.bf16.mxu0 0
    %3502 = vmatpush1.bf16.msra.mxu0 %v3041
    %3503 = vmatprep.subr.bf16.mxu0 0
    %3504 = vmatpush1.bf16.msra.mxu0 %v3042
    %3505 = vmatprep.subr.bf16.mxu0 0
    %3506 = vmatpush1.bf16.msra.mxu0 %v3043
    %3507 = vmatprep.subr.bf16.mxu0 0
    %3508 = vmatpush1.bf16.msra.mxu0 0
    %3509 = vmatprep.subr.bf16.mxu0 0
    %3510 = vmatpush1.bf16.msra.mxu0 0
    %3511 = vmatprep.subr.bf16.mxu0 0
    %3512 = vmatpush1.bf16.msra.mxu0 0
    %3513 = vmatprep.subr.bf16.mxu0 0
    %3514 = vmatpush1.bf16.msra.mxu0 0
    %3515 = vmatprep.subr.bf16.mxu0 0
    %3516 = vmatpush1.bf16.msra.mxu0 0
    %3517 = vmatprep.subr.bf16.mxu0 0
    %3518 = vmatpush1.bf16.msra.mxu0 0
    %3519 = vmatprep.subr.bf16.mxu0 0
    %3520 = vmatpush1.bf16.msra.mxu0 0
    %3521 = vmatprep.subr.bf16.mxu0 0
    %3522 = vmatpush1.bf16.msra.mxu0 0
    %3523 = vmatprep.subr.bf16.mxu0 0
    %3524 = vmatpush1.bf16.msra.mxu0 0
    %3525 = vmatprep.subr.bf16.mxu0 0
    %3526 = vmatpush1.bf16.msra.mxu0 0
    %3527 = vmatprep.subr.bf16.mxu0 0
    %3528 = vmatpush1.bf16.msra.mxu0 0
    %3529 = vmatprep.subr.bf16.mxu0 0
    %3530 = vmatpush1.bf16.msra.mxu0 0
    %3531 = vmatprep.mubr.bf16.mxu0 0
    %3532 = vmatmul.mubr.bf16.gmra.mrb[0].mxu0 %v3497
    %v3533 = vpop.f32.mrb[0].mxu0
    %v3534 = vadd.f32 %v140, %v3533
    %v3535 = vpop.f32.mrb[0].mxu0
    %v3536 = vpop.f32.mrb[0].mxu0
    %v3537 = vpop.f32.mrb[0].mxu0
    %3538 = vdwg.mxu0
    %v3539 = vxor.u32 %v3534, 2147483648
    %v3540 = vmul.f32 %v3539, 1.442695
    %v3541 = vpow.pop %v3540
    %v3542 = vadd.f32 %v3541, 1.0
    %v3543 = vrcp.pop %v3542
    %v3544 = vmul.f32 1.0, %v3543
    %3546 = vrot.lane.b32.xlu0 %v3534, 32
    %v3547 = vpop.permute.xlu0 %3546
    %v3549 = vmul.f32 %v3544, %v3547
    %3551 = vrot.lane.b32.xlu0 %v3549, 64
    %v3552 = vpop.permute.xlu0 %3551
    %v3554 = vadd.f32 %v3534, %v3552
    %v3555 = vtanh.pop %v3554
    %v3556 = vsub.f32 1.0, %v3544
    %3558 = vrot.lane.b32.xlu0 %v3555, 96
    %v3559 = vpop.permute.xlu0 %3558
    %v3561 = vmul.f32 %v3556, %v3559
    %v3562 = vmul.f32 %v3544, %v3115
    %v3563 = vadd.f32 %v3561, %v3562
    %3565 = vrot.lane.b32.xlu0 %v3563, 96
    %v3566 = vpop.permute.xlu0 %3565
    %v3568 = vsel %vm243, %v3566, %v3222
    %v3569 = vpack.c.bf16 %v3568, %v3568
    %v3571 = vsel %vm351, %v3569, 0
    %3573 = vmatprep.subr.bf16.mxu0 0
    %3574 = vmatpush1.bf16.msra.mxu0 %v3147
    %3575 = vmatprep.subr.bf16.mxu0 0
    %3576 = vmatpush1.bf16.msra.mxu0 %v3148
    %3577 = vmatprep.subr.bf16.mxu0 0
    %3578 = vmatpush1.bf16.msra.mxu0 %v3149
    %3579 = vmatprep.subr.bf16.mxu0 0
    %3580 = vmatpush1.bf16.msra.mxu0 %v3150
    %3581 = vmatprep.subr.bf16.mxu0 0
    %3582 = vmatpush1.bf16.msra.mxu0 0
    %3583 = vmatprep.subr.bf16.mxu0 0
    %3584 = vmatpush1.bf16.msra.mxu0 0
    %3585 = vmatprep.subr.bf16.mxu0 0
    %3586 = vmatpush1.bf16.msra.mxu0 0
    %3587 = vmatprep.subr.bf16.mxu0 0
    %3588 = vmatpush1.bf16.msra.mxu0 0
    %3589 = vmatprep.subr.bf16.mxu0 0
    %3590 = vmatpush1.bf16.msra.mxu0 0
    %3591 = vmatprep.subr.bf16.mxu0 0
    %3592 = vmatpush1.bf16.msra.mxu0 0
    %3593 = vmatprep.subr.bf16.mxu0 0
    %3594 = vmatpush1.bf16.msra.mxu0 0
    %3595 = vmatprep.subr.bf16.mxu0 0
    %3596 = vmatpush1.bf16.msra.mxu0 0
    %3597 = vmatprep.subr.bf16.mxu0 0
    %3598 = vmatpush1.bf16.msra.mxu0 0
    %3599 = vmatprep.subr.bf16.mxu0 0
    %3600 = vmatpush1.bf16.msra.mxu0 0
    %3601 = vmatprep.subr.bf16.mxu0 0
    %3602 = vmatpush1.bf16.msra.mxu0 0
    %3603 = vmatprep.subr.bf16.mxu0 0
    %3604 = vmatpush1.bf16.msra.mxu0 0
    %3605 = vmatprep.mubr.bf16.mxu0 0
    %3606 = vmatmul.mubr.bf16.gmra.mrb[0].mxu0 %v3571
    %v3607 = vpop.f32.mrb[0].mxu0
    %v3608 = vadd.f32 %v148, %v3607
    %v3609 = vpop.f32.mrb[0].mxu0
    %v3610 = vpop.f32.mrb[0].mxu0
    %v3611 = vpop.f32.mrb[0].mxu0
    %3612 = vdwg.mxu0
    %v3613 = vxor.u32 %v3608, 2147483648
    %v3614 = vmul.f32 %v3613, 1.442695
    %v3615 = vpow.pop %v3614
    %v3616 = vadd.f32 %v3615, 1.0
    %v3617 = vrcp.pop %v3616
    %v3618 = vmul.f32 1.0, %v3617
    %3620 = vrot.lane.b32.xlu0 %v3608, 32
    %v3621 = vpop.permute.xlu0 %3620
    %v3623 = vmul.f32 %v3618, %v3621
    %3625 = vrot.lane.b32.xlu0 %v3623, 64
    %v3626 = vpop.permute.xlu0 %3625
    %v3628 = vadd.f32 %v3608, %v3626
    %v3629 = vtanh.pop %v3628
    %v3630 = vsub.f32 1.0, %v3618
    %3632 = vrot.lane.b32.xlu0 %v3629, 96
    %v3633 = vpop.permute.xlu0 %3632
    %v3635 = vmul.f32 %v3630, %v3633
    %v3636 = vmul.f32 %v3618, %v3222
    %v3637 = vadd.f32 %v3635, %v3636
    %v3638 = vpack.c.bf16 %v3637, %v3637
    %3640 = vrot.lane.b32.xlu0 %v3638, 96
    %v3641 = vpop.permute.xlu0 %3640
    %v3643 = vsel %vm243, %v3641, 0
    %3645 = vmatprep.subr.bf16.mxu0 0
    %3646 = vmatpush1.bf16.msra.mxu0 %v3235
    %3647 = vmatprep.subr.bf16.mxu0 0
    %3648 = vmatpush1.bf16.msra.mxu0 %v3236
    %3649 = vmatprep.subr.bf16.mxu0 0
    %3650 = vmatpush1.bf16.msra.mxu0 0
    %3651 = vmatprep.subr.bf16.mxu0 0
    %3652 = vmatpush1.bf16.msra.mxu0 0
    %3653 = vmatprep.subr.bf16.mxu0 0
    %3654 = vmatpush1.bf16.msra.mxu0 0
    %3655 = vmatprep.subr.bf16.mxu0 0
    %3656 = vmatpush1.bf16.msra.mxu0 0
    %3657 = vmatprep.subr.bf16.mxu0 0
    %3658 = vmatpush1.bf16.msra.mxu0 0
    %3659 = vmatprep.subr.bf16.mxu0 0
    %3660 = vmatpush1.bf16.msra.mxu0 0
    %3661 = vmatprep.subr.bf16.mxu0 0
    %3662 = vmatpush1.bf16.msra.mxu0 0
    %3663 = vmatprep.subr.bf16.mxu0 0
    %3664 = vmatpush1.bf16.msra.mxu0 0
    %3665 = vmatprep.subr.bf16.mxu0 0
    %3666 = vmatpush1.bf16.msra.mxu0 0
    %3667 = vmatprep.subr.bf16.mxu0 0
    %3668 = vmatpush1.bf16.msra.mxu0 0
    %3669 = vmatprep.subr.bf16.mxu0 0
    %3670 = vmatpush1.bf16.msra.mxu0 0
    %3671 = vmatprep.subr.bf16.mxu0 0
    %3672 = vmatpush1.bf16.msra.mxu0 0
    %3673 = vmatprep.subr.bf16.mxu0 0
    %3674 = vmatpush1.bf16.msra.mxu0 0
    %3675 = vmatprep.subr.bf16.mxu0 0
    %3676 = vmatpush1.bf16.msra.mxu0 0
    %3677 = vmatprep.mubr.bf16.mxu0 0
    %3678 = vmatmul.mubr.bf16.gmra.mrb[0].mxu0 %v3643
    %v3679 = vpop.f32.mrb[0].mxu0
    %v3680 = vadd.f32 %v162, %v3679
    %v3681 = vpop.f32.mrb[0].mxu0
    %v3682 = vpop.f32.mrb[0].mxu0
    %v3683 = vpop.f32.mrb[0].mxu0
    %3684 = vdwg.mxu0
    %v3685 = vmax.f32 %v3680, 0.0
    %v3686 = vpack.c.bf16 %v3685, %v3685
    %v3688 = vsel %vm243, %v3686, 0
    %3690 = vmatprep.subr.bf16.mxu0 0
    %3691 = vmatpush1.bf16.msra.mxu0 %v3292
    %3692 = vmatprep.subr.bf16.mxu0 0
    %3693 = vmatpush1.bf16.msra.mxu0 %v3293
    %3694 = vmatprep.subr.bf16.mxu0 0
    %3695 = vmatpush1.bf16.msra.mxu0 0
    %3696 = vmatprep.subr.bf16.mxu0 0
    %3697 = vmatpush1.bf16.msra.mxu0 0
    %3698 = vmatprep.subr.bf16.mxu0 0
    %3699 = vmatpush1.bf16.msra.mxu0 0
    %3700 = vmatprep.subr.bf16.mxu0 0
    %3701 = vmatpush1.bf16.msra.mxu0 0
    %3702 = vmatprep.subr.bf16.mxu0 0
    %3703 = vmatpush1.bf16.msra.mxu0 0
    %3704 = vmatprep.subr.bf16.mxu0 0
    %3705 = vmatpush1.bf16.msra.mxu0 0
    %3706 = vmatprep.subr.bf16.mxu0 0
    %3707 = vmatpush1.bf16.msra.mxu0 0
    %3708 = vmatprep.subr.bf16.mxu0 0
    %3709 = vmatpush1.bf16.msra.mxu0 0
    %3710 = vmatprep.subr.bf16.mxu0 0
    %3711 = vmatpush1.bf16.msra.mxu0 0
    %3712 = vmatprep.subr.bf16.mxu0 0
    %3713 = vmatpush1.bf16.msra.mxu0 0
    %3714 = vmatprep.subr.bf16.mxu0 0
    %3715 = vmatpush1.bf16.msra.mxu0 0
    %3716 = vmatprep.subr.bf16.mxu0 0
    %3717 = vmatpush1.bf16.msra.mxu0 0
    %3718 = vmatprep.subr.bf16.mxu0 0
    %3719 = vmatpush1.bf16.msra.mxu0 0
    %3720 = vmatprep.subr.bf16.mxu0 0
    %3721 = vmatpush1.bf16.msra.mxu0 0
    %3722 = vmatprep.mubr.bf16.mxu0 0
    %3723 = vmatmul.mubr.bf16.gmra.mrb[0].mxu0 %v3688
    %v3724 = vpop.f32.mrb[0].mxu0
    %v3725 = vadd.f32 %v169, %v3724
    %v3726 = vpop.f32.mrb[0].mxu0
    %v3727 = vpop.f32.mrb[0].mxu0
    %v3728 = vpop.f32.mrb[0].mxu0
    %3729 = vdwg.mxu0
    %v3730 = vld [vmem:[%s1 + $0x4] sm:$0x3]
    %v3731 = vsub.f32 %v3725, %v3730
    %v3732 = vmul.f32 %v3731, %v3731
    %v3733 = vadd.f32 %v3342, %v3732
    %3734 = vrot.lane.b32.xlu0 %v3415, 100
    %v3735 = vpop.permute.xlu0 %3734
    %v3737 = vsel %vm182, %v3725, %v3735
    %v3738 = vpack.c.bf16 %v3737, %v3737
    %v3740 = vsel %vm2831, %v3738, 0
    %3742 = vmatprep.subr.bf16.mxu0 0
    %3743 = vmatpush1.bf16.msra.mxu0 %v2826
    %3744 = vmatprep.subr.bf16.mxu0 0
    %3745 = vmatpush1.bf16.msra.mxu0 %v2827
    %3746 = vmatprep.subr.bf16.mxu0 0
    %3747 = vmatpush1.bf16.msra.mxu0 %v2836
    %3748 = vmatprep.subr.bf16.mxu0 0
    %3749 = vmatpush1.bf16.msra.mxu0 0
    %3750 = vmatprep.subr.bf16.mxu0 0
    %3751 = vmatpush1.bf16.msra.mxu0 0
    %3752 = vmatprep.subr.bf16.mxu0 0
    %3753 = vmatpush1.bf16.msra.mxu0 0
    %3754 = vmatprep.subr.bf16.mxu0 0
    %3755 = vmatpush1.bf16.msra.mxu0 0
    %3756 = vmatprep.subr.bf16.mxu0 0
    %3757 = vmatpush1.bf16.msra.mxu0 0
    %3758 = vmatprep.subr.bf16.mxu0 0
    %3759 = vmatpush1.bf16.msra.mxu0 0
    %3760 = vmatprep.subr.bf16.mxu0 0
    %3761 = vmatpush1.bf16.msra.mxu0 0
    %3762 = vmatprep.subr.bf16.mxu0 0
    %3763 = vmatpush1.bf16.msra.mxu0 0
    %3764 = vmatprep.subr.bf16.mxu0 0
    %3765 = vmatpush1.bf16.msra.mxu0 0
    %3766 = vmatprep.subr.bf16.mxu0 0
    %3767 = vmatpush1.bf16.msra.mxu0 0
    %3768 = vmatprep.subr.bf16.mxu0 0
    %3769 = vmatpush1.bf16.msra.mxu0 0
    %3770 = vmatprep.subr.bf16.mxu0 0
    %3771 = vmatpush1.bf16.msra.mxu0 0
    %3772 = vmatprep.subr.bf16.mxu0 0
    %3773 = vmatpush1.bf16.msra.mxu0 0
    %3774 = vmatprep.mubr.bf16.mxu0 0
    %3775 = vmatmul.mubr.bf16.gmra.mrb[0].mxu0 %v3740
    %v3776 = vpop.f32.mrb[0].mxu0
    %v3777 = vadd.f32 %v155, %v3776
    %v3778 = vpop.f32.mrb[0].mxu0
    %v3779 = vpop.f32.mrb[0].mxu0
    %v3780 = vpop.f32.mrb[0].mxu0
    %3781 = vdwg.mxu0
    %v3782 = vxor.u32 %v3777, 2147483648
    %v3783 = vmul.f32 %v3782, 1.442695
    %v3784 = vpow.pop %v3783
    %v3785 = vadd.f32 %v3784, 1.0
    %v3786 = vrcp.pop %v3785
    %v3787 = vmul.f32 1.0, %v3786
    %3789 = vrot.lane.b32.xlu0 %v3777, 32
    %v3790 = vpop.permute.xlu0 %3789
    %v3792 = vmul.f32 %v3787, %v3790
    %3794 = vrot.lane.b32.xlu0 %v3792, 64
    %v3795 = vpop.permute.xlu0 %3794
    %v3797 = vadd.f32 %v3777, %v3795
    %v3798 = vtanh.pop %v3797
    %v3799 = vsub.f32 1.0, %v3787
    %3801 = vrot.lane.b32.xlu0 %v3798, 96
    %v3802 = vpop.permute.xlu0 %3801
    %v3804 = vmul.f32 %v3799, %v3802
    %v3805 = vmul.f32 %v3787, %v3415
    %v3806 = vadd.f32 %v3804, %v3805
    %3808 = vrot.lane.b32.xlu0 %v3806, 96
    %v3809 = vpop.permute.xlu0 %3808
    %v3811 = vsel %vm243, %v3809, %v3489
    %v3812 = vpack.c.bf16 %v3811, %v3811
    %v3814 = vsel %vm351, %v3812, 0
    %3816 = vmatprep.subr.bf16.mxu0 0
    %3817 = vmatpush1.bf16.msra.mxu0 %v2933
    %3818 = vmatprep.subr.bf16.mxu0 0
    %3819 = vmatpush1.bf16.msra.mxu0 %v2934
    %3820 = vmatprep.subr.bf16.mxu0 0
    %3821 = vmatpush1.bf16.msra.mxu0 %v2935
    %3822 = vmatprep.subr.bf16.mxu0 0
    %3823 = vmatpush1.bf16.msra.mxu0 %v2936
    %3824 = vmatprep.subr.bf16.mxu0 0
    %3825 = vmatpush1.bf16.msra.mxu0 0
    %3826 = vmatprep.subr.bf16.mxu0 0
    %3827 = vmatpush1.bf16.msra.mxu0 0
    %3828 = vmatprep.subr.bf16.mxu0 0
    %3829 = vmatpush1.bf16.msra.mxu0 0
    %3830 = vmatprep.subr.bf16.mxu0 0
    %3831 = vmatpush1.bf16.msra.mxu0 0
    %3832 = vmatprep.subr.bf16.mxu0 0
    %3833 = vmatpush1.bf16.msra.mxu0 0
    %3834 = vmatprep.subr.bf16.mxu0 0
    %3835 = vmatpush1.bf16.msra.mxu0 0
    %3836 = vmatprep.subr.bf16.mxu0 0
    %3837 = vmatpush1.bf16.msra.mxu0 0
    %3838 = vmatprep.subr.bf16.mxu0 0
    %3839 = vmatpush1.bf16.msra.mxu0 0
    %3840 = vmatprep.subr.bf16.mxu0 0
    %3841 = vmatpush1.bf16.msra.mxu0 0
    %3842 = vmatprep.subr.bf16.mxu0 0
    %3843 = vmatpush1.bf16.msra.mxu0 0
    %3844 = vmatprep.subr.bf16.mxu0 0
    %3845 = vmatpush1.bf16.msra.mxu0 0
    %3846 = vmatprep.subr.bf16.mxu0 0
    %3847 = vmatpush1.bf16.msra.mxu0 0
    %3848 = vmatprep.mubr.bf16.mxu0 0
    %3849 = vmatmul.mubr.bf16.gmra.mrb[0].mxu0 %v3814
    %v3850 = vpop.f32.mrb[0].mxu0
    %v3851 = vadd.f32 %v132, %v3850
    %v3852 = vpop.f32.mrb[0].mxu0
    %v3853 = vpop.f32.mrb[0].mxu0
    %v3854 = vpop.f32.mrb[0].mxu0
    %3855 = vdwg.mxu0
    %v3856 = vxor.u32 %v3851, 2147483648
    %v3857 = vmul.f32 %v3856, 1.442695
    %v3858 = vpow.pop %v3857
    %v3859 = vadd.f32 %v3858, 1.0
    %v3860 = vrcp.pop %v3859
    %v3861 = vmul.f32 1.0, %v3860
    %3863 = vrot.lane.b32.xlu0 %v3851, 32
    %v3864 = vpop.permute.xlu0 %3863
    %v3866 = vmul.f32 %v3861, %v3864
    %3868 = vrot.lane.b32.xlu0 %v3866, 64
    %v3869 = vpop.permute.xlu0 %3868
    %v3871 = vadd.f32 %v3851, %v3869
    %v3872 = vtanh.pop %v3871
    %v3873 = vsub.f32 1.0, %v3861
    %3875 = vrot.lane.b32.xlu0 %v3872, 96
    %v3876 = vpop.permute.xlu0 %3875
    %v3878 = vmul.f32 %v3873, %v3876
    %v3879 = vmul.f32 %v3861, %v3489
    %v3880 = vadd.f32 %v3878, %v3879
    %3882 = vrot.lane.b32.xlu0 %v3880, 96
    %v3883 = vpop.permute.xlu0 %3882
    %v3885 = vsel %vm243, %v3883, %v3563
    %v3886 = vpack.c.bf16 %v3885, %v3885
    %v3888 = vsel %vm351, %v3886, 0
    %3890 = vmatprep.subr.bf16.mxu0 0
    %3891 = vmatpush1.bf16.msra.mxu0 %v3040
    %3892 = vmatprep.subr.bf16.mxu0 0
    %3893 = vmatpush1.bf16.msra.mxu0 %v3041
    %3894 = vmatprep.subr.bf16.mxu0 0
    %3895 = vmatpush1.bf16.msra.mxu0 %v3042
    %3896 = vmatprep.subr.bf16.mxu0 0
    %3897 = vmatpush1.bf16.msra.mxu0 %v3043
    %3898 = vmatprep.subr.bf16.mxu0 0
    %3899 = vmatpush1.bf16.msra.mxu0 0
    %3900 = vmatprep.subr.bf16.mxu0 0
    %3901 = vmatpush1.bf16.msra.mxu0 0
    %3902 = vmatprep.subr.bf16.mxu0 0
    %3903 = vmatpush1.bf16.msra.mxu0 0
    %3904 = vmatprep.subr.bf16.mxu0 0
    %3905 = vmatpush1.bf16.msra.mxu0 0
    %3906 = vmatprep.subr.bf16.mxu0 0
    %3907 = vmatpush1.bf16.msra.mxu0 0
    %3908 = vmatprep.subr.bf16.mxu0 0
    %3909 = vmatpush1.bf16.msra.mxu0 0
    %3910 = vmatprep.subr.bf16.mxu0 0
    %3911 = vmatpush1.bf16.msra.mxu0 0
    %3912 = vmatprep.subr.bf16.mxu0 0
    %3913 = vmatpush1.bf16.msra.mxu0 0
    %3914 = vmatprep.subr.bf16.mxu0 0
    %3915 = vmatpush1.bf16.msra.mxu0 0
    %3916 = vmatprep.subr.bf16.mxu0 0
    %3917 = vmatpush1.bf16.msra.mxu0 0
    %3918 = vmatprep.subr.bf16.mxu0 0
    %3919 = vmatpush1.bf16.msra.mxu0 0
    %3920 = vmatprep.subr.bf16.mxu0 0
    %3921 = vmatpush1.bf16.msra.mxu0 0
    %3922 = vmatprep.mubr.bf16.mxu0 0
    %3923 = vmatmul.mubr.bf16.gmra.mrb[0].mxu0 %v3888
    %v3924 = vpop.f32.mrb[0].mxu0
    %v3925 = vadd.f32 %v140, %v3924
    %v3926 = vpop.f32.mrb[0].mxu0
    %v3927 = vpop.f32.mrb[0].mxu0
    %v3928 = vpop.f32.mrb[0].mxu0
    %3929 = vdwg.mxu0
    %v3930 = vxor.u32 %v3925, 2147483648
    %v3931 = vmul.f32 %v3930, 1.442695
    %v3932 = vpow.pop %v3931
    %v3933 = vadd.f32 %v3932, 1.0
    %v3934 = vrcp.pop %v3933
    %v3935 = vmul.f32 1.0, %v3934
    %3937 = vrot.lane.b32.xlu0 %v3925, 32
    %v3938 = vpop.permute.xlu0 %3937
    %v3940 = vmul.f32 %v3935, %v3938
    %3942 = vrot.lane.b32.xlu0 %v3940, 64
    %v3943 = vpop.permute.xlu0 %3942
    %v3945 = vadd.f32 %v3925, %v3943
    %v3946 = vtanh.pop %v3945
    %v3947 = vsub.f32 1.0, %v3935
    %3949 = vrot.lane.b32.xlu0 %v3946, 96
    %v3950 = vpop.permute.xlu0 %3949
    %v3952 = vmul.f32 %v3947, %v3950
    %v3953 = vmul.f32 %v3935, %v3563
    %v3954 = vadd.f32 %v3952, %v3953
    %3956 = vrot.lane.b32.xlu0 %v3954, 96
    %v3957 = vpop.permute.xlu0 %3956
    %v3959 = vsel %vm243, %v3957, %v3637
    %v3960 = vpack.c.bf16 %v3959, %v3959
    %v3962 = vsel %vm351, %v3960, 0
    %3964 = vmatprep.subr.bf16.mxu0 0
    %3965 = vmatpush1.bf16.msra.mxu0 %v3147
    %3966 = vmatprep.subr.bf16.mxu0 0
    %3967 = vmatpush1.bf16.msra.mxu0 %v3148
    %3968 = vmatprep.subr.bf16.mxu0 0
    %3969 = vmatpush1.bf16.msra.mxu0 %v3149
    %3970 = vmatprep.subr.bf16.mxu0 0
    %3971 = vmatpush1.bf16.msra.mxu0 %v3150
    %3972 = vmatprep.subr.bf16.mxu0 0
    %3973 = vmatpush1.bf16.msra.mxu0 0
    %3974 = vmatprep.subr.bf16.mxu0 0
    %3975 = vmatpush1.bf16.msra.mxu0 0
    %3976 = vmatprep.subr.bf16.mxu0 0
    %3977 = vmatpush1.bf16.msra.mxu0 0
    %3978 = vmatprep.subr.bf16.mxu0 0
    %3979 = vmatpush1.bf16.msra.mxu0 0
    %3980 = vmatprep.subr.bf16.mxu0 0
    %3981 = vmatpush1.bf16.msra.mxu0 0
    %3982 = vmatprep.subr.bf16.mxu0 0
    %3983 = vmatpush1.bf16.msra.mxu0 0
    %3984 = vmatprep.subr.bf16.mxu0 0
    %3985 = vmatpush1.bf16.msra.mxu0 0
    %3986 = vmatprep.subr.bf16.mxu0 0
    %3987 = vmatpush1.bf16.msra.mxu0 0
    %3988 = vmatprep.subr.bf16.mxu0 0
    %3989 = vmatpush1.bf16.msra.mxu0 0
    %3990 = vmatprep.subr.bf16.mxu0 0
    %3991 = vmatpush1.bf16.msra.mxu0 0
    %3992 = vmatprep.subr.bf16.mxu0 0
    %3993 = vmatpush1.bf16.msra.mxu0 0
    %3994 = vmatprep.subr.bf16.mxu0 0
    %3995 = vmatpush1.bf16.msra.mxu0 0
    %3996 = vmatprep.mubr.bf16.mxu0 0
    %3997 = vmatmul.mubr.bf16.gmra.mrb[0].mxu0 %v3962
    %v3998 = vpop.f32.mrb[0].mxu0
    %v3999 = vadd.f32 %v148, %v3998
    %v4000 = vpop.f32.mrb[0].mxu0
    %v4001 = vpop.f32.mrb[0].mxu0
    %v4002 = vpop.f32.mrb[0].mxu0
    %4003 = vdwg.mxu0
    %v4004 = vxor.u32 %v3999, 2147483648
    %v4005 = vmul.f32 %v4004, 1.442695
    %v4006 = vpow.pop %v4005
    %v4007 = vadd.f32 %v4006, 1.0
    %v4008 = vrcp.pop %v4007
    %v4009 = vmul.f32 1.0, %v4008
    %4011 = vrot.lane.b32.xlu0 %v3999, 32
    %v4012 = vpop.permute.xlu0 %4011
    %v4014 = vmul.f32 %v4009, %v4012
    %4016 = vrot.lane.b32.xlu0 %v4014, 64
    %v4017 = vpop.permute.xlu0 %4016
    %v4019 = vadd.f32 %v3999, %v4017
    %v4020 = vtanh.pop %v4019
    %v4021 = vsub.f32 1.0, %v4009
    %4023 = vrot.lane.b32.xlu0 %v4020, 96
    %v4024 = vpop.permute.xlu0 %4023
    %v4026 = vmul.f32 %v4021, %v4024
    %v4027 = vmul.f32 %v4009, %v3637
    %v4028 = vadd.f32 %v4026, %v4027
    %v4029 = vpack.c.bf16 %v4028, %v4028
    %4031 = vrot.lane.b32.xlu0 %v4029, 96
    %v4032 = vpop.permute.xlu0 %4031
    %v4034 = vsel %vm243, %v4032, 0
    %4036 = vmatprep.subr.bf16.mxu0 0
    %4037 = vmatpush1.bf16.msra.mxu0 %v3235
    %4038 = vmatprep.subr.bf16.mxu0 0
    %4039 = vmatpush1.bf16.msra.mxu0 %v3236
    %4040 = vmatprep.subr.bf16.mxu0 0
    %4041 = vmatpush1.bf16.msra.mxu0 0
    %4042 = vmatprep.subr.bf16.mxu0 0
    %4043 = vmatpush1.bf16.msra.mxu0 0
    %4044 = vmatprep.subr.bf16.mxu0 0
    %4045 = vmatpush1.bf16.msra.mxu0 0
    %4046 = vmatprep.subr.bf16.mxu0 0
    %4047 = vmatpush1.bf16.msra.mxu0 0
    %4048 = vmatprep.subr.bf16.mxu0 0
    %4049 = vmatpush1.bf16.msra.mxu0 0
    %4050 = vmatprep.subr.bf16.mxu0 0
    %4051 = vmatpush1.bf16.msra.mxu0 0
    %4052 = vmatprep.subr.bf16.mxu0 0
    %4053 = vmatpush1.bf16.msra.mxu0 0
    %4054 = vmatprep.subr.bf16.mxu0 0
    %4055 = vmatpush1.bf16.msra.mxu0 0
    %4056 = vmatprep.subr.bf16.mxu0 0
    %4057 = vmatpush1.bf16.msra.mxu0 0
    %4058 = vmatprep.subr.bf16.mxu0 0
    %4059 = vmatpush1.bf16.msra.mxu0 0
    %4060 = vmatprep.subr.bf16.mxu0 0
    %4061 = vmatpush1.bf16.msra.mxu0 0
    %4062 = vmatprep.subr.bf16.mxu0 0
    %4063 = vmatpush1.bf16.msra.mxu0 0
    %4064 = vmatprep.subr.bf16.mxu0 0
    %4065 = vmatpush1.bf16.msra.mxu0 0
    %4066 = vmatprep.subr.bf16.mxu0 0
    %4067 = vmatpush1.bf16.msra.mxu0 0
    %4068 = vmatprep.mubr.bf16.mxu0 0
    %4069 = vmatmul.mubr.bf16.gmra.mrb[0].mxu0 %v4034
    %v4070 = vpop.f32.mrb[0].mxu0
    %v4071 = vadd.f32 %v162, %v4070
    %v4072 = vpop.f32.mrb[0].mxu0
    %v4073 = vpop.f32.mrb[0].mxu0
    %v4074 = vpop.f32.mrb[0].mxu0
    %4075 = vdwg.mxu0
    %v4076 = vmax.f32 %v4071, 0.0
    %v4077 = vpack.c.bf16 %v4076, %v4076
    %v4079 = vsel %vm243, %v4077, 0
    %4081 = vmatprep.subr.bf16.mxu0 0
    %4082 = vmatpush1.bf16.msra.mxu0 %v3292
    %4083 = vmatprep.subr.bf16.mxu0 0
    %4084 = vmatpush1.bf16.msra.mxu0 %v3293
    %4085 = vmatprep.subr.bf16.mxu0 0
    %4086 = vmatpush1.bf16.msra.mxu0 0
    %4087 = vmatprep.subr.bf16.mxu0 0
    %4088 = vmatpush1.bf16.msra.mxu0 0
    %4089 = vmatprep.subr.bf16.mxu0 0
    %4090 = vmatpush1.bf16.msra.mxu0 0
    %4091 = vmatprep.subr.bf16.mxu0 0
    %4092 = vmatpush1.bf16.msra.mxu0 0
    %4093 = vmatprep.subr.bf16.mxu0 0
    %4094 = vmatpush1.bf16.msra.mxu0 0
    %4095 = vmatprep.subr.bf16.mxu0 0
    %4096 = vmatpush1.bf16.msra.mxu0 0
    %4097 = vmatprep.subr.bf16.mxu0 0
    %4098 = vmatpush1.bf16.msra.mxu0 0
    %4099 = vmatprep.subr.bf16.mxu0 0
    %4100 = vmatpush1.bf16.msra.mxu0 0
    %4101 = vmatprep.subr.bf16.mxu0 0
    %4102 = vmatpush1.bf16.msra.mxu0 0
    %4103 = vmatprep.subr.bf16.mxu0 0
    %4104 = vmatpush1.bf16.msra.mxu0 0
    %4105 = vmatprep.subr.bf16.mxu0 0
    %4106 = vmatpush1.bf16.msra.mxu0 0
    %4107 = vmatprep.subr.bf16.mxu0 0
    %4108 = vmatpush1.bf16.msra.mxu0 0
    %4109 = vmatprep.subr.bf16.mxu0 0
    %4110 = vmatpush1.bf16.msra.mxu0 0
    %4111 = vmatprep.subr.bf16.mxu0 0
    %4112 = vmatpush1.bf16.msra.mxu0 0
    %4113 = vmatprep.mubr.bf16.mxu0 0
    %4114 = vmatmul.mubr.bf16.gmra.mrb[0].mxu0 %v4079
    %v4115 = vpop.f32.mrb[0].mxu0
    %v4116 = vadd.f32 %v169, %v4115
    %v4117 = vpop.f32.mrb[0].mxu0
    %v4118 = vpop.f32.mrb[0].mxu0
    %v4119 = vpop.f32.mrb[0].mxu0
    %4120 = vdwg.mxu0
    %v4121 = vld [vmem:[%s1 + $0x6] sm:$0x3]
    %v4122 = vsub.f32 %v4116, %v4121
    %v4123 = vmul.f32 %v4122, %v4122
    %v4124 = vadd.f32 %v3733, %v4123
    %4125 = vrot.lane.b32.xlu0 %v3806, 100
    %v4126 = vpop.permute.xlu0 %4125
    %v4128 = vsel %vm182, %v4116, %v4126
    %v4129 = vpack.c.bf16 %v4128, %v4128
    %v4131 = vsel %vm2831, %v4129, 0
    %4133 = vmatprep.subr.bf16.mxu0 0
    %4134 = vmatpush1.bf16.msra.mxu0 %v2826
    %4135 = vmatprep.subr.bf16.mxu0 0
    %4136 = vmatpush1.bf16.msra.mxu0 %v2827
    %4137 = vmatprep.subr.bf16.mxu0 0
    %4138 = vmatpush1.bf16.msra.mxu0 %v2836
    %4139 = vmatprep.subr.bf16.mxu0 0
    %4140 = vmatpush1.bf16.msra.mxu0 0
    %4141 = vmatprep.subr.bf16.mxu0 0
    %4142 = vmatpush1.bf16.msra.mxu0 0
    %4143 = vmatprep.subr.bf16.mxu0 0
    %4144 = vmatpush1.bf16.msra.mxu0 0
    %4145 = vmatprep.subr.bf16.mxu0 0
    %4146 = vmatpush1.bf16.msra.mxu0 0
    %4147 = vmatprep.subr.bf16.mxu0 0
    %4148 = vmatpush1.bf16.msra.mxu0 0
    %4149 = vmatprep.subr.bf16.mxu0 0
    %4150 = vmatpush1.bf16.msra.mxu0 0
    %4151 = vmatprep.subr.bf16.mxu0 0
    %4152 = vmatpush1.bf16.msra.mxu0 0
    %4153 = vmatprep.subr.bf16.mxu0 0
    %4154 = vmatpush1.bf16.msra.mxu0 0
    %4155 = vmatprep.subr.bf16.mxu0 0
    %4156 = vmatpush1.bf16.msra.mxu0 0
    %4157 = vmatprep.subr.bf16.mxu0 0
    %4158 = vmatpush1.bf16.msra.mxu0 0
    %4159 = vmatprep.subr.bf16.mxu0 0
    %4160 = vmatpush1.bf16.msra.mxu0 0
    %4161 = vmatprep.subr.bf16.mxu0 0
    %4162 = vmatpush1.bf16.msra.mxu0 0
    %4163 = vmatprep.subr.bf16.mxu0 0
    %4164 = vmatpush1.bf16.msra.mxu0 0
    %4165 = vmatprep.mubr.bf16.mxu0 0
    %4166 = vmatmul.mubr.bf16.gmra.mrb[0].mxu0 %v4131
    %v4167 = vpop.f32.mrb[0].mxu0
    %v4168 = vadd.f32 %v155, %v4167
    %v4169 = vpop.f32.mrb[0].mxu0
    %v4170 = vpop.f32.mrb[0].mxu0
    %v4171 = vpop.f32.mrb[0].mxu0
    %4172 = vdwg.mxu0
    %v4173 = vxor.u32 %v4168, 2147483648
    %v4174 = vmul.f32 %v4173, 1.442695
    %v4175 = vpow.pop %v4174
    %v4176 = vadd.f32 %v4175, 1.0
    %v4177 = vrcp.pop %v4176
    %v4178 = vmul.f32 1.0, %v4177
    %4180 = vrot.lane.b32.xlu0 %v4168, 32
    %v4181 = vpop.permute.xlu0 %4180
    %v4183 = vmul.f32 %v4178, %v4181
    %4185 = vrot.lane.b32.xlu0 %v4183, 64
    %v4186 = vpop.permute.xlu0 %4185
    %v4188 = vadd.f32 %v4168, %v4186
    %v4189 = vtanh.pop %v4188
    %v4190 = vsub.f32 1.0, %v4178
    %4192 = vrot.lane.b32.xlu0 %v4189, 96
    %v4193 = vpop.permute.xlu0 %4192
    %v4195 = vmul.f32 %v4190, %v4193
    %v4196 = vmul.f32 %v4178, %v3806
    %v4197 = vadd.f32 %v4195, %v4196
    %4199 = vrot.lane.b32.xlu0 %v4197, 96
    %v4200 = vpop.permute.xlu0 %4199
    %v4202 = vsel %vm243, %v4200, %v3880
    %v4203 = vpack.c.bf16 %v4202, %v4202
    %v4205 = vsel %vm351, %v4203, 0
    %4207 = vmatprep.subr.bf16.mxu0 0
    %4208 = vmatpush1.bf16.msra.mxu0 %v2933
    %4209 = vmatprep.subr.bf16.mxu0 0
    %4210 = vmatpush1.bf16.msra.mxu0 %v2934
    %4211 = vmatprep.subr.bf16.mxu0 0
    %4212 = vmatpush1.bf16.msra.mxu0 %v2935
    %4213 = vmatprep.subr.bf16.mxu0 0
    %4214 = vmatpush1.bf16.msra.mxu0 %v2936
    %4215 = vmatprep.subr.bf16.mxu0 0
    %4216 = vmatpush1.bf16.msra.mxu0 0
    %4217 = vmatprep.subr.bf16.mxu0 0
    %4218 = vmatpush1.bf16.msra.mxu0 0
    %4219 = vmatprep.subr.bf16.mxu0 0
    %4220 = vmatpush1.bf16.msra.mxu0 0
    %4221 = vmatprep.subr.bf16.mxu0 0
    %4222 = vmatpush1.bf16.msra.mxu0 0
    %4223 = vmatprep.subr.bf16.mxu0 0
    %4224 = vmatpush1.bf16.msra.mxu0 0
    %4225 = vmatprep.subr.bf16.mxu0 0
    %4226 = vmatpush1.bf16.msra.mxu0 0
    %4227 = vmatprep.subr.bf16.mxu0 0
    %4228 = vmatpush1.bf16.msra.mxu0 0
    %4229 = vmatprep.subr.bf16.mxu0 0
    %4230 = vmatpush1.bf16.msra.mxu0 0
    %4231 = vmatprep.subr.bf16.mxu0 0
    %4232 = vmatpush1.bf16.msra.mxu0 0
    %4233 = vmatprep.subr.bf16.mxu0 0
    %4234 = vmatpush1.bf16.msra.mxu0 0
    %4235 = vmatprep.subr.bf16.mxu0 0
    %4236 = vmatpush1.bf16.msra.mxu0 0
    %4237 = vmatprep.subr.bf16.mxu0 0
    %4238 = vmatpush1.bf16.msra.mxu0 0
    %4239 = vmatprep.mubr.bf16.mxu0 0
    %4240 = vmatmul.mubr.bf16.gmra.mrb[0].mxu0 %v4205
    %v4241 = vpop.f32.mrb[0].mxu0
    %v4242 = vadd.f32 %v132, %v4241
    %v4243 = vpop.f32.mrb[0].mxu0
    %v4244 = vpop.f32.mrb[0].mxu0
    %v4245 = vpop.f32.mrb[0].mxu0
    %4246 = vdwg.mxu0
    %v4247 = vxor.u32 %v4242, 2147483648
    %v4248 = vmul.f32 %v4247, 1.442695
    %v4249 = vpow.pop %v4248
    %v4250 = vadd.f32 %v4249, 1.0
    %v4251 = vrcp.pop %v4250
    %v4252 = vmul.f32 1.0, %v4251
    %4254 = vrot.lane.b32.xlu0 %v4242, 32
    %v4255 = vpop.permute.xlu0 %4254
    %v4257 = vmul.f32 %v4252, %v4255
    %4259 = vrot.lane.b32.xlu0 %v4257, 64
    %v4260 = vpop.permute.xlu0 %4259
    %v4262 = vadd.f32 %v4242, %v4260
    %v4263 = vtanh.pop %v4262
    %v4264 = vsub.f32 1.0, %v4252
    %4266 = vrot.lane.b32.xlu0 %v4263, 96
    %v4267 = vpop.permute.xlu0 %4266
    %v4269 = vmul.f32 %v4264, %v4267
    %v4270 = vmul.f32 %v4252, %v3880
    %v4271 = vadd.f32 %v4269, %v4270
    %4273 = vrot.lane.b32.xlu0 %v4271, 96
    %v4274 = vpop.permute.xlu0 %4273
    %v4276 = vsel %vm243, %v4274, %v3954
    %v4277 = vpack.c.bf16 %v4276, %v4276
    %v4279 = vsel %vm351, %v4277, 0
    %4281 = vmatprep.subr.bf16.mxu0 0
    %4282 = vmatpush1.bf16.msra.mxu0 %v3040
    %4283 = vmatprep.subr.bf16.mxu0 0
    %4284 = vmatpush1.bf16.msra.mxu0 %v3041
    %4285 = vmatprep.subr.bf16.mxu0 0
    %4286 = vmatpush1.bf16.msra.mxu0 %v3042
    %4287 = vmatprep.subr.bf16.mxu0 0
    %4288 = vmatpush1.bf16.msra.mxu0 %v3043
    %4289 = vmatprep.subr.bf16.mxu0 0
    %4290 = vmatpush1.bf16.msra.mxu0 0
    %4291 = vmatprep.subr.bf16.mxu0 0
    %4292 = vmatpush1.bf16.msra.mxu0 0
    %4293 = vmatprep.subr.bf16.mxu0 0
    %4294 = vmatpush1.bf16.msra.mxu0 0
    %4295 = vmatprep.subr.bf16.mxu0 0
    %4296 = vmatpush1.bf16.msra.mxu0 0
    %4297 = vmatprep.subr.bf16.mxu0 0
    %4298 = vmatpush1.bf16.msra.mxu0 0
    %4299 = vmatprep.subr.bf16.mxu0 0
    %4300 = vmatpush1.bf16.msra.mxu0 0
    %4301 = vmatprep.subr.bf16.mxu0 0
    %4302 = vmatpush1.bf16.msra.mxu0 0
    %4303 = vmatprep.subr.bf16.mxu0 0
    %4304 = vmatpush1.bf16.msra.mxu0 0
    %4305 = vmatprep.subr.bf16.mxu0 0
    %4306 = vmatpush1.bf16.msra.mxu0 0
    %4307 = vmatprep.subr.bf16.mxu0 0
    %4308 = vmatpush1.bf16.msra.mxu0 0
    %4309 = vmatprep.subr.bf16.mxu0 0
    %4310 = vmatpush1.bf16.msra.mxu0 0
    %4311 = vmatprep.subr.bf16.mxu0 0
    %4312 = vmatpush1.bf16.msra.mxu0 0
    %4313 = vmatprep.mubr.bf16.mxu0 0
    %4314 = vmatmul.mubr.bf16.gmra.mrb[0].mxu0 %v4279
    %v4315 = vpop.f32.mrb[0].mxu0
    %v4316 = vadd.f32 %v140, %v4315
    %v4317 = vpop.f32.mrb[0].mxu0
    %v4318 = vpop.f32.mrb[0].mxu0
    %v4319 = vpop.f32.mrb[0].mxu0
    %4320 = vdwg.mxu0
    %v4321 = vxor.u32 %v4316, 2147483648
    %v4322 = vmul.f32 %v4321, 1.442695
    %v4323 = vpow.pop %v4322
    %v4324 = vadd.f32 %v4323, 1.0
    %v4325 = vrcp.pop %v4324
    %v4326 = vmul.f32 1.0, %v4325
    %4328 = vrot.lane.b32.xlu0 %v4316, 32
    %v4329 = vpop.permute.xlu0 %4328
    %v4331 = vmul.f32 %v4326, %v4329
    %4333 = vrot.lane.b32.xlu0 %v4331, 64
    %v4334 = vpop.permute.xlu0 %4333
    %v4336 = vadd.f32 %v4316, %v4334
    %v4337 = vtanh.pop %v4336
    %v4338 = vsub.f32 1.0, %v4326
    %4340 = vrot.lane.b32.xlu0 %v4337, 96
    %v4341 = vpop.permute.xlu0 %4340
    %v4343 = vmul.f32 %v4338, %v4341
    %v4344 = vmul.f32 %v4326, %v3954
    %v4345 = vadd.f32 %v4343, %v4344
    %4347 = vrot.lane.b32.xlu0 %v4345, 96
    %v4348 = vpop.permute.xlu0 %4347
    %v4350 = vsel %vm243, %v4348, %v4028
    %v4351 = vpack.c.bf16 %v4350, %v4350
    %v4353 = vsel %vm351, %v4351, 0
    %4355 = vmatprep.subr.bf16.mxu0 0
    %4356 = vmatpush1.bf16.msra.mxu0 %v3147
    %4357 = vmatprep.subr.bf16.mxu0 0
    %4358 = vmatpush1.bf16.msra.mxu0 %v3148
    %4359 = vmatprep.subr.bf16.mxu0 0
    %4360 = vmatpush1.bf16.msra.mxu0 %v3149
    %4361 = vmatprep.subr.bf16.mxu0 0
    %4362 = vmatpush1.bf16.msra.mxu0 %v3150
    %4363 = vmatprep.subr.bf16.mxu0 0
    %4364 = vmatpush1.bf16.msra.mxu0 0
    %4365 = vmatprep.subr.bf16.mxu0 0
    %4366 = vmatpush1.bf16.msra.mxu0 0
    %4367 = vmatprep.subr.bf16.mxu0 0
    %4368 = vmatpush1.bf16.msra.mxu0 0
    %4369 = vmatprep.subr.bf16.mxu0 0
    %4370 = vmatpush1.bf16.msra.mxu0 0
    %4371 = vmatprep.subr.bf16.mxu0 0
    %4372 = vmatpush1.bf16.msra.mxu0 0
    %4373 = vmatprep.subr.bf16.mxu0 0
    %4374 = vmatpush1.bf16.msra.mxu0 0
    %4375 = vmatprep.subr.bf16.mxu0 0
    %4376 = vmatpush1.bf16.msra.mxu0 0
    %4377 = vmatprep.subr.bf16.mxu0 0
    %4378 = vmatpush1.bf16.msra.mxu0 0
    %4379 = vmatprep.subr.bf16.mxu0 0
    %4380 = vmatpush1.bf16.msra.mxu0 0
    %4381 = vmatprep.subr.bf16.mxu0 0
    %4382 = vmatpush1.bf16.msra.mxu0 0
    %4383 = vmatprep.subr.bf16.mxu0 0
    %4384 = vmatpush1.bf16.msra.mxu0 0
    %4385 = vmatprep.subr.bf16.mxu0 0
    %4386 = vmatpush1.bf16.msra.mxu0 0
    %4387 = vmatprep.mubr.bf16.mxu0 0
    %4388 = vmatmul.mubr.bf16.gmra.mrb[0].mxu0 %v4353
    %v4389 = vpop.f32.mrb[0].mxu0
    %v4390 = vadd.f32 %v148, %v4389
    %v4391 = vpop.f32.mrb[0].mxu0
    %v4392 = vpop.f32.mrb[0].mxu0
    %v4393 = vpop.f32.mrb[0].mxu0
    %4394 = vdwg.mxu0
    %v4395 = vxor.u32 %v4390, 2147483648
    %v4396 = vmul.f32 %v4395, 1.442695
    %v4397 = vpow.pop %v4396
    %v4398 = vadd.f32 %v4397, 1.0
    %v4399 = vrcp.pop %v4398
    %v4400 = vmul.f32 1.0, %v4399
    %4402 = vrot.lane.b32.xlu0 %v4390, 32
    %v4403 = vpop.permute.xlu0 %4402
    %v4405 = vmul.f32 %v4400, %v4403
    %4407 = vrot.lane.b32.xlu0 %v4405, 64
    %v4408 = vpop.permute.xlu0 %4407
    %v4410 = vadd.f32 %v4390, %v4408
    %v4411 = vtanh.pop %v4410
    %v4412 = vsub.f32 1.0, %v4400
    %4414 = vrot.lane.b32.xlu0 %v4411, 96
    %v4415 = vpop.permute.xlu0 %4414
    %v4417 = vmul.f32 %v4412, %v4415
    %v4418 = vmul.f32 %v4400, %v4028
    %v4419 = vadd.f32 %v4417, %v4418
    %v4420 = vpack.c.bf16 %v4419, %v4419
    %4422 = vrot.lane.b32.xlu0 %v4420, 96
    %v4423 = vpop.permute.xlu0 %4422
    %v4425 = vsel %vm243, %v4423, 0
    %4427 = vmatprep.subr.bf16.mxu0 0
    %4428 = vmatpush1.bf16.msra.mxu0 %v3235
    %4429 = vmatprep.subr.bf16.mxu0 0
    %4430 = vmatpush1.bf16.msra.mxu0 %v3236
    %4431 = vmatprep.subr.bf16.mxu0 0
    %4432 = vmatpush1.bf16.msra.mxu0 0
    %4433 = vmatprep.subr.bf16.mxu0 0
    %4434 = vmatpush1.bf16.msra.mxu0 0
    %4435 = vmatprep.subr.bf16.mxu0 0
    %4436 = vmatpush1.bf16.msra.mxu0 0
    %4437 = vmatprep.subr.bf16.mxu0 0
    %4438 = vmatpush1.bf16.msra.mxu0 0
    %4439 = vmatprep.subr.bf16.mxu0 0
    %4440 = vmatpush1.bf16.msra.mxu0 0
    %4441 = vmatprep.subr.bf16.mxu0 0
    %4442 = vmatpush1.bf16.msra.mxu0 0
    %4443 = vmatprep.subr.bf16.mxu0 0
    %4444 = vmatpush1.bf16.msra.mxu0 0
    %4445 = vmatprep.subr.bf16.mxu0 0
    %4446 = vmatpush1.bf16.msra.mxu0 0
    %4447 = vmatprep.subr.bf16.mxu0 0
    %4448 = vmatpush1.bf16.msra.mxu0 0
    %4449 = vmatprep.subr.bf16.mxu0 0
    %4450 = vmatpush1.bf16.msra.mxu0 0
    %4451 = vmatprep.subr.bf16.mxu0 0
    %4452 = vmatpush1.bf16.msra.mxu0 0
    %4453 = vmatprep.subr.bf16.mxu0 0
    %4454 = vmatpush1.bf16.msra.mxu0 0
    %4455 = vmatprep.subr.bf16.mxu0 0
    %4456 = vmatpush1.bf16.msra.mxu0 0
    %4457 = vmatprep.subr.bf16.mxu0 0
    %4458 = vmatpush1.bf16.msra.mxu0 0
    %4459 = vmatprep.mubr.bf16.mxu0 0
    %4460 = vmatmul.mubr.bf16.gmra.mrb[0].mxu0 %v4425
    %v4461 = vpop.f32.mrb[0].mxu0
    %v4462 = vadd.f32 %v162, %v4461
    %v4463 = vpop.f32.mrb[0].mxu0
    %v4464 = vpop.f32.mrb[0].mxu0
    %v4465 = vpop.f32.mrb[0].mxu0
    %4466 = vdwg.mxu0
    %v4467 = vmax.f32 %v4462, 0.0
    %v4468 = vpack.c.bf16 %v4467, %v4467
    %v4470 = vsel %vm243, %v4468, 0
    %4472 = vmatprep.subr.bf16.mxu0 0
    %4473 = vmatpush1.bf16.msra.mxu0 %v3292
    %4474 = vmatprep.subr.bf16.mxu0 0
    %4475 = vmatpush1.bf16.msra.mxu0 %v3293
    %4476 = vmatprep.subr.bf16.mxu0 0
    %4477 = vmatpush1.bf16.msra.mxu0 0
    %4478 = vmatprep.subr.bf16.mxu0 0
    %4479 = vmatpush1.bf16.msra.mxu0 0
    %4480 = vmatprep.subr.bf16.mxu0 0
    %4481 = vmatpush1.bf16.msra.mxu0 0
    %4482 = vmatprep.subr.bf16.mxu0 0
    %4483 = vmatpush1.bf16.msra.mxu0 0
    %4484 = vmatprep.subr.bf16.mxu0 0
    %4485 = vmatpush1.bf16.msra.mxu0 0
    %4486 = vmatprep.subr.bf16.mxu0 0
    %4487 = vmatpush1.bf16.msra.mxu0 0
    %4488 = vmatprep.subr.bf16.mxu0 0
    %4489 = vmatpush1.bf16.msra.mxu0 0
    %4490 = vmatprep.subr.bf16.mxu0 0
    %4491 = vmatpush1.bf16.msra.mxu0 0
    %4492 = vmatprep.subr.bf16.mxu0 0
    %4493 = vmatpush1.bf16.msra.mxu0 0
    %4494 = vmatprep.subr.bf16.mxu0 0
    %4495 = vmatpush1.bf16.msra.mxu0 0
    %4496 = vmatprep.subr.bf16.mxu0 0
    %4497 = vmatpush1.bf16.msra.mxu0 0
    %4498 = vmatprep.subr.bf16.mxu0 0
    %4499 = vmatpush1.bf16.msra.mxu0 0
    %4500 = vmatprep.subr.bf16.mxu0 0
    %4501 = vmatpush1.bf16.msra.mxu0 0
    %4502 = vmatprep.subr.bf16.mxu0 0
    %4503 = vmatpush1.bf16.msra.mxu0 0
    %4504 = vmatprep.mubr.bf16.mxu0 0
    %4505 = vmatmul.mubr.bf16.gmra.mrb[0].mxu0 %v4470
    %v4506 = vpop.f32.mrb[0].mxu0
    %v4507 = vadd.f32 %v169, %v4506
    %v4508 = vpop.f32.mrb[0].mxu0
    %v4509 = vpop.f32.mrb[0].mxu0
    %v4510 = vpop.f32.mrb[0].mxu0
    %4511 = vdwg.mxu0
    %v4512 = vld [vmem:[%s1 + $0x8] sm:$0x3]
    %v4513 = vsub.f32 %v4507, %v4512
    %v4514 = vmul.f32 %v4513, %v4513
    %v4515 = vadd.f32 %v4124, %v4514
    %4516 = vrot.lane.b32.xlu0 %v4197, 100
    %v4517 = vpop.permute.xlu0 %4516
    %v4519 = vsel %vm182, %v4507, %v4517
    %v4520 = vpack.c.bf16 %v4519, %v4519
    %v4522 = vsel %vm2831, %v4520, 0
    %4524 = vmatprep.subr.bf16.mxu0 0
    %4525 = vmatpush1.bf16.msra.mxu0 %v2826
    %4526 = vmatprep.subr.bf16.mxu0 0
    %4527 = vmatpush1.bf16.msra.mxu0 %v2827
    %4528 = vmatprep.subr.bf16.mxu0 0
    %4529 = vmatpush1.bf16.msra.mxu0 %v2836
    %4530 = vmatprep.subr.bf16.mxu0 0
    %4531 = vmatpush1.bf16.msra.mxu0 0
    %4532 = vmatprep.subr.bf16.mxu0 0
    %4533 = vmatpush1.bf16.msra.mxu0 0
    %4534 = vmatprep.subr.bf16.mxu0 0
    %4535 = vmatpush1.bf16.msra.mxu0 0
    %4536 = vmatprep.subr.bf16.mxu0 0
    %4537 = vmatpush1.bf16.msra.mxu0 0
    %4538 = vmatprep.subr.bf16.mxu0 0
    %4539 = vmatpush1.bf16.msra.mxu0 0
    %4540 = vmatprep.subr.bf16.mxu0 0
    %4541 = vmatpush1.bf16.msra.mxu0 0
    %4542 = vmatprep.subr.bf16.mxu0 0
    %4543 = vmatpush1.bf16.msra.mxu0 0
    %4544 = vmatprep.subr.bf16.mxu0 0
    %4545 = vmatpush1.bf16.msra.mxu0 0
    %4546 = vmatprep.subr.bf16.mxu0 0
    %4547 = vmatpush1.bf16.msra.mxu0 0
    %4548 = vmatprep.subr.bf16.mxu0 0
    %4549 = vmatpush1.bf16.msra.mxu0 0
    %4550 = vmatprep.subr.bf16.mxu0 0
    %4551 = vmatpush1.bf16.msra.mxu0 0
    %4552 = vmatprep.subr.bf16.mxu0 0
    %4553 = vmatpush1.bf16.msra.mxu0 0
    %4554 = vmatprep.subr.bf16.mxu0 0
    %4555 = vmatpush1.bf16.msra.mxu0 0
    %4556 = vmatprep.mubr.bf16.mxu0 0
    %4557 = vmatmul.mubr.bf16.gmra.mrb[0].mxu0 %v4522
    %v4558 = vpop.f32.mrb[0].mxu0
    %v4559 = vadd.f32 %v155, %v4558
    %v4560 = vpop.f32.mrb[0].mxu0
    %v4561 = vpop.f32.mrb[0].mxu0
    %v4562 = vpop.f32.mrb[0].mxu0
    %4563 = vdwg.mxu0
    %v4564 = vxor.u32 %v4559, 2147483648
    %v4565 = vmul.f32 %v4564, 1.442695
    %v4566 = vpow.pop %v4565
    %v4567 = vadd.f32 %v4566, 1.0
    %v4568 = vrcp.pop %v4567
    %v4569 = vmul.f32 1.0, %v4568
    %4571 = vrot.lane.b32.xlu0 %v4559, 32
    %v4572 = vpop.permute.xlu0 %4571
    %v4574 = vmul.f32 %v4569, %v4572
    %4576 = vrot.lane.b32.xlu0 %v4574, 64
    %v4577 = vpop.permute.xlu0 %4576
    %v4579 = vadd.f32 %v4559, %v4577
    %v4580 = vtanh.pop %v4579
    %v4581 = vsub.f32 1.0, %v4569
    %4583 = vrot.lane.b32.xlu0 %v4580, 96
    %v4584 = vpop.permute.xlu0 %4583
    %v4586 = vmul.f32 %v4581, %v4584
    %v4587 = vmul.f32 %v4569, %v4197
    %v4588 = vadd.f32 %v4586, %v4587
    %4590 = vrot.lane.b32.xlu0 %v4588, 96
    %v4591 = vpop.permute.xlu0 %4590
    %v4593 = vsel %vm243, %v4591, %v4271
    %v4594 = vpack.c.bf16 %v4593, %v4593
    %v4596 = vsel %vm351, %v4594, 0
    %4598 = vmatprep.subr.bf16.mxu0 0
    %4599 = vmatpush1.bf16.msra.mxu0 %v2933
    %4600 = vmatprep.subr.bf16.mxu0 0
    %4601 = vmatpush1.bf16.msra.mxu0 %v2934
    %4602 = vmatprep.subr.bf16.mxu0 0
    %4603 = vmatpush1.bf16.msra.mxu0 %v2935
    %4604 = vmatprep.subr.bf16.mxu0 0
    %4605 = vmatpush1.bf16.msra.mxu0 %v2936
    %4606 = vmatprep.subr.bf16.mxu0 0
    %4607 = vmatpush1.bf16.msra.mxu0 0
    %4608 = vmatprep.subr.bf16.mxu0 0
    %4609 = vmatpush1.bf16.msra.mxu0 0
    %4610 = vmatprep.subr.bf16.mxu0 0
    %4611 = vmatpush1.bf16.msra.mxu0 0
    %4612 = vmatprep.subr.bf16.mxu0 0
    %4613 = vmatpush1.bf16.msra.mxu0 0
    %4614 = vmatprep.subr.bf16.mxu0 0
    %4615 = vmatpush1.bf16.msra.mxu0 0
    %4616 = vmatprep.subr.bf16.mxu0 0
    %4617 = vmatpush1.bf16.msra.mxu0 0
    %4618 = vmatprep.subr.bf16.mxu0 0
    %4619 = vmatpush1.bf16.msra.mxu0 0
    %4620 = vmatprep.subr.bf16.mxu0 0
    %4621 = vmatpush1.bf16.msra.mxu0 0
    %4622 = vmatprep.subr.bf16.mxu0 0
    %4623 = vmatpush1.bf16.msra.mxu0 0
    %4624 = vmatprep.subr.bf16.mxu0 0
    %4625 = vmatpush1.bf16.msra.mxu0 0
    %4626 = vmatprep.subr.bf16.mxu0 0
    %4627 = vmatpush1.bf16.msra.mxu0 0
    %4628 = vmatprep.subr.bf16.mxu0 0
    %4629 = vmatpush1.bf16.msra.mxu0 0
    %4630 = vmatprep.mubr.bf16.mxu0 0
    %4631 = vmatmul.mubr.bf16.gmra.mrb[0].mxu0 %v4596
    %v4632 = vpop.f32.mrb[0].mxu0
    %v4633 = vadd.f32 %v132, %v4632
    %v4634 = vpop.f32.mrb[0].mxu0
    %v4635 = vpop.f32.mrb[0].mxu0
    %v4636 = vpop.f32.mrb[0].mxu0
    %4637 = vdwg.mxu0
    %v4638 = vxor.u32 %v4633, 2147483648
    %v4639 = vmul.f32 %v4638, 1.442695
    %v4640 = vpow.pop %v4639
    %v4641 = vadd.f32 %v4640, 1.0
    %v4642 = vrcp.pop %v4641
    %v4643 = vmul.f32 1.0, %v4642
    %4645 = vrot.lane.b32.xlu0 %v4633, 32
    %v4646 = vpop.permute.xlu0 %4645
    %v4648 = vmul.f32 %v4643, %v4646
    %4650 = vrot.lane.b32.xlu0 %v4648, 64
    %v4651 = vpop.permute.xlu0 %4650
    %v4653 = vadd.f32 %v4633, %v4651
    %v4654 = vtanh.pop %v4653
    %v4655 = vsub.f32 1.0, %v4643
    %4657 = vrot.lane.b32.xlu0 %v4654, 96
    %v4658 = vpop.permute.xlu0 %4657
    %v4660 = vmul.f32 %v4655, %v4658
    %v4661 = vmul.f32 %v4643, %v4271
    %v4662 = vadd.f32 %v4660, %v4661
    %4664 = vrot.lane.b32.xlu0 %v4662, 96
    %v4665 = vpop.permute.xlu0 %4664
    %v4667 = vsel %vm243, %v4665, %v4345
    %v4668 = vpack.c.bf16 %v4667, %v4667
    %v4670 = vsel %vm351, %v4668, 0
    %4672 = vmatprep.subr.bf16.mxu0 0
    %4673 = vmatpush1.bf16.msra.mxu0 %v3040
    %4674 = vmatprep.subr.bf16.mxu0 0
    %4675 = vmatpush1.bf16.msra.mxu0 %v3041
    %4676 = vmatprep.subr.bf16.mxu0 0
    %4677 = vmatpush1.bf16.msra.mxu0 %v3042
    %4678 = vmatprep.subr.bf16.mxu0 0
    %4679 = vmatpush1.bf16.msra.mxu0 %v3043
    %4680 = vmatprep.subr.bf16.mxu0 0
    %4681 = vmatpush1.bf16.msra.mxu0 0
    %4682 = vmatprep.subr.bf16.mxu0 0
    %4683 = vmatpush1.bf16.msra.mxu0 0
    %4684 = vmatprep.subr.bf16.mxu0 0
    %4685 = vmatpush1.bf16.msra.mxu0 0
    %4686 = vmatprep.subr.bf16.mxu0 0
    %4687 = vmatpush1.bf16.msra.mxu0 0
    %4688 = vmatprep.subr.bf16.mxu0 0
    %4689 = vmatpush1.bf16.msra.mxu0 0
    %4690 = vmatprep.subr.bf16.mxu0 0
    %4691 = vmatpush1.bf16.msra.mxu0 0
    %4692 = vmatprep.subr.bf16.mxu0 0
    %4693 = vmatpush1.bf16.msra.mxu0 0
    %4694 = vmatprep.subr.bf16.mxu0 0
    %4695 = vmatpush1.bf16.msra.mxu0 0
    %4696 = vmatprep.subr.bf16.mxu0 0
    %4697 = vmatpush1.bf16.msra.mxu0 0
    %4698 = vmatprep.subr.bf16.mxu0 0
    %4699 = vmatpush1.bf16.msra.mxu0 0
    %4700 = vmatprep.subr.bf16.mxu0 0
    %4701 = vmatpush1.bf16.msra.mxu0 0
    %4702 = vmatprep.subr.bf16.mxu0 0
    %4703 = vmatpush1.bf16.msra.mxu0 0
    %4704 = vmatprep.mubr.bf16.mxu0 0
    %4705 = vmatmul.mubr.bf16.gmra.mrb[0].mxu0 %v4670
    %v4706 = vpop.f32.mrb[0].mxu0
    %v4707 = vadd.f32 %v140, %v4706
    %v4708 = vpop.f32.mrb[0].mxu0
    %v4709 = vpop.f32.mrb[0].mxu0
    %v4710 = vpop.f32.mrb[0].mxu0
    %4711 = vdwg.mxu0
    %v4712 = vxor.u32 %v4707, 2147483648
    %v4713 = vmul.f32 %v4712, 1.442695
    %v4714 = vpow.pop %v4713
    %v4715 = vadd.f32 %v4714, 1.0
    %v4716 = vrcp.pop %v4715
    %v4717 = vmul.f32 1.0, %v4716
    %4719 = vrot.lane.b32.xlu0 %v4707, 32
    %v4720 = vpop.permute.xlu0 %4719
    %v4722 = vmul.f32 %v4717, %v4720
    %4724 = vrot.lane.b32.xlu0 %v4722, 64
    %v4725 = vpop.permute.xlu0 %4724
    %v4727 = vadd.f32 %v4707, %v4725
    %v4728 = vtanh.pop %v4727
    %v4729 = vsub.f32 1.0, %v4717
    %4731 = vrot.lane.b32.xlu0 %v4728, 96
    %v4732 = vpop.permute.xlu0 %4731
    %v4734 = vmul.f32 %v4729, %v4732
    %v4735 = vmul.f32 %v4717, %v4345
    %v4736 = vadd.f32 %v4734, %v4735
    %4738 = vrot.lane.b32.xlu0 %v4736, 96
    %v4739 = vpop.permute.xlu0 %4738
    %v4741 = vsel %vm243, %v4739, %v4419
    %v4742 = vpack.c.bf16 %v4741, %v4741
    %v4744 = vsel %vm351, %v4742, 0
    %4746 = vmatprep.subr.bf16.mxu0 0
    %4747 = vmatpush1.bf16.msra.mxu0 %v3147
    %4748 = vmatprep.subr.bf16.mxu0 0
    %4749 = vmatpush1.bf16.msra.mxu0 %v3148
    %4750 = vmatprep.subr.bf16.mxu0 0
    %4751 = vmatpush1.bf16.msra.mxu0 %v3149
    %4752 = vmatprep.subr.bf16.mxu0 0
    %4753 = vmatpush1.bf16.msra.mxu0 %v3150
    %4754 = vmatprep.subr.bf16.mxu0 0
    %4755 = vmatpush1.bf16.msra.mxu0 0
    %4756 = vmatprep.subr.bf16.mxu0 0
    %4757 = vmatpush1.bf16.msra.mxu0 0
    %4758 = vmatprep.subr.bf16.mxu0 0
    %4759 = vmatpush1.bf16.msra.mxu0 0
    %4760 = vmatprep.subr.bf16.mxu0 0
    %4761 = vmatpush1.bf16.msra.mxu0 0
    %4762 = vmatprep.subr.bf16.mxu0 0
    %4763 = vmatpush1.bf16.msra.mxu0 0
    %4764 = vmatprep.subr.bf16.mxu0 0
    %4765 = vmatpush1.bf16.msra.mxu0 0
    %4766 = vmatprep.subr.bf16.mxu0 0
    %4767 = vmatpush1.bf16.msra.mxu0 0
    %4768 = vmatprep.subr.bf16.mxu0 0
    %4769 = vmatpush1.bf16.msra.mxu0 0
    %4770 = vmatprep.subr.bf16.mxu0 0
    %4771 = vmatpush1.bf16.msra.mxu0 0
    %4772 = vmatprep.subr.bf16.mxu0 0
    %4773 = vmatpush1.bf16.msra.mxu0 0
    %4774 = vmatprep.subr.bf16.mxu0 0
    %4775 = vmatpush1.bf16.msra.mxu0 0
    %4776 = vmatprep.subr.bf16.mxu0 0
    %4777 = vmatpush1.bf16.msra.mxu0 0
    %4778 = vmatprep.mubr.bf16.mxu0 0
    %4779 = vmatmul.mubr.bf16.gmra.mrb[0].mxu0 %v4744
    %v4780 = vpop.f32.mrb[0].mxu0
    %v4781 = vadd.f32 %v148, %v4780
    %v4782 = vpop.f32.mrb[0].mxu0
    %v4783 = vpop.f32.mrb[0].mxu0
    %v4784 = vpop.f32.mrb[0].mxu0
    %4785 = vdwg.mxu0
    %v4786 = vxor.u32 %v4781, 2147483648
    %v4787 = vmul.f32 %v4786, 1.442695
    %v4788 = vpow.pop %v4787
    %v4789 = vadd.f32 %v4788, 1.0
    %v4790 = vrcp.pop %v4789
    %v4791 = vmul.f32 1.0, %v4790
    %4793 = vrot.lane.b32.xlu0 %v4781, 32
    %v4794 = vpop.permute.xlu0 %4793
    %v4796 = vmul.f32 %v4791, %v4794
    %4798 = vrot.lane.b32.xlu0 %v4796, 64
    %v4799 = vpop.permute.xlu0 %4798
    %v4801 = vadd.f32 %v4781, %v4799
    %v4802 = vtanh.pop %v4801
    %v4803 = vsub.f32 1.0, %v4791
    %4805 = vrot.lane.b32.xlu0 %v4802, 96
    %v4806 = vpop.permute.xlu0 %4805
    %v4808 = vmul.f32 %v4803, %v4806
    %v4809 = vmul.f32 %v4791, %v4419
    %v4810 = vadd.f32 %v4808, %v4809
    %v4811 = vpack.c.bf16 %v4810, %v4810
    %4813 = vrot.lane.b32.xlu0 %v4811, 96
    %v4814 = vpop.permute.xlu0 %4813
    %v4816 = vsel %vm243, %v4814, 0
    %4818 = vmatprep.subr.bf16.mxu0 0
    %4819 = vmatpush1.bf16.msra.mxu0 %v3235
    %4820 = vmatprep.subr.bf16.mxu0 0
    %4821 = vmatpush1.bf16.msra.mxu0 %v3236
    %4822 = vmatprep.subr.bf16.mxu0 0
    %4823 = vmatpush1.bf16.msra.mxu0 0
    %4824 = vmatprep.subr.bf16.mxu0 0
    %4825 = vmatpush1.bf16.msra.mxu0 0
    %4826 = vmatprep.subr.bf16.mxu0 0
    %4827 = vmatpush1.bf16.msra.mxu0 0
    %4828 = vmatprep.subr.bf16.mxu0 0
    %4829 = vmatpush1.bf16.msra.mxu0 0
    %4830 = vmatprep.subr.bf16.mxu0 0
    %4831 = vmatpush1.bf16.msra.mxu0 0
    %4832 = vmatprep.subr.bf16.mxu0 0
    %4833 = vmatpush1.bf16.msra.mxu0 0
    %4834 = vmatprep.subr.bf16.mxu0 0
    %4835 = vmatpush1.bf16.msra.mxu0 0
    %4836 = vmatprep.subr.bf16.mxu0 0
    %4837 = vmatpush1.bf16.msra.mxu0 0
    %4838 = vmatprep.subr.bf16.mxu0 0
    %4839 = vmatpush1.bf16.msra.mxu0 0
    %4840 = vmatprep.subr.bf16.mxu0 0
    %4841 = vmatpush1.bf16.msra.mxu0 0
    %4842 = vmatprep.subr.bf16.mxu0 0
    %4843 = vmatpush1.bf16.msra.mxu0 0
    %4844 = vmatprep.subr.bf16.mxu0 0
    %4845 = vmatpush1.bf16.msra.mxu0 0
    %4846 = vmatprep.subr.bf16.mxu0 0
    %4847 = vmatpush1.bf16.msra.mxu0 0
    %4848 = vmatprep.subr.bf16.mxu0 0
    %4849 = vmatpush1.bf16.msra.mxu0 0
    %4850 = vmatprep.mubr.bf16.mxu0 0
    %4851 = vmatmul.mubr.bf16.gmra.mrb[0].mxu0 %v4816
    %v4852 = vpop.f32.mrb[0].mxu0
    %v4853 = vadd.f32 %v162, %v4852
    %v4854 = vpop.f32.mrb[0].mxu0
    %v4855 = vpop.f32.mrb[0].mxu0
    %v4856 = vpop.f32.mrb[0].mxu0
    %4857 = vdwg.mxu0
    %v4858 = vmax.f32 %v4853, 0.0
    %v4859 = vpack.c.bf16 %v4858, %v4858
    %v4861 = vsel %vm243, %v4859, 0
    %4863 = vmatprep.subr.bf16.mxu0 0
    %4864 = vmatpush1.bf16.msra.mxu0 %v3292
    %4865 = vmatprep.subr.bf16.mxu0 0
    %4866 = vmatpush1.bf16.msra.mxu0 %v3293
    %4867 = vmatprep.subr.bf16.mxu0 0
    %4868 = vmatpush1.bf16.msra.mxu0 0
    %4869 = vmatprep.subr.bf16.mxu0 0
    %4870 = vmatpush1.bf16.msra.mxu0 0
    %4871 = vmatprep.subr.bf16.mxu0 0
    %4872 = vmatpush1.bf16.msra.mxu0 0
    %4873 = vmatprep.subr.bf16.mxu0 0
    %4874 = vmatpush1.bf16.msra.mxu0 0
    %4875 = vmatprep.subr.bf16.mxu0 0
    %4876 = vmatpush1.bf16.msra.mxu0 0
    %4877 = vmatprep.subr.bf16.mxu0 0
    %4878 = vmatpush1.bf16.msra.mxu0 0
    %4879 = vmatprep.subr.bf16.mxu0 0
    %4880 = vmatpush1.bf16.msra.mxu0 0
    %4881 = vmatprep.subr.bf16.mxu0 0
    %4882 = vmatpush1.bf16.msra.mxu0 0
    %4883 = vmatprep.subr.bf16.mxu0 0
    %4884 = vmatpush1.bf16.msra.mxu0 0
    %4885 = vmatprep.subr.bf16.mxu0 0
    %4886 = vmatpush1.bf16.msra.mxu0 0
    %4887 = vmatprep.subr.bf16.mxu0 0
    %4888 = vmatpush1.bf16.msra.mxu0 0
    %4889 = vmatprep.subr.bf16.mxu0 0
    %4890 = vmatpush1.bf16.msra.mxu0 0
    %4891 = vmatprep.subr.bf16.mxu0 0
    %4892 = vmatpush1.bf16.msra.mxu0 0
    %4893 = vmatprep.subr.bf16.mxu0 0
    %4894 = vmatpush1.bf16.msra.mxu0 0
    %4895 = vmatprep.mubr.bf16.mxu0 0
    %4896 = vmatmul.mubr.bf16.gmra.mrb[0].mxu0 %v4861
    %v4897 = vpop.f32.mrb[0].mxu0
    %v4898 = vadd.f32 %v169, %v4897
    %v4899 = vpop.f32.mrb[0].mxu0
    %v4900 = vpop.f32.mrb[0].mxu0
    %v4901 = vpop.f32.mrb[0].mxu0
    %4902 = vdwg.mxu0
    %v4903 = vld [vmem:[%s1 + $0xa] sm:$0x3]
    %v4904 = vsub.f32 %v4898, %v4903
    %v4905 = vmul.f32 %v4904, %v4904
    %v4906 = vadd.f32 %v4515, %v4905
    %4907 = vrot.lane.b32.xlu0 %v4588, 100
    %v4908 = vpop.permute.xlu0 %4907
    %v4910 = vsel %vm182, %v4898, %v4908
    %v4911 = vpack.c.bf16 %v4910, %v4910
    %v4913 = vsel %vm2831, %v4911, 0
    %4915 = vmatprep.subr.bf16.mxu0 0
    %4916 = vmatpush1.bf16.msra.mxu0 %v2826
    %4917 = vmatprep.subr.bf16.mxu0 0
    %4918 = vmatpush1.bf16.msra.mxu0 %v2827
    %4919 = vmatprep.subr.bf16.mxu0 0
    %4920 = vmatpush1.bf16.msra.mxu0 %v2836
    %4921 = vmatprep.subr.bf16.mxu0 0
    %4922 = vmatpush1.bf16.msra.mxu0 0
    %4923 = vmatprep.subr.bf16.mxu0 0
    %4924 = vmatpush1.bf16.msra.mxu0 0
    %4925 = vmatprep.subr.bf16.mxu0 0
    %4926 = vmatpush1.bf16.msra.mxu0 0
    %4927 = vmatprep.subr.bf16.mxu0 0
    %4928 = vmatpush1.bf16.msra.mxu0 0
    %4929 = vmatprep.subr.bf16.mxu0 0
    %4930 = vmatpush1.bf16.msra.mxu0 0
    %4931 = vmatprep.subr.bf16.mxu0 0
    %4932 = vmatpush1.bf16.msra.mxu0 0
    %4933 = vmatprep.subr.bf16.mxu0 0
    %4934 = vmatpush1.bf16.msra.mxu0 0
    %4935 = vmatprep.subr.bf16.mxu0 0
    %4936 = vmatpush1.bf16.msra.mxu0 0
    %4937 = vmatprep.subr.bf16.mxu0 0
    %4938 = vmatpush1.bf16.msra.mxu0 0
    %4939 = vmatprep.subr.bf16.mxu0 0
    %4940 = vmatpush1.bf16.msra.mxu0 0
    %4941 = vmatprep.subr.bf16.mxu0 0
    %4942 = vmatpush1.bf16.msra.mxu0 0
    %4943 = vmatprep.subr.bf16.mxu0 0
    %4944 = vmatpush1.bf16.msra.mxu0 0
    %4945 = vmatprep.subr.bf16.mxu0 0
    %4946 = vmatpush1.bf16.msra.mxu0 0
    %4947 = vmatprep.mubr.bf16.mxu0 0
    %4948 = vmatmul.mubr.bf16.gmra.mrb[0].mxu0 %v4913
    %v4949 = vpop.f32.mrb[0].mxu0
    %v4950 = vadd.f32 %v155, %v4949
    %v4951 = vpop.f32.mrb[0].mxu0
    %v4952 = vpop.f32.mrb[0].mxu0
    %v4953 = vpop.f32.mrb[0].mxu0
    %4954 = vdwg.mxu0
    %v4955 = vxor.u32 %v4950, 2147483648
    %v4956 = vmul.f32 %v4955, 1.442695
    %v4957 = vpow.pop %v4956
    %v4958 = vadd.f32 %v4957, 1.0
    %v4959 = vrcp.pop %v4958
    %v4960 = vmul.f32 1.0, %v4959
    %4962 = vrot.lane.b32.xlu0 %v4950, 32
    %v4963 = vpop.permute.xlu0 %4962
    %v4965 = vmul.f32 %v4960, %v4963
    %4967 = vrot.lane.b32.xlu0 %v4965, 64
    %v4968 = vpop.permute.xlu0 %4967
    %v4970 = vadd.f32 %v4950, %v4968
    %v4971 = vtanh.pop %v4970
    %v4972 = vsub.f32 1.0, %v4960
    %4974 = vrot.lane.b32.xlu0 %v4971, 96
    %v4975 = vpop.permute.xlu0 %4974
    %v4977 = vmul.f32 %v4972, %v4975
    %v4978 = vmul.f32 %v4960, %v4588
    %v4979 = vadd.f32 %v4977, %v4978
    %4981 = vrot.lane.b32.xlu0 %v4979, 96
    %v4982 = vpop.permute.xlu0 %4981
    %v4984 = vsel %vm243, %v4982, %v4662
    %v4985 = vpack.c.bf16 %v4984, %v4984
    %v4987 = vsel %vm351, %v4985, 0
    %4989 = vmatprep.subr.bf16.mxu0 0
    %4990 = vmatpush1.bf16.msra.mxu0 %v2933
    %4991 = vmatprep.subr.bf16.mxu0 0
    %4992 = vmatpush1.bf16.msra.mxu0 %v2934
    %4993 = vmatprep.subr.bf16.mxu0 0
    %4994 = vmatpush1.bf16.msra.mxu0 %v2935
    %4995 = vmatprep.subr.bf16.mxu0 0
    %4996 = vmatpush1.bf16.msra.mxu0 %v2936
    %4997 = vmatprep.subr.bf16.mxu0 0
    %4998 = vmatpush1.bf16.msra.mxu0 0
    %4999 = vmatprep.subr.bf16.mxu0 0
    %5000 = vmatpush1.bf16.msra.mxu0 0
    %5001 = vmatprep.subr.bf16.mxu0 0
    %5002 = vmatpush1.bf16.msra.mxu0 0
    %5003 = vmatprep.subr.bf16.mxu0 0
    %5004 = vmatpush1.bf16.msra.mxu0 0
    %5005 = vmatprep.subr.bf16.mxu0 0
    %5006 = vmatpush1.bf16.msra.mxu0 0
    %5007 = vmatprep.subr.bf16.mxu0 0
    %5008 = vmatpush1.bf16.msra.mxu0 0
    %5009 = vmatprep.subr.bf16.mxu0 0
    %5010 = vmatpush1.bf16.msra.mxu0 0
    %5011 = vmatprep.subr.bf16.mxu0 0
    %5012 = vmatpush1.bf16.msra.mxu0 0
    %5013 = vmatprep.subr.bf16.mxu0 0
    %5014 = vmatpush1.bf16.msra.mxu0 0
    %5015 = vmatprep.subr.bf16.mxu0 0
    %5016 = vmatpush1.bf16.msra.mxu0 0
    %5017 = vmatprep.subr.bf16.mxu0 0
    %5018 = vmatpush1.bf16.msra.mxu0 0
    %5019 = vmatprep.subr.bf16.mxu0 0
    %5020 = vmatpush1.bf16.msra.mxu0 0
    %5021 = vmatprep.mubr.bf16.mxu0 0
    %5022 = vmatmul.mubr.bf16.gmra.mrb[0].mxu0 %v4987
    %v5023 = vpop.f32.mrb[0].mxu0
    %v5024 = vadd.f32 %v132, %v5023
    %v5025 = vpop.f32.mrb[0].mxu0
    %v5026 = vpop.f32.mrb[0].mxu0
    %v5027 = vpop.f32.mrb[0].mxu0
    %5028 = vdwg.mxu0
    %v5029 = vxor.u32 %v5024, 2147483648
    %v5030 = vmul.f32 %v5029, 1.442695
    %v5031 = vpow.pop %v5030
    %v5032 = vadd.f32 %v5031, 1.0
    %v5033 = vrcp.pop %v5032
    %v5034 = vmul.f32 1.0, %v5033
    %5036 = vrot.lane.b32.xlu0 %v5024, 32
    %v5037 = vpop.permute.xlu0 %5036
    %v5039 = vmul.f32 %v5034, %v5037
    %5041 = vrot.lane.b32.xlu0 %v5039, 64
    %v5042 = vpop.permute.xlu0 %5041
    %v5044 = vadd.f32 %v5024, %v5042
    %v5045 = vtanh.pop %v5044
    %v5046 = vsub.f32 1.0, %v5034
    %5048 = vrot.lane.b32.xlu0 %v5045, 96
    %v5049 = vpop.permute.xlu0 %5048
    %v5051 = vmul.f32 %v5046, %v5049
    %v5052 = vmul.f32 %v5034, %v4662
    %v5053 = vadd.f32 %v5051, %v5052
    %5055 = vrot.lane.b32.xlu0 %v5053, 96
    %v5056 = vpop.permute.xlu0 %5055
    %v5058 = vsel %vm243, %v5056, %v4736
    %v5059 = vpack.c.bf16 %v5058, %v5058
    %v5061 = vsel %vm351, %v5059, 0
    %5063 = vmatprep.subr.bf16.mxu0 0
    %5064 = vmatpush1.bf16.msra.mxu0 %v3040
    %5065 = vmatprep.subr.bf16.mxu0 0
    %5066 = vmatpush1.bf16.msra.mxu0 %v3041
    %5067 = vmatprep.subr.bf16.mxu0 0
    %5068 = vmatpush1.bf16.msra.mxu0 %v3042
    %5069 = vmatprep.subr.bf16.mxu0 0
    %5070 = vmatpush1.bf16.msra.mxu0 %v3043
    %5071 = vmatprep.subr.bf16.mxu0 0
    %5072 = vmatpush1.bf16.msra.mxu0 0
    %5073 = vmatprep.subr.bf16.mxu0 0
    %5074 = vmatpush1.bf16.msra.mxu0 0
    %5075 = vmatprep.subr.bf16.mxu0 0
    %5076 = vmatpush1.bf16.msra.mxu0 0
    %5077 = vmatprep.subr.bf16.mxu0 0
    %5078 = vmatpush1.bf16.msra.mxu0 0
    %5079 = vmatprep.subr.bf16.mxu0 0
    %5080 = vmatpush1.bf16.msra.mxu0 0
    %5081 = vmatprep.subr.bf16.mxu0 0
    %5082 = vmatpush1.bf16.msra.mxu0 0
    %5083 = vmatprep.subr.bf16.mxu0 0
    %5084 = vmatpush1.bf16.msra.mxu0 0
    %5085 = vmatprep.subr.bf16.mxu0 0
    %5086 = vmatpush1.bf16.msra.mxu0 0
    %5087 = vmatprep.subr.bf16.mxu0 0
    %5088 = vmatpush1.bf16.msra.mxu0 0
    %5089 = vmatprep.subr.bf16.mxu0 0
    %5090 = vmatpush1.bf16.msra.mxu0 0
    %5091 = vmatprep.subr.bf16.mxu0 0
    %5092 = vmatpush1.bf16.msra.mxu0 0
    %5093 = vmatprep.subr.bf16.mxu0 0
    %5094 = vmatpush1.bf16.msra.mxu0 0
    %5095 = vmatprep.mubr.bf16.mxu0 0
    %5096 = vmatmul.mubr.bf16.gmra.mrb[0].mxu0 %v5061
    %v5097 = vpop.f32.mrb[0].mxu0
    %v5098 = vadd.f32 %v140, %v5097
    %v5099 = vpop.f32.mrb[0].mxu0
    %v5100 = vpop.f32.mrb[0].mxu0
    %v5101 = vpop.f32.mrb[0].mxu0
    %5102 = vdwg.mxu0
    %v5103 = vxor.u32 %v5098, 2147483648
    %v5104 = vmul.f32 %v5103, 1.442695
    %v5105 = vpow.pop %v5104
    %v5106 = vadd.f32 %v5105, 1.0
    %v5107 = vrcp.pop %v5106
    %v5108 = vmul.f32 1.0, %v5107
    %5110 = vrot.lane.b32.xlu0 %v5098, 32
    %v5111 = vpop.permute.xlu0 %5110
    %v5113 = vmul.f32 %v5108, %v5111
    %5115 = vrot.lane.b32.xlu0 %v5113, 64
    %v5116 = vpop.permute.xlu0 %5115
    %v5118 = vadd.f32 %v5098, %v5116
    %v5119 = vtanh.pop %v5118
    %v5120 = vsub.f32 1.0, %v5108
    %5122 = vrot.lane.b32.xlu0 %v5119, 96
    %v5123 = vpop.permute.xlu0 %5122
    %v5125 = vmul.f32 %v5120, %v5123
    %v5126 = vmul.f32 %v5108, %v4736
    %v5127 = vadd.f32 %v5125, %v5126
    %5129 = vrot.lane.b32.xlu0 %v5127, 96
    %v5130 = vpop.permute.xlu0 %5129
    %v5132 = vsel %vm243, %v5130, %v4810
    %v5133 = vpack.c.bf16 %v5132, %v5132
    %v5135 = vsel %vm351, %v5133, 0
    %5137 = vmatprep.subr.bf16.mxu0 0
    %5138 = vmatpush1.bf16.msra.mxu0 %v3147
    %5139 = vmatprep.subr.bf16.mxu0 0
    %5140 = vmatpush1.bf16.msra.mxu0 %v3148
    %5141 = vmatprep.subr.bf16.mxu0 0
    %5142 = vmatpush1.bf16.msra.mxu0 %v3149
    %5143 = vmatprep.subr.bf16.mxu0 0
    %5144 = vmatpush1.bf16.msra.mxu0 %v3150
    %5145 = vmatprep.subr.bf16.mxu0 0
    %5146 = vmatpush1.bf16.msra.mxu0 0
    %5147 = vmatprep.subr.bf16.mxu0 0
    %5148 = vmatpush1.bf16.msra.mxu0 0
    %5149 = vmatprep.subr.bf16.mxu0 0
    %5150 = vmatpush1.bf16.msra.mxu0 0
    %5151 = vmatprep.subr.bf16.mxu0 0
    %5152 = vmatpush1.bf16.msra.mxu0 0
    %5153 = vmatprep.subr.bf16.mxu0 0
    %5154 = vmatpush1.bf16.msra.mxu0 0
    %5155 = vmatprep.subr.bf16.mxu0 0
    %5156 = vmatpush1.bf16.msra.mxu0 0
    %5157 = vmatprep.subr.bf16.mxu0 0
    %5158 = vmatpush1.bf16.msra.mxu0 0
    %5159 = vmatprep.subr.bf16.mxu0 0
    %5160 = vmatpush1.bf16.msra.mxu0 0
    %5161 = vmatprep.subr.bf16.mxu0 0
    %5162 = vmatpush1.bf16.msra.mxu0 0
    %5163 = vmatprep.subr.bf16.mxu0 0
    %5164 = vmatpush1.bf16.msra.mxu0 0
    %5165 = vmatprep.subr.bf16.mxu0 0
    %5166 = vmatpush1.bf16.msra.mxu0 0
    %5167 = vmatprep.subr.bf16.mxu0 0
    %5168 = vmatpush1.bf16.msra.mxu0 0
    %5169 = vmatprep.mubr.bf16.mxu0 0
    %5170 = vmatmul.mubr.bf16.gmra.mrb[0].mxu0 %v5135
    %v5171 = vpop.f32.mrb[0].mxu0
    %v5172 = vadd.f32 %v148, %v5171
    %v5173 = vpop.f32.mrb[0].mxu0
    %v5174 = vpop.f32.mrb[0].mxu0
    %v5175 = vpop.f32.mrb[0].mxu0
    %5176 = vdwg.mxu0
    %v5177 = vxor.u32 %v5172, 2147483648
    %v5178 = vmul.f32 %v5177, 1.442695
    %v5179 = vpow.pop %v5178
    %v5180 = vadd.f32 %v5179, 1.0
    %v5181 = vrcp.pop %v5180
    %v5182 = vmul.f32 1.0, %v5181
    %5184 = vrot.lane.b32.xlu0 %v5172, 32
    %v5185 = vpop.permute.xlu0 %5184
    %v5187 = vmul.f32 %v5182, %v5185
    %5189 = vrot.lane.b32.xlu0 %v5187, 64
    %v5190 = vpop.permute.xlu0 %5189
    %v5192 = vadd.f32 %v5172, %v5190
    %v5193 = vtanh.pop %v5192
    %v5194 = vsub.f32 1.0, %v5182
    %5196 = vrot.lane.b32.xlu0 %v5193, 96
    %v5197 = vpop.permute.xlu0 %5196
    %v5199 = vmul.f32 %v5194, %v5197
    %v5200 = vmul.f32 %v5182, %v4810
    %v5201 = vadd.f32 %v5199, %v5200
    %v5202 = vpack.c.bf16 %v5201, %v5201
    %5204 = vrot.lane.b32.xlu0 %v5202, 96
    %v5205 = vpop.permute.xlu0 %5204
    %v5207 = vsel %vm243, %v5205, 0
    %5209 = vmatprep.subr.bf16.mxu0 0
    %5210 = vmatpush1.bf16.msra.mxu0 %v3235
    %5211 = vmatprep.subr.bf16.mxu0 0
    %5212 = vmatpush1.bf16.msra.mxu0 %v3236
    %5213 = vmatprep.subr.bf16.mxu0 0
    %5214 = vmatpush1.bf16.msra.mxu0 0
    %5215 = vmatprep.subr.bf16.mxu0 0
    %5216 = vmatpush1.bf16.msra.mxu0 0
    %5217 = vmatprep.subr.bf16.mxu0 0
    %5218 = vmatpush1.bf16.msra.mxu0 0
    %5219 = vmatprep.subr.bf16.mxu0 0
    %5220 = vmatpush1.bf16.msra.mxu0 0
    %5221 = vmatprep.subr.bf16.mxu0 0
    %5222 = vmatpush1.bf16.msra.mxu0 0
    %5223 = vmatprep.subr.bf16.mxu0 0
    %5224 = vmatpush1.bf16.msra.mxu0 0
    %5225 = vmatprep.subr.bf16.mxu0 0
    %5226 = vmatpush1.bf16.msra.mxu0 0
    %5227 = vmatprep.subr.bf16.mxu0 0
    %5228 = vmatpush1.bf16.msra.mxu0 0
    %5229 = vmatprep.subr.bf16.mxu0 0
    %5230 = vmatpush1.bf16.msra.mxu0 0
    %5231 = vmatprep.subr.bf16.mxu0 0
    %5232 = vmatpush1.bf16.msra.mxu0 0
    %5233 = vmatprep.subr.bf16.mxu0 0
    %5234 = vmatpush1.bf16.msra.mxu0 0
    %5235 = vmatprep.subr.bf16.mxu0 0
    %5236 = vmatpush1.bf16.msra.mxu0 0
    %5237 = vmatprep.subr.bf16.mxu0 0
    %5238 = vmatpush1.bf16.msra.mxu0 0
    %5239 = vmatprep.subr.bf16.mxu0 0
    %5240 = vmatpush1.bf16.msra.mxu0 0
    %5241 = vmatprep.mubr.bf16.mxu0 0
    %5242 = vmatmul.mubr.bf16.gmra.mrb[0].mxu0 %v5207
    %v5243 = vpop.f32.mrb[0].mxu0
    %v5244 = vadd.f32 %v162, %v5243
    %v5245 = vpop.f32.mrb[0].mxu0
    %v5246 = vpop.f32.mrb[0].mxu0
    %v5247 = vpop.f32.mrb[0].mxu0
    %5248 = vdwg.mxu0
    %v5249 = vmax.f32 %v5244, 0.0
    %v5250 = vpack.c.bf16 %v5249, %v5249
    %v5252 = vsel %vm243, %v5250, 0
    %5254 = vmatprep.subr.bf16.mxu0 0
    %5255 = vmatpush1.bf16.msra.mxu0 %v3292
    %5256 = vmatprep.subr.bf16.mxu0 0
    %5257 = vmatpush1.bf16.msra.mxu0 %v3293
    %5258 = vmatprep.subr.bf16.mxu0 0
    %5259 = vmatpush1.bf16.msra.mxu0 0
    %5260 = vmatprep.subr.bf16.mxu0 0
    %5261 = vmatpush1.bf16.msra.mxu0 0
    %5262 = vmatprep.subr.bf16.mxu0 0
    %5263 = vmatpush1.bf16.msra.mxu0 0
    %5264 = vmatprep.subr.bf16.mxu0 0
    %5265 = vmatpush1.bf16.msra.mxu0 0
    %5266 = vmatprep.subr.bf16.mxu0 0
    %5267 = vmatpush1.bf16.msra.mxu0 0
    %5268 = vmatprep.subr.bf16.mxu0 0
    %5269 = vmatpush1.bf16.msra.mxu0 0
    %5270 = vmatprep.subr.bf16.mxu0 0
    %5271 = vmatpush1.bf16.msra.mxu0 0
    %5272 = vmatprep.subr.bf16.mxu0 0
    %5273 = vmatpush1.bf16.msra.mxu0 0
    %5274 = vmatprep.subr.bf16.mxu0 0
    %5275 = vmatpush1.bf16.msra.mxu0 0
    %5276 = vmatprep.subr.bf16.mxu0 0
    %5277 = vmatpush1.bf16.msra.mxu0 0
    %5278 = vmatprep.subr.bf16.mxu0 0
    %5279 = vmatpush1.bf16.msra.mxu0 0
    %5280 = vmatprep.subr.bf16.mxu0 0
    %5281 = vmatpush1.bf16.msra.mxu0 0
    %5282 = vmatprep.subr.bf16.mxu0 0
    %5283 = vmatpush1.bf16.msra.mxu0 0
    %5284 = vmatprep.subr.bf16.mxu0 0
    %5285 = vmatpush1.bf16.msra.mxu0 0
    %5286 = vmatprep.mubr.bf16.mxu0 0
    %5287 = vmatmul.mubr.bf16.gmra.mrb[0].mxu0 %v5252
    %v5288 = vpop.f32.mrb[0].mxu0
    %v5289 = vadd.f32 %v169, %v5288
    %v5290 = vpop.f32.mrb[0].mxu0
    %v5291 = vpop.f32.mrb[0].mxu0
    %v5292 = vpop.f32.mrb[0].mxu0
    %5293 = vdwg.mxu0
    %v5294 = vld [vmem:[%s1 + $0xc] sm:$0x3]
    %v5295 = vsub.f32 %v5289, %v5294
    %v5296 = vmul.f32 %v5295, %v5295
    %v5297 = vadd.f32 %v4906, %v5296
    %5298 = vrot.lane.b32.xlu0 %v4979, 100
    %v5299 = vpop.permute.xlu0 %5298
    %v5301 = vsel %vm182, %v5289, %v5299
    %v5302 = vpack.c.bf16 %v5301, %v5301
    %v5304 = vsel %vm2831, %v5302, 0
    %5306 = vmatprep.subr.bf16.mxu0 0
    %5307 = vmatpush1.bf16.msra.mxu0 %v2826
    %5308 = vmatprep.subr.bf16.mxu0 0
    %5309 = vmatpush1.bf16.msra.mxu0 %v2827
    %5310 = vmatprep.subr.bf16.mxu0 0
    %5311 = vmatpush1.bf16.msra.mxu0 %v2836
    %5312 = vmatprep.subr.bf16.mxu0 0
    %5313 = vmatpush1.bf16.msra.mxu0 0
    %5314 = vmatprep.subr.bf16.mxu0 0
    %5315 = vmatpush1.bf16.msra.mxu0 0
    %5316 = vmatprep.subr.bf16.mxu0 0
    %5317 = vmatpush1.bf16.msra.mxu0 0
    %5318 = vmatprep.subr.bf16.mxu0 0
    %5319 = vmatpush1.bf16.msra.mxu0 0
    %5320 = vmatprep.subr.bf16.mxu0 0
    %5321 = vmatpush1.bf16.msra.mxu0 0
    %5322 = vmatprep.subr.bf16.mxu0 0
    %5323 = vmatpush1.bf16.msra.mxu0 0
    %5324 = vmatprep.subr.bf16.mxu0 0
    %5325 = vmatpush1.bf16.msra.mxu0 0
    %5326 = vmatprep.subr.bf16.mxu0 0
    %5327 = vmatpush1.bf16.msra.mxu0 0
    %5328 = vmatprep.subr.bf16.mxu0 0
    %5329 = vmatpush1.bf16.msra.mxu0 0
    %5330 = vmatprep.subr.bf16.mxu0 0
    %5331 = vmatpush1.bf16.msra.mxu0 0
    %5332 = vmatprep.subr.bf16.mxu0 0
    %5333 = vmatpush1.bf16.msra.mxu0 0
    %5334 = vmatprep.subr.bf16.mxu0 0
    %5335 = vmatpush1.bf16.msra.mxu0 0
    %5336 = vmatprep.subr.bf16.mxu0 0
    %5337 = vmatpush1.bf16.msra.mxu0 0
    %5338 = vmatprep.mubr.bf16.mxu0 0
    %5339 = vmatmul.mubr.bf16.gmra.mrb[0].mxu0 %v5304
    %v5340 = vpop.f32.mrb[0].mxu0
    %v5341 = vadd.f32 %v155, %v5340
    %v5342 = vpop.f32.mrb[0].mxu0
    %v5343 = vpop.f32.mrb[0].mxu0
    %v5344 = vpop.f32.mrb[0].mxu0
    %5345 = vdwg.mxu0
    %v5346 = vxor.u32 %v5341, 2147483648
    %v5347 = vmul.f32 %v5346, 1.442695
    %v5348 = vpow.pop %v5347
    %v5349 = vadd.f32 %v5348, 1.0
    %v5350 = vrcp.pop %v5349
    %v5351 = vmul.f32 1.0, %v5350
    %5353 = vrot.lane.b32.xlu0 %v5341, 32
    %v5354 = vpop.permute.xlu0 %5353
    %v5356 = vmul.f32 %v5351, %v5354
    %5358 = vrot.lane.b32.xlu0 %v5356, 64
    %v5359 = vpop.permute.xlu0 %5358
    %v5361 = vadd.f32 %v5341, %v5359
    %v5362 = vtanh.pop %v5361
    %v5363 = vsub.f32 1.0, %v5351
    %5365 = vrot.lane.b32.xlu0 %v5362, 96
    %v5366 = vpop.permute.xlu0 %5365
    %v5368 = vmul.f32 %v5363, %v5366
    %v5369 = vmul.f32 %v5351, %v4979
    %v5370 = vadd.f32 %v5368, %v5369
    %5372 = vrot.lane.b32.xlu0 %v5370, 96
    %v5373 = vpop.permute.xlu0 %5372
    %v5375 = vsel %vm243, %v5373, %v5053
    %v5376 = vpack.c.bf16 %v5375, %v5375
    %v5378 = vsel %vm351, %v5376, 0
    %5380 = vmatprep.subr.bf16.mxu0 0
    %5381 = vmatpush1.bf16.msra.mxu0 %v2933
    %5382 = vmatprep.subr.bf16.mxu0 0
    %5383 = vmatpush1.bf16.msra.mxu0 %v2934
    %5384 = vmatprep.subr.bf16.mxu0 0
    %5385 = vmatpush1.bf16.msra.mxu0 %v2935
    %5386 = vmatprep.subr.bf16.mxu0 0
    %5387 = vmatpush1.bf16.msra.mxu0 %v2936
    %5388 = vmatprep.subr.bf16.mxu0 0
    %5389 = vmatpush1.bf16.msra.mxu0 0
    %5390 = vmatprep.subr.bf16.mxu0 0
    %5391 = vmatpush1.bf16.msra.mxu0 0
    %5392 = vmatprep.subr.bf16.mxu0 0
    %5393 = vmatpush1.bf16.msra.mxu0 0
    %5394 = vmatprep.subr.bf16.mxu0 0
    %5395 = vmatpush1.bf16.msra.mxu0 0
    %5396 = vmatprep.subr.bf16.mxu0 0
    %5397 = vmatpush1.bf16.msra.mxu0 0
    %5398 = vmatprep.subr.bf16.mxu0 0
    %5399 = vmatpush1.bf16.msra.mxu0 0
    %5400 = vmatprep.subr.bf16.mxu0 0
    %5401 = vmatpush1.bf16.msra.mxu0 0
    %5402 = vmatprep.subr.bf16.mxu0 0
    %5403 = vmatpush1.bf16.msra.mxu0 0
    %5404 = vmatprep.subr.bf16.mxu0 0
    %5405 = vmatpush1.bf16.msra.mxu0 0
    %5406 = vmatprep.subr.bf16.mxu0 0
    %5407 = vmatpush1.bf16.msra.mxu0 0
    %5408 = vmatprep.subr.bf16.mxu0 0
    %5409 = vmatpush1.bf16.msra.mxu0 0
    %5410 = vmatprep.subr.bf16.mxu0 0
    %5411 = vmatpush1.bf16.msra.mxu0 0
    %5412 = vmatprep.mubr.bf16.mxu0 0
    %5413 = vmatmul.mubr.bf16.gmra.mrb[0].mxu0 %v5378
    %v5414 = vpop.f32.mrb[0].mxu0
    %v5415 = vadd.f32 %v132, %v5414
    %v5416 = vpop.f32.mrb[0].mxu0
    %v5417 = vpop.f32.mrb[0].mxu0
    %v5418 = vpop.f32.mrb[0].mxu0
    %5419 = vdwg.mxu0
    %v5420 = vxor.u32 %v5415, 2147483648
    %v5421 = vmul.f32 %v5420, 1.442695
    %v5422 = vpow.pop %v5421
    %v5423 = vadd.f32 %v5422, 1.0
    %v5424 = vrcp.pop %v5423
    %v5425 = vmul.f32 1.0, %v5424
    %5427 = vrot.lane.b32.xlu0 %v5415, 32
    %v5428 = vpop.permute.xlu0 %5427
    %v5430 = vmul.f32 %v5425, %v5428
    %5432 = vrot.lane.b32.xlu0 %v5430, 64
    %v5433 = vpop.permute.xlu0 %5432
    %v5435 = vadd.f32 %v5415, %v5433
    %v5436 = vtanh.pop %v5435
    %v5437 = vsub.f32 1.0, %v5425
    %5439 = vrot.lane.b32.xlu0 %v5436, 96
    %v5440 = vpop.permute.xlu0 %5439
    %v5442 = vmul.f32 %v5437, %v5440
    %v5443 = vmul.f32 %v5425, %v5053
    %v5444 = vadd.f32 %v5442, %v5443
    %5446 = vrot.lane.b32.xlu0 %v5444, 96
    %v5447 = vpop.permute.xlu0 %5446
    %v5449 = vsel %vm243, %v5447, %v5127
    %v5450 = vpack.c.bf16 %v5449, %v5449
    %v5452 = vsel %vm351, %v5450, 0
    %5454 = vmatprep.subr.bf16.mxu0 0
    %5455 = vmatpush1.bf16.msra.mxu0 %v3040
    %5456 = vmatprep.subr.bf16.mxu0 0
    %5457 = vmatpush1.bf16.msra.mxu0 %v3041
    %5458 = vmatprep.subr.bf16.mxu0 0
    %5459 = vmatpush1.bf16.msra.mxu0 %v3042
    %5460 = vmatprep.subr.bf16.mxu0 0
    %5461 = vmatpush1.bf16.msra.mxu0 %v3043
    %5462 = vmatprep.subr.bf16.mxu0 0
    %5463 = vmatpush1.bf16.msra.mxu0 0
    %5464 = vmatprep.subr.bf16.mxu0 0
    %5465 = vmatpush1.bf16.msra.mxu0 0
    %5466 = vmatprep.subr.bf16.mxu0 0
    %5467 = vmatpush1.bf16.msra.mxu0 0
    %5468 = vmatprep.subr.bf16.mxu0 0
    %5469 = vmatpush1.bf16.msra.mxu0 0
    %5470 = vmatprep.subr.bf16.mxu0 0
    %5471 = vmatpush1.bf16.msra.mxu0 0
    %5472 = vmatprep.subr.bf16.mxu0 0
    %5473 = vmatpush1.bf16.msra.mxu0 0
    %5474 = vmatprep.subr.bf16.mxu0 0
    %5475 = vmatpush1.bf16.msra.mxu0 0
    %5476 = vmatprep.subr.bf16.mxu0 0
    %5477 = vmatpush1.bf16.msra.mxu0 0
    %5478 = vmatprep.subr.bf16.mxu0 0
    %5479 = vmatpush1.bf16.msra.mxu0 0
    %5480 = vmatprep.subr.bf16.mxu0 0
    %5481 = vmatpush1.bf16.msra.mxu0 0
    %5482 = vmatprep.subr.bf16.mxu0 0
    %5483 = vmatpush1.bf16.msra.mxu0 0
    %5484 = vmatprep.subr.bf16.mxu0 0
    %5485 = vmatpush1.bf16.msra.mxu0 0
    %5486 = vmatprep.mubr.bf16.mxu0 0
    %5487 = vmatmul.mubr.bf16.gmra.mrb[0].mxu0 %v5452
    %v5488 = vpop.f32.mrb[0].mxu0
    %v5489 = vadd.f32 %v140, %v5488
    %v5490 = vpop.f32.mrb[0].mxu0
    %v5491 = vpop.f32.mrb[0].mxu0
    %v5492 = vpop.f32.mrb[0].mxu0
    %5493 = vdwg.mxu0
    %v5494 = vxor.u32 %v5489, 2147483648
    %v5495 = vmul.f32 %v5494, 1.442695
    %v5496 = vpow.pop %v5495
    %v5497 = vadd.f32 %v5496, 1.0
    %v5498 = vrcp.pop %v5497
    %v5499 = vmul.f32 1.0, %v5498
    %5501 = vrot.lane.b32.xlu0 %v5489, 32
    %v5502 = vpop.permute.xlu0 %5501
    %v5504 = vmul.f32 %v5499, %v5502
    %5506 = vrot.lane.b32.xlu0 %v5504, 64
    %v5507 = vpop.permute.xlu0 %5506
    %v5509 = vadd.f32 %v5489, %v5507
    %v5510 = vtanh.pop %v5509
    %v5511 = vsub.f32 1.0, %v5499
    %5513 = vrot.lane.b32.xlu0 %v5510, 96
    %v5514 = vpop.permute.xlu0 %5513
    %v5516 = vmul.f32 %v5511, %v5514
    %v5517 = vmul.f32 %v5499, %v5127
    %v5518 = vadd.f32 %v5516, %v5517
    %5520 = vrot.lane.b32.xlu0 %v5518, 96
    %v5521 = vpop.permute.xlu0 %5520
    %v5523 = vsel %vm243, %v5521, %v5201
    %v5524 = vpack.c.bf16 %v5523, %v5523
    %v5526 = vsel %vm351, %v5524, 0
    %5528 = vmatprep.subr.bf16.mxu0 0
    %5529 = vmatpush1.bf16.msra.mxu0 %v3147
    %5530 = vmatprep.subr.bf16.mxu0 0
    %5531 = vmatpush1.bf16.msra.mxu0 %v3148
    %5532 = vmatprep.subr.bf16.mxu0 0
    %5533 = vmatpush1.bf16.msra.mxu0 %v3149
    %5534 = vmatprep.subr.bf16.mxu0 0
    %5535 = vmatpush1.bf16.msra.mxu0 %v3150
    %5536 = vmatprep.subr.bf16.mxu0 0
    %5537 = vmatpush1.bf16.msra.mxu0 0
    %5538 = vmatprep.subr.bf16.mxu0 0
    %5539 = vmatpush1.bf16.msra.mxu0 0
    %5540 = vmatprep.subr.bf16.mxu0 0
    %5541 = vmatpush1.bf16.msra.mxu0 0
    %5542 = vmatprep.subr.bf16.mxu0 0
    %5543 = vmatpush1.bf16.msra.mxu0 0
    %5544 = vmatprep.subr.bf16.mxu0 0
    %5545 = vmatpush1.bf16.msra.mxu0 0
    %5546 = vmatprep.subr.bf16.mxu0 0
    %5547 = vmatpush1.bf16.msra.mxu0 0
    %5548 = vmatprep.subr.bf16.mxu0 0
    %5549 = vmatpush1.bf16.msra.mxu0 0
    %5550 = vmatprep.subr.bf16.mxu0 0
    %5551 = vmatpush1.bf16.msra.mxu0 0
    %5552 = vmatprep.subr.bf16.mxu0 0
    %5553 = vmatpush1.bf16.msra.mxu0 0
    %5554 = vmatprep.subr.bf16.mxu0 0
    %5555 = vmatpush1.bf16.msra.mxu0 0
    %5556 = vmatprep.subr.bf16.mxu0 0
    %5557 = vmatpush1.bf16.msra.mxu0 0
    %5558 = vmatprep.subr.bf16.mxu0 0
    %5559 = vmatpush1.bf16.msra.mxu0 0
    %5560 = vmatprep.mubr.bf16.mxu0 0
    %5561 = vmatmul.mubr.bf16.gmra.mrb[0].mxu0 %v5526
    %v5562 = vpop.f32.mrb[0].mxu0
    %v5563 = vadd.f32 %v148, %v5562
    %v5564 = vpop.f32.mrb[0].mxu0
    %v5565 = vpop.f32.mrb[0].mxu0
    %v5566 = vpop.f32.mrb[0].mxu0
    %5567 = vdwg.mxu0
    %v5568 = vxor.u32 %v5563, 2147483648
    %v5569 = vmul.f32 %v5568, 1.442695
    %v5570 = vpow.pop %v5569
    %v5571 = vadd.f32 %v5570, 1.0
    %v5572 = vrcp.pop %v5571
    %v5573 = vmul.f32 1.0, %v5572
    %5575 = vrot.lane.b32.xlu0 %v5563, 32
    %v5576 = vpop.permute.xlu0 %5575
    %v5578 = vmul.f32 %v5573, %v5576
    %5580 = vrot.lane.b32.xlu0 %v5578, 64
    %v5581 = vpop.permute.xlu0 %5580
    %v5583 = vadd.f32 %v5563, %v5581
    %v5584 = vtanh.pop %v5583
    %v5585 = vsub.f32 1.0, %v5573
    %5587 = vrot.lane.b32.xlu0 %v5584, 96
    %v5588 = vpop.permute.xlu0 %5587
    %v5590 = vmul.f32 %v5585, %v5588
    %v5591 = vmul.f32 %v5573, %v5201
    %v5592 = vadd.f32 %v5590, %v5591
    %v5593 = vpack.c.bf16 %v5592, %v5592
    %5595 = vrot.lane.b32.xlu0 %v5593, 96
    %v5596 = vpop.permute.xlu0 %5595
    %v5598 = vsel %vm243, %v5596, 0
    %5600 = vmatprep.subr.bf16.mxu0 0
    %5601 = vmatpush1.bf16.msra.mxu0 %v3235
    %5602 = vmatprep.subr.bf16.mxu0 0
    %5603 = vmatpush1.bf16.msra.mxu0 %v3236
    %5604 = vmatprep.subr.bf16.mxu0 0
    %5605 = vmatpush1.bf16.msra.mxu0 0
    %5606 = vmatprep.subr.bf16.mxu0 0
    %5607 = vmatpush1.bf16.msra.mxu0 0
    %5608 = vmatprep.subr.bf16.mxu0 0
    %5609 = vmatpush1.bf16.msra.mxu0 0
    %5610 = vmatprep.subr.bf16.mxu0 0
    %5611 = vmatpush1.bf16.msra.mxu0 0
    %5612 = vmatprep.subr.bf16.mxu0 0
    %5613 = vmatpush1.bf16.msra.mxu0 0
    %5614 = vmatprep.subr.bf16.mxu0 0
    %5615 = vmatpush1.bf16.msra.mxu0 0
    %5616 = vmatprep.subr.bf16.mxu0 0
    %5617 = vmatpush1.bf16.msra.mxu0 0
    %5618 = vmatprep.subr.bf16.mxu0 0
    %5619 = vmatpush1.bf16.msra.mxu0 0
    %5620 = vmatprep.subr.bf16.mxu0 0
    %5621 = vmatpush1.bf16.msra.mxu0 0
    %5622 = vmatprep.subr.bf16.mxu0 0
    %5623 = vmatpush1.bf16.msra.mxu0 0
    %5624 = vmatprep.subr.bf16.mxu0 0
    %5625 = vmatpush1.bf16.msra.mxu0 0
    %5626 = vmatprep.subr.bf16.mxu0 0
    %5627 = vmatpush1.bf16.msra.mxu0 0
    %5628 = vmatprep.subr.bf16.mxu0 0
    %5629 = vmatpush1.bf16.msra.mxu0 0
    %5630 = vmatprep.subr.bf16.mxu0 0
    %5631 = vmatpush1.bf16.msra.mxu0 0
    %5632 = vmatprep.mubr.bf16.mxu0 0
    %5633 = vmatmul.mubr.bf16.gmra.mrb[0].mxu0 %v5598
    %v5634 = vpop.f32.mrb[0].mxu0
    %v5635 = vadd.f32 %v162, %v5634
    %v5636 = vpop.f32.mrb[0].mxu0
    %v5637 = vpop.f32.mrb[0].mxu0
    %v5638 = vpop.f32.mrb[0].mxu0
    %5639 = vdwg.mxu0
    %v5640 = vmax.f32 %v5635, 0.0
    %v5641 = vpack.c.bf16 %v5640, %v5640
    %v5643 = vsel %vm243, %v5641, 0
    %5645 = vmatprep.subr.bf16.mxu0 0
    %5646 = vmatpush1.bf16.msra.mxu0 %v3292
    %5647 = vmatprep.subr.bf16.mxu0 0
    %5648 = vmatpush1.bf16.msra.mxu0 %v3293
    %5649 = vmatprep.subr.bf16.mxu0 0
    %5650 = vmatpush1.bf16.msra.mxu0 0
    %5651 = vmatprep.subr.bf16.mxu0 0
    %5652 = vmatpush1.bf16.msra.mxu0 0
    %5653 = vmatprep.subr.bf16.mxu0 0
    %5654 = vmatpush1.bf16.msra.mxu0 0
    %5655 = vmatprep.subr.bf16.mxu0 0
    %5656 = vmatpush1.bf16.msra.mxu0 0
    %5657 = vmatprep.subr.bf16.mxu0 0
    %5658 = vmatpush1.bf16.msra.mxu0 0
    %5659 = vmatprep.subr.bf16.mxu0 0
    %5660 = vmatpush1.bf16.msra.mxu0 0
    %5661 = vmatprep.subr.bf16.mxu0 0
    %5662 = vmatpush1.bf16.msra.mxu0 0
    %5663 = vmatprep.subr.bf16.mxu0 0
    %5664 = vmatpush1.bf16.msra.mxu0 0
    %5665 = vmatprep.subr.bf16.mxu0 0
    %5666 = vmatpush1.bf16.msra.mxu0 0
    %5667 = vmatprep.subr.bf16.mxu0 0
    %5668 = vmatpush1.bf16.msra.mxu0 0
    %5669 = vmatprep.subr.bf16.mxu0 0
    %5670 = vmatpush1.bf16.msra.mxu0 0
    %5671 = vmatprep.subr.bf16.mxu0 0
    %5672 = vmatpush1.bf16.msra.mxu0 0
    %5673 = vmatprep.subr.bf16.mxu0 0
    %5674 = vmatpush1.bf16.msra.mxu0 0
    %5675 = vmatprep.subr.bf16.mxu0 0
    %5676 = vmatpush1.bf16.msra.mxu0 0
    %5677 = vmatprep.mubr.bf16.mxu0 0
    %5678 = vmatmul.mubr.bf16.gmra.mrb[0].mxu0 %v5643
    %v5679 = vpop.f32.mrb[0].mxu0
    %v5680 = vadd.f32 %v169, %v5679
    %v5681 = vpop.f32.mrb[0].mxu0
    %v5682 = vpop.f32.mrb[0].mxu0
    %v5683 = vpop.f32.mrb[0].mxu0
    %5684 = vdwg.mxu0
    %v5685 = vld [vmem:[%s1 + $0xe] sm:$0x3]
    %v5686 = vsub.f32 %v5680, %v5685
    %v5687 = vmul.f32 %v5686, %v5686
    %v5688 = vadd.f32 %v5297, %v5687
    %v5690 = vrot.slane %v3334, 6
    %v5693 = vrot.slane %v3725, 4
    %v5696 = vrot.slane %v4116, 2
    %v5699 = vrot.slane %v4898, 6
    %v5702 = vrot.slane %v5289, 4
    %v5705 = vrot.slane %v5680, 2
    %v5707 = vsel %vm186, %v2810, %v5690
    %v5708 = vsel %vm2779, %v5707, %v5693
    %v5709 = vsel %vm2781, %v5708, %v5696
    %v5710 = vsel %vm186, %v4507, %v5699
    %v5711 = vsel %vm2779, %v5710, %v5702
    %v5712 = vsel %vm2781, %v5711, %v5705
    %5713 = vst.msk [vmem:[%s17] sm:$0xff] %vm182, %v5709
    %5714 = vst.msk [vmem:[%s17 + $0x8] sm:$0xff] %vm182, %v5712
    %v5715 = vrot.slane %v5444, 6
    %v5717 = vrot.slane %v5518, 4
    %v5720 = vrot.slane %v5592, 2
    %v5722 = vsel %vm186, %v5370, %v5715
    %v5723 = vsel %vm2779, %v5722, %v5717
    %v5724 = vsel %vm2781, %v5723, %v5720
    %5726 = vrot.lane.b32.xlu0 %v5724, 96
    %v5727 = vpop.permute.xlu0 %5726
    %5729 = vst.msk [vmem:[#allocation10] sm:$0xff] %vm243, %v5727
    %vm5730 = vcmask 25600
    %v5731 = vsel %vm5730, %v5688, 0.0
    %5732 = vadd.xlane.f32.xlu0 %v5731
    %v5733 = vpop.xlane.xlu0 %5732
    %v5734 = vrot.slane %v5733, 4
    %v5735 = vadd.f32 %v5733, %v5734
    %v5736 = vrot.slane %v5735, 2
    %v5737 = vadd.f32 %v5735, %v5736
    %v5738 = vrot.slane %v5737, 1
    %v5739 = vadd.f32 %v5737, %v5738
    %s5740 = vtos %v5739
    %s5741 = smul.f32 %s5740, 0.125
    %v5742 = vstv %s5741
    %vm5743 = vcmask 0
    %5744 = vst.msk [vmem:[#allocation11] sm:$0x1] %vm5743, %v5742
    // Predicated region
    $region70: #{tpu_custom_call.1} parent=1 // pred_check
      _
    $region71: #{tpu_custom_call.1} parent=1 // pred_check_branch
      %5746 = sbr.rel (0) target = $region73
    $region72: #{tpu_custom_call.1} parent=1 // pred_region
      %s5748 = ssub.s32 256, 256
      %5749 = vsyncadd [#allocation4], %s5748
      %s5750 = sshll.u32 [#allocation7], 4
      %s5751 = int_to_ptr.vmem [resolvable:$true] %s5750
      %5756 = dma.vmem_to_hbm [thread:$0]  %s5751, 256, %s15, [#allocation4], 128, 128, 8
    $region73: #{tpu_custom_call.1} parent=1 // pred_fallthru
      _
    // Predicated region
    $region74: #{tpu_custom_call.1} parent=1 // pred_check
      _
    $region75: #{tpu_custom_call.1} parent=1 // pred_check_branch
      %5758 = sbr.rel (0) target = $region77
    $region76: #{tpu_custom_call.1} parent=1 // pred_region
      %s5760 = ssub.s32 128, 128
      %5761 = vsyncadd [#allocation9], %s5760
      %s5763 = sshll.u32 [#allocation8], 4
      %s5764 = int_to_ptr.vmem [resolvable:$true] %s5763
      %5766 = dma.vmem_to_hbm [thread:$0]  %s5764, 128, %s16, [#allocation9]
    $region77: #{tpu_custom_call.1} parent=1 // pred_fallthru
      _
    // Predicated region
    $region78: #{tpu_custom_call.1} parent=1 // pred_check
      _
    $region79: #{tpu_custom_call.1} parent=1 // pred_check_branch
      %5768 = sbr.rel (0) target = $region81
    $region80: #{tpu_custom_call.1} parent=1 // pred_region
      _
    $region81: #{tpu_custom_call.1} parent=1 // pred_fallthru
      _
    // Predicated region
    $region82: #{tpu_custom_call.1} parent=1 // pred_check
      _
    $region83: #{tpu_custom_call.1} parent=1 // pred_check_branch
      %5770 = sbr.rel (0) target = $region85
    $region84: #{tpu_custom_call.1} parent=1 // pred_region
      %s5772 = ssub.s32 128, 128
      %5773 = vsyncadd [#allocation9], %s5772
      %s5775 = sshll.u32 [#allocation10], 4
      %s5776 = int_to_ptr.vmem [resolvable:$true] %s5775
      %5778 = dma.vmem_to_hbm [thread:$0]  %s5776, 128, %s18, [#allocation9]
    $region85: #{tpu_custom_call.1} parent=1 // pred_fallthru
      _
    // Predicated region
    $region86: #{tpu_custom_call.1} parent=1 // pred_check
      _
    $region87: #{tpu_custom_call.1} parent=1 // pred_check_branch
      %5780 = sbr.rel (0) target = $region89
    $region88: #{tpu_custom_call.1} parent=1 // pred_region
      %s5782 = ssub.s32 16, 16
      %5783 = vsyncadd [#allocation12], %s5782
      %s5785 = sshll.u32 [#allocation11], 4
      %s5786 = int_to_ptr.vmem [resolvable:$true] %s5785
      %5788 = dma.vmem_to_hbm [thread:$0]  %s5786, 16, %s19, [#allocation12]
    $region89: #{tpu_custom_call.1} parent=1 // pred_fallthru
      _
    // Predicated region
    $region90: #{tpu_custom_call.1} parent=1 // pred_check
      _
    $region91: #{tpu_custom_call.1} parent=1 // pred_check_branch
      %5790 = sbr.rel (0) target = $region93
    $region92: #{tpu_custom_call.1} parent=1 // pred_region
      %5791 = dma.done [#allocation4], 256
    $region93: #{tpu_custom_call.1} parent=1 // pred_fallthru
      _
    // Predicated region
    $region94: #{tpu_custom_call.1} parent=1 // pred_check
      _
    $region95: #{tpu_custom_call.1} parent=1 // pred_check_branch
      %5793 = sbr.rel (0) target = $region97
    $region96: #{tpu_custom_call.1} parent=1 // pred_region
      %5794 = dma.done [#allocation9], 128
    $region97: #{tpu_custom_call.1} parent=1 // pred_fallthru
      _
    // Predicated region
    $region98: #{tpu_custom_call.1} parent=1 // pred_check
      _
    $region99: #{tpu_custom_call.1} parent=1 // pred_check_branch
      %5796 = sbr.rel (0) target = $region101
    $region100: #{tpu_custom_call.1} parent=1 // pred_region
      _
    $region101: #{tpu_custom_call.1} parent=1 // pred_fallthru
      _
    // Predicated region
    $region102: #{tpu_custom_call.1} parent=1 // pred_check
      _
    $region103: #{tpu_custom_call.1} parent=1 // pred_check_branch
      %5798 = sbr.rel (0) target = $region105
    $region104: #{tpu_custom_call.1} parent=1 // pred_region
      %5799 = dma.done [#allocation9], 128
    $region105: #{tpu_custom_call.1} parent=1 // pred_fallthru
      _
    // Predicated region
    $region106: #{tpu_custom_call.1} parent=1 // pred_check
      _
    $region107: #{tpu_custom_call.1} parent=1 // pred_check_branch
      %5801 = sbr.rel (0) target = $region109
    $region108: #{tpu_custom_call.1} parent=1 // pred_region
      %5802 = dma.done [#allocation12], 16
    $region109: #{tpu_custom_call.1} parent=1 // pred_fallthru
      _
    %5803 = vsyncpa [#allocation3], 1
    %5804 = vsyncpa [#allocation6], 1
    %5805 = vsyncpa [#allocation4], 1
    %5806 = vsyncpa [#allocation9], 1
    %5807 = vsyncpa [#allocation12], 1

</llo_original>
